<compile_context>
chip_gen: v7x
topology: tpu7x:2x2x1
jax: 0.10.0
libtpu: 0.0.40
codegen_flags: <defaults>
</compile_context>

<pallas_src>
import jax
import jax.numpy as jnp
from jax.experimental import pallas as pl
from jax.experimental.pallas import tpu as pltpu

EPS = 1e-5

# ---------------------------------------------------------------------------
# Static problem description
# ---------------------------------------------------------------------------
NODE_TYPES = ('pfas_sites', 'sw_stations', 'gw_wells')
N_NODES = {'pfas_sites': 6, 'sw_stations': 5, 'gw_wells': 8}
CIN_DICT = {'pfas_sites': 12, 'sw_stations': 10, 'gw_wells': 14}
N_MAX = max(N_NODES.values())                 # padded rows per node type
N_TOT = N_MAX * len(NODE_TYPES)               # global padded node space (24)
CIN_MAX = max(CIN_DICT.values())

DIS_EDGE_TYPES = (
    ('pfas_sites', 'dis_edge', 'gw_wells'),
    ('pfas_sites', 'dis_edge', 'sw_stations'),
    ('sw_stations', 'dis_edge', 'pfas_sites'),
    ('sw_stations', 'dis_edge', 'gw_wells'),
    ('gw_wells', 'dis_edge', 'pfas_sites'),
    ('gw_wells', 'dis_edge', 'sw_stations'),
    ('gw_wells', 'dis_edge', 'gw_wells'),
)
SELF_EDGE_TYPES = tuple((nt, 'self_loop', nt) for nt in NODE_TYPES)

REDUCED_DIM = 32
OUT_CHANNELS = 16
EDGE_EMB_DIM = 16
EDGE_ATTR_DIM = 8
N_EDGES = 12

_PARALLEL = pltpu.CompilerParams(dimension_semantics=("parallel",))


# ---------------------------------------------------------------------------
# Pallas kernels (each pallas_call is batched over node / edge types via grid)
# ---------------------------------------------------------------------------

def _node_reduce_kernel(x_ref, w_ref, b_ref, g_ref, bt_ref, m_ref, invn_ref, o_ref):
    # Linear -> BatchNorm1d (training-mode stats over the VALID rows only) -> ReLU
    f32 = jnp.float32
    y = jnp.dot(x_ref[0], w_ref[0], preferred_element_type=f32) + b_ref[0]
    mask, inv_n = m_ref[0], invn_ref[0]
    mean = jnp.sum(y * mask, axis=0, keepdims=True) * inv_n
    d = (y - mean) * mask
    var = jnp.sum(d * d, axis=0, keepdims=True) * inv_n
    y = (y - mean) * jax.lax.rsqrt(var + EPS) * g_ref[0] + bt_ref[0]
    o_ref[0] = jnp.maximum(y, 0.0) * mask                  # zero padded rows


def _edge_reduce_kernel(a_ref, w_ref, b_ref, g_ref, bt_ref, o_ref):
    f32 = jnp.float32
    y = jnp.dot(a_ref[0], w_ref[0], preferred_element_type=f32) + b_ref[0]
    mean = jnp.mean(y, axis=0, keepdims=True)
    var = jnp.mean((y - mean) ** 2, axis=0, keepdims=True)
    y = (y - mean) * jax.lax.rsqrt(var + EPS) * g_ref[0] + bt_ref[0]
    o_ref[0] = jnp.maximum(y, 0.0)


def _sage_edge_kernel(x_ref, ea_ref, gat_ref, dsel_ref, sct_ref, sctT_ref, sselT_ref,
                      invdeg_ref, m_ref, invn_ref,
                      wl_ref, bl_ref, wr_ref, we_ref, be_ref, wte_ref, bte_ref,
                      wta_ref, bta_ref, wgo_ref, wgt_ref, wga_ref, bg_ref,
                      g_ref, bt_ref, o_ref):
    # One SAGEConvWithEdgeAttrAndEmbedding per grid step (edge type).
    f32 = jnp.float32
    x_all = x_ref[...]                                     # (N_TOT, Cin), shared block
    ea = ea_ref[0]                                         # (E, reduced_dim)
    mask, inv_n = m_ref[0], invn_ref[0]

    # SAGEConv mean aggregation (one-hot matmuls; transposes & 1/deg precomputed on host).
    x_j = jnp.dot(gat_ref[0], x_all, preferred_element_type=f32)         # (E, Cin)
    agg = jnp.dot(sctT_ref[0], x_j, preferred_element_type=f32) * invdeg_ref[0]
    xd = jnp.dot(dsel_ref[0], x_all, preferred_element_type=f32)         # (Nmax, Cin)
    out = (jnp.dot(agg, wl_ref[0], preferred_element_type=f32) + bl_ref[0]
           + jnp.dot(xd, wr_ref[0], preferred_element_type=f32))         # (Nmax, C)

    # Edge embedding / transforms.
    emb = jnp.maximum(jnp.dot(ea, we_ref[0], preferred_element_type=f32) + be_ref[0], 0.0)
    t_emb = jnp.dot(emb, wte_ref[0], preferred_element_type=f32) + bte_ref[0]
    t_attr = jnp.dot(ea, wta_ref[0], preferred_element_type=f32) + bta_ref[0]
    t = t_emb + t_attr                                     # edge_attr_transformed

    # gate(cat([out[col], t, t_attr])) — gate weight pre-split on the host.
    out_col = jnp.dot(sct_ref[0], out, preferred_element_type=f32)       # (E, C)
    gate = jax.nn.sigmoid(jnp.dot(out_col, wgo_ref[0], preferred_element_type=f32)
                          + jnp.dot(t, wgt_ref[0], preferred_element_type=f32)
                          + jnp.dot(t_attr, wga_ref[0], preferred_element_type=f32)
                          + bg_ref[0])
    contrib = gate * t                                     # edge_contributions

    # out += scatter_(zeros, col, contrib): deterministic last-edge-wins overwrite into zeros.
    out = out + jnp.dot(sselT_ref[0], contrib, preferred_element_type=f32)

    # BatchNorm1d (training stats over valid dst rows), Identity residual (=> *2), ReLU.
    mean = jnp.sum(out * mask, axis=0, keepdims=True) * inv_n
    d = (out - mean) * mask
    var = jnp.sum(d * d, axis=0, keepdims=True) * inv_n
    out = (out - mean) * jax.lax.rsqrt(var + EPS) * g_ref[0] + bt_ref[0]
    out = out + out
    o_ref[0] = jnp.maximum(out, 0.0) * mask                # zero padded rows


def _sage_self_kernel(x_ref, gat_ref, dsel_ref, sctT_ref, invdeg_ref, m_ref,
                      wl_ref, bl_ref, wr_ref, o_ref):
    # Plain PyG SAGEConv (mean aggregation) per grid step (node type).
    f32 = jnp.float32
    x_all = x_ref[...]
    x_j = jnp.dot(gat_ref[0], x_all, preferred_element_type=f32)
    agg = jnp.dot(sctT_ref[0], x_j, preferred_element_type=f32) * invdeg_ref[0]
    xd = jnp.dot(dsel_ref[0], x_all, preferred_element_type=f32)
    out = (jnp.dot(agg, wl_ref[0], preferred_element_type=f32) + bl_ref[0]
           + jnp.dot(xd, wr_ref[0], preferred_element_type=f32))
    o_ref[0] = out * m_ref[0]


def _linear_prelu_kernel(x_ref, w_ref, b_ref, a_ref, o_ref):
    f32 = jnp.float32
    y = jnp.dot(x_ref[...], w_ref[...], preferred_element_type=f32) + b_ref[...]
    o_ref[...] = jnp.where(y >= 0.0, y, a_ref[...] * y)


# ---------------------------------------------------------------------------
# pallas_call wrappers
# ---------------------------------------------------------------------------

def _pt(a):
    """Per-type stacked input: one (1, ...) block per grid step."""
    return pl.BlockSpec((1,) + a.shape[1:], lambda i: (i, 0, 0))


def _sh(a):
    """Shared 2-D input: same full block for every grid step (fetched once)."""
    return pl.BlockSpec(a.shape, lambda i: (0, 0))


def node_reduce(x, p, mask, inv_n):
    t, nmax, _ = x.shape
    r = p['w'].shape[2]
    args = (x, p['w'], p['b'], p['gamma'], p['beta'], mask, inv_n)
    return pl.pallas_call(
        _node_reduce_kernel,
        out_shape=jax.ShapeDtypeStruct((t, nmax, r), jnp.float32),
        grid=(t,),
        in_specs=[_pt(a) for a in args],
        out_specs=pl.BlockSpec((1, nmax, r), lambda i: (i, 0, 0)),
        compiler_params=_PARALLEL,
    )(*args)


def edge_reduce(a, p):
    t, e, _ = a.shape
    r = p['w'].shape[2]
    args = (a, p['w'], p['b'], p['gamma'], p['beta'])
    return pl.pallas_call(
        _edge_reduce_kernel,
        out_shape=jax.ShapeDtypeStruct((t, e, r), jnp.float32),
        grid=(t,),
        in_specs=[_pt(x) for x in args],
        out_specs=pl.BlockSpec((1, e, r), lambda i: (i, 0, 0)),
        compiler_params=_PARALLEL,
    )(*args)


def sage_edge_conv(x_all, ea, st, p):
    t, nmax, _ = st['dsel'].shape
    c_out = p['wl'].shape[2]
    args = (x_all, ea, st['gat'], st['dsel'], st['sct'], st['sctT'], st['sselT'],
            st['inv_deg'], st['mask'], st['inv_n'],
            p['wl'], p['bl'], p['wr'], p['we'], p['be'], p['wte'], p['bte'],
            p['wta'], p['bta'], p['wgo'], p['wgt'], p['wga'], p['bg'],
            p['gamma'], p['beta'])
    in_specs = [_sh(x_all)] + [_pt(a) for a in args[1:]]
    return pl.pallas_call(
        _sage_edge_kernel,
        out_shape=jax.ShapeDtypeStruct((t, nmax, c_out), jnp.float32),
        grid=(t,),
        in_specs=in_specs,
        out_specs=pl.BlockSpec((1, nmax, c_out), lambda i: (i, 0, 0)),
        compiler_params=_PARALLEL,
    )(*args)


def sage_self_conv(x_all, st, p):
    t, nmax, _ = st['dsel'].shape
    c_out = p['wl'].shape[2]
    args = (x_all, st['gat'], st['dsel'], st['sctT'], st['inv_deg'], st['mask'],
            p['wl'], p['bl'], p['wr'])
    in_specs = [_sh(x_all)] + [_pt(a) for a in args[1:]]
    return pl.pallas_call(
        _sage_self_kernel,
        out_shape=jax.ShapeDtypeStruct((t, nmax, c_out), jnp.float32),
        grid=(t,),
        in_specs=in_specs,
        out_specs=pl.BlockSpec((1, nmax, c_out), lambda i: (i, 0, 0)),
        compiler_params=_PARALLEL,
    )(*args)


def linear_prelu(x, w, b, a):
    return pl.pallas_call(
        _linear_prelu_kernel,
        out_shape=jax.ShapeDtypeStruct((x.shape[0], w.shape[1]), jnp.float32),
        in_specs=[pl.BlockSpec(memory_space=pltpu.MemorySpace.VMEM)] * 4,
        out_specs=pl.BlockSpec(memory_space=pltpu.MemorySpace.VMEM),
    )(x, w, b, a)


# ---------------------------------------------------------------------------
# Hoisted graph structure (built once, reused by conv1 and conv2)
# ---------------------------------------------------------------------------

def one_hot_f32(idx, n):
    return (idx[:, None] == jnp.arange(n)[None, :]).astype(jnp.float32)


def _dst_selector(dst, base):
    nd = N_NODES[dst]
    sel = jnp.zeros((N_MAX, N_TOT), jnp.float32)
    return sel.at[jnp.arange(nd), base[dst] + jnp.arange(nd)].set(1.0)


def build_dis_structs(edge_index_dict):
    base = {nt: i * N_MAX for i, nt in enumerate(NODE_TYPES)}
    cols = dict(gat=[], dsel=[], sct=[], sctT=[], sselT=[], inv_deg=[], mask=[], inv_n=[])
    for et in DIS_EDGE_TYPES:
        src, _, dst = et
        row, col = edge_index_dict[et]
        e = row.shape[0]
        gat = one_hot_f32(row + base[src], N_TOT)                  # gather x_src[row]
        sct = one_hot_f32(col, N_MAX)                              # gather out[col]
        eids = jnp.arange(e)[:, None]
        last = jnp.max(jnp.where(sct > 0, eids, -1), axis=0)
        ssel = ((eids == last[None, :]) & (sct > 0)).astype(jnp.float32)
        deg = jnp.sum(sct, axis=0)
        nd = N_NODES[dst]
        cols['gat'].append(gat)
        cols['dsel'].append(_dst_selector(dst, base))
        cols['sct'].append(sct)
        cols['sctT'].append(sct.T)
        cols['sselT'].append(ssel.T)
        cols['inv_deg'].append((1.0 / jnp.maximum(deg, 1.0))[:, None])
        cols['mask'].append((jnp.arange(N_MAX) < nd).astype(jnp.float32)[:, None])
        cols['inv_n'].append(jnp.full((1, 1), 1.0 / nd, jnp.float32))
    return {k: jnp.stack(v) for k, v in cols.items()}


def build_self_structs(edge_index_dict):
    base = {nt: i * N_MAX for i, nt in enumerate(NODE_TYPES)}
    cols = dict(gat=[], dsel=[], sctT=[], inv_deg=[], mask=[])
    for et in SELF_EDGE_TYPES:
        src, _, dst = et
        row, col = edge_index_dict[et]
        e = row.shape[0]
        pad = jnp.full((N_MAX - e,), -1, row.dtype)
        rowp = jnp.concatenate([row, pad])
        colp = jnp.concatenate([col, pad])
        grow = jnp.where(rowp >= 0, rowp + base[src], -1)
        sct = one_hot_f32(colp, N_MAX)
        deg = jnp.sum(sct, axis=0)
        nd = N_NODES[dst]
        cols['gat'].append(one_hot_f32(grow, N_TOT))
        cols['dsel'].append(_dst_selector(dst, base))
        cols['sctT'].append(sct.T)
        cols['inv_deg'].append((1.0 / jnp.maximum(deg, 1.0))[:, None])
        cols['mask'].append((jnp.arange(N_MAX) < nd).astype(jnp.float32)[:, None])
    return {k: jnp.stack(v) for k, v in cols.items()}


# ---------------------------------------------------------------------------
# Full model forward (matches GatedEdgeEmbeddingPReLUGNN.forward), fully jitted
# ---------------------------------------------------------------------------

@jax.jit
def gnn_forward(params, x_pad, ea_stack, st):
    # node_reduce_dim -> node_norm -> relu (one batched call)
    h0 = node_reduce(x_pad, params['node'], st['node_mask'], st['node_inv_n'])
    x_all = h0.reshape(N_TOT, -1)
    # edge_reduce_dim -> edge_norm -> relu (one batched call, reused by both conv layers)
    ea = edge_reduce(ea_stack, params['edge'])

    def hetero_layer(x_all, p_dis, p_self):
        dis = sage_edge_conv(x_all, ea, st['dis'], p_dis)          # (7, N_MAX, C)
        slf = sage_self_conv(x_all, st['self'], p_self)            # (3, N_MAX, C)
        # HeteroConv aggr='sum' over all edge types sharing the dst node type, then ReLU.
        out = jnp.einsum('dt,tnc->dnc', st['dst_assign'], dis) + slf
        return jnp.maximum(out, 0.0)                               # (3, N_MAX, C)

    h1 = hetero_layer(x_all, params['conv1_dis'], params['conv1_self'])
    h2 = hetero_layer(h1.reshape(N_TOT, -1), params['conv2_dis'], params['conv2_self'])

    # shared Linear(out_channels -> 1) + PReLU on one dense 24-row slab (single call)
    y = linear_prelu(h2.reshape(N_TOT, -1), params['lin_w'], params['lin_b'],
                     params['prelu_a'])

    out = {}
    for ti, nt in enumerate(NODE_TYPES):
        n = N_NODES[nt]
        if nt in ('gw_wells', 'sw_stations'):
            out[nt] = y[ti * N_MAX: ti * N_MAX + n]
        else:
            out[nt] = h2[ti, :n, :]
    return out


# ---------------------------------------------------------------------------
# Parameter init (stacked per type so each stage is a single pallas_call)
# ---------------------------------------------------------------------------

def init_linear(key, fan_in, fan_out):
    kw, kb = jax.random.split(key)
    bound = 1.0 / (fan_in ** 0.5)
    w = jax.random.uniform(kw, (fan_in, fan_out), jnp.float32, -bound, bound)
    b = jax.random.uniform(kb, (1, fan_out), jnp.float32, -bound, bound)
    return w, b


def stack_dicts(dicts):
    return {k: jnp.stack([d[k] for d in dicts]) for k in dicts[0]}


def init_node_params(keys):
    w, b = [], []
    for nt in NODE_TYPES:
        c_in = CIN_DICT[nt]
        wi, bi = init_linear(next(keys), c_in, REDUCED_DIM)
        w.append(jnp.zeros((CIN_MAX, REDUCED_DIM), jnp.float32).at[:c_in].set(wi))
        b.append(bi)
    n = len(NODE_TYPES)
    return dict(w=jnp.stack(w), b=jnp.stack(b),
                gamma=jnp.ones((n, 1, REDUCED_DIM), jnp.float32),
                beta=jnp.zeros((n, 1, REDUCED_DIM), jnp.float32))


def init_edge_params(keys):
    w, b = [], []
    for _ in DIS_EDGE_TYPES:
        wi, bi = init_linear(next(keys), EDGE_ATTR_DIM, REDUCED_DIM)
        w.append(wi)
        b.append(bi)
    n = len(DIS_EDGE_TYPES)
    return dict(w=jnp.stack(w), b=jnp.stack(b),
                gamma=jnp.ones((n, 1, REDUCED_DIM), jnp.float32),
                beta=jnp.zeros((n, 1, REDUCED_DIM), jnp.float32))


def init_sage_edge_conv(key, c_in, c_out, edge_dim, emb_dim):
    ks = jax.random.split(key, 6)
    wl, bl = init_linear(ks[0], c_in, c_out)
    wr, _ = init_linear(ks[1], c_in, c_out)          # lin_r has no bias in PyG SAGEConv
    we, be = init_linear(ks[2], edge_dim, emb_dim)
    wte, bte = init_linear(ks[3], emb_dim, c_out)
    wta, bta = init_linear(ks[4], edge_dim, c_out)
    wg, bg = init_linear(ks[5], 3 * c_out, c_out)    # gate weight, split per cat segment
    return dict(wl=wl, bl=bl, wr=wr, we=we, be=be, wte=wte, bte=bte,
                wta=wta, bta=bta,
                wgo=wg[:c_out], wgt=wg[c_out:2 * c_out], wga=wg[2 * c_out:], bg=bg,
                gamma=jnp.ones((1, c_out), jnp.float32),
                beta=jnp.zeros((1, c_out), jnp.float32))


def init_sage_conv(key, c_in, c_out):
    k1, k2 = jax.random.split(key)
    wl, bl = init_linear(k1, c_in, c_out)
    wr, _ = init_linear(k2, c_in, c_out)
    return dict(wl=wl, bl=bl, wr=wr)


# ---------------------------------------------------------------------------
# Example
# ---------------------------------------------------------------------------

if __name__ == "__main__":
    root = jax.random.PRNGKey(0)
    keys = iter(jax.random.split(root, 128))

    # ---- example inputs ----
    x_dict = {nt: jax.random.normal(next(keys), (N_NODES[nt], CIN_DICT[nt]), jnp.float32)
              for nt in NODE_TYPES}
    edge_index_dict = {}
    edge_attrs = []
    for et in DIS_EDGE_TYPES:
        src, _, dst = et
        row = jax.random.randint(next(keys), (N_EDGES,), 0, N_NODES[src])
        col = jax.random.randint(next(keys), (N_EDGES,), 0, N_NODES[dst])
        edge_index_dict[et] = (row, col)
        edge_attrs.append(jax.random.normal(next(keys), (N_EDGES, EDGE_ATTR_DIM),
                                            jnp.float32))
    ea_stack = jnp.stack(edge_attrs)                              # (7, E, edge_attr_dim)
    for et in SELF_EDGE_TYPES:
        idx = jnp.arange(N_NODES[et[0]], dtype=jnp.int32)
        edge_index_dict[et] = (idx, idx)

    x_pad = jnp.stack([jnp.zeros((N_MAX, CIN_MAX), jnp.float32)
                       .at[:N_NODES[nt], :CIN_DICT[nt]].set(x_dict[nt])
                       for nt in NODE_TYPES])                     # (3, N_MAX, CIN_MAX)

    # ---- hoisted graph structures (shared by conv1 and conv2) ----
    structs = {
        'dis': build_dis_structs(edge_index_dict),
        'self': build_self_structs(edge_index_dict),
        'dst_assign': jnp.array([[1.0 if et[2] == nt else 0.0 for et in DIS_EDGE_TYPES]
                                 for nt in NODE_TYPES], jnp.float32),
        'node_mask': jnp.stack([(jnp.arange(N_MAX) < N_NODES[nt])
                                .astype(jnp.float32)[:, None] for nt in NODE_TYPES]),
        'node_inv_n': jnp.stack([jnp.full((1, 1), 1.0 / N_NODES[nt], jnp.float32)
                                 for nt in NODE_TYPES]),
    }

    # ---- parameters (stacked per node/edge type) ----
    node_p = init_node_params(keys)
    edge_p = init_edge_params(keys)
    conv1_dis = stack_dicts([init_sage_edge_conv(next(keys), REDUCED_DIM, OUT_CHANNELS,
                                                 REDUCED_DIM, EDGE_EMB_DIM)
                             for _ in DIS_EDGE_TYPES])
    conv2_dis = stack_dicts([init_sage_edge_conv(next(keys), OUT_CHANNELS, OUT_CHANNELS,
                                                 REDUCED_DIM, EDGE_EMB_DIM)
                             for _ in DIS_EDGE_TYPES])
    conv1_self = stack_dicts([init_sage_conv(next(keys), REDUCED_DIM, OUT_CHANNELS)
                              for _ in SELF_EDGE_TYPES])
    conv2_self = stack_dicts([init_sage_conv(next(keys), OUT_CHANNELS, OUT_CHANNELS)
                              for _ in SELF_EDGE_TYPES])
    lin_w, lin_b = init_linear(next(keys), OUT_CHANNELS, 1)
    params = dict(node=node_p, edge=edge_p,
                  conv1_dis=conv1_dis, conv1_self=conv1_self,
                  conv2_dis=conv2_dis, conv2_self=conv2_self,
                  lin_w=lin_w, lin_b=lin_b,
                  prelu_a=jnp.full((1, 1), 0.25, jnp.float32))

    # ---- run (whole forward is one jitted executable with 7 pallas_calls) ----
    out = gnn_forward(params, x_pad, ea_stack, structs)
    out = jax.tree_util.tree_map(jax.block_until_ready, out)

    assert out['gw_wells'].shape == (N_NODES['gw_wells'], 1)
    assert out['sw_stations'].shape == (N_NODES['sw_stations'], 1)
    assert out['pfas_sites'].shape == (N_NODES['pfas_sites'], OUT_CHANNELS)
    print("KERNEL_OK")
</pallas_src>

<mosaic_0001>
module attributes {stable_mosaic.version = 11 : i64} {
  func.func @_edge_reduce_kernel(%arg0: i32, %arg1: memref<1x12x8xf32, #tpu.memory_space<vmem>>, %arg2: memref<1x8x32xf32, #tpu.memory_space<vmem>>, %arg3: memref<1x1x32xf32, #tpu.memory_space<vmem>>, %arg4: memref<1x1x32xf32, #tpu.memory_space<vmem>>, %arg5: memref<1x1x32xf32, #tpu.memory_space<vmem>>, %arg6: memref<1x12x32xf32, #tpu.memory_space<vmem>>) attributes {dimension_semantics = [#tpu.dimension_semantics<parallel>], iteration_bounds = array<i64: 7>, scalar_prefetch = 0 : i64, scratch_operands = 0 : i64, tpu.core_type = #tpu.core_type<tc>, window_params = [{transform_indices = @transform_0, window_bounds = array<i64: 1, 12, 8>}, {transform_indices = @transform_1, window_bounds = array<i64: 1, 8, 32>}, {transform_indices = @transform_2, window_bounds = array<i64: 1, 1, 32>}, {transform_indices = @transform_3, window_bounds = array<i64: 1, 1, 32>}, {transform_indices = @transform_4, window_bounds = array<i64: 1, 1, 32>}, {transform_indices = @transform_5, window_bounds = array<i64: 1, 12, 32>}]} {
    %c0 = arith.constant 0 : index
    %c0_0 = arith.constant 0 : index
    %c0_1 = arith.constant 0 : index
    %0 = vector.load %arg1[%c0, %c0_0, %c0_1] : memref<1x12x8xf32, #tpu.memory_space<vmem>>, vector<1x12x8xf32>
    %1 = vector.shape_cast %0 : vector<1x12x8xf32> to vector<12x8xf32>
    %c0_2 = arith.constant 0 : index
    %c0_3 = arith.constant 0 : index
    %c0_4 = arith.constant 0 : index
    %2 = vector.load %arg2[%c0_2, %c0_3, %c0_4] : memref<1x8x32xf32, #tpu.memory_space<vmem>>, vector<1x8x32xf32>
    %3 = vector.shape_cast %2 : vector<1x8x32xf32> to vector<8x32xf32>
    %cst = arith.constant dense<0.000000e+00> : vector<12x32xf32>
    %4 = tpu.matmul %1, %3, %cst {dimension_numbers = #tpu.dot_dimension_numbers<[1], [0], [0], [1], [0, 0, 1, 1], [], []>} : vector<12x8xf32>, vector<8x32xf32>, vector<12x32xf32> -> vector<12x32xf32>
    %c0_5 = arith.constant 0 : index
    %c0_6 = arith.constant 0 : index
    %c0_7 = arith.constant 0 : index
    %5 = vector.load %arg3[%c0_5, %c0_6, %c0_7] : memref<1x1x32xf32, #tpu.memory_space<vmem>>, vector<1x1x32xf32>
    %6 = vector.shape_cast %5 : vector<1x1x32xf32> to vector<1x32xf32>
    %7 = vector.broadcast %6 : vector<1x32xf32> to vector<12x32xf32>
    %8 = arith.addf %4, %7 : vector<12x32xf32>
    %cst_8 = arith.constant dense<0.000000e+00> : vector<32xf32>
    %9 = vector.multi_reduction <add>, %8, %cst_8 [0] : vector<12x32xf32> to vector<32xf32>
    %10 = vector.shape_cast %9 : vector<32xf32> to vector<1x32xf32>
    %cst_9 = arith.constant 1.200000e+01 : f32
    %11 = vector.broadcast %cst_9 : f32 to vector<1x32xf32>
    %12 = arith.divf %10, %11 : vector<1x32xf32>
    %13 = vector.broadcast %12 : vector<1x32xf32> to vector<12x32xf32>
    %14 = arith.subf %8, %13 : vector<12x32xf32>
    %15 = arith.mulf %14, %14 : vector<12x32xf32>
    %cst_10 = arith.constant dense<0.000000e+00> : vector<32xf32>
    %16 = vector.multi_reduction <add>, %15, %cst_10 [0] : vector<12x32xf32> to vector<32xf32>
    %17 = vector.shape_cast %16 : vector<32xf32> to vector<1x32xf32>
    %cst_11 = arith.constant 1.200000e+01 : f32
    %18 = vector.broadcast %cst_11 : f32 to vector<1x32xf32>
    %19 = arith.divf %17, %18 : vector<1x32xf32>
    %20 = vector.broadcast %12 : vector<1x32xf32> to vector<12x32xf32>
    %21 = arith.subf %8, %20 : vector<12x32xf32>
    %cst_12 = arith.constant 9.99999974E-6 : f32
    %22 = vector.broadcast %cst_12 : f32 to vector<1x32xf32>
    %23 = arith.addf %19, %22 : vector<1x32xf32>
    %24 = math.rsqrt %23 : vector<1x32xf32>
    %25 = vector.broadcast %24 : vector<1x32xf32> to vector<12x32xf32>
    %26 = arith.mulf %21, %25 : vector<12x32xf32>
    %c0_13 = arith.constant 0 : index
    %c0_14 = arith.constant 0 : index
    %c0_15 = arith.constant 0 : index
    %27 = vector.load %arg4[%c0_13, %c0_14, %c0_15] : memref<1x1x32xf32, #tpu.memory_space<vmem>>, vector<1x1x32xf32>
    %28 = vector.shape_cast %27 : vector<1x1x32xf32> to vector<1x32xf32>
    %29 = vector.broadcast %28 : vector<1x32xf32> to vector<12x32xf32>
    %30 = arith.mulf %26, %29 : vector<12x32xf32>
    %c0_16 = arith.constant 0 : index
    %c0_17 = arith.constant 0 : index
    %c0_18 = arith.constant 0 : index
    %31 = vector.load %arg5[%c0_16, %c0_17, %c0_18] : memref<1x1x32xf32, #tpu.memory_space<vmem>>, vector<1x1x32xf32>
    %32 = vector.shape_cast %31 : vector<1x1x32xf32> to vector<1x32xf32>
    %33 = vector.broadcast %32 : vector<1x32xf32> to vector<12x32xf32>
    %34 = arith.addf %30, %33 : vector<12x32xf32>
    %cst_19 = arith.constant 0.000000e+00 : f32
    %35 = vector.broadcast %cst_19 : f32 to vector<12x32xf32>
    %36 = arith.maximumf %34, %35 : vector<12x32xf32>
    %c0_20 = arith.constant 0 : index
    %c0_21 = arith.constant 0 : index
    %c0_22 = arith.constant 0 : index
    %37 = vector.load %arg6[%c0_20, %c0_21, %c0_22] : memref<1x12x32xf32, #tpu.memory_space<vmem>>, vector<1x12x32xf32>
    %38 = vector.shape_cast %37 : vector<1x12x32xf32> to vector<12x32xf32>
    %39 = vector.shape_cast %36 : vector<12x32xf32> to vector<1x12x32xf32>
    tpu.vector_store %arg6[%c0_20, %c0_21, %c0_22], %39 {strides = array<i32>} : memref<1x12x32xf32, #tpu.memory_space<vmem>>, vector<1x12x32xf32>,
    return
  }
  func.func @transform_0(%arg0: i32) -> (i32, i32, i32) {
    %c0_i32 = arith.constant 0 : i32
    %c0_i32_0 = arith.constant 0 : i32
    %c0_i32_1 = arith.constant 0 : i32
    return %arg0, %c0_i32, %c0_i32_0 : i32, i32, i32
  }
  func.func @transform_1(%arg0: i32) -> (i32, i32, i32) {
    %c0_i32 = arith.constant 0 : i32
    %c0_i32_0 = arith.constant 0 : i32
    %c0_i32_1 = arith.constant 0 : i32
    return %arg0, %c0_i32, %c0_i32_0 : i32, i32, i32
  }
  func.func @transform_2(%arg0: i32) -> (i32, i32, i32) {
    %c0_i32 = arith.constant 0 : i32
    %c0_i32_0 = arith.constant 0 : i32
    %c0_i32_1 = arith.constant 0 : i32
    return %arg0, %c0_i32, %c0_i32_0 : i32, i32, i32
  }
  func.func @transform_3(%arg0: i32) -> (i32, i32, i32) {
    %c0_i32 = arith.constant 0 : i32
    %c0_i32_0 = arith.constant 0 : i32
    %c0_i32_1 = arith.constant 0 : i32
    return %arg0, %c0_i32, %c0_i32_0 : i32, i32, i32
  }
  func.func @transform_4(%arg0: i32) -> (i32, i32, i32) {
    %c0_i32 = arith.constant 0 : i32
    %c0_i32_0 = arith.constant 0 : i32
    %c0_i32_1 = arith.constant 0 : i32
    return %arg0, %c0_i32, %c0_i32_0 : i32, i32, i32
  }
  func.func @transform_5(%arg0: i32) -> (i32, i32, i32) {
    %c0_i32 = arith.constant 0 : i32
    %c0_i32_0 = arith.constant 0 : i32
    %c0_i32_1 = arith.constant 0 : i32
    return %arg0, %c0_i32, %c0_i32_0 : i32, i32, i32
  }
}

module attributes {stable_mosaic.version = 11 : i64} {
  func.func @_node_reduce_kernel(%arg0: i32, %arg1: memref<1x8x14xf32, #tpu.memory_space<vmem>>, %arg2: memref<1x14x32xf32, #tpu.memory_space<vmem>>, %arg3: memref<1x1x32xf32, #tpu.memory_space<vmem>>, %arg4: memref<1x1x32xf32, #tpu.memory_space<vmem>>, %arg5: memref<1x1x32xf32, #tpu.memory_space<vmem>>, %arg6: memref<1x8x1xf32, #tpu.memory_space<vmem>>, %arg7: memref<1x1x1xf32, #tpu.memory_space<vmem>>, %arg8: memref<1x8x32xf32, #tpu.memory_space<vmem>>) attributes {dimension_semantics = [#tpu.dimension_semantics<parallel>], iteration_bounds = array<i64: 3>, scalar_prefetch = 0 : i64, scratch_operands = 0 : i64, tpu.core_type = #tpu.core_type<tc>, window_params = [{transform_indices = @transform_0, window_bounds = array<i64: 1, 8, 14>}, {transform_indices = @transform_1, window_bounds = array<i64: 1, 14, 32>}, {transform_indices = @transform_2, window_bounds = array<i64: 1, 1, 32>}, {transform_indices = @transform_3, window_bounds = array<i64: 1, 1, 32>}, {transform_indices = @transform_4, window_bounds = array<i64: 1, 1, 32>}, {transform_indices = @transform_5, window_bounds = array<i64: 1, 8, 1>}, {transform_indices = @transform_6, window_bounds = array<i64: 1, 1, 1>}, {transform_indices = @transform_7, window_bounds = array<i64: 1, 8, 32>}]} {
    %c0 = arith.constant 0 : index
    %c0_0 = arith.constant 0 : index
    %c0_1 = arith.constant 0 : index
    %0 = vector.load %arg1[%c0, %c0_0, %c0_1] : memref<1x8x14xf32, #tpu.memory_space<vmem>>, vector<1x8x14xf32>
    %1 = vector.shape_cast %0 : vector<1x8x14xf32> to vector<8x14xf32>
    %c0_2 = arith.constant 0 : index
    %c0_3 = arith.constant 0 : index
    %c0_4 = arith.constant 0 : index
    %2 = vector.load %arg2[%c0_2, %c0_3, %c0_4] : memref<1x14x32xf32, #tpu.memory_space<vmem>>, vector<1x14x32xf32>
    %3 = vector.shape_cast %2 : vector<1x14x32xf32> to vector<14x32xf32>
    %cst = arith.constant dense<0.000000e+00> : vector<8x32xf32>
    %4 = tpu.matmul %1, %3, %cst {dimension_numbers = #tpu.dot_dimension_numbers<[1], [0], [0], [1], [0, 0, 1, 1], [], []>} : vector<8x14xf32>, vector<14x32xf32>, vector<8x32xf32> -> vector<8x32xf32>
    %c0_5 = arith.constant 0 : index
    %c0_6 = arith.constant 0 : index
    %c0_7 = arith.constant 0 : index
    %5 = vector.load %arg3[%c0_5, %c0_6, %c0_7] : memref<1x1x32xf32, #tpu.memory_space<vmem>>, vector<1x1x32xf32>
    %6 = vector.shape_cast %5 : vector<1x1x32xf32> to vector<1x32xf32>
    %7 = vector.broadcast %6 : vector<1x32xf32> to vector<8x32xf32>
    %8 = arith.addf %4, %7 : vector<8x32xf32>
    %c0_8 = arith.constant 0 : index
    %c0_9 = arith.constant 0 : index
    %c0_10 = arith.constant 0 : index
    %9 = vector.load %arg6[%c0_8, %c0_9, %c0_10] : memref<1x8x1xf32, #tpu.memory_space<vmem>>, vector<1x8x1xf32>
    %10 = vector.shape_cast %9 : vector<1x8x1xf32> to vector<8x1xf32>
    %c0_11 = arith.constant 0 : index
    %c0_12 = arith.constant 0 : index
    %c0_13 = arith.constant 0 : index
    %11 = vector.load %arg7[%c0_11, %c0_12, %c0_13] : memref<1x1x1xf32, #tpu.memory_space<vmem>>, vector<1x1x1xf32>
    %12 = vector.shape_cast %11 : vector<1x1x1xf32> to vector<1x1xf32>
    %13 = vector.broadcast %10 : vector<8x1xf32> to vector<8x32xf32>
    %14 = arith.mulf %8, %13 : vector<8x32xf32>
    %cst_14 = arith.constant dense<0.000000e+00> : vector<32xf32>
    %15 = vector.multi_reduction <add>, %14, %cst_14 [0] : vector<8x32xf32> to vector<32xf32>
    %16 = vector.shape_cast %15 : vector<32xf32> to vector<1x32xf32>
    %17 = vector.broadcast %12 : vector<1x1xf32> to vector<1x32xf32>
    %18 = arith.mulf %16, %17 : vector<1x32xf32>
    %19 = vector.broadcast %18 : vector<1x32xf32> to vector<8x32xf32>
    %20 = arith.subf %8, %19 : vector<8x32xf32>
    %21 = vector.broadcast %10 : vector<8x1xf32> to vector<8x32xf32>
    %22 = arith.mulf %20, %21 : vector<8x32xf32>
    %23 = arith.mulf %22, %22 : vector<8x32xf32>
    %cst_15 = arith.constant dense<0.000000e+00> : vector<32xf32>
    %24 = vector.multi_reduction <add>, %23, %cst_15 [0] : vector<8x32xf32> to vector<32xf32>
    %25 = vector.shape_cast %24 : vector<32xf32> to vector<1x32xf32>
    %26 = vector.broadcast %12 : vector<1x1xf32> to vector<1x32xf32>
    %27 = arith.mulf %25, %26 : vector<1x32xf32>
    %28 = vector.broadcast %18 : vector<1x32xf32> to vector<8x32xf32>
    %29 = arith.subf %8, %28 : vector<8x32xf32>
    %cst_16 = arith.constant 9.99999974E-6 : f32
    %30 = vector.broadcast %cst_16 : f32 to vector<1x32xf32>
    %31 = arith.addf %27, %30 : vector<1x32xf32>
    %32 = math.rsqrt %31 : vector<1x32xf32>
    %33 = vector.broadcast %32 : vector<1x32xf32> to vector<8x32xf32>
    %34 = arith.mulf %29, %33 : vector<8x32xf32>
    %c0_17 = arith.constant 0 : index
    %c0_18 = arith.constant 0 : index
    %c0_19 = arith.constant 0 : index
    %35 = vector.load %arg4[%c0_17, %c0_18, %c0_19] : memref<1x1x32xf32, #tpu.memory_space<vmem>>, vector<1x1x32xf32>
    %36 = vector.shape_cast %35 : vector<1x1x32xf32> to vector<1x32xf32>
    %37 = vector.broadcast %36 : vector<1x32xf32> to vector<8x32xf32>
    %38 = arith.mulf %34, %37 : vector<8x32xf32>
    %c0_20 = arith.constant 0 : index
    %c0_21 = arith.constant 0 : index
    %c0_22 = arith.constant 0 : index
    %39 = vector.load %arg5[%c0_20, %c0_21, %c0_22] : memref<1x1x32xf32, #tpu.memory_space<vmem>>, vector<1x1x32xf32>
    %40 = vector.shape_cast %39 : vector<1x1x32xf32> to vector<1x32xf32>
    %41 = vector.broadcast %40 : vector<1x32xf32> to vector<8x32xf32>
    %42 = arith.addf %38, %41 : vector<8x32xf32>
    %cst_23 = arith.constant 0.000000e+00 : f32
    %43 = vector.broadcast %cst_23 : f32 to vector<8x32xf32>
    %44 = arith.maximumf %42, %43 : vector<8x32xf32>
    %45 = vector.broadcast %10 : vector<8x1xf32> to vector<8x32xf32>
    %46 = arith.mulf %44, %45 : vector<8x32xf32>
    %c0_24 = arith.constant 0 : index
    %c0_25 = arith.constant 0 : index
    %c0_26 = arith.constant 0 : index
    %47 = vector.load %arg8[%c0_24, %c0_25, %c0_26] : memref<1x8x32xf32, #tpu.memory_space<vmem>>, vector<1x8x32xf32>
    %48 = vector.shape_cast %47 : vector<1x8x32xf32> to vector<8x32xf32>
    %49 = vector.shape_cast %46 : vector<8x32xf32> to vector<1x8x32xf32>
    tpu.vector_store %arg8[%c0_24, %c0_25, %c0_26], %49 {strides = array<i32>} : memref<1x8x32xf32, #tpu.memory_space<vmem>>, vector<1x8x32xf32>,
    return
  }
  func.func @transform_0(%arg0: i32) -> (i32, i32, i32) {
    %c0_i32 = arith.constant 0 : i32
    %c0_i32_0 = arith.constant 0 : i32
    %c0_i32_1 = arith.constant 0 : i32
    return %arg0, %c0_i32, %c0_i32_0 : i32, i32, i32
  }
  func.func @transform_1(%arg0: i32) -> (i32, i32, i32) {
    %c0_i32 = arith.constant 0 : i32
    %c0_i32_0 = arith.constant 0 : i32
    %c0_i32_1 = arith.constant 0 : i32
    return %arg0, %c0_i32, %c0_i32_0 : i32, i32, i32
  }
  func.func @transform_2(%arg0: i32) -> (i32, i32, i32) {
    %c0_i32 = arith.constant 0 : i32
    %c0_i32_0 = arith.constant 0 : i32
    %c0_i32_1 = arith.constant 0 : i32
    return %arg0, %c0_i32, %c0_i32_0 : i32, i32, i32
  }
  func.func @transform_3(%arg0: i32) -> (i32, i32, i32) {
    %c0_i32 = arith.constant 0 : i32
    %c0_i32_0 = arith.constant 0 : i32
    %c0_i32_1 = arith.constant 0 : i32
    return %arg0, %c0_i32, %c0_i32_0 : i32, i32, i32
  }
  func.func @transform_4(%arg0: i32) -> (i32, i32, i32) {
    %c0_i32 = arith.constant 0 : i32
    %c0_i32_0 = arith.constant 0 : i32
    %c0_i32_1 = arith.constant 0 : i32
    return %arg0, %c0_i32, %c0_i32_0 : i32, i32, i32
  }
  func.func @transform_5(%arg0: i32) -> (i32, i32, i32) {
    %c0_i32 = arith.constant 0 : i32
    %c0_i32_0 = arith.constant 0 : i32
    %c0_i32_1 = arith.constant 0 : i32
    return %arg0, %c0_i32, %c0_i32_0 : i32, i32, i32
  }
  func.func @transform_6(%arg0: i32) -> (i32, i32, i32) {
    %c0_i32 = arith.constant 0 : i32
    %c0_i32_0 = arith.constant 0 : i32
    %c0_i32_1 = arith.constant 0 : i32
    return %arg0, %c0_i32, %c0_i32_0 : i32, i32, i32
  }
  func.func @transform_7(%arg0: i32) -> (i32, i32, i32) {
    %c0_i32 = arith.constant 0 : i32
    %c0_i32_0 = arith.constant 0 : i32
    %c0_i32_1 = arith.constant 0 : i32
    return %arg0, %c0_i32, %c0_i32_0 : i32, i32, i32
  }
}

module attributes {stable_mosaic.version = 11 : i64} {
  func.func @_sage_edge_kernel(%arg0: i32, %arg1: memref<24x32xf32, #tpu.memory_space<vmem>>, %arg2: memref<1x12x32xf32, #tpu.memory_space<vmem>>, %arg3: memref<1x12x24xf32, #tpu.memory_space<vmem>>, %arg4: memref<1x8x24xf32, #tpu.memory_space<vmem>>, %arg5: memref<1x12x8xf32, #tpu.memory_space<vmem>>, %arg6: memref<1x8x12xf32, #tpu.memory_space<vmem>>, %arg7: memref<1x8x12xf32, #tpu.memory_space<vmem>>, %arg8: memref<1x8x1xf32, #tpu.memory_space<vmem>>, %arg9: memref<1x8x1xf32, #tpu.memory_space<vmem>>, %arg10: memref<1x1x1xf32, #tpu.memory_space<vmem>>, %arg11: memref<1x32x16xf32, #tpu.memory_space<vmem>>, %arg12: memref<1x1x16xf32, #tpu.memory_space<vmem>>, %arg13: memref<1x32x16xf32, #tpu.memory_space<vmem>>, %arg14: memref<1x32x16xf32, #tpu.memory_space<vmem>>, %arg15: memref<1x1x16xf32, #tpu.memory_space<vmem>>, %arg16: memref<1x16x16xf32, #tpu.memory_space<vmem>>, %arg17: memref<1x1x16xf32, #tpu.memory_space<vmem>>, %arg18: memref<1x32x16xf32, #tpu.memory_space<vmem>>, %arg19: memref<1x1x16xf32, #tpu.memory_space<vmem>>, %arg20: memref<1x16x16xf32, #tpu.memory_space<vmem>>, %arg21: memref<1x16x16xf32, #tpu.memory_space<vmem>>, %arg22: memref<1x16x16xf32, #tpu.memory_space<vmem>>, %arg23: memref<1x1x16xf32, #tpu.memory_space<vmem>>, %arg24: memref<1x1x16xf32, #tpu.memory_space<vmem>>, %arg25: memref<1x1x16xf32, #tpu.memory_space<vmem>>, %arg26: memref<1x8x16xf32, #tpu.memory_space<vmem>>) attributes {dimension_semantics = [#tpu.dimension_semantics<parallel>], iteration_bounds = array<i64: 7>, scalar_prefetch = 0 : i64, scratch_operands = 0 : i64, tpu.core_type = #tpu.core_type<tc>, window_params = [{pipeline_mode = #tpu.pipeline_mode<synchronous>, transform_indices = @transform_0, window_bounds = array<i64: 24, 32>}, {transform_indices = @transform_1, window_bounds = array<i64: 1, 12, 32>}, {transform_indices = @transform_2, window_bounds = array<i64: 1, 12, 24>}, {transform_indices = @transform_3, window_bounds = array<i64: 1, 8, 24>}, {transform_indices = @transform_4, window_bounds = array<i64: 1, 12, 8>}, {transform_indices = @transform_5, window_bounds = array<i64: 1, 8, 12>}, {transform_indices = @transform_6, window_bounds = array<i64: 1, 8, 12>}, {transform_indices = @transform_7, window_bounds = array<i64: 1, 8, 1>}, {transform_indices = @transform_8, window_bounds = array<i64: 1, 8, 1>}, {transform_indices = @transform_9, window_bounds = array<i64: 1, 1, 1>}, {transform_indices = @transform_10, window_bounds = array<i64: 1, 32, 16>}, {transform_indices = @transform_11, window_bounds = array<i64: 1, 1, 16>}, {transform_indices = @transform_12, window_bounds = array<i64: 1, 32, 16>}, {transform_indices = @transform_13, window_bounds = array<i64: 1, 32, 16>}, {transform_indices = @transform_14, window_bounds = array<i64: 1, 1, 16>}, {transform_indices = @transform_15, window_bounds = array<i64: 1, 16, 16>}, {transform_indices = @transform_16, window_bounds = array<i64: 1, 1, 16>}, {transform_indices = @transform_17, window_bounds = array<i64: 1, 32, 16>}, {transform_indices = @transform_18, window_bounds = array<i64: 1, 1, 16>}, {transform_indices = @transform_19, window_bounds = array<i64: 1, 16, 16>}, {transform_indices = @transform_20, window_bounds = array<i64: 1, 16, 16>}, {transform_indices = @transform_21, window_bounds = array<i64: 1, 16, 16>}, {transform_indices = @transform_22, window_bounds = array<i64: 1, 1, 16>}, {transform_indices = @transform_23, window_bounds = array<i64: 1, 1, 16>}, {transform_indices = @transform_24, window_bounds = array<i64: 1, 1, 16>}, {transform_indices = @transform_25, window_bounds = array<i64: 1, 8, 16>}]} {
    %c0 = arith.constant 0 : index
    %c0_0 = arith.constant 0 : index
    %0 = vector.load %arg1[%c0, %c0_0] : memref<24x32xf32, #tpu.memory_space<vmem>>, vector<24x32xf32>
    %c0_1 = arith.constant 0 : index
    %c0_2 = arith.constant 0 : index
    %c0_3 = arith.constant 0 : index
    %1 = vector.load %arg2[%c0_1, %c0_2, %c0_3] : memref<1x12x32xf32, #tpu.memory_space<vmem>>, vector<1x12x32xf32>
    %2 = vector.shape_cast %1 : vector<1x12x32xf32> to vector<12x32xf32>
    %c0_4 = arith.constant 0 : index
    %c0_5 = arith.constant 0 : index
    %c0_6 = arith.constant 0 : index
    %3 = vector.load %arg9[%c0_4, %c0_5, %c0_6] : memref<1x8x1xf32, #tpu.memory_space<vmem>>, vector<1x8x1xf32>
    %4 = vector.shape_cast %3 : vector<1x8x1xf32> to vector<8x1xf32>
    %c0_7 = arith.constant 0 : index
    %c0_8 = arith.constant 0 : index
    %c0_9 = arith.constant 0 : index
    %5 = vector.load %arg10[%c0_7, %c0_8, %c0_9] : memref<1x1x1xf32, #tpu.memory_space<vmem>>, vector<1x1x1xf32>
    %6 = vector.shape_cast %5 : vector<1x1x1xf32> to vector<1x1xf32>
    %c0_10 = arith.constant 0 : index
    %c0_11 = arith.constant 0 : index
    %c0_12 = arith.constant 0 : index
    %7 = vector.load %arg3[%c0_10, %c0_11, %c0_12] : memref<1x12x24xf32, #tpu.memory_space<vmem>>, vector<1x12x24xf32>
    %8 = vector.shape_cast %7 : vector<1x12x24xf32> to vector<12x24xf32>
    %cst = arith.constant dense<0.000000e+00> : vector<12x32xf32>
    %9 = tpu.matmul %8, %0, %cst {dimension_numbers = #tpu.dot_dimension_numbers<[1], [0], [0], [1], [0, 0, 1, 1], [], []>} : vector<12x24xf32>, vector<24x32xf32>, vector<12x32xf32> -> vector<12x32xf32>
    %c0_13 = arith.constant 0 : index
    %c0_14 = arith.constant 0 : index
    %c0_15 = arith.constant 0 : index
    %10 = vector.load %arg6[%c0_13, %c0_14, %c0_15] : memref<1x8x12xf32, #tpu.memory_space<vmem>>, vector<1x8x12xf32>
    %11 = vector.shape_cast %10 : vector<1x8x12xf32> to vector<8x12xf32>
    %cst_16 = arith.constant dense<0.000000e+00> : vector<8x32xf32>
    %12 = tpu.matmul %11, %9, %cst_16 {dimension_numbers = #tpu.dot_dimension_numbers<[1], [0], [0], [1], [0, 0, 1, 1], [], []>} : vector<8x12xf32>, vector<12x32xf32>, vector<8x32xf32> -> vector<8x32xf32>
    %c0_17 = arith.constant 0 : index
    %c0_18 = arith.constant 0 : index
    %c0_19 = arith.constant 0 : index
    %13 = vector.load %arg8[%c0_17, %c0_18, %c0_19] : memref<1x8x1xf32, #tpu.memory_space<vmem>>, vector<1x8x1xf32>
    %14 = vector.shape_cast %13 : vector<1x8x1xf32> to vector<8x1xf32>
    %15 = vector.broadcast %14 : vector<8x1xf32> to vector<8x32xf32>
    %16 = arith.mulf %12, %15 : vector<8x32xf32>
    %c0_20 = arith.constant 0 : index
    %c0_21 = arith.constant 0 : index
    %c0_22 = arith.constant 0 : index
    %17 = vector.load %arg4[%c0_20, %c0_21, %c0_22] : memref<1x8x24xf32, #tpu.memory_space<vmem>>, vector<1x8x24xf32>
    %18 = vector.shape_cast %17 : vector<1x8x24xf32> to vector<8x24xf32>
    %cst_23 = arith.constant dense<0.000000e+00> : vector<8x32xf32>
    %19 = tpu.matmul %18, %0, %cst_23 {dimension_numbers = #tpu.dot_dimension_numbers<[1], [0], [0], [1], [0, 0, 1, 1], [], []>} : vector<8x24xf32>, vector<24x32xf32>, vector<8x32xf32> -> vector<8x32xf32>
    %c0_24 = arith.constant 0 : index
    %c0_25 = arith.constant 0 : index
    %c0_26 = arith.constant 0 : index
    %20 = vector.load %arg11[%c0_24, %c0_25, %c0_26] : memref<1x32x16xf32, #tpu.memory_space<vmem>>, vector<1x32x16xf32>
    %21 = vector.shape_cast %20 : vector<1x32x16xf32> to vector<32x16xf32>
    %cst_27 = arith.constant dense<0.000000e+00> : vector<8x16xf32>
    %22 = tpu.matmul %16, %21, %cst_27 {dimension_numbers = #tpu.dot_dimension_numbers<[1], [0], [0], [1], [0, 0, 1, 1], [], []>} : vector<8x32xf32>, vector<32x16xf32>, vector<8x16xf32> -> vector<8x16xf32>
    %c0_28 = arith.constant 0 : index
    %c0_29 = arith.constant 0 : index
    %c0_30 = arith.constant 0 : index
    %23 = vector.load %arg12[%c0_28, %c0_29, %c0_30] : memref<1x1x16xf32, #tpu.memory_space<vmem>>, vector<1x1x16xf32>
    %24 = vector.shape_cast %23 : vector<1x1x16xf32> to vector<1x16xf32>
    %25 = vector.broadcast %24 : vector<1x16xf32> to vector<8x16xf32>
    %26 = arith.addf %22, %25 : vector<8x16xf32>
    %c0_31 = arith.constant 0 : index
    %c0_32 = arith.constant 0 : index
    %c0_33 = arith.constant 0 : index
    %27 = vector.load %arg13[%c0_31, %c0_32, %c0_33] : memref<1x32x16xf32, #tpu.memory_space<vmem>>, vector<1x32x16xf32>
    %28 = vector.shape_cast %27 : vector<1x32x16xf32> to vector<32x16xf32>
    %cst_34 = arith.constant dense<0.000000e+00> : vector<8x16xf32>
    %29 = tpu.matmul %19, %28, %cst_34 {dimension_numbers = #tpu.dot_dimension_numbers<[1], [0], [0], [1], [0, 0, 1, 1], [], []>} : vector<8x32xf32>, vector<32x16xf32>, vector<8x16xf32> -> vector<8x16xf32>
    %30 = arith.addf %26, %29 : vector<8x16xf32>
    %c0_35 = arith.constant 0 : index
    %c0_36 = arith.constant 0 : index
    %c0_37 = arith.constant 0 : index
    %31 = vector.load %arg14[%c0_35, %c0_36, %c0_37] : memref<1x32x16xf32, #tpu.memory_space<vmem>>, vector<1x32x16xf32>
    %32 = vector.shape_cast %31 : vector<1x32x16xf32> to vector<32x16xf32>
    %cst_38 = arith.constant dense<0.000000e+00> : vector<12x16xf32>
    %33 = tpu.matmul %2, %32, %cst_38 {dimension_numbers = #tpu.dot_dimension_numbers<[1], [0], [0], [1], [0, 0, 1, 1], [], []>} : vector<12x32xf32>, vector<32x16xf32>, vector<12x16xf32> -> vector<12x16xf32>
    %c0_39 = arith.constant 0 : index
    %c0_40 = arith.constant 0 : index
    %c0_41 = arith.constant 0 : index
    %34 = vector.load %arg15[%c0_39, %c0_40, %c0_41] : memref<1x1x16xf32, #tpu.memory_space<vmem>>, vector<1x1x16xf32>
    %35 = vector.shape_cast %34 : vector<1x1x16xf32> to vector<1x16xf32>
    %36 = vector.broadcast %35 : vector<1x16xf32> to vector<12x16xf32>
    %37 = arith.addf %33, %36 : vector<12x16xf32>
    %cst_42 = arith.constant 0.000000e+00 : f32
    %38 = vector.broadcast %cst_42 : f32 to vector<12x16xf32>
    %39 = arith.maximumf %37, %38 : vector<12x16xf32>
    %c0_43 = arith.constant 0 : index
    %c0_44 = arith.constant 0 : index
    %c0_45 = arith.constant 0 : index
    %40 = vector.load %arg16[%c0_43, %c0_44, %c0_45] : memref<1x16x16xf32, #tpu.memory_space<vmem>>, vector<1x16x16xf32>
    %41 = vector.shape_cast %40 : vector<1x16x16xf32> to vector<16x16xf32>
    %cst_46 = arith.constant dense<0.000000e+00> : vector<12x16xf32>
    %42 = tpu.matmul %39, %41, %cst_46 {dimension_numbers = #tpu.dot_dimension_numbers<[1], [0], [0], [1], [0, 0, 1, 1], [], []>} : vector<12x16xf32>, vector<16x16xf32>, vector<12x16xf32> -> vector<12x16xf32>
    %c0_47 = arith.constant 0 : index
    %c0_48 = arith.constant 0 : index
    %c0_49 = arith.constant 0 : index
    %43 = vector.load %arg17[%c0_47, %c0_48, %c0_49] : memref<1x1x16xf32, #tpu.memory_space<vmem>>, vector<1x1x16xf32>
    %44 = vector.shape_cast %43 : vector<1x1x16xf32> to vector<1x16xf32>
    %45 = vector.broadcast %44 : vector<1x16xf32> to vector<12x16xf32>
    %46 = arith.addf %42, %45 : vector<12x16xf32>
    %c0_50 = arith.constant 0 : index
    %c0_51 = arith.constant 0 : index
    %c0_52 = arith.constant 0 : index
    %47 = vector.load %arg18[%c0_50, %c0_51, %c0_52] : memref<1x32x16xf32, #tpu.memory_space<vmem>>, vector<1x32x16xf32>
    %48 = vector.shape_cast %47 : vector<1x32x16xf32> to vector<32x16xf32>
    %cst_53 = arith.constant dense<0.000000e+00> : vector<12x16xf32>
    %49 = tpu.matmul %2, %48, %cst_53 {dimension_numbers = #tpu.dot_dimension_numbers<[1], [0], [0], [1], [0, 0, 1, 1], [], []>} : vector<12x32xf32>, vector<32x16xf32>, vector<12x16xf32> -> vector<12x16xf32>
    %c0_54 = arith.constant 0 : index
    %c0_55 = arith.constant 0 : index
    %c0_56 = arith.constant 0 : index
    %50 = vector.load %arg19[%c0_54, %c0_55, %c0_56] : memref<1x1x16xf32, #tpu.memory_space<vmem>>, vector<1x1x16xf32>
    %51 = vector.shape_cast %50 : vector<1x1x16xf32> to vector<1x16xf32>
    %52 = vector.broadcast %51 : vector<1x16xf32> to vector<12x16xf32>
    %53 = arith.addf %49, %52 : vector<12x16xf32>
    %54 = arith.addf %46, %53 : vector<12x16xf32>
    %c0_57 = arith.constant 0 : index
    %c0_58 = arith.constant 0 : index
    %c0_59 = arith.constant 0 : index
    %55 = vector.load %arg5[%c0_57, %c0_58, %c0_59] : memref<1x12x8xf32, #tpu.memory_space<vmem>>, vector<1x12x8xf32>
    %56 = vector.shape_cast %55 : vector<1x12x8xf32> to vector<12x8xf32>
    %cst_60 = arith.constant dense<0.000000e+00> : vector<12x16xf32>
    %57 = tpu.matmul %56, %30, %cst_60 {dimension_numbers = #tpu.dot_dimension_numbers<[1], [0], [0], [1], [0, 0, 1, 1], [], []>} : vector<12x8xf32>, vector<8x16xf32>, vector<12x16xf32> -> vector<12x16xf32>
    %c0_61 = arith.constant 0 : index
    %c0_62 = arith.constant 0 : index
    %c0_63 = arith.constant 0 : index
    %58 = vector.load %arg20[%c0_61, %c0_62, %c0_63] : memref<1x16x16xf32, #tpu.memory_space<vmem>>, vector<1x16x16xf32>
    %59 = vector.shape_cast %58 : vector<1x16x16xf32> to vector<16x16xf32>
    %cst_64 = arith.constant dense<0.000000e+00> : vector<12x16xf32>
    %60 = tpu.matmul %57, %59, %cst_64 {dimension_numbers = #tpu.dot_dimension_numbers<[1], [0], [0], [1], [0, 0, 1, 1], [], []>} : vector<12x16xf32>, vector<16x16xf32>, vector<12x16xf32> -> vector<12x16xf32>
    %c0_65 = arith.constant 0 : index
    %c0_66 = arith.constant 0 : index
    %c0_67 = arith.constant 0 : index
    %61 = vector.load %arg21[%c0_65, %c0_66, %c0_67] : memref<1x16x16xf32, #tpu.memory_space<vmem>>, vector<1x16x16xf32>
    %62 = vector.shape_cast %61 : vector<1x16x16xf32> to vector<16x16xf32>
    %cst_68 = arith.constant dense<0.000000e+00> : vector<12x16xf32>
    %63 = tpu.matmul %54, %62, %cst_68 {dimension_numbers = #tpu.dot_dimension_numbers<[1], [0], [0], [1], [0, 0, 1, 1], [], []>} : vector<12x16xf32>, vector<16x16xf32>, vector<12x16xf32> -> vector<12x16xf32>
    %64 = arith.addf %60, %63 : vector<12x16xf32>
    %c0_69 = arith.constant 0 : index
    %c0_70 = arith.constant 0 : index
    %c0_71 = arith.constant 0 : index
    %65 = vector.load %arg22[%c0_69, %c0_70, %c0_71] : memref<1x16x16xf32, #tpu.memory_space<vmem>>, vector<1x16x16xf32>
    %66 = vector.shape_cast %65 : vector<1x16x16xf32> to vector<16x16xf32>
    %cst_72 = arith.constant dense<0.000000e+00> : vector<12x16xf32>
    %67 = tpu.matmul %53, %66, %cst_72 {dimension_numbers = #tpu.dot_dimension_numbers<[1], [0], [0], [1], [0, 0, 1, 1], [], []>} : vector<12x16xf32>, vector<16x16xf32>, vector<12x16xf32> -> vector<12x16xf32>
    %68 = arith.addf %64, %67 : vector<12x16xf32>
    %c0_73 = arith.constant 0 : index
    %c0_74 = arith.constant 0 : index
    %c0_75 = arith.constant 0 : index
    %69 = vector.load %arg23[%c0_73, %c0_74, %c0_75] : memref<1x1x16xf32, #tpu.memory_space<vmem>>, vector<1x1x16xf32>
    %70 = vector.shape_cast %69 : vector<1x1x16xf32> to vector<1x16xf32>
    %71 = vector.broadcast %70 : vector<1x16xf32> to vector<12x16xf32>
    %72 = arith.addf %68, %71 : vector<12x16xf32>
    %73 = arith.negf %72 : vector<12x16xf32>
    %74 = math.exp %73 : vector<12x16xf32>
    %cst_76 = arith.constant 1.000000e+00 : f32
    %75 = vector.broadcast %cst_76 : f32 to vector<12x16xf32>
    %76 = arith.addf %75, %74 : vector<12x16xf32>
    %77 = arith.divf %75, %76 : vector<12x16xf32>
    %78 = arith.mulf %77, %54 : vector<12x16xf32>
    %c0_77 = arith.constant 0 : index
    %c0_78 = arith.constant 0 : index
    %c0_79 = arith.constant 0 : index
    %79 = vector.load %arg7[%c0_77, %c0_78, %c0_79] : memref<1x8x12xf32, #tpu.memory_space<vmem>>, vector<1x8x12xf32>
    %80 = vector.shape_cast %79 : vector<1x8x12xf32> to vector<8x12xf32>
    %cst_80 = arith.constant dense<0.000000e+00> : vector<8x16xf32>
    %81 = tpu.matmul %80, %78, %cst_80 {dimension_numbers = #tpu.dot_dimension_numbers<[1], [0], [0], [1], [0, 0, 1, 1], [], []>} : vector<8x12xf32>, vector<12x16xf32>, vector<8x16xf32> -> vector<8x16xf32>
    %82 = arith.addf %30, %81 : vector<8x16xf32>
    %83 = vector.broadcast %4 : vector<8x1xf32> to vector<8x16xf32>
    %84 = arith.mulf %82, %83 : vector<8x16xf32>
    %cst_81 = arith.constant dense<0.000000e+00> : vector<16xf32>
    %85 = vector.multi_reduction <add>, %84, %cst_81 [0] : vector<8x16xf32> to vector<16xf32>
    %86 = vector.shape_cast %85 : vector<16xf32> to vector<1x16xf32>
    %87 = vector.broadcast %6 : vector<1x1xf32> to vector<1x16xf32>
    %88 = arith.mulf %86, %87 : vector<1x16xf32>
    %89 = vector.broadcast %88 : vector<1x16xf32> to vector<8x16xf32>
    %90 = arith.subf %82, %89 : vector<8x16xf32>
    %91 = vector.broadcast %4 : vector<8x1xf32> to vector<8x16xf32>
    %92 = arith.mulf %90, %91 : vector<8x16xf32>
    %93 = arith.mulf %92, %92 : vector<8x16xf32>
    %cst_82 = arith.constant dense<0.000000e+00> : vector<16xf32>
    %94 = vector.multi_reduction <add>, %93, %cst_82 [0] : vector<8x16xf32> to vector<16xf32>
    %95 = vector.shape_cast %94 : vector<16xf32> to vector<1x16xf32>
    %96 = vector.broadcast %6 : vector<1x1xf32> to vector<1x16xf32>
    %97 = arith.mulf %95, %96 : vector<1x16xf32>
    %98 = vector.broadcast %88 : vector<1x16xf32> to vector<8x16xf32>
    %99 = arith.subf %82, %98 : vector<8x16xf32>
    %cst_83 = arith.constant 9.99999974E-6 : f32
    %100 = vector.broadcast %cst_83 : f32 to vector<1x16xf32>
    %101 = arith.addf %97, %100 : vector<1x16xf32>
    %102 = math.rsqrt %101 : vector<1x16xf32>
    %103 = vector.broadcast %102 : vector<1x16xf32> to vector<8x16xf32>
    %104 = arith.mulf %99, %103 : vector<8x16xf32>
    %c0_84 = arith.constant 0 : index
    %c0_85 = arith.constant 0 : index
    %c0_86 = arith.constant 0 : index
    %105 = vector.load %arg24[%c0_84, %c0_85, %c0_86] : memref<1x1x16xf32, #tpu.memory_space<vmem>>, vector<1x1x16xf32>
    %106 = vector.shape_cast %105 : vector<1x1x16xf32> to vector<1x16xf32>
    %107 = vector.broadcast %106 : vector<1x16xf32> to vector<8x16xf32>
    %108 = arith.mulf %104, %107 : vector<8x16xf32>
    %c0_87 = arith.constant 0 : index
    %c0_88 = arith.constant 0 : index
    %c0_89 = arith.constant 0 : index
    %109 = vector.load %arg25[%c0_87, %c0_88, %c0_89] : memref<1x1x16xf32, #tpu.memory_space<vmem>>, vector<1x1x16xf32>
    %110 = vector.shape_cast %109 : vector<1x1x16xf32> to vector<1x16xf32>
    %111 = vector.broadcast %110 : vector<1x16xf32> to vector<8x16xf32>
    %112 = arith.addf %108, %111 : vector<8x16xf32>
    %113 = arith.addf %112, %112 : vector<8x16xf32>
    %cst_90 = arith.constant 0.000000e+00 : f32
    %114 = vector.broadcast %cst_90 : f32 to vector<8x16xf32>
    %115 = arith.maximumf %113, %114 : vector<8x16xf32>
    %116 = vector.broadcast %4 : vector<8x1xf32> to vector<8x16xf32>
    %117 = arith.mulf %115, %116 : vector<8x16xf32>
    %c0_91 = arith.constant 0 : index
    %c0_92 = arith.constant 0 : index
    %c0_93 = arith.constant 0 : index
    %118 = vector.load %arg26[%c0_91, %c0_92, %c0_93] : memref<1x8x16xf32, #tpu.memory_space<vmem>>, vector<1x8x16xf32>
    %119 = vector.shape_cast %118 : vector<1x8x16xf32> to vector<8x16xf32>
    %120 = vector.shape_cast %117 : vector<8x16xf32> to vector<1x8x16xf32>
    tpu.vector_store %arg26[%c0_91, %c0_92, %c0_93], %120 {strides = array<i32>} : memref<1x8x16xf32, #tpu.memory_space<vmem>>, vector<1x8x16xf32>,
    return
  }
  func.func @transform_0(%arg0: i32) -> (i32, i32) {
    %c0_i32 = arith.constant 0 : i32
    %c0_i32_0 = arith.constant 0 : i32
    %c0_i32_1 = arith.constant 0 : i32
    return %c0_i32, %c0_i32_0 : i32, i32
  }
  func.func @transform_1(%arg0: i32) -> (i32, i32, i32) {
    %c0_i32 = arith.constant 0 : i32
    %c0_i32_0 = arith.constant 0 : i32
    %c0_i32_1 = arith.constant 0 : i32
    return %arg0, %c0_i32, %c0_i32_0 : i32, i32, i32
  }
  func.func @transform_2(%arg0: i32) -> (i32, i32, i32) {
    %c0_i32 = arith.constant 0 : i32
    %c0_i32_0 = arith.constant 0 : i32
    %c0_i32_1 = arith.constant 0 : i32
    return %arg0, %c0_i32, %c0_i32_0 : i32, i32, i32
  }
  func.func @transform_3(%arg0: i32) -> (i32, i32, i32) {
    %c0_i32 = arith.constant 0 : i32
    %c0_i32_0 = arith.constant 0 : i32
    %c0_i32_1 = arith.constant 0 : i32
    return %arg0, %c0_i32, %c0_i32_0 : i32, i32, i32
  }
  func.func @transform_4(%arg0: i32) -> (i32, i32, i32) {
    %c0_i32 = arith.constant 0 : i32
    %c0_i32_0 = arith.constant 0 : i32
    %c0_i32_1 = arith.constant 0 : i32
    return %arg0, %c0_i32, %c0_i32_0 : i32, i32, i32
  }
  func.func @transform_5(%arg0: i32) -> (i32, i32, i32) {
    %c0_i32 = arith.constant 0 : i32
    %c0_i32_0 = arith.constant 0 : i32
    %c0_i32_1 = arith.constant 0 : i32
    return %arg0, %c0_i32, %c0_i32_0 : i32, i32, i32
  }
  func.func @transform_6(%arg0: i32) -> (i32, i32, i32) {
    %c0_i32 = arith.constant 0 : i32
    %c0_i32_0 = arith.constant 0 : i32
    %c0_i32_1 = arith.constant 0 : i32
    return %arg0, %c0_i32, %c0_i32_0 : i32, i32, i32
  }
  func.func @transform_7(%arg0: i32) -> (i32, i32, i32) {
    %c0_i32 = arith.constant 0 : i32
    %c0_i32_0 = arith.constant 0 : i32
    %c0_i32_1 = arith.constant 0 : i32
    return %arg0, %c0_i32, %c0_i32_0 : i32, i32, i32
  }
  func.func @transform_8(%arg0: i32) -> (i32, i32, i32) {
    %c0_i32 = arith.constant 0 : i32
    %c0_i32_0 = arith.constant 0 : i32
    %c0_i32_1 = arith.constant 0 : i32
    return %arg0, %c0_i32, %c0_i32_0 : i32, i32, i32
  }
  func.func @transform_9(%arg0: i32) -> (i32, i32, i32) {
    %c0_i32 = arith.constant 0 : i32
    %c0_i32_0 = arith.constant 0 : i32
    %c0_i32_1 = arith.constant 0 : i32
    return %arg0, %c0_i32, %c0_i32_0 : i32, i32, i32
  }
  func.func @transform_10(%arg0: i32) -> (i32, i32, i32) {
    %c0_i32 = arith.constant 0 : i32
    %c0_i32_0 = arith.constant 0 : i32
    %c0_i32_1 = arith.constant 0 : i32
    return %arg0, %c0_i32, %c0_i32_0 : i32, i32, i32
  }
  func.func @transform_11(%arg0: i32) -> (i32, i32, i32) {
    %c0_i32 = arith.constant 0 : i32
    %c0_i32_0 = arith.constant 0 : i32
    %c0_i32_1 = arith.constant 0 : i32
    return %arg0, %c0_i32, %c0_i32_0 : i32, i32, i32
  }
  func.func @transform_12(%arg0: i32) -> (i32, i32, i32) {
    %c0_i32 = arith.constant 0 : i32
    %c0_i32_0 = arith.constant 0 : i32
    %c0_i32_1 = arith.constant 0 : i32
    return %arg0, %c0_i32, %c0_i32_0 : i32, i32, i32
  }
  func.func @transform_13(%arg0: i32) -> (i32, i32, i32) {
    %c0_i32 = arith.constant 0 : i32
    %c0_i32_0 = arith.constant 0 : i32
    %c0_i32_1 = arith.constant 0 : i32
    return %arg0, %c0_i32, %c0_i32_0 : i32, i32, i32
  }
  func.func @transform_14(%arg0: i32) -> (i32, i32, i32) {
    %c0_i32 = arith.constant 0 : i32
    %c0_i32_0 = arith.constant 0 : i32
    %c0_i32_1 = arith.constant 0 : i32
    return %arg0, %c0_i32, %c0_i32_0 : i32, i32, i32
  }
  func.func @transform_15(%arg0: i32) -> (i32, i32, i32) {
    %c0_i32 = arith.constant 0 : i32
    %c0_i32_0 = arith.constant 0 : i32
    %c0_i32_1 = arith.constant 0 : i32
    return %arg0, %c0_i32, %c0_i32_0 : i32, i32, i32
  }
  func.func @transform_16(%arg0: i32) -> (i32, i32, i32) {
    %c0_i32 = arith.constant 0 : i32
    %c0_i32_0 = arith.constant 0 : i32
    %c0_i32_1 = arith.constant 0 : i32
    return %arg0, %c0_i32, %c0_i32_0 : i32, i32, i32
  }
  func.func @transform_17(%arg0: i32) -> (i32, i32, i32) {
    %c0_i32 = arith.constant 0 : i32
    %c0_i32_0 = arith.constant 0 : i32
    %c0_i32_1 = arith.constant 0 : i32
    return %arg0, %c0_i32, %c0_i32_0 : i32, i32, i32
  }
  func.func @transform_18(%arg0: i32) -> (i32, i32, i32) {
    %c0_i32 = arith.constant 0 : i32
    %c0_i32_0 = arith.constant 0 : i32
    %c0_i32_1 = arith.constant 0 : i32
    return %arg0, %c0_i32, %c0_i32_0 : i32, i32, i32
  }
  func.func @transform_19(%arg0: i32) -> (i32, i32, i32) {
    %c0_i32 = arith.constant 0 : i32
    %c0_i32_0 = arith.constant 0 : i32
    %c0_i32_1 = arith.constant 0 : i32
    return %arg0, %c0_i32, %c0_i32_0 : i32, i32, i32
  }
  func.func @transform_20(%arg0: i32) -> (i32, i32, i32) {
    %c0_i32 = arith.constant 0 : i32
    %c0_i32_0 = arith.constant 0 : i32
    %c0_i32_1 = arith.constant 0 : i32
    return %arg0, %c0_i32, %c0_i32_0 : i32, i32, i32
  }
  func.func @transform_21(%arg0: i32) -> (i32, i32, i32) {
    %c0_i32 = arith.constant 0 : i32
    %c0_i32_0 = arith.constant 0 : i32
    %c0_i32_1 = arith.constant 0 : i32
    return %arg0, %c0_i32, %c0_i32_0 : i32, i32, i32
  }
  func.func @transform_22(%arg0: i32) -> (i32, i32, i32) {
    %c0_i32 = arith.constant 0 : i32
    %c0_i32_0 = arith.constant 0 : i32
    %c0_i32_1 = arith.constant 0 : i32
    return %arg0, %c0_i32, %c0_i32_0 : i32, i32, i32
  }
  func.func @transform_23(%arg0: i32) -> (i32, i32, i32) {
    %c0_i32 = arith.constant 0 : i32
    %c0_i32_0 = arith.constant 0 : i32
    %c0_i32_1 = arith.constant 0 : i32
    return %arg0, %c0_i32, %c0_i32_0 : i32, i32, i32
  }
  func.func @transform_24(%arg0: i32) -> (i32, i32, i32) {
    %c0_i32 = arith.constant 0 : i32
    %c0_i32_0 = arith.constant 0 : i32
    %c0_i32_1 = arith.constant 0 : i32
    return %arg0, %c0_i32, %c0_i32_0 : i32, i32, i32
  }
  func.func @transform_25(%arg0: i32) -> (i32, i32, i32) {
    %c0_i32 = arith.constant 0 : i32
    %c0_i32_0 = arith.constant 0 : i32
    %c0_i32_1 = arith.constant 0 : i32
    return %arg0, %c0_i32, %c0_i32_0 : i32, i32, i32
  }
}

module attributes {stable_mosaic.version = 11 : i64} {
  func.func @_sage_self_kernel(%arg0: i32, %arg1: memref<24x32xf32, #tpu.memory_space<vmem>>, %arg2: memref<1x8x24xf32, #tpu.memory_space<vmem>>, %arg3: memref<1x8x24xf32, #tpu.memory_space<vmem>>, %arg4: memref<1x8x8xf32, #tpu.memory_space<vmem>>, %arg5: memref<1x8x1xf32, #tpu.memory_space<vmem>>, %arg6: memref<1x8x1xf32, #tpu.memory_space<vmem>>, %arg7: memref<1x32x16xf32, #tpu.memory_space<vmem>>, %arg8: memref<1x1x16xf32, #tpu.memory_space<vmem>>, %arg9: memref<1x32x16xf32, #tpu.memory_space<vmem>>, %arg10: memref<1x8x16xf32, #tpu.memory_space<vmem>>) attributes {dimension_semantics = [#tpu.dimension_semantics<parallel>], iteration_bounds = array<i64: 3>, scalar_prefetch = 0 : i64, scratch_operands = 0 : i64, tpu.core_type = #tpu.core_type<tc>, window_params = [{pipeline_mode = #tpu.pipeline_mode<synchronous>, transform_indices = @transform_0, window_bounds = array<i64: 24, 32>}, {transform_indices = @transform_1, window_bounds = array<i64: 1, 8, 24>}, {transform_indices = @transform_2, window_bounds = array<i64: 1, 8, 24>}, {transform_indices = @transform_3, window_bounds = array<i64: 1, 8, 8>}, {transform_indices = @transform_4, window_bounds = array<i64: 1, 8, 1>}, {transform_indices = @transform_5, window_bounds = array<i64: 1, 8, 1>}, {transform_indices = @transform_6, window_bounds = array<i64: 1, 32, 16>}, {transform_indices = @transform_7, window_bounds = array<i64: 1, 1, 16>}, {transform_indices = @transform_8, window_bounds = array<i64: 1, 32, 16>}, {transform_indices = @transform_9, window_bounds = array<i64: 1, 8, 16>}]} {
    %c0 = arith.constant 0 : index
    %c0_0 = arith.constant 0 : index
    %0 = vector.load %arg1[%c0, %c0_0] : memref<24x32xf32, #tpu.memory_space<vmem>>, vector<24x32xf32>
    %c0_1 = arith.constant 0 : index
    %c0_2 = arith.constant 0 : index
    %c0_3 = arith.constant 0 : index
    %1 = vector.load %arg2[%c0_1, %c0_2, %c0_3] : memref<1x8x24xf32, #tpu.memory_space<vmem>>, vector<1x8x24xf32>
    %2 = vector.shape_cast %1 : vector<1x8x24xf32> to vector<8x24xf32>
    %cst = arith.constant dense<0.000000e+00> : vector<8x32xf32>
    %3 = tpu.matmul %2, %0, %cst {dimension_numbers = #tpu.dot_dimension_numbers<[1], [0], [0], [1], [0, 0, 1, 1], [], []>} : vector<8x24xf32>, vector<24x32xf32>, vector<8x32xf32> -> vector<8x32xf32>
    %c0_4 = arith.constant 0 : index
    %c0_5 = arith.constant 0 : index
    %c0_6 = arith.constant 0 : index
    %4 = vector.load %arg4[%c0_4, %c0_5, %c0_6] : memref<1x8x8xf32, #tpu.memory_space<vmem>>, vector<1x8x8xf32>
    %5 = vector.shape_cast %4 : vector<1x8x8xf32> to vector<8x8xf32>
    %cst_7 = arith.constant dense<0.000000e+00> : vector<8x32xf32>
    %6 = tpu.matmul %5, %3, %cst_7 {dimension_numbers = #tpu.dot_dimension_numbers<[1], [0], [0], [1], [0, 0, 1, 1], [], []>} : vector<8x8xf32>, vector<8x32xf32>, vector<8x32xf32> -> vector<8x32xf32>
    %c0_8 = arith.constant 0 : index
    %c0_9 = arith.constant 0 : index
    %c0_10 = arith.constant 0 : index
    %7 = vector.load %arg5[%c0_8, %c0_9, %c0_10] : memref<1x8x1xf32, #tpu.memory_space<vmem>>, vector<1x8x1xf32>
    %8 = vector.shape_cast %7 : vector<1x8x1xf32> to vector<8x1xf32>
    %9 = vector.broadcast %8 : vector<8x1xf32> to vector<8x32xf32>
    %10 = arith.mulf %6, %9 : vector<8x32xf32>
    %c0_11 = arith.constant 0 : index
    %c0_12 = arith.constant 0 : index
    %c0_13 = arith.constant 0 : index
    %11 = vector.load %arg3[%c0_11, %c0_12, %c0_13] : memref<1x8x24xf32, #tpu.memory_space<vmem>>, vector<1x8x24xf32>
    %12 = vector.shape_cast %11 : vector<1x8x24xf32> to vector<8x24xf32>
    %cst_14 = arith.constant dense<0.000000e+00> : vector<8x32xf32>
    %13 = tpu.matmul %12, %0, %cst_14 {dimension_numbers = #tpu.dot_dimension_numbers<[1], [0], [0], [1], [0, 0, 1, 1], [], []>} : vector<8x24xf32>, vector<24x32xf32>, vector<8x32xf32> -> vector<8x32xf32>
    %c0_15 = arith.constant 0 : index
    %c0_16 = arith.constant 0 : index
    %c0_17 = arith.constant 0 : index
    %14 = vector.load %arg7[%c0_15, %c0_16, %c0_17] : memref<1x32x16xf32, #tpu.memory_space<vmem>>, vector<1x32x16xf32>
    %15 = vector.shape_cast %14 : vector<1x32x16xf32> to vector<32x16xf32>
    %cst_18 = arith.constant dense<0.000000e+00> : vector<8x16xf32>
    %16 = tpu.matmul %10, %15, %cst_18 {dimension_numbers = #tpu.dot_dimension_numbers<[1], [0], [0], [1], [0, 0, 1, 1], [], []>} : vector<8x32xf32>, vector<32x16xf32>, vector<8x16xf32> -> vector<8x16xf32>
    %c0_19 = arith.constant 0 : index
    %c0_20 = arith.constant 0 : index
    %c0_21 = arith.constant 0 : index
    %17 = vector.load %arg8[%c0_19, %c0_20, %c0_21] : memref<1x1x16xf32, #tpu.memory_space<vmem>>, vector<1x1x16xf32>
    %18 = vector.shape_cast %17 : vector<1x1x16xf32> to vector<1x16xf32>
    %19 = vector.broadcast %18 : vector<1x16xf32> to vector<8x16xf32>
    %20 = arith.addf %16, %19 : vector<8x16xf32>
    %c0_22 = arith.constant 0 : index
    %c0_23 = arith.constant 0 : index
    %c0_24 = arith.constant 0 : index
    %21 = vector.load %arg9[%c0_22, %c0_23, %c0_24] : memref<1x32x16xf32, #tpu.memory_space<vmem>>, vector<1x32x16xf32>
    %22 = vector.shape_cast %21 : vector<1x32x16xf32> to vector<32x16xf32>
    %cst_25 = arith.constant dense<0.000000e+00> : vector<8x16xf32>
    %23 = tpu.matmul %13, %22, %cst_25 {dimension_numbers = #tpu.dot_dimension_numbers<[1], [0], [0], [1], [0, 0, 1, 1], [], []>} : vector<8x32xf32>, vector<32x16xf32>, vector<8x16xf32> -> vector<8x16xf32>
    %24 = arith.addf %20, %23 : vector<8x16xf32>
    %c0_26 = arith.constant 0 : index
    %c0_27 = arith.constant 0 : index
    %c0_28 = arith.constant 0 : index
    %25 = vector.load %arg6[%c0_26, %c0_27, %c0_28] : memref<1x8x1xf32, #tpu.memory_space<vmem>>, vector<1x8x1xf32>
    %26 = vector.shape_cast %25 : vector<1x8x1xf32> to vector<8x1xf32>
    %27 = vector.broadcast %26 : vector<8x1xf32> to vector<8x16xf32>
    %28 = arith.mulf %24, %27 : vector<8x16xf32>
    %c0_29 = arith.constant 0 : index
    %c0_30 = arith.constant 0 : index
    %c0_31 = arith.constant 0 : index
    %29 = vector.load %arg10[%c0_29, %c0_30, %c0_31] : memref<1x8x16xf32, #tpu.memory_space<vmem>>, vector<1x8x16xf32>
    %30 = vector.shape_cast %29 : vector<1x8x16xf32> to vector<8x16xf32>
    %31 = vector.shape_cast %28 : vector<8x16xf32> to vector<1x8x16xf32>
    tpu.vector_store %arg10[%c0_29, %c0_30, %c0_31], %31 {strides = array<i32>} : memref<1x8x16xf32, #tpu.memory_space<vmem>>, vector<1x8x16xf32>,
    return
  }
  func.func @transform_0(%arg0: i32) -> (i32, i32) {
    %c0_i32 = arith.constant 0 : i32
    %c0_i32_0 = arith.constant 0 : i32
    %c0_i32_1 = arith.constant 0 : i32
    return %c0_i32, %c0_i32_0 : i32, i32
  }
  func.func @transform_1(%arg0: i32) -> (i32, i32, i32) {
    %c0_i32 = arith.constant 0 : i32
    %c0_i32_0 = arith.constant 0 : i32
    %c0_i32_1 = arith.constant 0 : i32
    return %arg0, %c0_i32, %c0_i32_0 : i32, i32, i32
  }
  func.func @transform_2(%arg0: i32) -> (i32, i32, i32) {
    %c0_i32 = arith.constant 0 : i32
    %c0_i32_0 = arith.constant 0 : i32
    %c0_i32_1 = arith.constant 0 : i32
    return %arg0, %c0_i32, %c0_i32_0 : i32, i32, i32
  }
  func.func @transform_3(%arg0: i32) -> (i32, i32, i32) {
    %c0_i32 = arith.constant 0 : i32
    %c0_i32_0 = arith.constant 0 : i32
    %c0_i32_1 = arith.constant 0 : i32
    return %arg0, %c0_i32, %c0_i32_0 : i32, i32, i32
  }
  func.func @transform_4(%arg0: i32) -> (i32, i32, i32) {
    %c0_i32 = arith.constant 0 : i32
    %c0_i32_0 = arith.constant 0 : i32
    %c0_i32_1 = arith.constant 0 : i32
    return %arg0, %c0_i32, %c0_i32_0 : i32, i32, i32
  }
  func.func @transform_5(%arg0: i32) -> (i32, i32, i32) {
    %c0_i32 = arith.constant 0 : i32
    %c0_i32_0 = arith.constant 0 : i32
    %c0_i32_1 = arith.constant 0 : i32
    return %arg0, %c0_i32, %c0_i32_0 : i32, i32, i32
  }
  func.func @transform_6(%arg0: i32) -> (i32, i32, i32) {
    %c0_i32 = arith.constant 0 : i32
    %c0_i32_0 = arith.constant 0 : i32
    %c0_i32_1 = arith.constant 0 : i32
    return %arg0, %c0_i32, %c0_i32_0 : i32, i32, i32
  }
  func.func @transform_7(%arg0: i32) -> (i32, i32, i32) {
    %c0_i32 = arith.constant 0 : i32
    %c0_i32_0 = arith.constant 0 : i32
    %c0_i32_1 = arith.constant 0 : i32
    return %arg0, %c0_i32, %c0_i32_0 : i32, i32, i32
  }
  func.func @transform_8(%arg0: i32) -> (i32, i32, i32) {
    %c0_i32 = arith.constant 0 : i32
    %c0_i32_0 = arith.constant 0 : i32
    %c0_i32_1 = arith.constant 0 : i32
    return %arg0, %c0_i32, %c0_i32_0 : i32, i32, i32
  }
  func.func @transform_9(%arg0: i32) -> (i32, i32, i32) {
    %c0_i32 = arith.constant 0 : i32
    %c0_i32_0 = arith.constant 0 : i32
    %c0_i32_1 = arith.constant 0 : i32
    return %arg0, %c0_i32, %c0_i32_0 : i32, i32, i32
  }
}

module attributes {stable_mosaic.version = 11 : i64} {
  func.func @_sage_self_kernel(%arg0: i32, %arg1: memref<24x16xf32, #tpu.memory_space<vmem>>, %arg2: memref<1x8x24xf32, #tpu.memory_space<vmem>>, %arg3: memref<1x8x24xf32, #tpu.memory_space<vmem>>, %arg4: memref<1x8x8xf32, #tpu.memory_space<vmem>>, %arg5: memref<1x8x1xf32, #tpu.memory_space<vmem>>, %arg6: memref<1x8x1xf32, #tpu.memory_space<vmem>>, %arg7: memref<1x16x16xf32, #tpu.memory_space<vmem>>, %arg8: memref<1x1x16xf32, #tpu.memory_space<vmem>>, %arg9: memref<1x16x16xf32, #tpu.memory_space<vmem>>, %arg10: memref<1x8x16xf32, #tpu.memory_space<vmem>>) attributes {dimension_semantics = [#tpu.dimension_semantics<parallel>], iteration_bounds = array<i64: 3>, scalar_prefetch = 0 : i64, scratch_operands = 0 : i64, tpu.core_type = #tpu.core_type<tc>, window_params = [{pipeline_mode = #tpu.pipeline_mode<synchronous>, transform_indices = @transform_0, window_bounds = array<i64: 24, 16>}, {transform_indices = @transform_1, window_bounds = array<i64: 1, 8, 24>}, {transform_indices = @transform_2, window_bounds = array<i64: 1, 8, 24>}, {transform_indices = @transform_3, window_bounds = array<i64: 1, 8, 8>}, {transform_indices = @transform_4, window_bounds = array<i64: 1, 8, 1>}, {transform_indices = @transform_5, window_bounds = array<i64: 1, 8, 1>}, {transform_indices = @transform_6, window_bounds = array<i64: 1, 16, 16>}, {transform_indices = @transform_7, window_bounds = array<i64: 1, 1, 16>}, {transform_indices = @transform_8, window_bounds = array<i64: 1, 16, 16>}, {transform_indices = @transform_9, window_bounds = array<i64: 1, 8, 16>}]} {
    %c0 = arith.constant 0 : index
    %c0_0 = arith.constant 0 : index
    %0 = vector.load %arg1[%c0, %c0_0] : memref<24x16xf32, #tpu.memory_space<vmem>>, vector<24x16xf32>
    %c0_1 = arith.constant 0 : index
    %c0_2 = arith.constant 0 : index
    %c0_3 = arith.constant 0 : index
    %1 = vector.load %arg2[%c0_1, %c0_2, %c0_3] : memref<1x8x24xf32, #tpu.memory_space<vmem>>, vector<1x8x24xf32>
    %2 = vector.shape_cast %1 : vector<1x8x24xf32> to vector<8x24xf32>
    %cst = arith.constant dense<0.000000e+00> : vector<8x16xf32>
    %3 = tpu.matmul %2, %0, %cst {dimension_numbers = #tpu.dot_dimension_numbers<[1], [0], [0], [1], [0, 0, 1, 1], [], []>} : vector<8x24xf32>, vector<24x16xf32>, vector<8x16xf32> -> vector<8x16xf32>
    %c0_4 = arith.constant 0 : index
    %c0_5 = arith.constant 0 : index
    %c0_6 = arith.constant 0 : index
    %4 = vector.load %arg4[%c0_4, %c0_5, %c0_6] : memref<1x8x8xf32, #tpu.memory_space<vmem>>, vector<1x8x8xf32>
    %5 = vector.shape_cast %4 : vector<1x8x8xf32> to vector<8x8xf32>
    %cst_7 = arith.constant dense<0.000000e+00> : vector<8x16xf32>
    %6 = tpu.matmul %5, %3, %cst_7 {dimension_numbers = #tpu.dot_dimension_numbers<[1], [0], [0], [1], [0, 0, 1, 1], [], []>} : vector<8x8xf32>, vector<8x16xf32>, vector<8x16xf32> -> vector<8x16xf32>
    %c0_8 = arith.constant 0 : index
    %c0_9 = arith.constant 0 : index
    %c0_10 = arith.constant 0 : index
    %7 = vector.load %arg5[%c0_8, %c0_9, %c0_10] : memref<1x8x1xf32, #tpu.memory_space<vmem>>, vector<1x8x1xf32>
    %8 = vector.shape_cast %7 : vector<1x8x1xf32> to vector<8x1xf32>
    %9 = vector.broadcast %8 : vector<8x1xf32> to vector<8x16xf32>
    %10 = arith.mulf %6, %9 : vector<8x16xf32>
    %c0_11 = arith.constant 0 : index
    %c0_12 = arith.constant 0 : index
    %c0_13 = arith.constant 0 : index
    %11 = vector.load %arg3[%c0_11, %c0_12, %c0_13] : memref<1x8x24xf32, #tpu.memory_space<vmem>>, vector<1x8x24xf32>
    %12 = vector.shape_cast %11 : vector<1x8x24xf32> to vector<8x24xf32>
    %cst_14 = arith.constant dense<0.000000e+00> : vector<8x16xf32>
    %13 = tpu.matmul %12, %0, %cst_14 {dimension_numbers = #tpu.dot_dimension_numbers<[1], [0], [0], [1], [0, 0, 1, 1], [], []>} : vector<8x24xf32>, vector<24x16xf32>, vector<8x16xf32> -> vector<8x16xf32>
    %c0_15 = arith.constant 0 : index
    %c0_16 = arith.constant 0 : index
    %c0_17 = arith.constant 0 : index
    %14 = vector.load %arg7[%c0_15, %c0_16, %c0_17] : memref<1x16x16xf32, #tpu.memory_space<vmem>>, vector<1x16x16xf32>
    %15 = vector.shape_cast %14 : vector<1x16x16xf32> to vector<16x16xf32>
    %cst_18 = arith.constant dense<0.000000e+00> : vector<8x16xf32>
    %16 = tpu.matmul %10, %15, %cst_18 {dimension_numbers = #tpu.dot_dimension_numbers<[1], [0], [0], [1], [0, 0, 1, 1], [], []>} : vector<8x16xf32>, vector<16x16xf32>, vector<8x16xf32> -> vector<8x16xf32>
    %c0_19 = arith.constant 0 : index
    %c0_20 = arith.constant 0 : index
    %c0_21 = arith.constant 0 : index
    %17 = vector.load %arg8[%c0_19, %c0_20, %c0_21] : memref<1x1x16xf32, #tpu.memory_space<vmem>>, vector<1x1x16xf32>
    %18 = vector.shape_cast %17 : vector<1x1x16xf32> to vector<1x16xf32>
    %19 = vector.broadcast %18 : vector<1x16xf32> to vector<8x16xf32>
    %20 = arith.addf %16, %19 : vector<8x16xf32>
    %c0_22 = arith.constant 0 : index
    %c0_23 = arith.constant 0 : index
    %c0_24 = arith.constant 0 : index
    %21 = vector.load %arg9[%c0_22, %c0_23, %c0_24] : memref<1x16x16xf32, #tpu.memory_space<vmem>>, vector<1x16x16xf32>
    %22 = vector.shape_cast %21 : vector<1x16x16xf32> to vector<16x16xf32>
    %cst_25 = arith.constant dense<0.000000e+00> : vector<8x16xf32>
    %23 = tpu.matmul %13, %22, %cst_25 {dimension_numbers = #tpu.dot_dimension_numbers<[1], [0], [0], [1], [0, 0, 1, 1], [], []>} : vector<8x16xf32>, vector<16x16xf32>, vector<8x16xf32> -> vector<8x16xf32>
    %24 = arith.addf %20, %23 : vector<8x16xf32>
    %c0_26 = arith.constant 0 : index
    %c0_27 = arith.constant 0 : index
    %c0_28 = arith.constant 0 : index
    %25 = vector.load %arg6[%c0_26, %c0_27, %c0_28] : memref<1x8x1xf32, #tpu.memory_space<vmem>>, vector<1x8x1xf32>
    %26 = vector.shape_cast %25 : vector<1x8x1xf32> to vector<8x1xf32>
    %27 = vector.broadcast %26 : vector<8x1xf32> to vector<8x16xf32>
    %28 = arith.mulf %24, %27 : vector<8x16xf32>
    %c0_29 = arith.constant 0 : index
    %c0_30 = arith.constant 0 : index
    %c0_31 = arith.constant 0 : index
    %29 = vector.load %arg10[%c0_29, %c0_30, %c0_31] : memref<1x8x16xf32, #tpu.memory_space<vmem>>, vector<1x8x16xf32>
    %30 = vector.shape_cast %29 : vector<1x8x16xf32> to vector<8x16xf32>
    %31 = vector.shape_cast %28 : vector<8x16xf32> to vector<1x8x16xf32>
    tpu.vector_store %arg10[%c0_29, %c0_30, %c0_31], %31 {strides = array<i32>} : memref<1x8x16xf32, #tpu.memory_space<vmem>>, vector<1x8x16xf32>,
    return
  }
  func.func @transform_0(%arg0: i32) -> (i32, i32) {
    %c0_i32 = arith.constant 0 : i32
    %c0_i32_0 = arith.constant 0 : i32
    %c0_i32_1 = arith.constant 0 : i32
    return %c0_i32, %c0_i32_0 : i32, i32
  }
  func.func @transform_1(%arg0: i32) -> (i32, i32, i32) {
    %c0_i32 = arith.constant 0 : i32
    %c0_i32_0 = arith.constant 0 : i32
    %c0_i32_1 = arith.constant 0 : i32
    return %arg0, %c0_i32, %c0_i32_0 : i32, i32, i32
  }
  func.func @transform_2(%arg0: i32) -> (i32, i32, i32) {
    %c0_i32 = arith.constant 0 : i32
    %c0_i32_0 = arith.constant 0 : i32
    %c0_i32_1 = arith.constant 0 : i32
    return %arg0, %c0_i32, %c0_i32_0 : i32, i32, i32
  }
  func.func @transform_3(%arg0: i32) -> (i32, i32, i32) {
    %c0_i32 = arith.constant 0 : i32
    %c0_i32_0 = arith.constant 0 : i32
    %c0_i32_1 = arith.constant 0 : i32
    return %arg0, %c0_i32, %c0_i32_0 : i32, i32, i32
  }
  func.func @transform_4(%arg0: i32) -> (i32, i32, i32) {
    %c0_i32 = arith.constant 0 : i32
    %c0_i32_0 = arith.constant 0 : i32
    %c0_i32_1 = arith.constant 0 : i32
    return %arg0, %c0_i32, %c0_i32_0 : i32, i32, i32
  }
  func.func @transform_5(%arg0: i32) -> (i32, i32, i32) {
    %c0_i32 = arith.constant 0 : i32
    %c0_i32_0 = arith.constant 0 : i32
    %c0_i32_1 = arith.constant 0 : i32
    return %arg0, %c0_i32, %c0_i32_0 : i32, i32, i32
  }
  func.func @transform_6(%arg0: i32) -> (i32, i32, i32) {
    %c0_i32 = arith.constant 0 : i32
    %c0_i32_0 = arith.constant 0 : i32
    %c0_i32_1 = arith.constant 0 : i32
    return %arg0, %c0_i32, %c0_i32_0 : i32, i32, i32
  }
  func.func @transform_7(%arg0: i32) -> (i32, i32, i32) {
    %c0_i32 = arith.constant 0 : i32
    %c0_i32_0 = arith.constant 0 : i32
    %c0_i32_1 = arith.constant 0 : i32
    return %arg0, %c0_i32, %c0_i32_0 : i32, i32, i32
  }
  func.func @transform_8(%arg0: i32) -> (i32, i32, i32) {
    %c0_i32 = arith.constant 0 : i32
    %c0_i32_0 = arith.constant 0 : i32
    %c0_i32_1 = arith.constant 0 : i32
    return %arg0, %c0_i32, %c0_i32_0 : i32, i32, i32
  }
  func.func @transform_9(%arg0: i32) -> (i32, i32, i32) {
    %c0_i32 = arith.constant 0 : i32
    %c0_i32_0 = arith.constant 0 : i32
    %c0_i32_1 = arith.constant 0 : i32
    return %arg0, %c0_i32, %c0_i32_0 : i32, i32, i32
  }
}

module attributes {stable_mosaic.version = 11 : i64} {
  func.func @_sage_edge_kernel(%arg0: i32, %arg1: memref<24x16xf32, #tpu.memory_space<vmem>>, %arg2: memref<1x12x32xf32, #tpu.memory_space<vmem>>, %arg3: memref<1x12x24xf32, #tpu.memory_space<vmem>>, %arg4: memref<1x8x24xf32, #tpu.memory_space<vmem>>, %arg5: memref<1x12x8xf32, #tpu.memory_space<vmem>>, %arg6: memref<1x8x12xf32, #tpu.memory_space<vmem>>, %arg7: memref<1x8x12xf32, #tpu.memory_space<vmem>>, %arg8: memref<1x8x1xf32, #tpu.memory_space<vmem>>, %arg9: memref<1x8x1xf32, #tpu.memory_space<vmem>>, %arg10: memref<1x1x1xf32, #tpu.memory_space<vmem>>, %arg11: memref<1x16x16xf32, #tpu.memory_space<vmem>>, %arg12: memref<1x1x16xf32, #tpu.memory_space<vmem>>, %arg13: memref<1x16x16xf32, #tpu.memory_space<vmem>>, %arg14: memref<1x32x16xf32, #tpu.memory_space<vmem>>, %arg15: memref<1x1x16xf32, #tpu.memory_space<vmem>>, %arg16: memref<1x16x16xf32, #tpu.memory_space<vmem>>, %arg17: memref<1x1x16xf32, #tpu.memory_space<vmem>>, %arg18: memref<1x32x16xf32, #tpu.memory_space<vmem>>, %arg19: memref<1x1x16xf32, #tpu.memory_space<vmem>>, %arg20: memref<1x16x16xf32, #tpu.memory_space<vmem>>, %arg21: memref<1x16x16xf32, #tpu.memory_space<vmem>>, %arg22: memref<1x16x16xf32, #tpu.memory_space<vmem>>, %arg23: memref<1x1x16xf32, #tpu.memory_space<vmem>>, %arg24: memref<1x1x16xf32, #tpu.memory_space<vmem>>, %arg25: memref<1x1x16xf32, #tpu.memory_space<vmem>>, %arg26: memref<1x8x16xf32, #tpu.memory_space<vmem>>) attributes {dimension_semantics = [#tpu.dimension_semantics<parallel>], iteration_bounds = array<i64: 7>, scalar_prefetch = 0 : i64, scratch_operands = 0 : i64, tpu.core_type = #tpu.core_type<tc>, window_params = [{pipeline_mode = #tpu.pipeline_mode<synchronous>, transform_indices = @transform_0, window_bounds = array<i64: 24, 16>}, {transform_indices = @transform_1, window_bounds = array<i64: 1, 12, 32>}, {transform_indices = @transform_2, window_bounds = array<i64: 1, 12, 24>}, {transform_indices = @transform_3, window_bounds = array<i64: 1, 8, 24>}, {transform_indices = @transform_4, window_bounds = array<i64: 1, 12, 8>}, {transform_indices = @transform_5, window_bounds = array<i64: 1, 8, 12>}, {transform_indices = @transform_6, window_bounds = array<i64: 1, 8, 12>}, {transform_indices = @transform_7, window_bounds = array<i64: 1, 8, 1>}, {transform_indices = @transform_8, window_bounds = array<i64: 1, 8, 1>}, {transform_indices = @transform_9, window_bounds = array<i64: 1, 1, 1>}, {transform_indices = @transform_10, window_bounds = array<i64: 1, 16, 16>}, {transform_indices = @transform_11, window_bounds = array<i64: 1, 1, 16>}, {transform_indices = @transform_12, window_bounds = array<i64: 1, 16, 16>}, {transform_indices = @transform_13, window_bounds = array<i64: 1, 32, 16>}, {transform_indices = @transform_14, window_bounds = array<i64: 1, 1, 16>}, {transform_indices = @transform_15, window_bounds = array<i64: 1, 16, 16>}, {transform_indices = @transform_16, window_bounds = array<i64: 1, 1, 16>}, {transform_indices = @transform_17, window_bounds = array<i64: 1, 32, 16>}, {transform_indices = @transform_18, window_bounds = array<i64: 1, 1, 16>}, {transform_indices = @transform_19, window_bounds = array<i64: 1, 16, 16>}, {transform_indices = @transform_20, window_bounds = array<i64: 1, 16, 16>}, {transform_indices = @transform_21, window_bounds = array<i64: 1, 16, 16>}, {transform_indices = @transform_22, window_bounds = array<i64: 1, 1, 16>}, {transform_indices = @transform_23, window_bounds = array<i64: 1, 1, 16>}, {transform_indices = @transform_24, window_bounds = array<i64: 1, 1, 16>}, {transform_indices = @transform_25, window_bounds = array<i64: 1, 8, 16>}]} {
    %c0 = arith.constant 0 : index
    %c0_0 = arith.constant 0 : index
    %0 = vector.load %arg1[%c0, %c0_0] : memref<24x16xf32, #tpu.memory_space<vmem>>, vector<24x16xf32>
    %c0_1 = arith.constant 0 : index
    %c0_2 = arith.constant 0 : index
    %c0_3 = arith.constant 0 : index
    %1 = vector.load %arg2[%c0_1, %c0_2, %c0_3] : memref<1x12x32xf32, #tpu.memory_space<vmem>>, vector<1x12x32xf32>
    %2 = vector.shape_cast %1 : vector<1x12x32xf32> to vector<12x32xf32>
    %c0_4 = arith.constant 0 : index
    %c0_5 = arith.constant 0 : index
    %c0_6 = arith.constant 0 : index
    %3 = vector.load %arg9[%c0_4, %c0_5, %c0_6] : memref<1x8x1xf32, #tpu.memory_space<vmem>>, vector<1x8x1xf32>
    %4 = vector.shape_cast %3 : vector<1x8x1xf32> to vector<8x1xf32>
    %c0_7 = arith.constant 0 : index
    %c0_8 = arith.constant 0 : index
    %c0_9 = arith.constant 0 : index
    %5 = vector.load %arg10[%c0_7, %c0_8, %c0_9] : memref<1x1x1xf32, #tpu.memory_space<vmem>>, vector<1x1x1xf32>
    %6 = vector.shape_cast %5 : vector<1x1x1xf32> to vector<1x1xf32>
    %c0_10 = arith.constant 0 : index
    %c0_11 = arith.constant 0 : index
    %c0_12 = arith.constant 0 : index
    %7 = vector.load %arg3[%c0_10, %c0_11, %c0_12] : memref<1x12x24xf32, #tpu.memory_space<vmem>>, vector<1x12x24xf32>
    %8 = vector.shape_cast %7 : vector<1x12x24xf32> to vector<12x24xf32>
    %cst = arith.constant dense<0.000000e+00> : vector<12x16xf32>
    %9 = tpu.matmul %8, %0, %cst {dimension_numbers = #tpu.dot_dimension_numbers<[1], [0], [0], [1], [0, 0, 1, 1], [], []>} : vector<12x24xf32>, vector<24x16xf32>, vector<12x16xf32> -> vector<12x16xf32>
    %c0_13 = arith.constant 0 : index
    %c0_14 = arith.constant 0 : index
    %c0_15 = arith.constant 0 : index
    %10 = vector.load %arg6[%c0_13, %c0_14, %c0_15] : memref<1x8x12xf32, #tpu.memory_space<vmem>>, vector<1x8x12xf32>
    %11 = vector.shape_cast %10 : vector<1x8x12xf32> to vector<8x12xf32>
    %cst_16 = arith.constant dense<0.000000e+00> : vector<8x16xf32>
    %12 = tpu.matmul %11, %9, %cst_16 {dimension_numbers = #tpu.dot_dimension_numbers<[1], [0], [0], [1], [0, 0, 1, 1], [], []>} : vector<8x12xf32>, vector<12x16xf32>, vector<8x16xf32> -> vector<8x16xf32>
    %c0_17 = arith.constant 0 : index
    %c0_18 = arith.constant 0 : index
    %c0_19 = arith.constant 0 : index
    %13 = vector.load %arg8[%c0_17, %c0_18, %c0_19] : memref<1x8x1xf32, #tpu.memory_space<vmem>>, vector<1x8x1xf32>
    %14 = vector.shape_cast %13 : vector<1x8x1xf32> to vector<8x1xf32>
    %15 = vector.broadcast %14 : vector<8x1xf32> to vector<8x16xf32>
    %16 = arith.mulf %12, %15 : vector<8x16xf32>
    %c0_20 = arith.constant 0 : index
    %c0_21 = arith.constant 0 : index
    %c0_22 = arith.constant 0 : index
    %17 = vector.load %arg4[%c0_20, %c0_21, %c0_22] : memref<1x8x24xf32, #tpu.memory_space<vmem>>, vector<1x8x24xf32>
    %18 = vector.shape_cast %17 : vector<1x8x24xf32> to vector<8x24xf32>
    %cst_23 = arith.constant dense<0.000000e+00> : vector<8x16xf32>
    %19 = tpu.matmul %18, %0, %cst_23 {dimension_numbers = #tpu.dot_dimension_numbers<[1], [0], [0], [1], [0, 0, 1, 1], [], []>} : vector<8x24xf32>, vector<24x16xf32>, vector<8x16xf32> -> vector<8x16xf32>
    %c0_24 = arith.constant 0 : index
    %c0_25 = arith.constant 0 : index
    %c0_26 = arith.constant 0 : index
    %20 = vector.load %arg11[%c0_24, %c0_25, %c0_26] : memref<1x16x16xf32, #tpu.memory_space<vmem>>, vector<1x16x16xf32>
    %21 = vector.shape_cast %20 : vector<1x16x16xf32> to vector<16x16xf32>
    %cst_27 = arith.constant dense<0.000000e+00> : vector<8x16xf32>
    %22 = tpu.matmul %16, %21, %cst_27 {dimension_numbers = #tpu.dot_dimension_numbers<[1], [0], [0], [1], [0, 0, 1, 1], [], []>} : vector<8x16xf32>, vector<16x16xf32>, vector<8x16xf32> -> vector<8x16xf32>
    %c0_28 = arith.constant 0 : index
    %c0_29 = arith.constant 0 : index
    %c0_30 = arith.constant 0 : index
    %23 = vector.load %arg12[%c0_28, %c0_29, %c0_30] : memref<1x1x16xf32, #tpu.memory_space<vmem>>, vector<1x1x16xf32>
    %24 = vector.shape_cast %23 : vector<1x1x16xf32> to vector<1x16xf32>
    %25 = vector.broadcast %24 : vector<1x16xf32> to vector<8x16xf32>
    %26 = arith.addf %22, %25 : vector<8x16xf32>
    %c0_31 = arith.constant 0 : index
    %c0_32 = arith.constant 0 : index
    %c0_33 = arith.constant 0 : index
    %27 = vector.load %arg13[%c0_31, %c0_32, %c0_33] : memref<1x16x16xf32, #tpu.memory_space<vmem>>, vector<1x16x16xf32>
    %28 = vector.shape_cast %27 : vector<1x16x16xf32> to vector<16x16xf32>
    %cst_34 = arith.constant dense<0.000000e+00> : vector<8x16xf32>
    %29 = tpu.matmul %19, %28, %cst_34 {dimension_numbers = #tpu.dot_dimension_numbers<[1], [0], [0], [1], [0, 0, 1, 1], [], []>} : vector<8x16xf32>, vector<16x16xf32>, vector<8x16xf32> -> vector<8x16xf32>
    %30 = arith.addf %26, %29 : vector<8x16xf32>
    %c0_35 = arith.constant 0 : index
    %c0_36 = arith.constant 0 : index
    %c0_37 = arith.constant 0 : index
    %31 = vector.load %arg14[%c0_35, %c0_36, %c0_37] : memref<1x32x16xf32, #tpu.memory_space<vmem>>, vector<1x32x16xf32>
    %32 = vector.shape_cast %31 : vector<1x32x16xf32> to vector<32x16xf32>
    %cst_38 = arith.constant dense<0.000000e+00> : vector<12x16xf32>
    %33 = tpu.matmul %2, %32, %cst_38 {dimension_numbers = #tpu.dot_dimension_numbers<[1], [0], [0], [1], [0, 0, 1, 1], [], []>} : vector<12x32xf32>, vector<32x16xf32>, vector<12x16xf32> -> vector<12x16xf32>
    %c0_39 = arith.constant 0 : index
    %c0_40 = arith.constant 0 : index
    %c0_41 = arith.constant 0 : index
    %34 = vector.load %arg15[%c0_39, %c0_40, %c0_41] : memref<1x1x16xf32, #tpu.memory_space<vmem>>, vector<1x1x16xf32>
    %35 = vector.shape_cast %34 : vector<1x1x16xf32> to vector<1x16xf32>
    %36 = vector.broadcast %35 : vector<1x16xf32> to vector<12x16xf32>
    %37 = arith.addf %33, %36 : vector<12x16xf32>
    %cst_42 = arith.constant 0.000000e+00 : f32
    %38 = vector.broadcast %cst_42 : f32 to vector<12x16xf32>
    %39 = arith.maximumf %37, %38 : vector<12x16xf32>
    %c0_43 = arith.constant 0 : index
    %c0_44 = arith.constant 0 : index
    %c0_45 = arith.constant 0 : index
    %40 = vector.load %arg16[%c0_43, %c0_44, %c0_45] : memref<1x16x16xf32, #tpu.memory_space<vmem>>, vector<1x16x16xf32>
    %41 = vector.shape_cast %40 : vector<1x16x16xf32> to vector<16x16xf32>
    %cst_46 = arith.constant dense<0.000000e+00> : vector<12x16xf32>
    %42 = tpu.matmul %39, %41, %cst_46 {dimension_numbers = #tpu.dot_dimension_numbers<[1], [0], [0], [1], [0, 0, 1, 1], [], []>} : vector<12x16xf32>, vector<16x16xf32>, vector<12x16xf32> -> vector<12x16xf32>
    %c0_47 = arith.constant 0 : index
    %c0_48 = arith.constant 0 : index
    %c0_49 = arith.constant 0 : index
    %43 = vector.load %arg17[%c0_47, %c0_48, %c0_49] : memref<1x1x16xf32, #tpu.memory_space<vmem>>, vector<1x1x16xf32>
    %44 = vector.shape_cast %43 : vector<1x1x16xf32> to vector<1x16xf32>
    %45 = vector.broadcast %44 : vector<1x16xf32> to vector<12x16xf32>
    %46 = arith.addf %42, %45 : vector<12x16xf32>
    %c0_50 = arith.constant 0 : index
    %c0_51 = arith.constant 0 : index
    %c0_52 = arith.constant 0 : index
    %47 = vector.load %arg18[%c0_50, %c0_51, %c0_52] : memref<1x32x16xf32, #tpu.memory_space<vmem>>, vector<1x32x16xf32>
    %48 = vector.shape_cast %47 : vector<1x32x16xf32> to vector<32x16xf32>
    %cst_53 = arith.constant dense<0.000000e+00> : vector<12x16xf32>
    %49 = tpu.matmul %2, %48, %cst_53 {dimension_numbers = #tpu.dot_dimension_numbers<[1], [0], [0], [1], [0, 0, 1, 1], [], []>} : vector<12x32xf32>, vector<32x16xf32>, vector<12x16xf32> -> vector<12x16xf32>
    %c0_54 = arith.constant 0 : index
    %c0_55 = arith.constant 0 : index
    %c0_56 = arith.constant 0 : index
    %50 = vector.load %arg19[%c0_54, %c0_55, %c0_56] : memref<1x1x16xf32, #tpu.memory_space<vmem>>, vector<1x1x16xf32>
    %51 = vector.shape_cast %50 : vector<1x1x16xf32> to vector<1x16xf32>
    %52 = vector.broadcast %51 : vector<1x16xf32> to vector<12x16xf32>
    %53 = arith.addf %49, %52 : vector<12x16xf32>
    %54 = arith.addf %46, %53 : vector<12x16xf32>
    %c0_57 = arith.constant 0 : index
    %c0_58 = arith.constant 0 : index
    %c0_59 = arith.constant 0 : index
    %55 = vector.load %arg5[%c0_57, %c0_58, %c0_59] : memref<1x12x8xf32, #tpu.memory_space<vmem>>, vector<1x12x8xf32>
    %56 = vector.shape_cast %55 : vector<1x12x8xf32> to vector<12x8xf32>
    %cst_60 = arith.constant dense<0.000000e+00> : vector<12x16xf32>
    %57 = tpu.matmul %56, %30, %cst_60 {dimension_numbers = #tpu.dot_dimension_numbers<[1], [0], [0], [1], [0, 0, 1, 1], [], []>} : vector<12x8xf32>, vector<8x16xf32>, vector<12x16xf32> -> vector<12x16xf32>
    %c0_61 = arith.constant 0 : index
    %c0_62 = arith.constant 0 : index
    %c0_63 = arith.constant 0 : index
    %58 = vector.load %arg20[%c0_61, %c0_62, %c0_63] : memref<1x16x16xf32, #tpu.memory_space<vmem>>, vector<1x16x16xf32>
    %59 = vector.shape_cast %58 : vector<1x16x16xf32> to vector<16x16xf32>
    %cst_64 = arith.constant dense<0.000000e+00> : vector<12x16xf32>
    %60 = tpu.matmul %57, %59, %cst_64 {dimension_numbers = #tpu.dot_dimension_numbers<[1], [0], [0], [1], [0, 0, 1, 1], [], []>} : vector<12x16xf32>, vector<16x16xf32>, vector<12x16xf32> -> vector<12x16xf32>
    %c0_65 = arith.constant 0 : index
    %c0_66 = arith.constant 0 : index
    %c0_67 = arith.constant 0 : index
    %61 = vector.load %arg21[%c0_65, %c0_66, %c0_67] : memref<1x16x16xf32, #tpu.memory_space<vmem>>, vector<1x16x16xf32>
    %62 = vector.shape_cast %61 : vector<1x16x16xf32> to vector<16x16xf32>
    %cst_68 = arith.constant dense<0.000000e+00> : vector<12x16xf32>
    %63 = tpu.matmul %54, %62, %cst_68 {dimension_numbers = #tpu.dot_dimension_numbers<[1], [0], [0], [1], [0, 0, 1, 1], [], []>} : vector<12x16xf32>, vector<16x16xf32>, vector<12x16xf32> -> vector<12x16xf32>
    %64 = arith.addf %60, %63 : vector<12x16xf32>
    %c0_69 = arith.constant 0 : index
    %c0_70 = arith.constant 0 : index
    %c0_71 = arith.constant 0 : index
    %65 = vector.load %arg22[%c0_69, %c0_70, %c0_71] : memref<1x16x16xf32, #tpu.memory_space<vmem>>, vector<1x16x16xf32>
    %66 = vector.shape_cast %65 : vector<1x16x16xf32> to vector<16x16xf32>
    %cst_72 = arith.constant dense<0.000000e+00> : vector<12x16xf32>
    %67 = tpu.matmul %53, %66, %cst_72 {dimension_numbers = #tpu.dot_dimension_numbers<[1], [0], [0], [1], [0, 0, 1, 1], [], []>} : vector<12x16xf32>, vector<16x16xf32>, vector<12x16xf32> -> vector<12x16xf32>
    %68 = arith.addf %64, %67 : vector<12x16xf32>
    %c0_73 = arith.constant 0 : index
    %c0_74 = arith.constant 0 : index
    %c0_75 = arith.constant 0 : index
    %69 = vector.load %arg23[%c0_73, %c0_74, %c0_75] : memref<1x1x16xf32, #tpu.memory_space<vmem>>, vector<1x1x16xf32>
    %70 = vector.shape_cast %69 : vector<1x1x16xf32> to vector<1x16xf32>
    %71 = vector.broadcast %70 : vector<1x16xf32> to vector<12x16xf32>
    %72 = arith.addf %68, %71 : vector<12x16xf32>
    %73 = arith.negf %72 : vector<12x16xf32>
    %74 = math.exp %73 : vector<12x16xf32>
    %cst_76 = arith.constant 1.000000e+00 : f32
    %75 = vector.broadcast %cst_76 : f32 to vector<12x16xf32>
    %76 = arith.addf %75, %74 : vector<12x16xf32>
    %77 = arith.divf %75, %76 : vector<12x16xf32>
    %78 = arith.mulf %77, %54 : vector<12x16xf32>
    %c0_77 = arith.constant 0 : index
    %c0_78 = arith.constant 0 : index
    %c0_79 = arith.constant 0 : index
    %79 = vector.load %arg7[%c0_77, %c0_78, %c0_79] : memref<1x8x12xf32, #tpu.memory_space<vmem>>, vector<1x8x12xf32>
    %80 = vector.shape_cast %79 : vector<1x8x12xf32> to vector<8x12xf32>
    %cst_80 = arith.constant dense<0.000000e+00> : vector<8x16xf32>
    %81 = tpu.matmul %80, %78, %cst_80 {dimension_numbers = #tpu.dot_dimension_numbers<[1], [0], [0], [1], [0, 0, 1, 1], [], []>} : vector<8x12xf32>, vector<12x16xf32>, vector<8x16xf32> -> vector<8x16xf32>
    %82 = arith.addf %30, %81 : vector<8x16xf32>
    %83 = vector.broadcast %4 : vector<8x1xf32> to vector<8x16xf32>
    %84 = arith.mulf %82, %83 : vector<8x16xf32>
    %cst_81 = arith.constant dense<0.000000e+00> : vector<16xf32>
    %85 = vector.multi_reduction <add>, %84, %cst_81 [0] : vector<8x16xf32> to vector<16xf32>
    %86 = vector.shape_cast %85 : vector<16xf32> to vector<1x16xf32>
    %87 = vector.broadcast %6 : vector<1x1xf32> to vector<1x16xf32>
    %88 = arith.mulf %86, %87 : vector<1x16xf32>
    %89 = vector.broadcast %88 : vector<1x16xf32> to vector<8x16xf32>
    %90 = arith.subf %82, %89 : vector<8x16xf32>
    %91 = vector.broadcast %4 : vector<8x1xf32> to vector<8x16xf32>
    %92 = arith.mulf %90, %91 : vector<8x16xf32>
    %93 = arith.mulf %92, %92 : vector<8x16xf32>
    %cst_82 = arith.constant dense<0.000000e+00> : vector<16xf32>
    %94 = vector.multi_reduction <add>, %93, %cst_82 [0] : vector<8x16xf32> to vector<16xf32>
    %95 = vector.shape_cast %94 : vector<16xf32> to vector<1x16xf32>
    %96 = vector.broadcast %6 : vector<1x1xf32> to vector<1x16xf32>
    %97 = arith.mulf %95, %96 : vector<1x16xf32>
    %98 = vector.broadcast %88 : vector<1x16xf32> to vector<8x16xf32>
    %99 = arith.subf %82, %98 : vector<8x16xf32>
    %cst_83 = arith.constant 9.99999974E-6 : f32
    %100 = vector.broadcast %cst_83 : f32 to vector<1x16xf32>
    %101 = arith.addf %97, %100 : vector<1x16xf32>
    %102 = math.rsqrt %101 : vector<1x16xf32>
    %103 = vector.broadcast %102 : vector<1x16xf32> to vector<8x16xf32>
    %104 = arith.mulf %99, %103 : vector<8x16xf32>
    %c0_84 = arith.constant 0 : index
    %c0_85 = arith.constant 0 : index
    %c0_86 = arith.constant 0 : index
    %105 = vector.load %arg24[%c0_84, %c0_85, %c0_86] : memref<1x1x16xf32, #tpu.memory_space<vmem>>, vector<1x1x16xf32>
    %106 = vector.shape_cast %105 : vector<1x1x16xf32> to vector<1x16xf32>
    %107 = vector.broadcast %106 : vector<1x16xf32> to vector<8x16xf32>
    %108 = arith.mulf %104, %107 : vector<8x16xf32>
    %c0_87 = arith.constant 0 : index
    %c0_88 = arith.constant 0 : index
    %c0_89 = arith.constant 0 : index
    %109 = vector.load %arg25[%c0_87, %c0_88, %c0_89] : memref<1x1x16xf32, #tpu.memory_space<vmem>>, vector<1x1x16xf32>
    %110 = vector.shape_cast %109 : vector<1x1x16xf32> to vector<1x16xf32>
    %111 = vector.broadcast %110 : vector<1x16xf32> to vector<8x16xf32>
    %112 = arith.addf %108, %111 : vector<8x16xf32>
    %113 = arith.addf %112, %112 : vector<8x16xf32>
    %cst_90 = arith.constant 0.000000e+00 : f32
    %114 = vector.broadcast %cst_90 : f32 to vector<8x16xf32>
    %115 = arith.maximumf %113, %114 : vector<8x16xf32>
    %116 = vector.broadcast %4 : vector<8x1xf32> to vector<8x16xf32>
    %117 = arith.mulf %115, %116 : vector<8x16xf32>
    %c0_91 = arith.constant 0 : index
    %c0_92 = arith.constant 0 : index
    %c0_93 = arith.constant 0 : index
    %118 = vector.load %arg26[%c0_91, %c0_92, %c0_93] : memref<1x8x16xf32, #tpu.memory_space<vmem>>, vector<1x8x16xf32>
    %119 = vector.shape_cast %118 : vector<1x8x16xf32> to vector<8x16xf32>
    %120 = vector.shape_cast %117 : vector<8x16xf32> to vector<1x8x16xf32>
    tpu.vector_store %arg26[%c0_91, %c0_92, %c0_93], %120 {strides = array<i32>} : memref<1x8x16xf32, #tpu.memory_space<vmem>>, vector<1x8x16xf32>,
    return
  }
  func.func @transform_0(%arg0: i32) -> (i32, i32) {
    %c0_i32 = arith.constant 0 : i32
    %c0_i32_0 = arith.constant 0 : i32
    %c0_i32_1 = arith.constant 0 : i32
    return %c0_i32, %c0_i32_0 : i32, i32
  }
  func.func @transform_1(%arg0: i32) -> (i32, i32, i32) {
    %c0_i32 = arith.constant 0 : i32
    %c0_i32_0 = arith.constant 0 : i32
    %c0_i32_1 = arith.constant 0 : i32
    return %arg0, %c0_i32, %c0_i32_0 : i32, i32, i32
  }
  func.func @transform_2(%arg0: i32) -> (i32, i32, i32) {
    %c0_i32 = arith.constant 0 : i32
    %c0_i32_0 = arith.constant 0 : i32
    %c0_i32_1 = arith.constant 0 : i32
    return %arg0, %c0_i32, %c0_i32_0 : i32, i32, i32
  }
  func.func @transform_3(%arg0: i32) -> (i32, i32, i32) {
    %c0_i32 = arith.constant 0 : i32
    %c0_i32_0 = arith.constant 0 : i32
    %c0_i32_1 = arith.constant 0 : i32
    return %arg0, %c0_i32, %c0_i32_0 : i32, i32, i32
  }
  func.func @transform_4(%arg0: i32) -> (i32, i32, i32) {
    %c0_i32 = arith.constant 0 : i32
    %c0_i32_0 = arith.constant 0 : i32
    %c0_i32_1 = arith.constant 0 : i32
    return %arg0, %c0_i32, %c0_i32_0 : i32, i32, i32
  }
  func.func @transform_5(%arg0: i32) -> (i32, i32, i32) {
    %c0_i32 = arith.constant 0 : i32
    %c0_i32_0 = arith.constant 0 : i32
    %c0_i32_1 = arith.constant 0 : i32
    return %arg0, %c0_i32, %c0_i32_0 : i32, i32, i32
  }
  func.func @transform_6(%arg0: i32) -> (i32, i32, i32) {
    %c0_i32 = arith.constant 0 : i32
    %c0_i32_0 = arith.constant 0 : i32
    %c0_i32_1 = arith.constant 0 : i32
    return %arg0, %c0_i32, %c0_i32_0 : i32, i32, i32
  }
  func.func @transform_7(%arg0: i32) -> (i32, i32, i32) {
    %c0_i32 = arith.constant 0 : i32
    %c0_i32_0 = arith.constant 0 : i32
    %c0_i32_1 = arith.constant 0 : i32
    return %arg0, %c0_i32, %c0_i32_0 : i32, i32, i32
  }
  func.func @transform_8(%arg0: i32) -> (i32, i32, i32) {
    %c0_i32 = arith.constant 0 : i32
    %c0_i32_0 = arith.constant 0 : i32
    %c0_i32_1 = arith.constant 0 : i32
    return %arg0, %c0_i32, %c0_i32_0 : i32, i32, i32
  }
  func.func @transform_9(%arg0: i32) -> (i32, i32, i32) {
    %c0_i32 = arith.constant 0 : i32
    %c0_i32_0 = arith.constant 0 : i32
    %c0_i32_1 = arith.constant 0 : i32
    return %arg0, %c0_i32, %c0_i32_0 : i32, i32, i32
  }
  func.func @transform_10(%arg0: i32) -> (i32, i32, i32) {
    %c0_i32 = arith.constant 0 : i32
    %c0_i32_0 = arith.constant 0 : i32
    %c0_i32_1 = arith.constant 0 : i32
    return %arg0, %c0_i32, %c0_i32_0 : i32, i32, i32
  }
  func.func @transform_11(%arg0: i32) -> (i32, i32, i32) {
    %c0_i32 = arith.constant 0 : i32
    %c0_i32_0 = arith.constant 0 : i32
    %c0_i32_1 = arith.constant 0 : i32
    return %arg0, %c0_i32, %c0_i32_0 : i32, i32, i32
  }
  func.func @transform_12(%arg0: i32) -> (i32, i32, i32) {
    %c0_i32 = arith.constant 0 : i32
    %c0_i32_0 = arith.constant 0 : i32
    %c0_i32_1 = arith.constant 0 : i32
    return %arg0, %c0_i32, %c0_i32_0 : i32, i32, i32
  }
  func.func @transform_13(%arg0: i32) -> (i32, i32, i32) {
    %c0_i32 = arith.constant 0 : i32
    %c0_i32_0 = arith.constant 0 : i32
    %c0_i32_1 = arith.constant 0 : i32
    return %arg0, %c0_i32, %c0_i32_0 : i32, i32, i32
  }
  func.func @transform_14(%arg0: i32) -> (i32, i32, i32) {
    %c0_i32 = arith.constant 0 : i32
    %c0_i32_0 = arith.constant 0 : i32
    %c0_i32_1 = arith.constant 0 : i32
    return %arg0, %c0_i32, %c0_i32_0 : i32, i32, i32
  }
  func.func @transform_15(%arg0: i32) -> (i32, i32, i32) {
    %c0_i32 = arith.constant 0 : i32
    %c0_i32_0 = arith.constant 0 : i32
    %c0_i32_1 = arith.constant 0 : i32
    return %arg0, %c0_i32, %c0_i32_0 : i32, i32, i32
  }
  func.func @transform_16(%arg0: i32) -> (i32, i32, i32) {
    %c0_i32 = arith.constant 0 : i32
    %c0_i32_0 = arith.constant 0 : i32
    %c0_i32_1 = arith.constant 0 : i32
    return %arg0, %c0_i32, %c0_i32_0 : i32, i32, i32
  }
  func.func @transform_17(%arg0: i32) -> (i32, i32, i32) {
    %c0_i32 = arith.constant 0 : i32
    %c0_i32_0 = arith.constant 0 : i32
    %c0_i32_1 = arith.constant 0 : i32
    return %arg0, %c0_i32, %c0_i32_0 : i32, i32, i32
  }
  func.func @transform_18(%arg0: i32) -> (i32, i32, i32) {
    %c0_i32 = arith.constant 0 : i32
    %c0_i32_0 = arith.constant 0 : i32
    %c0_i32_1 = arith.constant 0 : i32
    return %arg0, %c0_i32, %c0_i32_0 : i32, i32, i32
  }
  func.func @transform_19(%arg0: i32) -> (i32, i32, i32) {
    %c0_i32 = arith.constant 0 : i32
    %c0_i32_0 = arith.constant 0 : i32
    %c0_i32_1 = arith.constant 0 : i32
    return %arg0, %c0_i32, %c0_i32_0 : i32, i32, i32
  }
  func.func @transform_20(%arg0: i32) -> (i32, i32, i32) {
    %c0_i32 = arith.constant 0 : i32
    %c0_i32_0 = arith.constant 0 : i32
    %c0_i32_1 = arith.constant 0 : i32
    return %arg0, %c0_i32, %c0_i32_0 : i32, i32, i32
  }
  func.func @transform_21(%arg0: i32) -> (i32, i32, i32) {
    %c0_i32 = arith.constant 0 : i32
    %c0_i32_0 = arith.constant 0 : i32
    %c0_i32_1 = arith.constant 0 : i32
    return %arg0, %c0_i32, %c0_i32_0 : i32, i32, i32
  }
  func.func @transform_22(%arg0: i32) -> (i32, i32, i32) {
    %c0_i32 = arith.constant 0 : i32
    %c0_i32_0 = arith.constant 0 : i32
    %c0_i32_1 = arith.constant 0 : i32
    return %arg0, %c0_i32, %c0_i32_0 : i32, i32, i32
  }
  func.func @transform_23(%arg0: i32) -> (i32, i32, i32) {
    %c0_i32 = arith.constant 0 : i32
    %c0_i32_0 = arith.constant 0 : i32
    %c0_i32_1 = arith.constant 0 : i32
    return %arg0, %c0_i32, %c0_i32_0 : i32, i32, i32
  }
  func.func @transform_24(%arg0: i32) -> (i32, i32, i32) {
    %c0_i32 = arith.constant 0 : i32
    %c0_i32_0 = arith.constant 0 : i32
    %c0_i32_1 = arith.constant 0 : i32
    return %arg0, %c0_i32, %c0_i32_0 : i32, i32, i32
  }
  func.func @transform_25(%arg0: i32) -> (i32, i32, i32) {
    %c0_i32 = arith.constant 0 : i32
    %c0_i32_0 = arith.constant 0 : i32
    %c0_i32_1 = arith.constant 0 : i32
    return %arg0, %c0_i32, %c0_i32_0 : i32, i32, i32
  }
}

module attributes {stable_mosaic.version = 11 : i64} {
  func.func @_linear_prelu_kernel(%arg0: memref<24x16xf32, #tpu.memory_space<vmem>>, %arg1: memref<16x1xf32, #tpu.memory_space<vmem>>, %arg2: memref<1x1xf32, #tpu.memory_space<vmem>>, %arg3: memref<1x1xf32, #tpu.memory_space<vmem>>, %arg4: memref<24x1xf32, #tpu.memory_space<vmem>>) attributes {dimension_semantics = [], scalar_prefetch = 0 : i64, scratch_operands = 0 : i64, tpu.core_type = #tpu.core_type<tc>} {
    %c0 = arith.constant 0 : index
    %c0_0 = arith.constant 0 : index
    %0 = vector.load %arg0[%c0, %c0_0] : memref<24x16xf32, #tpu.memory_space<vmem>>, vector<24x16xf32>
    %c0_1 = arith.constant 0 : index
    %c0_2 = arith.constant 0 : index
    %1 = vector.load %arg1[%c0_1, %c0_2] : memref<16x1xf32, #tpu.memory_space<vmem>>, vector<16x1xf32>
    %cst = arith.constant dense<0.000000e+00> : vector<24x1xf32>
    %2 = tpu.matmul %0, %1, %cst {dimension_numbers = #tpu.dot_dimension_numbers<[1], [0], [0], [1], [0, 0, 1, 1], [], []>} : vector<24x16xf32>, vector<16x1xf32>, vector<24x1xf32> -> vector<24x1xf32>
    %c0_3 = arith.constant 0 : index
    %c0_4 = arith.constant 0 : index
    %3 = vector.load %arg2[%c0_3, %c0_4] : memref<1x1xf32, #tpu.memory_space<vmem>>, vector<1x1xf32>
    %4 = vector.broadcast %3 : vector<1x1xf32> to vector<24x1xf32>
    %5 = arith.addf %2, %4 : vector<24x1xf32>
    %cst_5 = arith.constant 0.000000e+00 : f32
    %6 = vector.broadcast %cst_5 : f32 to vector<24x1xf32>
    %7 = arith.cmpf oge, %5, %6 : vector<24x1xf32>
    %c0_6 = arith.constant 0 : index
    %c0_7 = arith.constant 0 : index
    %8 = vector.load %arg3[%c0_6, %c0_7] : memref<1x1xf32, #tpu.memory_space<vmem>>, vector<1x1xf32>
    %9 = vector.broadcast %8 : vector<1x1xf32> to vector<24x1xf32>
    %10 = arith.mulf %9, %5 : vector<24x1xf32>
    %11 = arith.select %7, %5, %10 : vector<24x1xi1>, vector<24x1xf32>
    %c0_8 = arith.constant 0 : index
    %c0_9 = arith.constant 0 : index
    %12 = vector.load %arg4[%c0_8, %c0_9] : memref<24x1xf32, #tpu.memory_space<vmem>>, vector<24x1xf32>
    tpu.vector_store %arg4[%c0_8, %c0_9], %11 {strides = array<i32>} : memref<24x1xf32, #tpu.memory_space<vmem>>, vector<24x1xf32>,
    return
  }
}

</mosaic_0001>

<llo_original>
// kernel: gnn_forward.8
$region0: #{gnn_forward.8}
  #allocation0 [shape = 'u32[]', space=smem, size = 0x4, offset = 0x4, fixed_abs, tag = 'smem constant byte address 0x4 - core index']
  #allocation1 [shape = 'u32[144,128]{1,0:T(1,128)}', space=vmem, size = 0x12000, scoped, tag = 'internal scratch']
  %s0 = inlined_call_operand.vmem [shape: f32[7,12,8], index: 0, kind: input, shape index: {}]
  %s1 = inlined_call_operand.vmem [shape: f32[7,8,32], index: 1, kind: input, shape index: {}]
  %s2 = inlined_call_operand.vmem [shape: f32[7,1,32], index: 2, kind: input, shape index: {}]
  %s3 = inlined_call_operand.vmem [shape: f32[7,1,32], index: 3, kind: input, shape index: {}]
  %s4 = inlined_call_operand.vmem [shape: f32[7,1,32], index: 4, kind: input, shape index: {}]
  %s5 = inlined_call_operand.vmem [shape: f32[7,12,32], index: 5, kind: output, shape index: {}]
  %s6 = sld [smem:[#allocation0]]
  $region53: #{gnn_forward.8} parent=0
    _
  %s8 = ssub.s32 1, %s6
  %s9 = scalar_select 0, %s8, %s6
  loop: start=0, step=1, limit=9
  $region2: #{gnn_forward.8} parent=0 // loop_pre_header
    _
  $region3: #{gnn_forward.8} parent=0 // loop_header
    %s11 = sphi 0, %s15
    %p12 = scmp.ge.s32.totalorder %s11, 9
    %s21 = sphi 0, %s23
    %s24 = sphi 0, %s21
    %s25 = sphi 0, %s24
    %s41 = sphi 0, %s25
    %s47 = sphi 0, %s49
    %s50 = sphi 0, %s47
    %s51 = sphi 0, %s50
    %s67 = sphi 0, %s51
    %s73 = sphi 0, %s75
    %s76 = sphi 0, %s73
    %s77 = sphi 0, %s76
    %s93 = sphi 0, %s77
    %s99 = sphi 0, %s101
    %s102 = sphi 0, %s99
    %s103 = sphi 0, %s102
    %s119 = sphi 0, %s103
    %s125 = sphi 0, %s127
    %s128 = sphi 0, %s125
    %s129 = sphi 0, %s128
    %s145 = sphi 0, %s129
    %s151 = sphi 0, %s153
    %s154 = sphi 0, %s151
    %s155 = sphi 0, %s154
    %s171 = sphi 0, %s155
  $region4: #{gnn_forward.8} parent=0 // loop_header_branch
    %14 = sbr.rel (%p12) target = $region8
  $region5: #{gnn_forward.8} parent=0 // loop_body
    %s16 = ssub.s32 %s11, 1
    %s17 = ssub.s32 %s11, 2
    %s18 = sadd.s32 %s11, 1
    %s19 = ssub.s32 %s11, %s18
    %p20 = scmp.eq.s32.totalorder %s19, 0
    %s22 = sadd.s32 %s21, 1
    %s23 = scalar_select %p20, %s21, %s22
    %p26 = pneg %p20
    %p27 = scmp.eq.s32.totalorder %s11, 6
    %p28 = por %p26, %p27
    %p29 = scmp.ne.s32.totalorder %s21, %s24
    %p30 = scmp.eq.s32.totalorder %s11, 0
    %p31 = por %p29, %p30
    %p32 = scmp.ne.s32.totalorder %s21, %s24
    %p33 = scmp.eq.s32.totalorder %s16, 6
    %p34 = por %p32, %p33
    %p35 = scmp.ne.s32.totalorder %s24, %s25
    %p36 = scmp.eq.s32.totalorder %s16, 0
    %p37 = por %p35, %p36
    %p38 = scmp.ne.s32.totalorder %s24, %s25
    %p39 = scmp.eq.s32.totalorder %s17, 6
    %p40 = por %p38, %p39
    %p42 = scmp.ne.s32.totalorder %s25, %s41
    %p43 = scmp.eq.s32.totalorder %s17, 0
    %p44 = por %p42, %p43
    %s45 = ssub.s32 %s11, %s18
    %p46 = scmp.eq.s32.totalorder %s45, 0
    %s48 = sadd.s32 %s47, 1
    %s49 = scalar_select %p46, %s47, %s48
    %p52 = pneg %p46
    %p53 = scmp.eq.s32.totalorder %s11, 6
    %p54 = por %p52, %p53
    %p55 = scmp.ne.s32.totalorder %s47, %s50
    %p56 = scmp.eq.s32.totalorder %s11, 0
    %p57 = por %p55, %p56
    %p58 = scmp.ne.s32.totalorder %s47, %s50
    %p59 = scmp.eq.s32.totalorder %s16, 6
    %p60 = por %p58, %p59
    %p61 = scmp.ne.s32.totalorder %s50, %s51
    %p62 = scmp.eq.s32.totalorder %s16, 0
    %p63 = por %p61, %p62
    %p64 = scmp.ne.s32.totalorder %s50, %s51
    %p65 = scmp.eq.s32.totalorder %s17, 6
    %p66 = por %p64, %p65
    %p68 = scmp.ne.s32.totalorder %s51, %s67
    %p69 = scmp.eq.s32.totalorder %s17, 0
    %p70 = por %p68, %p69
    %s71 = ssub.s32 %s11, %s18
    %p72 = scmp.eq.s32.totalorder %s71, 0
    %s74 = sadd.s32 %s73, 1
    %s75 = scalar_select %p72, %s73, %s74
    %p78 = pneg %p72
    %p79 = scmp.eq.s32.totalorder %s11, 6
    %p80 = por %p78, %p79
    %p81 = scmp.ne.s32.totalorder %s73, %s76
    %p82 = scmp.eq.s32.totalorder %s11, 0
    %p83 = por %p81, %p82
    %p84 = scmp.ne.s32.totalorder %s73, %s76
    %p85 = scmp.eq.s32.totalorder %s16, 6
    %p86 = por %p84, %p85
    %p87 = scmp.ne.s32.totalorder %s76, %s77
    %p88 = scmp.eq.s32.totalorder %s16, 0
    %p89 = por %p87, %p88
    %p90 = scmp.ne.s32.totalorder %s76, %s77
    %p91 = scmp.eq.s32.totalorder %s17, 6
    %p92 = por %p90, %p91
    %p94 = scmp.ne.s32.totalorder %s77, %s93
    %p95 = scmp.eq.s32.totalorder %s17, 0
    %p96 = por %p94, %p95
    %s97 = ssub.s32 %s11, %s18
    %p98 = scmp.eq.s32.totalorder %s97, 0
    %s100 = sadd.s32 %s99, 1
    %s101 = scalar_select %p98, %s99, %s100
    %p104 = pneg %p98
    %p105 = scmp.eq.s32.totalorder %s11, 6
    %p106 = por %p104, %p105
    %p107 = scmp.ne.s32.totalorder %s99, %s102
    %p108 = scmp.eq.s32.totalorder %s11, 0
    %p109 = por %p107, %p108
    %p110 = scmp.ne.s32.totalorder %s99, %s102
    %p111 = scmp.eq.s32.totalorder %s16, 6
    %p112 = por %p110, %p111
    %p113 = scmp.ne.s32.totalorder %s102, %s103
    %p114 = scmp.eq.s32.totalorder %s16, 0
    %p115 = por %p113, %p114
    %p116 = scmp.ne.s32.totalorder %s102, %s103
    %p117 = scmp.eq.s32.totalorder %s17, 6
    %p118 = por %p116, %p117
    %p120 = scmp.ne.s32.totalorder %s103, %s119
    %p121 = scmp.eq.s32.totalorder %s17, 0
    %p122 = por %p120, %p121
    %s123 = ssub.s32 %s11, %s18
    %p124 = scmp.eq.s32.totalorder %s123, 0
    %s126 = sadd.s32 %s125, 1
    %s127 = scalar_select %p124, %s125, %s126
    %p130 = pneg %p124
    %p131 = scmp.eq.s32.totalorder %s11, 6
    %p132 = por %p130, %p131
    %p133 = scmp.ne.s32.totalorder %s125, %s128
    %p134 = scmp.eq.s32.totalorder %s11, 0
    %p135 = por %p133, %p134
    %p136 = scmp.ne.s32.totalorder %s125, %s128
    %p137 = scmp.eq.s32.totalorder %s16, 6
    %p138 = por %p136, %p137
    %p139 = scmp.ne.s32.totalorder %s128, %s129
    %p140 = scmp.eq.s32.totalorder %s16, 0
    %p141 = por %p139, %p140
    %p142 = scmp.ne.s32.totalorder %s128, %s129
    %p143 = scmp.eq.s32.totalorder %s17, 6
    %p144 = por %p142, %p143
    %p146 = scmp.ne.s32.totalorder %s129, %s145
    %p147 = scmp.eq.s32.totalorder %s17, 0
    %p148 = por %p146, %p147
    %s149 = ssub.s32 %s11, %s18
    %p150 = scmp.eq.s32.totalorder %s149, 0
    %s152 = sadd.s32 %s151, 1
    %s153 = scalar_select %p150, %s151, %s152
    %p156 = pneg %p150
    %p157 = scmp.eq.s32.totalorder %s11, 6
    %p158 = por %p156, %p157
    %p159 = scmp.ne.s32.totalorder %s151, %s154
    %p160 = scmp.eq.s32.totalorder %s11, 0
    %p161 = por %p159, %p160
    %p162 = scmp.ne.s32.totalorder %s151, %s154
    %p163 = scmp.eq.s32.totalorder %s16, 6
    %p164 = por %p162, %p163
    %p165 = scmp.ne.s32.totalorder %s154, %s155
    %p166 = scmp.eq.s32.totalorder %s16, 0
    %p167 = por %p165, %p166
    %p168 = scmp.ne.s32.totalorder %s154, %s155
    %p169 = scmp.eq.s32.totalorder %s17, 6
    %p170 = por %p168, %p169
    %p172 = scmp.ne.s32.totalorder %s155, %s171
    %p173 = scmp.eq.s32.totalorder %s17, 0
    %p174 = por %p172, %p173
    %p175 = scmp.le.s32.totalorder 1, %s11
    %p176 = scmp.lt.s32.totalorder %s11, 8
    %p177 = pnand %p175, %p176
    %p178 = pneg %p177
    // Predicated region
    $region9: #{gnn_forward.8} parent=5 // pred_check
      _
    $region10: #{gnn_forward.8} parent=5 // pred_check_branch
      %180 = sbr.rel (%p177) target = $region12
    $region11: #{gnn_forward.8} parent=5 // pred_region
      %s181 = ssub.s32 %s11, 1
    $region12: #{gnn_forward.8} parent=5 // pred_fallthru
      _
    %p182 = scmp.lt.s32.totalorder %s11, 7
    // Predicated region
    $region13: #{gnn_forward.8} parent=5 // pred_check
      %p183 = pneg %p182
    $region14: #{gnn_forward.8} parent=5 // pred_check_branch
      %185 = sbr.rel (%p183) target = $region16
    $region15: #{gnn_forward.8} parent=5 // pred_region
      // Predicated region
      $region17: #{gnn_forward.8} parent=15 // pred_check
        %p186 = pneg %p31
      $region18: #{gnn_forward.8} parent=15 // pred_check_branch
        %188 = sbr.rel (%p186) target = $region20
      $region19: #{gnn_forward.8} parent=15 // pred_region
        %p189 = scmp.lt.s32.totalorder %s11, 6
        %s190 = scalar_select %p189, %s11, 6
        %s191 = smul.addr %s190, 2
        %s192 = smul.addr %s191, 8
        %s193 = scalar_lea.vmem %s0, %s192
      $region20: #{gnn_forward.8} parent=15 // pred_fallthru
        _
      // Predicated region
      $region21: #{gnn_forward.8} parent=15 // pred_check
        %p194 = pneg %p57
      $region22: #{gnn_forward.8} parent=15 // pred_check_branch
        %196 = sbr.rel (%p194) target = $region24
      $region23: #{gnn_forward.8} parent=15 // pred_region
        %p197 = scmp.lt.s32.totalorder %s11, 6
        %s198 = scalar_select %p197, %s11, 6
        %s199 = smul.addr %s198, 8
        %s200 = scalar_lea.vmem %s1, %s199
      $region24: #{gnn_forward.8} parent=15 // pred_fallthru
        _
      // Predicated region
      $region25: #{gnn_forward.8} parent=15 // pred_check
        %p201 = pneg %p83
      $region26: #{gnn_forward.8} parent=15 // pred_check_branch
        %203 = sbr.rel (%p201) target = $region28
      $region27: #{gnn_forward.8} parent=15 // pred_region
        %p204 = scmp.lt.s32.totalorder %s11, 6
        %s205 = scalar_select %p204, %s11, 6
        %s206 = scalar_lea.vmem %s2, %s205
      $region28: #{gnn_forward.8} parent=15 // pred_fallthru
        _
      // Predicated region
      $region29: #{gnn_forward.8} parent=15 // pred_check
        %p207 = pneg %p109
      $region30: #{gnn_forward.8} parent=15 // pred_check_branch
        %209 = sbr.rel (%p207) target = $region32
      $region31: #{gnn_forward.8} parent=15 // pred_region
        %p210 = scmp.lt.s32.totalorder %s11, 6
        %s211 = scalar_select %p210, %s11, 6
        %s212 = scalar_lea.vmem %s3, %s211
      $region32: #{gnn_forward.8} parent=15 // pred_fallthru
        _
      // Predicated region
      $region33: #{gnn_forward.8} parent=15 // pred_check
        %p213 = pneg %p135
      $region34: #{gnn_forward.8} parent=15 // pred_check_branch
        %215 = sbr.rel (%p213) target = $region36
      $region35: #{gnn_forward.8} parent=15 // pred_region
        %p216 = scmp.lt.s32.totalorder %s11, 6
        %s217 = scalar_select %p216, %s11, 6
        %s218 = scalar_lea.vmem %s4, %s217
      $region36: #{gnn_forward.8} parent=15 // pred_fallthru
        _
    $region16: #{gnn_forward.8} parent=5 // pred_fallthru
      _
    %p219 = scmp.le.s32.totalorder 1, %s11
    %p220 = scmp.lt.s32.totalorder %s11, 8
    %p221 = pnand %p219, %p220
    %p222 = pneg %p221
    // Predicated region
    $region37: #{gnn_forward.8} parent=5 // pred_check
      _
    $region38: #{gnn_forward.8} parent=5 // pred_check_branch
      %224 = sbr.rel (%p221) target = $region40
    $region39: #{gnn_forward.8} parent=5 // pred_region
      %s225 = ssub.s32 %s11, 1
      %p226 = scmp.lt.s32.totalorder %s16, 6
      %s227 = scalar_select %p226, %s16, 6
      %s228 = smul.addr %s227, 2
      %s229 = smul.addr %s228, 8
      %s230 = scalar_lea.vmem %s0, %s229
      %p231 = pneg %p37
      %p232 = pneg %p34
      %p233 = scmp.lt.s32.totalorder %s16, 6
      %s234 = scalar_select %p233, %s16, 6
      %s235 = smul.addr %s234, 8
      %s236 = scalar_lea.vmem %s1, %s235
      %p237 = pneg %p63
      %p238 = pneg %p60
      %p239 = scmp.lt.s32.totalorder %s16, 6
      %s240 = scalar_select %p239, %s16, 6
      %s241 = scalar_lea.vmem %s2, %s240
      %p242 = pneg %p89
      %p243 = pneg %p86
      %p244 = scmp.lt.s32.totalorder %s16, 6
      %s245 = scalar_select %p244, %s16, 6
      %s246 = scalar_lea.vmem %s3, %s245
      %p247 = pneg %p115
      %p248 = pneg %p112
      %p249 = scmp.lt.s32.totalorder %s16, 6
      %s250 = scalar_select %p249, %s16, 6
      %s251 = scalar_lea.vmem %s4, %s250
      %p252 = pneg %p141
      %p253 = pneg %p138
      %p254 = pneg %p167
      %p255 = pneg %p164
      %p256 = scmp.lt.s32.totalorder %s16, 6
      %s257 = scalar_select %p256, %s16, 6
      %s258 = smul.addr %s257, 2
      %s259 = smul.addr %s258, 8
      %s260 = scalar_lea.vmem %s5, %s259
      %p261 = scmp.lt.s32.totalorder %s16, 6
      %s262 = scalar_select %p261, %s16, 6
      %s263 = smul.addr %s262, 2
      %s264 = smul.addr %s263, 8
      %s265 = scalar_lea.vmem %s0, %s264
      %p266 = scmp.lt.s32.totalorder %s16, 6
      %s267 = scalar_select %p266, %s16, 6
      %s268 = smul.addr %s267, 8
      %s269 = scalar_lea.vmem %s1, %s268
      %p270 = scmp.lt.s32.totalorder %s16, 6
      %s271 = scalar_select %p270, %s16, 6
      %s272 = scalar_lea.vmem %s2, %s271
      %p273 = scmp.lt.s32.totalorder %s16, 6
      %s274 = scalar_select %p273, %s16, 6
      %s275 = scalar_lea.vmem %s3, %s274
      %p276 = scmp.lt.s32.totalorder %s16, 6
      %s277 = scalar_select %p276, %s16, 6
      %s278 = scalar_lea.vmem %s4, %s277
      %p279 = scmp.lt.s32.totalorder %s16, 6
      %s280 = scalar_select %p279, %s16, 6
      %s281 = smul.addr %s280, 2
      %s282 = smul.addr %s281, 8
      %s283 = scalar_lea.vmem %s5, %s282
      %v284 = vld [vmem:[%s265] sm:$0xff]
      %v285 = vld [vmem:[%s265 + $0x8] sm:$0xf]
      %v286 = vld [vmem:[%s269] sm:$0xff]
      %v287 = vld [vmem:[%s272] sm:$0x1]
      %v289 = vlaneseq
      %v290 = vshrl.u32 %v289, 7
      %v291 = vsub.s32 0, %v290
      %v292 = vrot.slane %v287, %v291
      %vm294 = vcmask 64512
      %v296 = vsel %vm294, %v284, 0
      %v299 = vsel %vm294, %v285, 0
      %301 = vmatprep.subr.mxu0 0.0
      %302 = vmatpush1.msra.mxu0 %v286
      %303 = vmatprep.subr.mxu0 0.0
      %304 = vmatpush1.msra.mxu0 0.0
      %305 = vmatprep.subr.mxu0 0.0
      %306 = vmatpush1.msra.mxu0 0.0
      %307 = vmatprep.subr.mxu0 0.0
      %308 = vmatpush1.msra.mxu0 0.0
      %309 = vmatprep.subr.mxu0 0.0
      %310 = vmatpush1.msra.mxu0 0.0
      %311 = vmatprep.subr.mxu0 0.0
      %312 = vmatpush1.msra.mxu0 0.0
      %313 = vmatprep.subr.mxu0 0.0
      %314 = vmatpush1.msra.mxu0 0.0
      %315 = vmatprep.subr.mxu0 0.0
      %316 = vmatpush1.msra.mxu0 0.0
      %317 = vmatprep.subr.mxu0 0.0
      %318 = vmatpush1.msra.mxu0 0.0
      %319 = vmatprep.subr.mxu0 0.0
      %320 = vmatpush1.msra.mxu0 0.0
      %321 = vmatprep.subr.mxu0 0.0
      %322 = vmatpush1.msra.mxu0 0.0
      %323 = vmatprep.subr.mxu0 0.0
      %324 = vmatpush1.msra.mxu0 0.0
      %325 = vmatprep.subr.mxu0 0.0
      %326 = vmatpush1.msra.mxu0 0.0
      %327 = vmatprep.subr.mxu0 0.0
      %328 = vmatpush1.msra.mxu0 0.0
      %329 = vmatprep.subr.mxu0 0.0
      %330 = vmatpush1.msra.mxu0 0.0
      %331 = vmatprep.subr.mxu0 0.0
      %332 = vmatpush1.msra.mxu0 0.0
      %333 = vmatprep.subr.mxu0 0.0
      %334 = vmatpush1.msra.mxu0 0.0
      %335 = vmatprep.subr.mxu0 0.0
      %336 = vmatpush1.msra.mxu0 0.0
      %337 = vmatprep.subr.mxu0 0.0
      %338 = vmatpush1.msra.mxu0 0.0
      %339 = vmatprep.subr.mxu0 0.0
      %340 = vmatpush1.msra.mxu0 0.0
      %341 = vmatprep.subr.mxu0 0.0
      %342 = vmatpush1.msra.mxu0 0.0
      %343 = vmatprep.subr.mxu0 0.0
      %344 = vmatpush1.msra.mxu0 0.0
      %345 = vmatprep.subr.mxu0 0.0
      %346 = vmatpush1.msra.mxu0 0.0
      %347 = vmatprep.subr.mxu0 0.0
      %348 = vmatpush1.msra.mxu0 0.0
      %349 = vmatprep.subr.mxu0 0.0
      %350 = vmatpush1.msra.mxu0 0.0
      %351 = vmatprep.subr.mxu0 0.0
      %352 = vmatpush1.msra.mxu0 0.0
      %353 = vmatprep.subr.mxu0 0.0
      %354 = vmatpush1.msra.mxu0 0.0
      %355 = vmatprep.subr.mxu0 0.0
      %356 = vmatpush1.msra.mxu0 0.0
      %357 = vmatprep.subr.mxu0 0.0
      %358 = vmatpush1.msra.mxu0 0.0
      %359 = vmatprep.subr.mxu0 0.0
      %360 = vmatpush1.msra.mxu0 0.0
      %361 = vmatprep.subr.mxu0 0.0
      %362 = vmatpush1.msra.mxu0 0.0
      %363 = vmatprep.subr.mxu0 0.0
      %364 = vmatpush1.msra.mxu0 0.0
      %365 = vmatprep.mubr.f32.mxu0 0.0
      %366 = vmatmul.mubr.f32.gmra.mrb[0].mxu0 %v296
      %v367 = vpop.f32.mrb[0].mxu0
      %v368 = vadd.f32 %v292, %v367
      %v369 = vpop.f32.mrb[0].mxu0
      %370 = vmatprep.mubr.f32.mxu0 0.0
      %371 = vmatmul.mubr.f32.gmra.mrb[0].mxu0 %v299
      %v372 = vpop.f32.mrb[0].mxu0
      %v373 = vadd.f32 %v292, %v372
      %v374 = vpop.f32.mrb[0].mxu0
      %375 = vdwg.mxu0
      %vm376 = vcmask 261120
      %v377 = vsel %vm376, %v368, 0.0
      %vm378 = vcmask 257024
      %v379 = vsel %vm378, %v373, 0.0
      %v380 = vadd.f32 %v377, %v379
      %v381 = vrot.slane %v380, 4
      %v382 = vadd.f32 %v380, %v381
      %v383 = vrot.slane %v382, 2
      %v384 = vadd.f32 %v382, %v383
      %v385 = vrot.slane %v384, 1
      %v386 = vadd.f32 %v384, %v385
      %v387 = vrcp.pop 12.0
      %v388 = vmul.f32 %v386, %v387
      %v389 = vsub.f32 %v368, %v388
      %v390 = vsub.f32 %v373, %v388
      %v391 = vmul.f32 %v389, %v389
      %v392 = vmul.f32 %v390, %v390
      %v393 = vsel %vm376, %v391, 0.0
      %v394 = vsel %vm378, %v392, 0.0
      %v395 = vadd.f32 %v393, %v394
      %v396 = vrot.slane %v395, 4
      %v397 = vadd.f32 %v395, %v396
      %v398 = vrot.slane %v397, 2
      %v399 = vadd.f32 %v397, %v398
      %v400 = vrot.slane %v399, 1
      %v401 = vadd.f32 %v399, %v400
      %v402 = vmul.f32 %v401, %v387
      %v403 = vadd.f32 %v402, 1e-05
      %v404 = vrsqrt.pop %v403
      %v405 = vmul.f32 %v389, %v404
      %v406 = vmul.f32 %v390, %v404
      %v407 = vld [vmem:[%s275] sm:$0x1]
      %v409 = vlaneseq
      %v410 = vshrl.u32 %v409, 7
      %v411 = vsub.s32 0, %v410
      %v412 = vrot.slane %v407, %v411
      %v414 = vmul.f32 %v405, %v412
      %v415 = vmul.f32 %v406, %v412
      %v416 = vld [vmem:[%s278] sm:$0x1]
      %v418 = vlaneseq
      %v419 = vshrl.u32 %v418, 7
      %v420 = vsub.s32 0, %v419
      %v421 = vrot.slane %v416, %v420
      %v423 = vadd.f32 %v414, %v421
      %v424 = vadd.f32 %v415, %v421
      %v425 = vmax.f32 %v423, 0.0
      %v426 = vmax.f32 %v424, 0.0
      %427 = vst.msk [vmem:[%s283] sm:$0xff] %vm376, %v425
      %428 = vst.msk [vmem:[%s283 + $0x8] sm:$0xf] %vm378, %v426
      %p429 = scmp.lt.s32.totalorder %s16, 6
      %s430 = scalar_select %p429, %s16, 6
      %s431 = smul.addr %s430, 2
      %s432 = smul.addr %s431, 8
      %s433 = scalar_lea.vmem %s5, %s432
      // Predicated region
      $region41: #{gnn_forward.8} parent=39 // pred_check
        %p434 = pneg %p164
      $region42: #{gnn_forward.8} parent=39 // pred_check_branch
        %436 = sbr.rel (%p434) target = $region44
      $region43: #{gnn_forward.8} parent=39 // pred_region
        _
      $region44: #{gnn_forward.8} parent=39 // pred_fallthru
        _
    $region40: #{gnn_forward.8} parent=5 // pred_fallthru
      _
    %p437 = scmp.le.s32.totalorder 2, %s11
    // Predicated region
    $region45: #{gnn_forward.8} parent=5 // pred_check
      %p438 = pneg %p437
    $region46: #{gnn_forward.8} parent=5 // pred_check_branch
      %440 = sbr.rel (%p438) target = $region48
    $region47: #{gnn_forward.8} parent=5 // pred_region
      %s441 = ssub.s32 %s11, 2
      // Predicated region
      $region49: #{gnn_forward.8} parent=47 // pred_check
        %p442 = pneg %p170
      $region50: #{gnn_forward.8} parent=47 // pred_check_branch
        %444 = sbr.rel (%p442) target = $region52
      $region51: #{gnn_forward.8} parent=47 // pred_region
        %p445 = scmp.lt.s32.totalorder %s17, 6
        %s446 = scalar_select %p445, %s17, 6
        %s447 = smul.addr %s446, 2
        %s448 = smul.addr %s447, 8
        %s449 = scalar_lea.vmem %s5, %s448
      $region52: #{gnn_forward.8} parent=47 // pred_fallthru
        _
    $region48: #{gnn_forward.8} parent=5 // pred_fallthru
      _
  $region6: #{gnn_forward.8} parent=0 // loop_footer
    %s15 = sadd.s32 1, %s11
  $region7: #{gnn_forward.8} parent=0 // loop_footer_branch
    %10 = sbr.rel target = $region3
  $region8: #{gnn_forward.8} parent=0 // loop_exit
    _

// kernel: gnn_forward.7
$region0: #{gnn_forward.7}
  #allocation0 [shape = 'u32[]', space=smem, size = 0x4, offset = 0x4, fixed_abs, tag = 'smem constant byte address 0x4 - core index']
  #allocation1 [shape = 'u32[144,128]{1,0:T(1,128)}', space=vmem, size = 0x12000, scoped, tag = 'internal scratch']
  %s0 = inlined_call_operand.vmem [shape: f32[3,8,14], index: 0, kind: input, shape index: {}]
  %s1 = inlined_call_operand.vmem [shape: f32[3,14,32], index: 1, kind: input, shape index: {}]
  %s2 = inlined_call_operand.vmem [shape: f32[3,1,32], index: 2, kind: input, shape index: {}]
  %s3 = inlined_call_operand.vmem [shape: f32[3,1,32], index: 3, kind: input, shape index: {}]
  %s4 = inlined_call_operand.vmem [shape: f32[3,1,32], index: 4, kind: input, shape index: {}]
  %s5 = inlined_call_operand.vmem [shape: f32[3,8,1], index: 5, kind: input, shape index: {}]
  %s6 = inlined_call_operand.vmem [shape: f32[3,1,1], index: 6, kind: input, shape index: {}]
  %s7 = inlined_call_operand.vmem [shape: f32[3,8,32], index: 7, kind: output, shape index: {}]
  %s8 = sld [smem:[#allocation0]]
  $region61: #{gnn_forward.7} parent=0
    _
  %s10 = ssub.s32 1, %s8
  %s11 = scalar_select 0, %s10, %s8
  loop: start=0, step=1, limit=5
  $region2: #{gnn_forward.7} parent=0 // loop_pre_header
    _
  $region3: #{gnn_forward.7} parent=0 // loop_header
    %s13 = sphi 0, %s17
    %p14 = scmp.ge.s32.totalorder %s13, 5
    %s23 = sphi 0, %s25
    %s26 = sphi 0, %s23
    %s27 = sphi 0, %s26
    %s43 = sphi 0, %s27
    %s49 = sphi 0, %s51
    %s52 = sphi 0, %s49
    %s53 = sphi 0, %s52
    %s69 = sphi 0, %s53
    %s75 = sphi 0, %s77
    %s78 = sphi 0, %s75
    %s79 = sphi 0, %s78
    %s95 = sphi 0, %s79
    %s101 = sphi 0, %s103
    %s104 = sphi 0, %s101
    %s105 = sphi 0, %s104
    %s121 = sphi 0, %s105
    %s127 = sphi 0, %s129
    %s130 = sphi 0, %s127
    %s131 = sphi 0, %s130
    %s147 = sphi 0, %s131
    %s153 = sphi 0, %s155
    %s156 = sphi 0, %s153
    %s157 = sphi 0, %s156
    %s173 = sphi 0, %s157
    %s179 = sphi 0, %s181
    %s182 = sphi 0, %s179
    %s183 = sphi 0, %s182
    %s199 = sphi 0, %s183
    %s205 = sphi 0, %s207
    %s208 = sphi 0, %s205
    %s209 = sphi 0, %s208
    %s225 = sphi 0, %s209
  $region4: #{gnn_forward.7} parent=0 // loop_header_branch
    %16 = sbr.rel (%p14) target = $region8
  $region5: #{gnn_forward.7} parent=0 // loop_body
    %s18 = ssub.s32 %s13, 1
    %s19 = ssub.s32 %s13, 2
    %s20 = sadd.s32 %s13, 1
    %s21 = ssub.s32 %s13, %s20
    %p22 = scmp.eq.s32.totalorder %s21, 0
    %s24 = sadd.s32 %s23, 1
    %s25 = scalar_select %p22, %s23, %s24
    %p28 = pneg %p22
    %p29 = scmp.eq.s32.totalorder %s13, 2
    %p30 = por %p28, %p29
    %p31 = scmp.ne.s32.totalorder %s23, %s26
    %p32 = scmp.eq.s32.totalorder %s13, 0
    %p33 = por %p31, %p32
    %p34 = scmp.ne.s32.totalorder %s23, %s26
    %p35 = scmp.eq.s32.totalorder %s18, 2
    %p36 = por %p34, %p35
    %p37 = scmp.ne.s32.totalorder %s26, %s27
    %p38 = scmp.eq.s32.totalorder %s18, 0
    %p39 = por %p37, %p38
    %p40 = scmp.ne.s32.totalorder %s26, %s27
    %p41 = scmp.eq.s32.totalorder %s19, 2
    %p42 = por %p40, %p41
    %p44 = scmp.ne.s32.totalorder %s27, %s43
    %p45 = scmp.eq.s32.totalorder %s19, 0
    %p46 = por %p44, %p45
    %s47 = ssub.s32 %s13, %s20
    %p48 = scmp.eq.s32.totalorder %s47, 0
    %s50 = sadd.s32 %s49, 1
    %s51 = scalar_select %p48, %s49, %s50
    %p54 = pneg %p48
    %p55 = scmp.eq.s32.totalorder %s13, 2
    %p56 = por %p54, %p55
    %p57 = scmp.ne.s32.totalorder %s49, %s52
    %p58 = scmp.eq.s32.totalorder %s13, 0
    %p59 = por %p57, %p58
    %p60 = scmp.ne.s32.totalorder %s49, %s52
    %p61 = scmp.eq.s32.totalorder %s18, 2
    %p62 = por %p60, %p61
    %p63 = scmp.ne.s32.totalorder %s52, %s53
    %p64 = scmp.eq.s32.totalorder %s18, 0
    %p65 = por %p63, %p64
    %p66 = scmp.ne.s32.totalorder %s52, %s53
    %p67 = scmp.eq.s32.totalorder %s19, 2
    %p68 = por %p66, %p67
    %p70 = scmp.ne.s32.totalorder %s53, %s69
    %p71 = scmp.eq.s32.totalorder %s19, 0
    %p72 = por %p70, %p71
    %s73 = ssub.s32 %s13, %s20
    %p74 = scmp.eq.s32.totalorder %s73, 0
    %s76 = sadd.s32 %s75, 1
    %s77 = scalar_select %p74, %s75, %s76
    %p80 = pneg %p74
    %p81 = scmp.eq.s32.totalorder %s13, 2
    %p82 = por %p80, %p81
    %p83 = scmp.ne.s32.totalorder %s75, %s78
    %p84 = scmp.eq.s32.totalorder %s13, 0
    %p85 = por %p83, %p84
    %p86 = scmp.ne.s32.totalorder %s75, %s78
    %p87 = scmp.eq.s32.totalorder %s18, 2
    %p88 = por %p86, %p87
    %p89 = scmp.ne.s32.totalorder %s78, %s79
    %p90 = scmp.eq.s32.totalorder %s18, 0
    %p91 = por %p89, %p90
    %p92 = scmp.ne.s32.totalorder %s78, %s79
    %p93 = scmp.eq.s32.totalorder %s19, 2
    %p94 = por %p92, %p93
    %p96 = scmp.ne.s32.totalorder %s79, %s95
    %p97 = scmp.eq.s32.totalorder %s19, 0
    %p98 = por %p96, %p97
    %s99 = ssub.s32 %s13, %s20
    %p100 = scmp.eq.s32.totalorder %s99, 0
    %s102 = sadd.s32 %s101, 1
    %s103 = scalar_select %p100, %s101, %s102
    %p106 = pneg %p100
    %p107 = scmp.eq.s32.totalorder %s13, 2
    %p108 = por %p106, %p107
    %p109 = scmp.ne.s32.totalorder %s101, %s104
    %p110 = scmp.eq.s32.totalorder %s13, 0
    %p111 = por %p109, %p110
    %p112 = scmp.ne.s32.totalorder %s101, %s104
    %p113 = scmp.eq.s32.totalorder %s18, 2
    %p114 = por %p112, %p113
    %p115 = scmp.ne.s32.totalorder %s104, %s105
    %p116 = scmp.eq.s32.totalorder %s18, 0
    %p117 = por %p115, %p116
    %p118 = scmp.ne.s32.totalorder %s104, %s105
    %p119 = scmp.eq.s32.totalorder %s19, 2
    %p120 = por %p118, %p119
    %p122 = scmp.ne.s32.totalorder %s105, %s121
    %p123 = scmp.eq.s32.totalorder %s19, 0
    %p124 = por %p122, %p123
    %s125 = ssub.s32 %s13, %s20
    %p126 = scmp.eq.s32.totalorder %s125, 0
    %s128 = sadd.s32 %s127, 1
    %s129 = scalar_select %p126, %s127, %s128
    %p132 = pneg %p126
    %p133 = scmp.eq.s32.totalorder %s13, 2
    %p134 = por %p132, %p133
    %p135 = scmp.ne.s32.totalorder %s127, %s130
    %p136 = scmp.eq.s32.totalorder %s13, 0
    %p137 = por %p135, %p136
    %p138 = scmp.ne.s32.totalorder %s127, %s130
    %p139 = scmp.eq.s32.totalorder %s18, 2
    %p140 = por %p138, %p139
    %p141 = scmp.ne.s32.totalorder %s130, %s131
    %p142 = scmp.eq.s32.totalorder %s18, 0
    %p143 = por %p141, %p142
    %p144 = scmp.ne.s32.totalorder %s130, %s131
    %p145 = scmp.eq.s32.totalorder %s19, 2
    %p146 = por %p144, %p145
    %p148 = scmp.ne.s32.totalorder %s131, %s147
    %p149 = scmp.eq.s32.totalorder %s19, 0
    %p150 = por %p148, %p149
    %s151 = ssub.s32 %s13, %s20
    %p152 = scmp.eq.s32.totalorder %s151, 0
    %s154 = sadd.s32 %s153, 1
    %s155 = scalar_select %p152, %s153, %s154
    %p158 = pneg %p152
    %p159 = scmp.eq.s32.totalorder %s13, 2
    %p160 = por %p158, %p159
    %p161 = scmp.ne.s32.totalorder %s153, %s156
    %p162 = scmp.eq.s32.totalorder %s13, 0
    %p163 = por %p161, %p162
    %p164 = scmp.ne.s32.totalorder %s153, %s156
    %p165 = scmp.eq.s32.totalorder %s18, 2
    %p166 = por %p164, %p165
    %p167 = scmp.ne.s32.totalorder %s156, %s157
    %p168 = scmp.eq.s32.totalorder %s18, 0
    %p169 = por %p167, %p168
    %p170 = scmp.ne.s32.totalorder %s156, %s157
    %p171 = scmp.eq.s32.totalorder %s19, 2
    %p172 = por %p170, %p171
    %p174 = scmp.ne.s32.totalorder %s157, %s173
    %p175 = scmp.eq.s32.totalorder %s19, 0
    %p176 = por %p174, %p175
    %s177 = ssub.s32 %s13, %s20
    %p178 = scmp.eq.s32.totalorder %s177, 0
    %s180 = sadd.s32 %s179, 1
    %s181 = scalar_select %p178, %s179, %s180
    %p184 = pneg %p178
    %p185 = scmp.eq.s32.totalorder %s13, 2
    %p186 = por %p184, %p185
    %p187 = scmp.ne.s32.totalorder %s179, %s182
    %p188 = scmp.eq.s32.totalorder %s13, 0
    %p189 = por %p187, %p188
    %p190 = scmp.ne.s32.totalorder %s179, %s182
    %p191 = scmp.eq.s32.totalorder %s18, 2
    %p192 = por %p190, %p191
    %p193 = scmp.ne.s32.totalorder %s182, %s183
    %p194 = scmp.eq.s32.totalorder %s18, 0
    %p195 = por %p193, %p194
    %p196 = scmp.ne.s32.totalorder %s182, %s183
    %p197 = scmp.eq.s32.totalorder %s19, 2
    %p198 = por %p196, %p197
    %p200 = scmp.ne.s32.totalorder %s183, %s199
    %p201 = scmp.eq.s32.totalorder %s19, 0
    %p202 = por %p200, %p201
    %s203 = ssub.s32 %s13, %s20
    %p204 = scmp.eq.s32.totalorder %s203, 0
    %s206 = sadd.s32 %s205, 1
    %s207 = scalar_select %p204, %s205, %s206
    %p210 = pneg %p204
    %p211 = scmp.eq.s32.totalorder %s13, 2
    %p212 = por %p210, %p211
    %p213 = scmp.ne.s32.totalorder %s205, %s208
    %p214 = scmp.eq.s32.totalorder %s13, 0
    %p215 = por %p213, %p214
    %p216 = scmp.ne.s32.totalorder %s205, %s208
    %p217 = scmp.eq.s32.totalorder %s18, 2
    %p218 = por %p216, %p217
    %p219 = scmp.ne.s32.totalorder %s208, %s209
    %p220 = scmp.eq.s32.totalorder %s18, 0
    %p221 = por %p219, %p220
    %p222 = scmp.ne.s32.totalorder %s208, %s209
    %p223 = scmp.eq.s32.totalorder %s19, 2
    %p224 = por %p222, %p223
    %p226 = scmp.ne.s32.totalorder %s209, %s225
    %p227 = scmp.eq.s32.totalorder %s19, 0
    %p228 = por %p226, %p227
    %p229 = scmp.le.s32.totalorder 1, %s13
    %p230 = scmp.lt.s32.totalorder %s13, 4
    %p231 = pnand %p229, %p230
    %p232 = pneg %p231
    // Predicated region
    $region9: #{gnn_forward.7} parent=5 // pred_check
      _
    $region10: #{gnn_forward.7} parent=5 // pred_check_branch
      %234 = sbr.rel (%p231) target = $region12
    $region11: #{gnn_forward.7} parent=5 // pred_region
      %s235 = ssub.s32 %s13, 1
    $region12: #{gnn_forward.7} parent=5 // pred_fallthru
      _
    %p236 = scmp.lt.s32.totalorder %s13, 3
    // Predicated region
    $region13: #{gnn_forward.7} parent=5 // pred_check
      %p237 = pneg %p236
    $region14: #{gnn_forward.7} parent=5 // pred_check_branch
      %239 = sbr.rel (%p237) target = $region16
    $region15: #{gnn_forward.7} parent=5 // pred_region
      // Predicated region
      $region17: #{gnn_forward.7} parent=15 // pred_check
        %p240 = pneg %p33
      $region18: #{gnn_forward.7} parent=15 // pred_check_branch
        %242 = sbr.rel (%p240) target = $region20
      $region19: #{gnn_forward.7} parent=15 // pred_region
        %p243 = scmp.lt.s32.totalorder %s13, 2
        %s244 = scalar_select %p243, %s13, 2
        %s245 = smul.addr %s244, 8
        %s246 = scalar_lea.vmem %s0, %s245
      $region20: #{gnn_forward.7} parent=15 // pred_fallthru
        _
      // Predicated region
      $region21: #{gnn_forward.7} parent=15 // pred_check
        %p247 = pneg %p59
      $region22: #{gnn_forward.7} parent=15 // pred_check_branch
        %249 = sbr.rel (%p247) target = $region24
      $region23: #{gnn_forward.7} parent=15 // pred_region
        %p250 = scmp.lt.s32.totalorder %s13, 2
        %s251 = scalar_select %p250, %s13, 2
        %s252 = smul.addr %s251, 2
        %s253 = smul.addr %s252, 8
        %s254 = scalar_lea.vmem %s1, %s253
      $region24: #{gnn_forward.7} parent=15 // pred_fallthru
        _
      // Predicated region
      $region25: #{gnn_forward.7} parent=15 // pred_check
        %p255 = pneg %p85
      $region26: #{gnn_forward.7} parent=15 // pred_check_branch
        %257 = sbr.rel (%p255) target = $region28
      $region27: #{gnn_forward.7} parent=15 // pred_region
        %p258 = scmp.lt.s32.totalorder %s13, 2
        %s259 = scalar_select %p258, %s13, 2
        %s260 = scalar_lea.vmem %s2, %s259
      $region28: #{gnn_forward.7} parent=15 // pred_fallthru
        _
      // Predicated region
      $region29: #{gnn_forward.7} parent=15 // pred_check
        %p261 = pneg %p111
      $region30: #{gnn_forward.7} parent=15 // pred_check_branch
        %263 = sbr.rel (%p261) target = $region32
      $region31: #{gnn_forward.7} parent=15 // pred_region
        %p264 = scmp.lt.s32.totalorder %s13, 2
        %s265 = scalar_select %p264, %s13, 2
        %s266 = scalar_lea.vmem %s3, %s265
      $region32: #{gnn_forward.7} parent=15 // pred_fallthru
        _
      // Predicated region
      $region33: #{gnn_forward.7} parent=15 // pred_check
        %p267 = pneg %p137
      $region34: #{gnn_forward.7} parent=15 // pred_check_branch
        %269 = sbr.rel (%p267) target = $region36
      $region35: #{gnn_forward.7} parent=15 // pred_region
        %p270 = scmp.lt.s32.totalorder %s13, 2
        %s271 = scalar_select %p270, %s13, 2
        %s272 = scalar_lea.vmem %s4, %s271
      $region36: #{gnn_forward.7} parent=15 // pred_fallthru
        _
      // Predicated region
      $region37: #{gnn_forward.7} parent=15 // pred_check
        %p273 = pneg %p163
      $region38: #{gnn_forward.7} parent=15 // pred_check_branch
        %275 = sbr.rel (%p273) target = $region40
      $region39: #{gnn_forward.7} parent=15 // pred_region
        %p276 = scmp.lt.s32.totalorder %s13, 2
        %s277 = scalar_select %p276, %s13, 2
        %s278 = smul.addr %s277, 8
        %s279 = scalar_lea.vmem %s5, %s278
      $region40: #{gnn_forward.7} parent=15 // pred_fallthru
        _
      // Predicated region
      $region41: #{gnn_forward.7} parent=15 // pred_check
        %p280 = pneg %p189
      $region42: #{gnn_forward.7} parent=15 // pred_check_branch
        %282 = sbr.rel (%p280) target = $region44
      $region43: #{gnn_forward.7} parent=15 // pred_region
        %p283 = scmp.lt.s32.totalorder %s13, 2
        %s284 = scalar_select %p283, %s13, 2
        %s285 = scalar_lea.vmem %s6, %s284
      $region44: #{gnn_forward.7} parent=15 // pred_fallthru
        _
    $region16: #{gnn_forward.7} parent=5 // pred_fallthru
      _
    %p286 = scmp.le.s32.totalorder 1, %s13
    %p287 = scmp.lt.s32.totalorder %s13, 4
    %p288 = pnand %p286, %p287
    %p289 = pneg %p288
    // Predicated region
    $region45: #{gnn_forward.7} parent=5 // pred_check
      _
    $region46: #{gnn_forward.7} parent=5 // pred_check_branch
      %291 = sbr.rel (%p288) target = $region48
    $region47: #{gnn_forward.7} parent=5 // pred_region
      %s292 = ssub.s32 %s13, 1
      %p293 = scmp.lt.s32.totalorder %s18, 2
      %s294 = scalar_select %p293, %s18, 2
      %s295 = smul.addr %s294, 8
      %s296 = scalar_lea.vmem %s0, %s295
      %p297 = pneg %p39
      %p298 = pneg %p36
      %p299 = scmp.lt.s32.totalorder %s18, 2
      %s300 = scalar_select %p299, %s18, 2
      %s301 = smul.addr %s300, 2
      %s302 = smul.addr %s301, 8
      %s303 = scalar_lea.vmem %s1, %s302
      %p304 = pneg %p65
      %p305 = pneg %p62
      %p306 = scmp.lt.s32.totalorder %s18, 2
      %s307 = scalar_select %p306, %s18, 2
      %s308 = scalar_lea.vmem %s2, %s307
      %p309 = pneg %p91
      %p310 = pneg %p88
      %p311 = scmp.lt.s32.totalorder %s18, 2
      %s312 = scalar_select %p311, %s18, 2
      %s313 = scalar_lea.vmem %s3, %s312
      %p314 = pneg %p117
      %p315 = pneg %p114
      %p316 = scmp.lt.s32.totalorder %s18, 2
      %s317 = scalar_select %p316, %s18, 2
      %s318 = scalar_lea.vmem %s4, %s317
      %p319 = pneg %p143
      %p320 = pneg %p140
      %p321 = scmp.lt.s32.totalorder %s18, 2
      %s322 = scalar_select %p321, %s18, 2
      %s323 = smul.addr %s322, 8
      %s324 = scalar_lea.vmem %s5, %s323
      %p325 = pneg %p169
      %p326 = pneg %p166
      %p327 = scmp.lt.s32.totalorder %s18, 2
      %s328 = scalar_select %p327, %s18, 2
      %s329 = scalar_lea.vmem %s6, %s328
      %p330 = pneg %p195
      %p331 = pneg %p192
      %p332 = pneg %p221
      %p333 = pneg %p218
      %p334 = scmp.lt.s32.totalorder %s18, 2
      %s335 = scalar_select %p334, %s18, 2
      %s336 = smul.addr %s335, 8
      %s337 = scalar_lea.vmem %s7, %s336
      %p338 = scmp.lt.s32.totalorder %s18, 2
      %s339 = scalar_select %p338, %s18, 2
      %s340 = smul.addr %s339, 8
      %s341 = scalar_lea.vmem %s0, %s340
      %p342 = scmp.lt.s32.totalorder %s18, 2
      %s343 = scalar_select %p342, %s18, 2
      %s344 = smul.addr %s343, 2
      %s345 = smul.addr %s344, 8
      %s346 = scalar_lea.vmem %s1, %s345
      %p347 = scmp.lt.s32.totalorder %s18, 2
      %s348 = scalar_select %p347, %s18, 2
      %s349 = scalar_lea.vmem %s2, %s348
      %p350 = scmp.lt.s32.totalorder %s18, 2
      %s351 = scalar_select %p350, %s18, 2
      %s352 = scalar_lea.vmem %s3, %s351
      %p353 = scmp.lt.s32.totalorder %s18, 2
      %s354 = scalar_select %p353, %s18, 2
      %s355 = scalar_lea.vmem %s4, %s354
      %p356 = scmp.lt.s32.totalorder %s18, 2
      %s357 = scalar_select %p356, %s18, 2
      %s358 = smul.addr %s357, 8
      %s359 = scalar_lea.vmem %s5, %s358
      %p360 = scmp.lt.s32.totalorder %s18, 2
      %s361 = scalar_select %p360, %s18, 2
      %s362 = scalar_lea.vmem %s6, %s361
      %p363 = scmp.lt.s32.totalorder %s18, 2
      %s364 = scalar_select %p363, %s18, 2
      %s365 = smul.addr %s364, 8
      %s366 = scalar_lea.vmem %s7, %s365
      %v367 = vld [vmem:[%s341] sm:$0xff]
      %v368 = vld [vmem:[%s346] sm:$0xff]
      %v369 = vld [vmem:[%s346 + $0x8] sm:$0x3f]
      %v370 = vld [vmem:[%s349] sm:$0x1]
      %v372 = vlaneseq
      %v373 = vshrl.u32 %v372, 7
      %v374 = vsub.s32 0, %v373
      %v375 = vrot.slane %v370, %v374
      %vm377 = vcmask 113664
      %v379 = vsel %vm377, %v367, 0
      %vm381 = vcmask 1045504
      %v383 = vsel %vm381, %v369, 0
      %385 = vmatprep.subr.mxu0 0.0
      %386 = vmatpush1.msra.mxu0 %v368
      %387 = vmatprep.subr.mxu0 0.0
      %388 = vmatpush1.msra.mxu0 %v383
      %389 = vmatprep.subr.mxu0 0.0
      %390 = vmatpush1.msra.mxu0 0.0
      %391 = vmatprep.subr.mxu0 0.0
      %392 = vmatpush1.msra.mxu0 0.0
      %393 = vmatprep.subr.mxu0 0.0
      %394 = vmatpush1.msra.mxu0 0.0
      %395 = vmatprep.subr.mxu0 0.0
      %396 = vmatpush1.msra.mxu0 0.0
      %397 = vmatprep.subr.mxu0 0.0
      %398 = vmatpush1.msra.mxu0 0.0
      %399 = vmatprep.subr.mxu0 0.0
      %400 = vmatpush1.msra.mxu0 0.0
      %401 = vmatprep.subr.mxu0 0.0
      %402 = vmatpush1.msra.mxu0 0.0
      %403 = vmatprep.subr.mxu0 0.0
      %404 = vmatpush1.msra.mxu0 0.0
      %405 = vmatprep.subr.mxu0 0.0
      %406 = vmatpush1.msra.mxu0 0.0
      %407 = vmatprep.subr.mxu0 0.0
      %408 = vmatpush1.msra.mxu0 0.0
      %409 = vmatprep.subr.mxu0 0.0
      %410 = vmatpush1.msra.mxu0 0.0
      %411 = vmatprep.subr.mxu0 0.0
      %412 = vmatpush1.msra.mxu0 0.0
      %413 = vmatprep.subr.mxu0 0.0
      %414 = vmatpush1.msra.mxu0 0.0
      %415 = vmatprep.subr.mxu0 0.0
      %416 = vmatpush1.msra.mxu0 0.0
      %417 = vmatprep.subr.mxu0 0.0
      %418 = vmatpush1.msra.mxu0 0.0
      %419 = vmatprep.subr.mxu0 0.0
      %420 = vmatpush1.msra.mxu0 0.0
      %421 = vmatprep.subr.mxu0 0.0
      %422 = vmatpush1.msra.mxu0 0.0
      %423 = vmatprep.subr.mxu0 0.0
      %424 = vmatpush1.msra.mxu0 0.0
      %425 = vmatprep.subr.mxu0 0.0
      %426 = vmatpush1.msra.mxu0 0.0
      %427 = vmatprep.subr.mxu0 0.0
      %428 = vmatpush1.msra.mxu0 0.0
      %429 = vmatprep.subr.mxu0 0.0
      %430 = vmatpush1.msra.mxu0 0.0
      %431 = vmatprep.subr.mxu0 0.0
      %432 = vmatpush1.msra.mxu0 0.0
      %433 = vmatprep.subr.mxu0 0.0
      %434 = vmatpush1.msra.mxu0 0.0
      %435 = vmatprep.subr.mxu0 0.0
      %436 = vmatpush1.msra.mxu0 0.0
      %437 = vmatprep.subr.mxu0 0.0
      %438 = vmatpush1.msra.mxu0 0.0
      %439 = vmatprep.subr.mxu0 0.0
      %440 = vmatpush1.msra.mxu0 0.0
      %441 = vmatprep.subr.mxu0 0.0
      %442 = vmatpush1.msra.mxu0 0.0
      %443 = vmatprep.subr.mxu0 0.0
      %444 = vmatpush1.msra.mxu0 0.0
      %445 = vmatprep.subr.mxu0 0.0
      %446 = vmatpush1.msra.mxu0 0.0
      %447 = vmatprep.subr.mxu0 0.0
      %448 = vmatpush1.msra.mxu0 0.0
      %449 = vmatprep.mubr.f32.mxu0 0.0
      %450 = vmatmul.mubr.f32.gmra.mrb[0].mxu0 %v379
      %v451 = vpop.f32.mrb[0].mxu0
      %v452 = vadd.f32 %v375, %v451
      %v453 = vpop.f32.mrb[0].mxu0
      %454 = vdwg.mxu0
      %v455 = vld [vmem:[%s359] sm:$0xff]
      %v456 = vld [vmem:[%s362] sm:$0x1]
      %458 = vset.pattern.permute.xlu0 0
      %459 = vperm.xlu0 %458, %v455
      %v460 = vpop.permute.xlu0 %459
      %v462 = vmul.f32 %v452, %v460
      %vm463 = vcmask 261120
      %v464 = vsel %vm463, %v462, 0.0
      %v465 = vrot.slane %v464, 4
      %v466 = vadd.f32 %v464, %v465
      %v467 = vrot.slane %v466, 2
      %v468 = vadd.f32 %v466, %v467
      %v469 = vrot.slane %v468, 1
      %v470 = vadd.f32 %v468, %v469
      %472 = vset.pattern.permute.xlu0 0
      %473 = vperm.xlu0 %472, %v456
      %v474 = vpop.permute.xlu0 %473
      %v476 = vlaneseq
      %v477 = vshrl.u32 %v476, 7
      %v478 = vsub.s32 0, %v477
      %v479 = vrot.slane %v474, %v478
      %v480 = vmul.f32 %v470, %v479
      %v481 = vsub.f32 %v452, %v480
      %v482 = vmul.f32 %v481, %v460
      %v483 = vmul.f32 %v482, %v482
      %v484 = vsel %vm463, %v483, 0.0
      %v485 = vrot.slane %v484, 4
      %v486 = vadd.f32 %v484, %v485
      %v487 = vrot.slane %v486, 2
      %v488 = vadd.f32 %v486, %v487
      %v489 = vrot.slane %v488, 1
      %v490 = vadd.f32 %v488, %v489
      %v491 = vmul.f32 %v490, %v479
      %v492 = vadd.f32 %v491, 1e-05
      %v493 = vrsqrt.pop %v492
      %v494 = vmul.f32 %v481, %v493
      %v495 = vld [vmem:[%s352] sm:$0x1]
      %v497 = vlaneseq
      %v498 = vshrl.u32 %v497, 7
      %v499 = vsub.s32 0, %v498
      %v500 = vrot.slane %v495, %v499
      %v502 = vmul.f32 %v494, %v500
      %v503 = vld [vmem:[%s355] sm:$0x1]
      %v505 = vlaneseq
      %v506 = vshrl.u32 %v505, 7
      %v507 = vsub.s32 0, %v506
      %v508 = vrot.slane %v503, %v507
      %v510 = vadd.f32 %v502, %v508
      %v511 = vmax.f32 %v510, 0.0
      %v512 = vmul.f32 %v511, %v460
      %513 = vst.msk [vmem:[%s366] sm:$0xff] %vm463, %v512
      %p514 = scmp.lt.s32.totalorder %s18, 2
      %s515 = scalar_select %p514, %s18, 2
      %s516 = smul.addr %s515, 8
      %s517 = scalar_lea.vmem %s7, %s516
      // Predicated region
      $region49: #{gnn_forward.7} parent=47 // pred_check
        %p518 = pneg %p218
      $region50: #{gnn_forward.7} parent=47 // pred_check_branch
        %520 = sbr.rel (%p518) target = $region52
      $region51: #{gnn_forward.7} parent=47 // pred_region
        _
      $region52: #{gnn_forward.7} parent=47 // pred_fallthru
        _
    $region48: #{gnn_forward.7} parent=5 // pred_fallthru
      _
    %p521 = scmp.le.s32.totalorder 2, %s13
    // Predicated region
    $region53: #{gnn_forward.7} parent=5 // pred_check
      %p522 = pneg %p521
    $region54: #{gnn_forward.7} parent=5 // pred_check_branch
      %524 = sbr.rel (%p522) target = $region56
    $region55: #{gnn_forward.7} parent=5 // pred_region
      %s525 = ssub.s32 %s13, 2
      // Predicated region
      $region57: #{gnn_forward.7} parent=55 // pred_check
        %p526 = pneg %p224
      $region58: #{gnn_forward.7} parent=55 // pred_check_branch
        %528 = sbr.rel (%p526) target = $region60
      $region59: #{gnn_forward.7} parent=55 // pred_region
        %p529 = scmp.lt.s32.totalorder %s19, 2
        %s530 = scalar_select %p529, %s19, 2
        %s531 = smul.addr %s530, 8
        %s532 = scalar_lea.vmem %s7, %s531
      $region60: #{gnn_forward.7} parent=55 // pred_fallthru
        _
    $region56: #{gnn_forward.7} parent=5 // pred_fallthru
      _
  $region6: #{gnn_forward.7} parent=0 // loop_footer
    %s17 = sadd.s32 1, %s13
  $region7: #{gnn_forward.7} parent=0 // loop_footer_branch
    %12 = sbr.rel target = $region3
  $region8: #{gnn_forward.7} parent=0 // loop_exit
    _

// kernel: gnn_forward.10
$region0: #{gnn_forward.10}
  #allocation0 [shape = 'u32[]', space=smem, size = 0x4, offset = 0x4, fixed_abs, tag = 'smem constant byte address 0x4 - core index']
  #allocation1 [shape = 'u32[144,128]{1,0:T(1,128)}', space=vmem, size = 0x12000, scoped, tag = 'internal scratch']
  %s0 = inlined_call_operand.vmem [shape: f32[24,32], index: 0, kind: input, shape index: {}]
  %s1 = inlined_call_operand.vmem [shape: f32[3,8,24], index: 1, kind: input, shape index: {}]
  %s2 = inlined_call_operand.vmem [shape: f32[3,8,24], index: 2, kind: input, shape index: {}]
  %s3 = inlined_call_operand.vmem [shape: f32[3,8,8], index: 3, kind: input, shape index: {}]
  %s4 = inlined_call_operand.vmem [shape: f32[3,8,1], index: 4, kind: input, shape index: {}]
  %s5 = inlined_call_operand.vmem [shape: f32[3,8,1], index: 5, kind: input, shape index: {}]
  %s6 = inlined_call_operand.vmem [shape: f32[3,32,16], index: 6, kind: input, shape index: {}]
  %s7 = inlined_call_operand.vmem [shape: f32[3,1,16], index: 7, kind: input, shape index: {}]
  %s8 = inlined_call_operand.vmem [shape: f32[3,32,16], index: 8, kind: input, shape index: {}]
  %s9 = inlined_call_operand.vmem [shape: f32[3,8,16], index: 9, kind: output, shape index: {}]
  %s10 = sld [smem:[#allocation0]]
  $region69: #{gnn_forward.10} parent=0
    _
  %s12 = ssub.s32 1, %s10
  %s13 = scalar_select 0, %s12, %s10
  loop: start=0, step=1, limit=5
  $region2: #{gnn_forward.10} parent=0 // loop_pre_header
    _
  $region3: #{gnn_forward.10} parent=0 // loop_header
    %s15 = sphi 0, %s19
    %p16 = scmp.ge.s32.totalorder %s15, 5
    %s23 = sphi 0, %s23
    %s25 = sphi 0, %s23
    %s26 = sphi 0, %s25
    %s40 = sphi 0, %s26
    %s46 = sphi 0, %s48
    %s49 = sphi 0, %s46
    %s50 = sphi 0, %s49
    %s66 = sphi 0, %s50
    %s72 = sphi 0, %s74
    %s75 = sphi 0, %s72
    %s76 = sphi 0, %s75
    %s92 = sphi 0, %s76
    %s98 = sphi 0, %s100
    %s101 = sphi 0, %s98
    %s102 = sphi 0, %s101
    %s118 = sphi 0, %s102
    %s124 = sphi 0, %s126
    %s127 = sphi 0, %s124
    %s128 = sphi 0, %s127
    %s144 = sphi 0, %s128
    %s150 = sphi 0, %s152
    %s153 = sphi 0, %s150
    %s154 = sphi 0, %s153
    %s170 = sphi 0, %s154
    %s176 = sphi 0, %s178
    %s179 = sphi 0, %s176
    %s180 = sphi 0, %s179
    %s196 = sphi 0, %s180
    %s202 = sphi 0, %s204
    %s205 = sphi 0, %s202
    %s206 = sphi 0, %s205
    %s222 = sphi 0, %s206
    %s228 = sphi 0, %s230
    %s231 = sphi 0, %s228
    %s232 = sphi 0, %s231
    %s248 = sphi 0, %s232
    %s254 = sphi 0, %s256
    %s257 = sphi 0, %s254
    %s258 = sphi 0, %s257
    %s274 = sphi 0, %s258
  $region4: #{gnn_forward.10} parent=0 // loop_header_branch
    %18 = sbr.rel (%p16) target = $region8
  $region5: #{gnn_forward.10} parent=0 // loop_body
    %s20 = ssub.s32 %s15, 1
    %s21 = ssub.s32 %s15, 2
    %s22 = sadd.s32 %s15, 1
    %s24 = sadd.s32 %s23, 1
    %p27 = scmp.eq.s32.totalorder %s15, 2
    %p28 = scmp.ne.s32.totalorder %s23, %s25
    %p29 = scmp.eq.s32.totalorder %s15, 0
    %p30 = por %p28, %p29
    %p31 = scmp.ne.s32.totalorder %s23, %s25
    %p32 = scmp.eq.s32.totalorder %s20, 2
    %p33 = por %p31, %p32
    %p34 = scmp.ne.s32.totalorder %s25, %s26
    %p35 = scmp.eq.s32.totalorder %s20, 0
    %p36 = por %p34, %p35
    %p37 = scmp.ne.s32.totalorder %s25, %s26
    %p38 = scmp.eq.s32.totalorder %s21, 2
    %p39 = por %p37, %p38
    %p41 = scmp.ne.s32.totalorder %s26, %s40
    %p42 = scmp.eq.s32.totalorder %s21, 0
    %p43 = por %p41, %p42
    %s44 = ssub.s32 %s15, %s22
    %p45 = scmp.eq.s32.totalorder %s44, 0
    %s47 = sadd.s32 %s46, 1
    %s48 = scalar_select %p45, %s46, %s47
    %p51 = pneg %p45
    %p52 = scmp.eq.s32.totalorder %s15, 2
    %p53 = por %p51, %p52
    %p54 = scmp.ne.s32.totalorder %s46, %s49
    %p55 = scmp.eq.s32.totalorder %s15, 0
    %p56 = por %p54, %p55
    %p57 = scmp.ne.s32.totalorder %s46, %s49
    %p58 = scmp.eq.s32.totalorder %s20, 2
    %p59 = por %p57, %p58
    %p60 = scmp.ne.s32.totalorder %s49, %s50
    %p61 = scmp.eq.s32.totalorder %s20, 0
    %p62 = por %p60, %p61
    %p63 = scmp.ne.s32.totalorder %s49, %s50
    %p64 = scmp.eq.s32.totalorder %s21, 2
    %p65 = por %p63, %p64
    %p67 = scmp.ne.s32.totalorder %s50, %s66
    %p68 = scmp.eq.s32.totalorder %s21, 0
    %p69 = por %p67, %p68
    %s70 = ssub.s32 %s15, %s22
    %p71 = scmp.eq.s32.totalorder %s70, 0
    %s73 = sadd.s32 %s72, 1
    %s74 = scalar_select %p71, %s72, %s73
    %p77 = pneg %p71
    %p78 = scmp.eq.s32.totalorder %s15, 2
    %p79 = por %p77, %p78
    %p80 = scmp.ne.s32.totalorder %s72, %s75
    %p81 = scmp.eq.s32.totalorder %s15, 0
    %p82 = por %p80, %p81
    %p83 = scmp.ne.s32.totalorder %s72, %s75
    %p84 = scmp.eq.s32.totalorder %s20, 2
    %p85 = por %p83, %p84
    %p86 = scmp.ne.s32.totalorder %s75, %s76
    %p87 = scmp.eq.s32.totalorder %s20, 0
    %p88 = por %p86, %p87
    %p89 = scmp.ne.s32.totalorder %s75, %s76
    %p90 = scmp.eq.s32.totalorder %s21, 2
    %p91 = por %p89, %p90
    %p93 = scmp.ne.s32.totalorder %s76, %s92
    %p94 = scmp.eq.s32.totalorder %s21, 0
    %p95 = por %p93, %p94
    %s96 = ssub.s32 %s15, %s22
    %p97 = scmp.eq.s32.totalorder %s96, 0
    %s99 = sadd.s32 %s98, 1
    %s100 = scalar_select %p97, %s98, %s99
    %p103 = pneg %p97
    %p104 = scmp.eq.s32.totalorder %s15, 2
    %p105 = por %p103, %p104
    %p106 = scmp.ne.s32.totalorder %s98, %s101
    %p107 = scmp.eq.s32.totalorder %s15, 0
    %p108 = por %p106, %p107
    %p109 = scmp.ne.s32.totalorder %s98, %s101
    %p110 = scmp.eq.s32.totalorder %s20, 2
    %p111 = por %p109, %p110
    %p112 = scmp.ne.s32.totalorder %s101, %s102
    %p113 = scmp.eq.s32.totalorder %s20, 0
    %p114 = por %p112, %p113
    %p115 = scmp.ne.s32.totalorder %s101, %s102
    %p116 = scmp.eq.s32.totalorder %s21, 2
    %p117 = por %p115, %p116
    %p119 = scmp.ne.s32.totalorder %s102, %s118
    %p120 = scmp.eq.s32.totalorder %s21, 0
    %p121 = por %p119, %p120
    %s122 = ssub.s32 %s15, %s22
    %p123 = scmp.eq.s32.totalorder %s122, 0
    %s125 = sadd.s32 %s124, 1
    %s126 = scalar_select %p123, %s124, %s125
    %p129 = pneg %p123
    %p130 = scmp.eq.s32.totalorder %s15, 2
    %p131 = por %p129, %p130
    %p132 = scmp.ne.s32.totalorder %s124, %s127
    %p133 = scmp.eq.s32.totalorder %s15, 0
    %p134 = por %p132, %p133
    %p135 = scmp.ne.s32.totalorder %s124, %s127
    %p136 = scmp.eq.s32.totalorder %s20, 2
    %p137 = por %p135, %p136
    %p138 = scmp.ne.s32.totalorder %s127, %s128
    %p139 = scmp.eq.s32.totalorder %s20, 0
    %p140 = por %p138, %p139
    %p141 = scmp.ne.s32.totalorder %s127, %s128
    %p142 = scmp.eq.s32.totalorder %s21, 2
    %p143 = por %p141, %p142
    %p145 = scmp.ne.s32.totalorder %s128, %s144
    %p146 = scmp.eq.s32.totalorder %s21, 0
    %p147 = por %p145, %p146
    %s148 = ssub.s32 %s15, %s22
    %p149 = scmp.eq.s32.totalorder %s148, 0
    %s151 = sadd.s32 %s150, 1
    %s152 = scalar_select %p149, %s150, %s151
    %p155 = pneg %p149
    %p156 = scmp.eq.s32.totalorder %s15, 2
    %p157 = por %p155, %p156
    %p158 = scmp.ne.s32.totalorder %s150, %s153
    %p159 = scmp.eq.s32.totalorder %s15, 0
    %p160 = por %p158, %p159
    %p161 = scmp.ne.s32.totalorder %s150, %s153
    %p162 = scmp.eq.s32.totalorder %s20, 2
    %p163 = por %p161, %p162
    %p164 = scmp.ne.s32.totalorder %s153, %s154
    %p165 = scmp.eq.s32.totalorder %s20, 0
    %p166 = por %p164, %p165
    %p167 = scmp.ne.s32.totalorder %s153, %s154
    %p168 = scmp.eq.s32.totalorder %s21, 2
    %p169 = por %p167, %p168
    %p171 = scmp.ne.s32.totalorder %s154, %s170
    %p172 = scmp.eq.s32.totalorder %s21, 0
    %p173 = por %p171, %p172
    %s174 = ssub.s32 %s15, %s22
    %p175 = scmp.eq.s32.totalorder %s174, 0
    %s177 = sadd.s32 %s176, 1
    %s178 = scalar_select %p175, %s176, %s177
    %p181 = pneg %p175
    %p182 = scmp.eq.s32.totalorder %s15, 2
    %p183 = por %p181, %p182
    %p184 = scmp.ne.s32.totalorder %s176, %s179
    %p185 = scmp.eq.s32.totalorder %s15, 0
    %p186 = por %p184, %p185
    %p187 = scmp.ne.s32.totalorder %s176, %s179
    %p188 = scmp.eq.s32.totalorder %s20, 2
    %p189 = por %p187, %p188
    %p190 = scmp.ne.s32.totalorder %s179, %s180
    %p191 = scmp.eq.s32.totalorder %s20, 0
    %p192 = por %p190, %p191
    %p193 = scmp.ne.s32.totalorder %s179, %s180
    %p194 = scmp.eq.s32.totalorder %s21, 2
    %p195 = por %p193, %p194
    %p197 = scmp.ne.s32.totalorder %s180, %s196
    %p198 = scmp.eq.s32.totalorder %s21, 0
    %p199 = por %p197, %p198
    %s200 = ssub.s32 %s15, %s22
    %p201 = scmp.eq.s32.totalorder %s200, 0
    %s203 = sadd.s32 %s202, 1
    %s204 = scalar_select %p201, %s202, %s203
    %p207 = pneg %p201
    %p208 = scmp.eq.s32.totalorder %s15, 2
    %p209 = por %p207, %p208
    %p210 = scmp.ne.s32.totalorder %s202, %s205
    %p211 = scmp.eq.s32.totalorder %s15, 0
    %p212 = por %p210, %p211
    %p213 = scmp.ne.s32.totalorder %s202, %s205
    %p214 = scmp.eq.s32.totalorder %s20, 2
    %p215 = por %p213, %p214
    %p216 = scmp.ne.s32.totalorder %s205, %s206
    %p217 = scmp.eq.s32.totalorder %s20, 0
    %p218 = por %p216, %p217
    %p219 = scmp.ne.s32.totalorder %s205, %s206
    %p220 = scmp.eq.s32.totalorder %s21, 2
    %p221 = por %p219, %p220
    %p223 = scmp.ne.s32.totalorder %s206, %s222
    %p224 = scmp.eq.s32.totalorder %s21, 0
    %p225 = por %p223, %p224
    %s226 = ssub.s32 %s15, %s22
    %p227 = scmp.eq.s32.totalorder %s226, 0
    %s229 = sadd.s32 %s228, 1
    %s230 = scalar_select %p227, %s228, %s229
    %p233 = pneg %p227
    %p234 = scmp.eq.s32.totalorder %s15, 2
    %p235 = por %p233, %p234
    %p236 = scmp.ne.s32.totalorder %s228, %s231
    %p237 = scmp.eq.s32.totalorder %s15, 0
    %p238 = por %p236, %p237
    %p239 = scmp.ne.s32.totalorder %s228, %s231
    %p240 = scmp.eq.s32.totalorder %s20, 2
    %p241 = por %p239, %p240
    %p242 = scmp.ne.s32.totalorder %s231, %s232
    %p243 = scmp.eq.s32.totalorder %s20, 0
    %p244 = por %p242, %p243
    %p245 = scmp.ne.s32.totalorder %s231, %s232
    %p246 = scmp.eq.s32.totalorder %s21, 2
    %p247 = por %p245, %p246
    %p249 = scmp.ne.s32.totalorder %s232, %s248
    %p250 = scmp.eq.s32.totalorder %s21, 0
    %p251 = por %p249, %p250
    %s252 = ssub.s32 %s15, %s22
    %p253 = scmp.eq.s32.totalorder %s252, 0
    %s255 = sadd.s32 %s254, 1
    %s256 = scalar_select %p253, %s254, %s255
    %p259 = pneg %p253
    %p260 = scmp.eq.s32.totalorder %s15, 2
    %p261 = por %p259, %p260
    %p262 = scmp.ne.s32.totalorder %s254, %s257
    %p263 = scmp.eq.s32.totalorder %s15, 0
    %p264 = por %p262, %p263
    %p265 = scmp.ne.s32.totalorder %s254, %s257
    %p266 = scmp.eq.s32.totalorder %s20, 2
    %p267 = por %p265, %p266
    %p268 = scmp.ne.s32.totalorder %s257, %s258
    %p269 = scmp.eq.s32.totalorder %s20, 0
    %p270 = por %p268, %p269
    %p271 = scmp.ne.s32.totalorder %s257, %s258
    %p272 = scmp.eq.s32.totalorder %s21, 2
    %p273 = por %p271, %p272
    %p275 = scmp.ne.s32.totalorder %s258, %s274
    %p276 = scmp.eq.s32.totalorder %s21, 0
    %p277 = por %p275, %p276
    %p278 = scmp.le.s32.totalorder 1, %s15
    %p279 = scmp.lt.s32.totalorder %s15, 4
    %p280 = pnand %p278, %p279
    %p281 = pneg %p280
    // Predicated region
    $region9: #{gnn_forward.10} parent=5 // pred_check
      _
    $region10: #{gnn_forward.10} parent=5 // pred_check_branch
      %283 = sbr.rel (%p280) target = $region12
    $region11: #{gnn_forward.10} parent=5 // pred_region
      %s284 = ssub.s32 %s15, 1
      // Predicated region
      $region13: #{gnn_forward.10} parent=11 // pred_check
        %p285 = pneg %p36
      $region14: #{gnn_forward.10} parent=11 // pred_check_branch
        %287 = sbr.rel (%p285) target = $region16
      $region15: #{gnn_forward.10} parent=11 // pred_region
        _
      $region16: #{gnn_forward.10} parent=11 // pred_fallthru
        _
    $region12: #{gnn_forward.10} parent=5 // pred_fallthru
      _
    %p288 = scmp.lt.s32.totalorder %s15, 3
    // Predicated region
    $region17: #{gnn_forward.10} parent=5 // pred_check
      %p289 = pneg %p288
    $region18: #{gnn_forward.10} parent=5 // pred_check_branch
      %291 = sbr.rel (%p289) target = $region20
    $region19: #{gnn_forward.10} parent=5 // pred_region
      // Predicated region
      $region21: #{gnn_forward.10} parent=19 // pred_check
        %p292 = pneg %p56
      $region22: #{gnn_forward.10} parent=19 // pred_check_branch
        %294 = sbr.rel (%p292) target = $region24
      $region23: #{gnn_forward.10} parent=19 // pred_region
        %p295 = scmp.lt.s32.totalorder %s15, 2
        %s296 = scalar_select %p295, %s15, 2
        %s297 = smul.addr %s296, 8
        %s298 = scalar_lea.vmem %s1, %s297
      $region24: #{gnn_forward.10} parent=19 // pred_fallthru
        _
      // Predicated region
      $region25: #{gnn_forward.10} parent=19 // pred_check
        %p299 = pneg %p82
      $region26: #{gnn_forward.10} parent=19 // pred_check_branch
        %301 = sbr.rel (%p299) target = $region28
      $region27: #{gnn_forward.10} parent=19 // pred_region
        %p302 = scmp.lt.s32.totalorder %s15, 2
        %s303 = scalar_select %p302, %s15, 2
        %s304 = smul.addr %s303, 8
        %s305 = scalar_lea.vmem %s2, %s304
      $region28: #{gnn_forward.10} parent=19 // pred_fallthru
        _
      // Predicated region
      $region29: #{gnn_forward.10} parent=19 // pred_check
        %p306 = pneg %p108
      $region30: #{gnn_forward.10} parent=19 // pred_check_branch
        %308 = sbr.rel (%p306) target = $region32
      $region31: #{gnn_forward.10} parent=19 // pred_region
        %p309 = scmp.lt.s32.totalorder %s15, 2
        %s310 = scalar_select %p309, %s15, 2
        %s311 = smul.addr %s310, 8
        %s312 = scalar_lea.vmem %s3, %s311
      $region32: #{gnn_forward.10} parent=19 // pred_fallthru
        _
      // Predicated region
      $region33: #{gnn_forward.10} parent=19 // pred_check
        %p313 = pneg %p134
      $region34: #{gnn_forward.10} parent=19 // pred_check_branch
        %315 = sbr.rel (%p313) target = $region36
      $region35: #{gnn_forward.10} parent=19 // pred_region
        %p316 = scmp.lt.s32.totalorder %s15, 2
        %s317 = scalar_select %p316, %s15, 2
        %s318 = smul.addr %s317, 8
        %s319 = scalar_lea.vmem %s4, %s318
      $region36: #{gnn_forward.10} parent=19 // pred_fallthru
        _
      // Predicated region
      $region37: #{gnn_forward.10} parent=19 // pred_check
        %p320 = pneg %p160
      $region38: #{gnn_forward.10} parent=19 // pred_check_branch
        %322 = sbr.rel (%p320) target = $region40
      $region39: #{gnn_forward.10} parent=19 // pred_region
        %p323 = scmp.lt.s32.totalorder %s15, 2
        %s324 = scalar_select %p323, %s15, 2
        %s325 = smul.addr %s324, 8
        %s326 = scalar_lea.vmem %s5, %s325
      $region40: #{gnn_forward.10} parent=19 // pred_fallthru
        _
      // Predicated region
      $region41: #{gnn_forward.10} parent=19 // pred_check
        %p327 = pneg %p186
      $region42: #{gnn_forward.10} parent=19 // pred_check_branch
        %329 = sbr.rel (%p327) target = $region44
      $region43: #{gnn_forward.10} parent=19 // pred_region
        %p330 = scmp.lt.s32.totalorder %s15, 2
        %s331 = scalar_select %p330, %s15, 2
        %s332 = smul.addr %s331, 4
        %s333 = smul.addr %s332, 8
        %s334 = scalar_lea.vmem %s6, %s333
      $region44: #{gnn_forward.10} parent=19 // pred_fallthru
        _
      // Predicated region
      $region45: #{gnn_forward.10} parent=19 // pred_check
        %p335 = pneg %p212
      $region46: #{gnn_forward.10} parent=19 // pred_check_branch
        %337 = sbr.rel (%p335) target = $region48
      $region47: #{gnn_forward.10} parent=19 // pred_region
        %p338 = scmp.lt.s32.totalorder %s15, 2
        %s339 = scalar_select %p338, %s15, 2
        %s340 = scalar_lea.vmem %s7, %s339
      $region48: #{gnn_forward.10} parent=19 // pred_fallthru
        _
      // Predicated region
      $region49: #{gnn_forward.10} parent=19 // pred_check
        %p341 = pneg %p238
      $region50: #{gnn_forward.10} parent=19 // pred_check_branch
        %343 = sbr.rel (%p341) target = $region52
      $region51: #{gnn_forward.10} parent=19 // pred_region
        %p344 = scmp.lt.s32.totalorder %s15, 2
        %s345 = scalar_select %p344, %s15, 2
        %s346 = smul.addr %s345, 4
        %s347 = smul.addr %s346, 8
        %s348 = scalar_lea.vmem %s8, %s347
      $region52: #{gnn_forward.10} parent=19 // pred_fallthru
        _
    $region20: #{gnn_forward.10} parent=5 // pred_fallthru
      _
    %p349 = scmp.le.s32.totalorder 1, %s15
    %p350 = scmp.lt.s32.totalorder %s15, 4
    %p351 = pnand %p349, %p350
    %p352 = pneg %p351
    // Predicated region
    $region53: #{gnn_forward.10} parent=5 // pred_check
      _
    $region54: #{gnn_forward.10} parent=5 // pred_check_branch
      %354 = sbr.rel (%p351) target = $region56
    $region55: #{gnn_forward.10} parent=5 // pred_region
      %s355 = ssub.s32 %s15, 1
      %p356 = pneg %p36
      %p357 = pneg %p33
      %p358 = scmp.lt.s32.totalorder %s20, 2
      %s359 = scalar_select %p358, %s20, 2
      %s360 = smul.addr %s359, 8
      %s361 = scalar_lea.vmem %s1, %s360
      %p362 = pneg %p62
      %p363 = pneg %p59
      %p364 = scmp.lt.s32.totalorder %s20, 2
      %s365 = scalar_select %p364, %s20, 2
      %s366 = smul.addr %s365, 8
      %s367 = scalar_lea.vmem %s2, %s366
      %p368 = pneg %p88
      %p369 = pneg %p85
      %p370 = scmp.lt.s32.totalorder %s20, 2
      %s371 = scalar_select %p370, %s20, 2
      %s372 = smul.addr %s371, 8
      %s373 = scalar_lea.vmem %s3, %s372
      %p374 = pneg %p114
      %p375 = pneg %p111
      %p376 = scmp.lt.s32.totalorder %s20, 2
      %s377 = scalar_select %p376, %s20, 2
      %s378 = smul.addr %s377, 8
      %s379 = scalar_lea.vmem %s4, %s378
      %p380 = pneg %p140
      %p381 = pneg %p137
      %p382 = scmp.lt.s32.totalorder %s20, 2
      %s383 = scalar_select %p382, %s20, 2
      %s384 = smul.addr %s383, 8
      %s385 = scalar_lea.vmem %s5, %s384
      %p386 = pneg %p166
      %p387 = pneg %p163
      %p388 = scmp.lt.s32.totalorder %s20, 2
      %s389 = scalar_select %p388, %s20, 2
      %s390 = smul.addr %s389, 4
      %s391 = smul.addr %s390, 8
      %s392 = scalar_lea.vmem %s6, %s391
      %p393 = pneg %p192
      %p394 = pneg %p189
      %p395 = scmp.lt.s32.totalorder %s20, 2
      %s396 = scalar_select %p395, %s20, 2
      %s397 = scalar_lea.vmem %s7, %s396
      %p398 = pneg %p218
      %p399 = pneg %p215
      %p400 = scmp.lt.s32.totalorder %s20, 2
      %s401 = scalar_select %p400, %s20, 2
      %s402 = smul.addr %s401, 4
      %s403 = smul.addr %s402, 8
      %s404 = scalar_lea.vmem %s8, %s403
      %p405 = pneg %p244
      %p406 = pneg %p241
      %p407 = pneg %p270
      %p408 = pneg %p267
      %p409 = scmp.lt.s32.totalorder %s20, 2
      %s410 = scalar_select %p409, %s20, 2
      %s411 = smul.addr %s410, 8
      %s412 = scalar_lea.vmem %s9, %s411
      %p413 = scmp.lt.s32.totalorder %s20, 2
      %s414 = scalar_select %p413, %s20, 2
      %s415 = smul.addr %s414, 8
      %s416 = scalar_lea.vmem %s1, %s415
      %p417 = scmp.lt.s32.totalorder %s20, 2
      %s418 = scalar_select %p417, %s20, 2
      %s419 = smul.addr %s418, 8
      %s420 = scalar_lea.vmem %s2, %s419
      %p421 = scmp.lt.s32.totalorder %s20, 2
      %s422 = scalar_select %p421, %s20, 2
      %s423 = smul.addr %s422, 8
      %s424 = scalar_lea.vmem %s3, %s423
      %p425 = scmp.lt.s32.totalorder %s20, 2
      %s426 = scalar_select %p425, %s20, 2
      %s427 = smul.addr %s426, 8
      %s428 = scalar_lea.vmem %s4, %s427
      %p429 = scmp.lt.s32.totalorder %s20, 2
      %s430 = scalar_select %p429, %s20, 2
      %s431 = smul.addr %s430, 8
      %s432 = scalar_lea.vmem %s5, %s431
      %p433 = scmp.lt.s32.totalorder %s20, 2
      %s434 = scalar_select %p433, %s20, 2
      %s435 = smul.addr %s434, 4
      %s436 = smul.addr %s435, 8
      %s437 = scalar_lea.vmem %s6, %s436
      %p438 = scmp.lt.s32.totalorder %s20, 2
      %s439 = scalar_select %p438, %s20, 2
      %s440 = scalar_lea.vmem %s7, %s439
      %p441 = scmp.lt.s32.totalorder %s20, 2
      %s442 = scalar_select %p441, %s20, 2
      %s443 = smul.addr %s442, 4
      %s444 = smul.addr %s443, 8
      %s445 = scalar_lea.vmem %s8, %s444
      %p446 = scmp.lt.s32.totalorder %s20, 2
      %s447 = scalar_select %p446, %s20, 2
      %s448 = smul.addr %s447, 8
      %s449 = scalar_lea.vmem %s9, %s448
      %v450 = vld [vmem:[%s0] sm:$0xff]
      %v451 = vld [vmem:[%s0 + $0x8] sm:$0xff]
      %v452 = vld [vmem:[%s0 + $0x10] sm:$0xff]
      %v453 = vld [vmem:[%s416] sm:$0xff]
      %vm454 = vcmask 195584
      %v456 = vsel %vm454, %v453, 0
      %458 = vmatprep.subr.mxu0 0.0
      %459 = vmatpush1.msra.mxu0 %v450
      %460 = vmatprep.subr.mxu0 0.0
      %461 = vmatpush1.msra.mxu0 %v451
      %462 = vmatprep.subr.mxu0 0.0
      %463 = vmatpush1.msra.mxu0 %v452
      %464 = vmatprep.subr.mxu0 0.0
      %465 = vmatpush1.msra.mxu0 0.0
      %466 = vmatprep.subr.mxu0 0.0
      %467 = vmatpush1.msra.mxu0 0.0
      %468 = vmatprep.subr.mxu0 0.0
      %469 = vmatpush1.msra.mxu0 0.0
      %470 = vmatprep.subr.mxu0 0.0
      %471 = vmatpush1.msra.mxu0 0.0
      %472 = vmatprep.subr.mxu0 0.0
      %473 = vmatpush1.msra.mxu0 0.0
      %474 = vmatprep.subr.mxu0 0.0
      %475 = vmatpush1.msra.mxu0 0.0
      %476 = vmatprep.subr.mxu0 0.0
      %477 = vmatpush1.msra.mxu0 0.0
      %478 = vmatprep.subr.mxu0 0.0
      %479 = vmatpush1.msra.mxu0 0.0
      %480 = vmatprep.subr.mxu0 0.0
      %481 = vmatpush1.msra.mxu0 0.0
      %482 = vmatprep.subr.mxu0 0.0
      %483 = vmatpush1.msra.mxu0 0.0
      %484 = vmatprep.subr.mxu0 0.0
      %485 = vmatpush1.msra.mxu0 0.0
      %486 = vmatprep.subr.mxu0 0.0
      %487 = vmatpush1.msra.mxu0 0.0
      %488 = vmatprep.subr.mxu0 0.0
      %489 = vmatpush1.msra.mxu0 0.0
      %490 = vmatprep.subr.mxu0 0.0
      %491 = vmatpush1.msra.mxu0 0.0
      %492 = vmatprep.subr.mxu0 0.0
      %493 = vmatpush1.msra.mxu0 0.0
      %494 = vmatprep.subr.mxu0 0.0
      %495 = vmatpush1.msra.mxu0 0.0
      %496 = vmatprep.subr.mxu0 0.0
      %497 = vmatpush1.msra.mxu0 0.0
      %498 = vmatprep.subr.mxu0 0.0
      %499 = vmatpush1.msra.mxu0 0.0
      %500 = vmatprep.subr.mxu0 0.0
      %501 = vmatpush1.msra.mxu0 0.0
      %502 = vmatprep.subr.mxu0 0.0
      %503 = vmatpush1.msra.mxu0 0.0
      %504 = vmatprep.subr.mxu0 0.0
      %505 = vmatpush1.msra.mxu0 0.0
      %506 = vmatprep.subr.mxu0 0.0
      %507 = vmatpush1.msra.mxu0 0.0
      %508 = vmatprep.subr.mxu0 0.0
      %509 = vmatpush1.msra.mxu0 0.0
      %510 = vmatprep.subr.mxu0 0.0
      %511 = vmatpush1.msra.mxu0 0.0
      %512 = vmatprep.subr.mxu0 0.0
      %513 = vmatpush1.msra.mxu0 0.0
      %514 = vmatprep.subr.mxu0 0.0
      %515 = vmatpush1.msra.mxu0 0.0
      %516 = vmatprep.subr.mxu0 0.0
      %517 = vmatpush1.msra.mxu0 0.0
      %518 = vmatprep.subr.mxu0 0.0
      %519 = vmatpush1.msra.mxu0 0.0
      %520 = vmatprep.subr.mxu0 0.0
      %521 = vmatpush1.msra.mxu0 0.0
      %522 = vmatprep.mubr.f32.mxu0 0.0
      %523 = vmatmul.mubr.f32.gmra.mrb[0].mxu0 %v456
      %v524 = vpop.f32.mrb[0].mxu0
      %v525 = vadd.f32 0.0, %v524
      %v526 = vpop.f32.mrb[0].mxu0
      %527 = vdwg.mxu0
      %v528 = vld [vmem:[%s424] sm:$0xff]
      %vm529 = vcmask 64512
      %v531 = vsel %vm529, %v528, 0
      %533 = vmatprep.subr.mxu0 0.0
      %534 = vmatpush1.msra.mxu0 %v525
      %535 = vmatprep.subr.mxu0 0.0
      %536 = vmatpush1.msra.mxu0 0.0
      %537 = vmatprep.subr.mxu0 0.0
      %538 = vmatpush1.msra.mxu0 0.0
      %539 = vmatprep.subr.mxu0 0.0
      %540 = vmatpush1.msra.mxu0 0.0
      %541 = vmatprep.subr.mxu0 0.0
      %542 = vmatpush1.msra.mxu0 0.0
      %543 = vmatprep.subr.mxu0 0.0
      %544 = vmatpush1.msra.mxu0 0.0
      %545 = vmatprep.subr.mxu0 0.0
      %546 = vmatpush1.msra.mxu0 0.0
      %547 = vmatprep.subr.mxu0 0.0
      %548 = vmatpush1.msra.mxu0 0.0
      %549 = vmatprep.subr.mxu0 0.0
      %550 = vmatpush1.msra.mxu0 0.0
      %551 = vmatprep.subr.mxu0 0.0
      %552 = vmatpush1.msra.mxu0 0.0
      %553 = vmatprep.subr.mxu0 0.0
      %554 = vmatpush1.msra.mxu0 0.0
      %555 = vmatprep.subr.mxu0 0.0
      %556 = vmatpush1.msra.mxu0 0.0
      %557 = vmatprep.subr.mxu0 0.0
      %558 = vmatpush1.msra.mxu0 0.0
      %559 = vmatprep.subr.mxu0 0.0
      %560 = vmatpush1.msra.mxu0 0.0
      %561 = vmatprep.subr.mxu0 0.0
      %562 = vmatpush1.msra.mxu0 0.0
      %563 = vmatprep.subr.mxu0 0.0
      %564 = vmatpush1.msra.mxu0 0.0
      %565 = vmatprep.subr.mxu0 0.0
      %566 = vmatpush1.msra.mxu0 0.0
      %567 = vmatprep.subr.mxu0 0.0
      %568 = vmatpush1.msra.mxu0 0.0
      %569 = vmatprep.subr.mxu0 0.0
      %570 = vmatpush1.msra.mxu0 0.0
      %571 = vmatprep.subr.mxu0 0.0
      %572 = vmatpush1.msra.mxu0 0.0
      %573 = vmatprep.subr.mxu0 0.0
      %574 = vmatpush1.msra.mxu0 0.0
      %575 = vmatprep.subr.mxu0 0.0
      %576 = vmatpush1.msra.mxu0 0.0
      %577 = vmatprep.subr.mxu0 0.0
      %578 = vmatpush1.msra.mxu0 0.0
      %579 = vmatprep.subr.mxu0 0.0
      %580 = vmatpush1.msra.mxu0 0.0
      %581 = vmatprep.subr.mxu0 0.0
      %582 = vmatpush1.msra.mxu0 0.0
      %583 = vmatprep.subr.mxu0 0.0
      %584 = vmatpush1.msra.mxu0 0.0
      %585 = vmatprep.subr.mxu0 0.0
      %586 = vmatpush1.msra.mxu0 0.0
      %587 = vmatprep.subr.mxu0 0.0
      %588 = vmatpush1.msra.mxu0 0.0
      %589 = vmatprep.subr.mxu0 0.0
      %590 = vmatpush1.msra.mxu0 0.0
      %591 = vmatprep.subr.mxu0 0.0
      %592 = vmatpush1.msra.mxu0 0.0
      %593 = vmatprep.subr.mxu0 0.0
      %594 = vmatpush1.msra.mxu0 0.0
      %595 = vmatprep.subr.mxu0 0.0
      %596 = vmatpush1.msra.mxu0 0.0
      %597 = vmatprep.mubr.f32.mxu0 0.0
      %598 = vmatmul.mubr.f32.gmra.mrb[0].mxu0 %v531
      %v599 = vpop.f32.mrb[0].mxu0
      %v600 = vadd.f32 0.0, %v599
      %v601 = vpop.f32.mrb[0].mxu0
      %602 = vdwg.mxu0
      %v603 = vld [vmem:[%s428] sm:$0xff]
      %605 = vset.pattern.permute.xlu0 0
      %606 = vperm.xlu0 %605, %v603
      %v607 = vpop.permute.xlu0 %606
      %v609 = vmul.f32 %v600, %v607
      %v610 = vld [vmem:[%s420] sm:$0xff]
      %v612 = vsel %vm454, %v610, 0
      %614 = vmatprep.subr.mxu0 0.0
      %615 = vmatpush1.msra.mxu0 %v450
      %616 = vmatprep.subr.mxu0 0.0
      %617 = vmatpush1.msra.mxu0 %v451
      %618 = vmatprep.subr.mxu0 0.0
      %619 = vmatpush1.msra.mxu0 %v452
      %620 = vmatprep.subr.mxu0 0.0
      %621 = vmatpush1.msra.mxu0 0.0
      %622 = vmatprep.subr.mxu0 0.0
      %623 = vmatpush1.msra.mxu0 0.0
      %624 = vmatprep.subr.mxu0 0.0
      %625 = vmatpush1.msra.mxu0 0.0
      %626 = vmatprep.subr.mxu0 0.0
      %627 = vmatpush1.msra.mxu0 0.0
      %628 = vmatprep.subr.mxu0 0.0
      %629 = vmatpush1.msra.mxu0 0.0
      %630 = vmatprep.subr.mxu0 0.0
      %631 = vmatpush1.msra.mxu0 0.0
      %632 = vmatprep.subr.mxu0 0.0
      %633 = vmatpush1.msra.mxu0 0.0
      %634 = vmatprep.subr.mxu0 0.0
      %635 = vmatpush1.msra.mxu0 0.0
      %636 = vmatprep.subr.mxu0 0.0
      %637 = vmatpush1.msra.mxu0 0.0
      %638 = vmatprep.subr.mxu0 0.0
      %639 = vmatpush1.msra.mxu0 0.0
      %640 = vmatprep.subr.mxu0 0.0
      %641 = vmatpush1.msra.mxu0 0.0
      %642 = vmatprep.subr.mxu0 0.0
      %643 = vmatpush1.msra.mxu0 0.0
      %644 = vmatprep.subr.mxu0 0.0
      %645 = vmatpush1.msra.mxu0 0.0
      %646 = vmatprep.subr.mxu0 0.0
      %647 = vmatpush1.msra.mxu0 0.0
      %648 = vmatprep.subr.mxu0 0.0
      %649 = vmatpush1.msra.mxu0 0.0
      %650 = vmatprep.subr.mxu0 0.0
      %651 = vmatpush1.msra.mxu0 0.0
      %652 = vmatprep.subr.mxu0 0.0
      %653 = vmatpush1.msra.mxu0 0.0
      %654 = vmatprep.subr.mxu0 0.0
      %655 = vmatpush1.msra.mxu0 0.0
      %656 = vmatprep.subr.mxu0 0.0
      %657 = vmatpush1.msra.mxu0 0.0
      %658 = vmatprep.subr.mxu0 0.0
      %659 = vmatpush1.msra.mxu0 0.0
      %660 = vmatprep.subr.mxu0 0.0
      %661 = vmatpush1.msra.mxu0 0.0
      %662 = vmatprep.subr.mxu0 0.0
      %663 = vmatpush1.msra.mxu0 0.0
      %664 = vmatprep.subr.mxu0 0.0
      %665 = vmatpush1.msra.mxu0 0.0
      %666 = vmatprep.subr.mxu0 0.0
      %667 = vmatpush1.msra.mxu0 0.0
      %668 = vmatprep.subr.mxu0 0.0
      %669 = vmatpush1.msra.mxu0 0.0
      %670 = vmatprep.subr.mxu0 0.0
      %671 = vmatpush1.msra.mxu0 0.0
      %672 = vmatprep.subr.mxu0 0.0
      %673 = vmatpush1.msra.mxu0 0.0
      %674 = vmatprep.subr.mxu0 0.0
      %675 = vmatpush1.msra.mxu0 0.0
      %676 = vmatprep.subr.mxu0 0.0
      %677 = vmatpush1.msra.mxu0 0.0
      %678 = vmatprep.mubr.f32.mxu0 0.0
      %679 = vmatmul.mubr.f32.gmra.mrb[0].mxu0 %v612
      %v680 = vpop.f32.mrb[0].mxu0
      %v681 = vadd.f32 0.0, %v680
      %v682 = vpop.f32.mrb[0].mxu0
      %683 = vdwg.mxu0
      %v684 = vld [vmem:[%s437] sm:$0xff]
      %v685 = vld [vmem:[%s437 + $0x8] sm:$0xff]
      %v686 = vld [vmem:[%s437 + $0x10] sm:$0xff]
      %v687 = vld [vmem:[%s437 + $0x18] sm:$0xff]
      %v688 = vld [vmem:[%s440] sm:$0x1]
      %v690 = vlaneseq
      %v691 = vshrl.u32 %v690, 7
      %v692 = vsub.s32 0, %v691
      %v693 = vrot.slane %v688, %v692
      %vm695 = vcmask 261120
      %v697 = vsel %vm695, %v609, 0
      %699 = vmatprep.subr.mxu0 0.0
      %700 = vmatpush1.msra.mxu0 %v684
      %701 = vmatprep.subr.mxu0 0.0
      %702 = vmatpush1.msra.mxu0 %v685
      %703 = vmatprep.subr.mxu0 0.0
      %704 = vmatpush1.msra.mxu0 %v686
      %705 = vmatprep.subr.mxu0 0.0
      %706 = vmatpush1.msra.mxu0 %v687
      %707 = vmatprep.subr.mxu0 0.0
      %708 = vmatpush1.msra.mxu0 0.0
      %709 = vmatprep.subr.mxu0 0.0
      %710 = vmatpush1.msra.mxu0 0.0
      %711 = vmatprep.subr.mxu0 0.0
      %712 = vmatpush1.msra.mxu0 0.0
      %713 = vmatprep.subr.mxu0 0.0
      %714 = vmatpush1.msra.mxu0 0.0
      %715 = vmatprep.subr.mxu0 0.0
      %716 = vmatpush1.msra.mxu0 0.0
      %717 = vmatprep.subr.mxu0 0.0
      %718 = vmatpush1.msra.mxu0 0.0
      %719 = vmatprep.subr.mxu0 0.0
      %720 = vmatpush1.msra.mxu0 0.0
      %721 = vmatprep.subr.mxu0 0.0
      %722 = vmatpush1.msra.mxu0 0.0
      %723 = vmatprep.subr.mxu0 0.0
      %724 = vmatpush1.msra.mxu0 0.0
      %725 = vmatprep.subr.mxu0 0.0
      %726 = vmatpush1.msra.mxu0 0.0
      %727 = vmatprep.subr.mxu0 0.0
      %728 = vmatpush1.msra.mxu0 0.0
      %729 = vmatprep.subr.mxu0 0.0
      %730 = vmatpush1.msra.mxu0 0.0
      %731 = vmatprep.subr.mxu0 0.0
      %732 = vmatpush1.msra.mxu0 0.0
      %733 = vmatprep.subr.mxu0 0.0
      %734 = vmatpush1.msra.mxu0 0.0
      %735 = vmatprep.subr.mxu0 0.0
      %736 = vmatpush1.msra.mxu0 0.0
      %737 = vmatprep.subr.mxu0 0.0
      %738 = vmatpush1.msra.mxu0 0.0
      %739 = vmatprep.subr.mxu0 0.0
      %740 = vmatpush1.msra.mxu0 0.0
      %741 = vmatprep.subr.mxu0 0.0
      %742 = vmatpush1.msra.mxu0 0.0
      %743 = vmatprep.subr.mxu0 0.0
      %744 = vmatpush1.msra.mxu0 0.0
      %745 = vmatprep.subr.mxu0 0.0
      %746 = vmatpush1.msra.mxu0 0.0
      %747 = vmatprep.subr.mxu0 0.0
      %748 = vmatpush1.msra.mxu0 0.0
      %749 = vmatprep.subr.mxu0 0.0
      %750 = vmatpush1.msra.mxu0 0.0
      %751 = vmatprep.subr.mxu0 0.0
      %752 = vmatpush1.msra.mxu0 0.0
      %753 = vmatprep.subr.mxu0 0.0
      %754 = vmatpush1.msra.mxu0 0.0
      %755 = vmatprep.subr.mxu0 0.0
      %756 = vmatpush1.msra.mxu0 0.0
      %757 = vmatprep.subr.mxu0 0.0
      %758 = vmatpush1.msra.mxu0 0.0
      %759 = vmatprep.subr.mxu0 0.0
      %760 = vmatpush1.msra.mxu0 0.0
      %761 = vmatprep.subr.mxu0 0.0
      %762 = vmatpush1.msra.mxu0 0.0
      %763 = vmatprep.mubr.f32.mxu0 0.0
      %764 = vmatmul.mubr.f32.gmra.mrb[0].mxu0 %v697
      %v765 = vpop.f32.mrb[0].mxu0
      %v766 = vadd.f32 %v693, %v765
      %v767 = vpop.f32.mrb[0].mxu0
      %768 = vdwg.mxu0
      %v769 = vld [vmem:[%s445] sm:$0xff]
      %v770 = vld [vmem:[%s445 + $0x8] sm:$0xff]
      %v771 = vld [vmem:[%s445 + $0x10] sm:$0xff]
      %v772 = vld [vmem:[%s445 + $0x18] sm:$0xff]
      %v774 = vsel %vm695, %v681, 0
      %776 = vmatprep.subr.mxu0 0.0
      %777 = vmatpush1.msra.mxu0 %v769
      %778 = vmatprep.subr.mxu0 0.0
      %779 = vmatpush1.msra.mxu0 %v770
      %780 = vmatprep.subr.mxu0 0.0
      %781 = vmatpush1.msra.mxu0 %v771
      %782 = vmatprep.subr.mxu0 0.0
      %783 = vmatpush1.msra.mxu0 %v772
      %784 = vmatprep.subr.mxu0 0.0
      %785 = vmatpush1.msra.mxu0 0.0
      %786 = vmatprep.subr.mxu0 0.0
      %787 = vmatpush1.msra.mxu0 0.0
      %788 = vmatprep.subr.mxu0 0.0
      %789 = vmatpush1.msra.mxu0 0.0
      %790 = vmatprep.subr.mxu0 0.0
      %791 = vmatpush1.msra.mxu0 0.0
      %792 = vmatprep.subr.mxu0 0.0
      %793 = vmatpush1.msra.mxu0 0.0
      %794 = vmatprep.subr.mxu0 0.0
      %795 = vmatpush1.msra.mxu0 0.0
      %796 = vmatprep.subr.mxu0 0.0
      %797 = vmatpush1.msra.mxu0 0.0
      %798 = vmatprep.subr.mxu0 0.0
      %799 = vmatpush1.msra.mxu0 0.0
      %800 = vmatprep.subr.mxu0 0.0
      %801 = vmatpush1.msra.mxu0 0.0
      %802 = vmatprep.subr.mxu0 0.0
      %803 = vmatpush1.msra.mxu0 0.0
      %804 = vmatprep.subr.mxu0 0.0
      %805 = vmatpush1.msra.mxu0 0.0
      %806 = vmatprep.subr.mxu0 0.0
      %807 = vmatpush1.msra.mxu0 0.0
      %808 = vmatprep.subr.mxu0 0.0
      %809 = vmatpush1.msra.mxu0 0.0
      %810 = vmatprep.subr.mxu0 0.0
      %811 = vmatpush1.msra.mxu0 0.0
      %812 = vmatprep.subr.mxu0 0.0
      %813 = vmatpush1.msra.mxu0 0.0
      %814 = vmatprep.subr.mxu0 0.0
      %815 = vmatpush1.msra.mxu0 0.0
      %816 = vmatprep.subr.mxu0 0.0
      %817 = vmatpush1.msra.mxu0 0.0
      %818 = vmatprep.subr.mxu0 0.0
      %819 = vmatpush1.msra.mxu0 0.0
      %820 = vmatprep.subr.mxu0 0.0
      %821 = vmatpush1.msra.mxu0 0.0
      %822 = vmatprep.subr.mxu0 0.0
      %823 = vmatpush1.msra.mxu0 0.0
      %824 = vmatprep.subr.mxu0 0.0
      %825 = vmatpush1.msra.mxu0 0.0
      %826 = vmatprep.subr.mxu0 0.0
      %827 = vmatpush1.msra.mxu0 0.0
      %828 = vmatprep.subr.mxu0 0.0
      %829 = vmatpush1.msra.mxu0 0.0
      %830 = vmatprep.subr.mxu0 0.0
      %831 = vmatpush1.msra.mxu0 0.0
      %832 = vmatprep.subr.mxu0 0.0
      %833 = vmatpush1.msra.mxu0 0.0
      %834 = vmatprep.subr.mxu0 0.0
      %835 = vmatpush1.msra.mxu0 0.0
      %836 = vmatprep.subr.mxu0 0.0
      %837 = vmatpush1.msra.mxu0 0.0
      %838 = vmatprep.subr.mxu0 0.0
      %839 = vmatpush1.msra.mxu0 0.0
      %840 = vmatprep.mubr.f32.mxu0 0.0
      %841 = vmatmul.mubr.f32.gmra.mrb[0].mxu0 %v774
      %v842 = vpop.f32.mrb[0].mxu0
      %v843 = vadd.f32 0.0, %v842
      %v844 = vpop.f32.mrb[0].mxu0
      %845 = vdwg.mxu0
      %v846 = vadd.f32 %v766, %v843
      %v847 = vld [vmem:[%s432] sm:$0xff]
      %849 = vset.pattern.permute.xlu0 0
      %850 = vperm.xlu0 %849, %v847
      %v851 = vpop.permute.xlu0 %850
      %v853 = vmul.f32 %v846, %v851
      %vm854 = vcmask 130048
      %855 = vst.msk [vmem:[%s449] sm:$0xff] %vm854, %v853
      %p856 = scmp.lt.s32.totalorder %s20, 2
      %s857 = scalar_select %p856, %s20, 2
      %s858 = smul.addr %s857, 8
      %s859 = scalar_lea.vmem %s9, %s858
      // Predicated region
      $region57: #{gnn_forward.10} parent=55 // pred_check
        %p860 = pneg %p267
      $region58: #{gnn_forward.10} parent=55 // pred_check_branch
        %862 = sbr.rel (%p860) target = $region60
      $region59: #{gnn_forward.10} parent=55 // pred_region
        _
      $region60: #{gnn_forward.10} parent=55 // pred_fallthru
        _
    $region56: #{gnn_forward.10} parent=5 // pred_fallthru
      _
    %p863 = scmp.le.s32.totalorder 2, %s15
    // Predicated region
    $region61: #{gnn_forward.10} parent=5 // pred_check
      %p864 = pneg %p863
    $region62: #{gnn_forward.10} parent=5 // pred_check_branch
      %866 = sbr.rel (%p864) target = $region64
    $region63: #{gnn_forward.10} parent=5 // pred_region
      %s867 = ssub.s32 %s15, 2
      // Predicated region
      $region65: #{gnn_forward.10} parent=63 // pred_check
        %p868 = pneg %p273
      $region66: #{gnn_forward.10} parent=63 // pred_check_branch
        %870 = sbr.rel (%p868) target = $region68
      $region67: #{gnn_forward.10} parent=63 // pred_region
        %p871 = scmp.lt.s32.totalorder %s21, 2
        %s872 = scalar_select %p871, %s21, 2
        %s873 = smul.addr %s872, 8
        %s874 = scalar_lea.vmem %s9, %s873
      $region68: #{gnn_forward.10} parent=63 // pred_fallthru
        _
    $region64: #{gnn_forward.10} parent=5 // pred_fallthru
      _
  $region6: #{gnn_forward.10} parent=0 // loop_footer
    %s19 = sadd.s32 1, %s15
  $region7: #{gnn_forward.10} parent=0 // loop_footer_branch
    %14 = sbr.rel target = $region3
  $region8: #{gnn_forward.10} parent=0 // loop_exit
    _

// kernel: gnn_forward.12
$region0: #{gnn_forward.12}
  #allocation0 [shape = 'u32[]', space=smem, size = 0x4, offset = 0x4, fixed_abs, tag = 'smem constant byte address 0x4 - core index']
  #allocation1 [shape = 'u32[144,128]{1,0:T(1,128)}', space=vmem, size = 0x12000, scoped, tag = 'internal scratch']
  %s0 = inlined_call_operand.vmem [shape: f32[24,16], index: 0, kind: input, shape index: {}]
  %s1 = inlined_call_operand.vmem [shape: f32[3,8,24], index: 1, kind: input, shape index: {}]
  %s2 = inlined_call_operand.vmem [shape: f32[3,8,24], index: 2, kind: input, shape index: {}]
  %s3 = inlined_call_operand.vmem [shape: f32[3,8,8], index: 3, kind: input, shape index: {}]
  %s4 = inlined_call_operand.vmem [shape: f32[3,8,1], index: 4, kind: input, shape index: {}]
  %s5 = inlined_call_operand.vmem [shape: f32[3,8,1], index: 5, kind: input, shape index: {}]
  %s6 = inlined_call_operand.vmem [shape: f32[3,16,16], index: 6, kind: input, shape index: {}]
  %s7 = inlined_call_operand.vmem [shape: f32[3,1,16], index: 7, kind: input, shape index: {}]
  %s8 = inlined_call_operand.vmem [shape: f32[3,16,16], index: 8, kind: input, shape index: {}]
  %s9 = inlined_call_operand.vmem [shape: f32[3,8,16], index: 9, kind: output, shape index: {}]
  %s10 = sld [smem:[#allocation0]]
  $region69: #{gnn_forward.12} parent=0
    _
  %s12 = ssub.s32 1, %s10
  %s13 = scalar_select 0, %s12, %s10
  loop: start=0, step=1, limit=5
  $region2: #{gnn_forward.12} parent=0 // loop_pre_header
    _
  $region3: #{gnn_forward.12} parent=0 // loop_header
    %s15 = sphi 0, %s19
    %p16 = scmp.ge.s32.totalorder %s15, 5
    %s23 = sphi 0, %s23
    %s25 = sphi 0, %s23
    %s26 = sphi 0, %s25
    %s40 = sphi 0, %s26
    %s46 = sphi 0, %s48
    %s49 = sphi 0, %s46
    %s50 = sphi 0, %s49
    %s66 = sphi 0, %s50
    %s72 = sphi 0, %s74
    %s75 = sphi 0, %s72
    %s76 = sphi 0, %s75
    %s92 = sphi 0, %s76
    %s98 = sphi 0, %s100
    %s101 = sphi 0, %s98
    %s102 = sphi 0, %s101
    %s118 = sphi 0, %s102
    %s124 = sphi 0, %s126
    %s127 = sphi 0, %s124
    %s128 = sphi 0, %s127
    %s144 = sphi 0, %s128
    %s150 = sphi 0, %s152
    %s153 = sphi 0, %s150
    %s154 = sphi 0, %s153
    %s170 = sphi 0, %s154
    %s176 = sphi 0, %s178
    %s179 = sphi 0, %s176
    %s180 = sphi 0, %s179
    %s196 = sphi 0, %s180
    %s202 = sphi 0, %s204
    %s205 = sphi 0, %s202
    %s206 = sphi 0, %s205
    %s222 = sphi 0, %s206
    %s228 = sphi 0, %s230
    %s231 = sphi 0, %s228
    %s232 = sphi 0, %s231
    %s248 = sphi 0, %s232
    %s254 = sphi 0, %s256
    %s257 = sphi 0, %s254
    %s258 = sphi 0, %s257
    %s274 = sphi 0, %s258
  $region4: #{gnn_forward.12} parent=0 // loop_header_branch
    %18 = sbr.rel (%p16) target = $region8
  $region5: #{gnn_forward.12} parent=0 // loop_body
    %s20 = ssub.s32 %s15, 1
    %s21 = ssub.s32 %s15, 2
    %s22 = sadd.s32 %s15, 1
    %s24 = sadd.s32 %s23, 1
    %p27 = scmp.eq.s32.totalorder %s15, 2
    %p28 = scmp.ne.s32.totalorder %s23, %s25
    %p29 = scmp.eq.s32.totalorder %s15, 0
    %p30 = por %p28, %p29
    %p31 = scmp.ne.s32.totalorder %s23, %s25
    %p32 = scmp.eq.s32.totalorder %s20, 2
    %p33 = por %p31, %p32
    %p34 = scmp.ne.s32.totalorder %s25, %s26
    %p35 = scmp.eq.s32.totalorder %s20, 0
    %p36 = por %p34, %p35
    %p37 = scmp.ne.s32.totalorder %s25, %s26
    %p38 = scmp.eq.s32.totalorder %s21, 2
    %p39 = por %p37, %p38
    %p41 = scmp.ne.s32.totalorder %s26, %s40
    %p42 = scmp.eq.s32.totalorder %s21, 0
    %p43 = por %p41, %p42
    %s44 = ssub.s32 %s15, %s22
    %p45 = scmp.eq.s32.totalorder %s44, 0
    %s47 = sadd.s32 %s46, 1
    %s48 = scalar_select %p45, %s46, %s47
    %p51 = pneg %p45
    %p52 = scmp.eq.s32.totalorder %s15, 2
    %p53 = por %p51, %p52
    %p54 = scmp.ne.s32.totalorder %s46, %s49
    %p55 = scmp.eq.s32.totalorder %s15, 0
    %p56 = por %p54, %p55
    %p57 = scmp.ne.s32.totalorder %s46, %s49
    %p58 = scmp.eq.s32.totalorder %s20, 2
    %p59 = por %p57, %p58
    %p60 = scmp.ne.s32.totalorder %s49, %s50
    %p61 = scmp.eq.s32.totalorder %s20, 0
    %p62 = por %p60, %p61
    %p63 = scmp.ne.s32.totalorder %s49, %s50
    %p64 = scmp.eq.s32.totalorder %s21, 2
    %p65 = por %p63, %p64
    %p67 = scmp.ne.s32.totalorder %s50, %s66
    %p68 = scmp.eq.s32.totalorder %s21, 0
    %p69 = por %p67, %p68
    %s70 = ssub.s32 %s15, %s22
    %p71 = scmp.eq.s32.totalorder %s70, 0
    %s73 = sadd.s32 %s72, 1
    %s74 = scalar_select %p71, %s72, %s73
    %p77 = pneg %p71
    %p78 = scmp.eq.s32.totalorder %s15, 2
    %p79 = por %p77, %p78
    %p80 = scmp.ne.s32.totalorder %s72, %s75
    %p81 = scmp.eq.s32.totalorder %s15, 0
    %p82 = por %p80, %p81
    %p83 = scmp.ne.s32.totalorder %s72, %s75
    %p84 = scmp.eq.s32.totalorder %s20, 2
    %p85 = por %p83, %p84
    %p86 = scmp.ne.s32.totalorder %s75, %s76
    %p87 = scmp.eq.s32.totalorder %s20, 0
    %p88 = por %p86, %p87
    %p89 = scmp.ne.s32.totalorder %s75, %s76
    %p90 = scmp.eq.s32.totalorder %s21, 2
    %p91 = por %p89, %p90
    %p93 = scmp.ne.s32.totalorder %s76, %s92
    %p94 = scmp.eq.s32.totalorder %s21, 0
    %p95 = por %p93, %p94
    %s96 = ssub.s32 %s15, %s22
    %p97 = scmp.eq.s32.totalorder %s96, 0
    %s99 = sadd.s32 %s98, 1
    %s100 = scalar_select %p97, %s98, %s99
    %p103 = pneg %p97
    %p104 = scmp.eq.s32.totalorder %s15, 2
    %p105 = por %p103, %p104
    %p106 = scmp.ne.s32.totalorder %s98, %s101
    %p107 = scmp.eq.s32.totalorder %s15, 0
    %p108 = por %p106, %p107
    %p109 = scmp.ne.s32.totalorder %s98, %s101
    %p110 = scmp.eq.s32.totalorder %s20, 2
    %p111 = por %p109, %p110
    %p112 = scmp.ne.s32.totalorder %s101, %s102
    %p113 = scmp.eq.s32.totalorder %s20, 0
    %p114 = por %p112, %p113
    %p115 = scmp.ne.s32.totalorder %s101, %s102
    %p116 = scmp.eq.s32.totalorder %s21, 2
    %p117 = por %p115, %p116
    %p119 = scmp.ne.s32.totalorder %s102, %s118
    %p120 = scmp.eq.s32.totalorder %s21, 0
    %p121 = por %p119, %p120
    %s122 = ssub.s32 %s15, %s22
    %p123 = scmp.eq.s32.totalorder %s122, 0
    %s125 = sadd.s32 %s124, 1
    %s126 = scalar_select %p123, %s124, %s125
    %p129 = pneg %p123
    %p130 = scmp.eq.s32.totalorder %s15, 2
    %p131 = por %p129, %p130
    %p132 = scmp.ne.s32.totalorder %s124, %s127
    %p133 = scmp.eq.s32.totalorder %s15, 0
    %p134 = por %p132, %p133
    %p135 = scmp.ne.s32.totalorder %s124, %s127
    %p136 = scmp.eq.s32.totalorder %s20, 2
    %p137 = por %p135, %p136
    %p138 = scmp.ne.s32.totalorder %s127, %s128
    %p139 = scmp.eq.s32.totalorder %s20, 0
    %p140 = por %p138, %p139
    %p141 = scmp.ne.s32.totalorder %s127, %s128
    %p142 = scmp.eq.s32.totalorder %s21, 2
    %p143 = por %p141, %p142
    %p145 = scmp.ne.s32.totalorder %s128, %s144
    %p146 = scmp.eq.s32.totalorder %s21, 0
    %p147 = por %p145, %p146
    %s148 = ssub.s32 %s15, %s22
    %p149 = scmp.eq.s32.totalorder %s148, 0
    %s151 = sadd.s32 %s150, 1
    %s152 = scalar_select %p149, %s150, %s151
    %p155 = pneg %p149
    %p156 = scmp.eq.s32.totalorder %s15, 2
    %p157 = por %p155, %p156
    %p158 = scmp.ne.s32.totalorder %s150, %s153
    %p159 = scmp.eq.s32.totalorder %s15, 0
    %p160 = por %p158, %p159
    %p161 = scmp.ne.s32.totalorder %s150, %s153
    %p162 = scmp.eq.s32.totalorder %s20, 2
    %p163 = por %p161, %p162
    %p164 = scmp.ne.s32.totalorder %s153, %s154
    %p165 = scmp.eq.s32.totalorder %s20, 0
    %p166 = por %p164, %p165
    %p167 = scmp.ne.s32.totalorder %s153, %s154
    %p168 = scmp.eq.s32.totalorder %s21, 2
    %p169 = por %p167, %p168
    %p171 = scmp.ne.s32.totalorder %s154, %s170
    %p172 = scmp.eq.s32.totalorder %s21, 0
    %p173 = por %p171, %p172
    %s174 = ssub.s32 %s15, %s22
    %p175 = scmp.eq.s32.totalorder %s174, 0
    %s177 = sadd.s32 %s176, 1
    %s178 = scalar_select %p175, %s176, %s177
    %p181 = pneg %p175
    %p182 = scmp.eq.s32.totalorder %s15, 2
    %p183 = por %p181, %p182
    %p184 = scmp.ne.s32.totalorder %s176, %s179
    %p185 = scmp.eq.s32.totalorder %s15, 0
    %p186 = por %p184, %p185
    %p187 = scmp.ne.s32.totalorder %s176, %s179
    %p188 = scmp.eq.s32.totalorder %s20, 2
    %p189 = por %p187, %p188
    %p190 = scmp.ne.s32.totalorder %s179, %s180
    %p191 = scmp.eq.s32.totalorder %s20, 0
    %p192 = por %p190, %p191
    %p193 = scmp.ne.s32.totalorder %s179, %s180
    %p194 = scmp.eq.s32.totalorder %s21, 2
    %p195 = por %p193, %p194
    %p197 = scmp.ne.s32.totalorder %s180, %s196
    %p198 = scmp.eq.s32.totalorder %s21, 0
    %p199 = por %p197, %p198
    %s200 = ssub.s32 %s15, %s22
    %p201 = scmp.eq.s32.totalorder %s200, 0
    %s203 = sadd.s32 %s202, 1
    %s204 = scalar_select %p201, %s202, %s203
    %p207 = pneg %p201
    %p208 = scmp.eq.s32.totalorder %s15, 2
    %p209 = por %p207, %p208
    %p210 = scmp.ne.s32.totalorder %s202, %s205
    %p211 = scmp.eq.s32.totalorder %s15, 0
    %p212 = por %p210, %p211
    %p213 = scmp.ne.s32.totalorder %s202, %s205
    %p214 = scmp.eq.s32.totalorder %s20, 2
    %p215 = por %p213, %p214
    %p216 = scmp.ne.s32.totalorder %s205, %s206
    %p217 = scmp.eq.s32.totalorder %s20, 0
    %p218 = por %p216, %p217
    %p219 = scmp.ne.s32.totalorder %s205, %s206
    %p220 = scmp.eq.s32.totalorder %s21, 2
    %p221 = por %p219, %p220
    %p223 = scmp.ne.s32.totalorder %s206, %s222
    %p224 = scmp.eq.s32.totalorder %s21, 0
    %p225 = por %p223, %p224
    %s226 = ssub.s32 %s15, %s22
    %p227 = scmp.eq.s32.totalorder %s226, 0
    %s229 = sadd.s32 %s228, 1
    %s230 = scalar_select %p227, %s228, %s229
    %p233 = pneg %p227
    %p234 = scmp.eq.s32.totalorder %s15, 2
    %p235 = por %p233, %p234
    %p236 = scmp.ne.s32.totalorder %s228, %s231
    %p237 = scmp.eq.s32.totalorder %s15, 0
    %p238 = por %p236, %p237
    %p239 = scmp.ne.s32.totalorder %s228, %s231
    %p240 = scmp.eq.s32.totalorder %s20, 2
    %p241 = por %p239, %p240
    %p242 = scmp.ne.s32.totalorder %s231, %s232
    %p243 = scmp.eq.s32.totalorder %s20, 0
    %p244 = por %p242, %p243
    %p245 = scmp.ne.s32.totalorder %s231, %s232
    %p246 = scmp.eq.s32.totalorder %s21, 2
    %p247 = por %p245, %p246
    %p249 = scmp.ne.s32.totalorder %s232, %s248
    %p250 = scmp.eq.s32.totalorder %s21, 0
    %p251 = por %p249, %p250
    %s252 = ssub.s32 %s15, %s22
    %p253 = scmp.eq.s32.totalorder %s252, 0
    %s255 = sadd.s32 %s254, 1
    %s256 = scalar_select %p253, %s254, %s255
    %p259 = pneg %p253
    %p260 = scmp.eq.s32.totalorder %s15, 2
    %p261 = por %p259, %p260
    %p262 = scmp.ne.s32.totalorder %s254, %s257
    %p263 = scmp.eq.s32.totalorder %s15, 0
    %p264 = por %p262, %p263
    %p265 = scmp.ne.s32.totalorder %s254, %s257
    %p266 = scmp.eq.s32.totalorder %s20, 2
    %p267 = por %p265, %p266
    %p268 = scmp.ne.s32.totalorder %s257, %s258
    %p269 = scmp.eq.s32.totalorder %s20, 0
    %p270 = por %p268, %p269
    %p271 = scmp.ne.s32.totalorder %s257, %s258
    %p272 = scmp.eq.s32.totalorder %s21, 2
    %p273 = por %p271, %p272
    %p275 = scmp.ne.s32.totalorder %s258, %s274
    %p276 = scmp.eq.s32.totalorder %s21, 0
    %p277 = por %p275, %p276
    %p278 = scmp.le.s32.totalorder 1, %s15
    %p279 = scmp.lt.s32.totalorder %s15, 4
    %p280 = pnand %p278, %p279
    %p281 = pneg %p280
    // Predicated region
    $region9: #{gnn_forward.12} parent=5 // pred_check
      _
    $region10: #{gnn_forward.12} parent=5 // pred_check_branch
      %283 = sbr.rel (%p280) target = $region12
    $region11: #{gnn_forward.12} parent=5 // pred_region
      %s284 = ssub.s32 %s15, 1
      // Predicated region
      $region13: #{gnn_forward.12} parent=11 // pred_check
        %p285 = pneg %p36
      $region14: #{gnn_forward.12} parent=11 // pred_check_branch
        %287 = sbr.rel (%p285) target = $region16
      $region15: #{gnn_forward.12} parent=11 // pred_region
        _
      $region16: #{gnn_forward.12} parent=11 // pred_fallthru
        _
    $region12: #{gnn_forward.12} parent=5 // pred_fallthru
      _
    %p288 = scmp.lt.s32.totalorder %s15, 3
    // Predicated region
    $region17: #{gnn_forward.12} parent=5 // pred_check
      %p289 = pneg %p288
    $region18: #{gnn_forward.12} parent=5 // pred_check_branch
      %291 = sbr.rel (%p289) target = $region20
    $region19: #{gnn_forward.12} parent=5 // pred_region
      // Predicated region
      $region21: #{gnn_forward.12} parent=19 // pred_check
        %p292 = pneg %p56
      $region22: #{gnn_forward.12} parent=19 // pred_check_branch
        %294 = sbr.rel (%p292) target = $region24
      $region23: #{gnn_forward.12} parent=19 // pred_region
        %p295 = scmp.lt.s32.totalorder %s15, 2
        %s296 = scalar_select %p295, %s15, 2
        %s297 = smul.addr %s296, 8
        %s298 = scalar_lea.vmem %s1, %s297
      $region24: #{gnn_forward.12} parent=19 // pred_fallthru
        _
      // Predicated region
      $region25: #{gnn_forward.12} parent=19 // pred_check
        %p299 = pneg %p82
      $region26: #{gnn_forward.12} parent=19 // pred_check_branch
        %301 = sbr.rel (%p299) target = $region28
      $region27: #{gnn_forward.12} parent=19 // pred_region
        %p302 = scmp.lt.s32.totalorder %s15, 2
        %s303 = scalar_select %p302, %s15, 2
        %s304 = smul.addr %s303, 8
        %s305 = scalar_lea.vmem %s2, %s304
      $region28: #{gnn_forward.12} parent=19 // pred_fallthru
        _
      // Predicated region
      $region29: #{gnn_forward.12} parent=19 // pred_check
        %p306 = pneg %p108
      $region30: #{gnn_forward.12} parent=19 // pred_check_branch
        %308 = sbr.rel (%p306) target = $region32
      $region31: #{gnn_forward.12} parent=19 // pred_region
        %p309 = scmp.lt.s32.totalorder %s15, 2
        %s310 = scalar_select %p309, %s15, 2
        %s311 = smul.addr %s310, 8
        %s312 = scalar_lea.vmem %s3, %s311
      $region32: #{gnn_forward.12} parent=19 // pred_fallthru
        _
      // Predicated region
      $region33: #{gnn_forward.12} parent=19 // pred_check
        %p313 = pneg %p134
      $region34: #{gnn_forward.12} parent=19 // pred_check_branch
        %315 = sbr.rel (%p313) target = $region36
      $region35: #{gnn_forward.12} parent=19 // pred_region
        %p316 = scmp.lt.s32.totalorder %s15, 2
        %s317 = scalar_select %p316, %s15, 2
        %s318 = smul.addr %s317, 8
        %s319 = scalar_lea.vmem %s4, %s318
      $region36: #{gnn_forward.12} parent=19 // pred_fallthru
        _
      // Predicated region
      $region37: #{gnn_forward.12} parent=19 // pred_check
        %p320 = pneg %p160
      $region38: #{gnn_forward.12} parent=19 // pred_check_branch
        %322 = sbr.rel (%p320) target = $region40
      $region39: #{gnn_forward.12} parent=19 // pred_region
        %p323 = scmp.lt.s32.totalorder %s15, 2
        %s324 = scalar_select %p323, %s15, 2
        %s325 = smul.addr %s324, 8
        %s326 = scalar_lea.vmem %s5, %s325
      $region40: #{gnn_forward.12} parent=19 // pred_fallthru
        _
      // Predicated region
      $region41: #{gnn_forward.12} parent=19 // pred_check
        %p327 = pneg %p186
      $region42: #{gnn_forward.12} parent=19 // pred_check_branch
        %329 = sbr.rel (%p327) target = $region44
      $region43: #{gnn_forward.12} parent=19 // pred_region
        %p330 = scmp.lt.s32.totalorder %s15, 2
        %s331 = scalar_select %p330, %s15, 2
        %s332 = smul.addr %s331, 2
        %s333 = smul.addr %s332, 8
        %s334 = scalar_lea.vmem %s6, %s333
      $region44: #{gnn_forward.12} parent=19 // pred_fallthru
        _
      // Predicated region
      $region45: #{gnn_forward.12} parent=19 // pred_check
        %p335 = pneg %p212
      $region46: #{gnn_forward.12} parent=19 // pred_check_branch
        %337 = sbr.rel (%p335) target = $region48
      $region47: #{gnn_forward.12} parent=19 // pred_region
        %p338 = scmp.lt.s32.totalorder %s15, 2
        %s339 = scalar_select %p338, %s15, 2
        %s340 = scalar_lea.vmem %s7, %s339
      $region48: #{gnn_forward.12} parent=19 // pred_fallthru
        _
      // Predicated region
      $region49: #{gnn_forward.12} parent=19 // pred_check
        %p341 = pneg %p238
      $region50: #{gnn_forward.12} parent=19 // pred_check_branch
        %343 = sbr.rel (%p341) target = $region52
      $region51: #{gnn_forward.12} parent=19 // pred_region
        %p344 = scmp.lt.s32.totalorder %s15, 2
        %s345 = scalar_select %p344, %s15, 2
        %s346 = smul.addr %s345, 2
        %s347 = smul.addr %s346, 8
        %s348 = scalar_lea.vmem %s8, %s347
      $region52: #{gnn_forward.12} parent=19 // pred_fallthru
        _
    $region20: #{gnn_forward.12} parent=5 // pred_fallthru
      _
    %p349 = scmp.le.s32.totalorder 1, %s15
    %p350 = scmp.lt.s32.totalorder %s15, 4
    %p351 = pnand %p349, %p350
    %p352 = pneg %p351
    // Predicated region
    $region53: #{gnn_forward.12} parent=5 // pred_check
      _
    $region54: #{gnn_forward.12} parent=5 // pred_check_branch
      %354 = sbr.rel (%p351) target = $region56
    $region55: #{gnn_forward.12} parent=5 // pred_region
      %s355 = ssub.s32 %s15, 1
      %p356 = pneg %p36
      %p357 = pneg %p33
      %p358 = scmp.lt.s32.totalorder %s20, 2
      %s359 = scalar_select %p358, %s20, 2
      %s360 = smul.addr %s359, 8
      %s361 = scalar_lea.vmem %s1, %s360
      %p362 = pneg %p62
      %p363 = pneg %p59
      %p364 = scmp.lt.s32.totalorder %s20, 2
      %s365 = scalar_select %p364, %s20, 2
      %s366 = smul.addr %s365, 8
      %s367 = scalar_lea.vmem %s2, %s366
      %p368 = pneg %p88
      %p369 = pneg %p85
      %p370 = scmp.lt.s32.totalorder %s20, 2
      %s371 = scalar_select %p370, %s20, 2
      %s372 = smul.addr %s371, 8
      %s373 = scalar_lea.vmem %s3, %s372
      %p374 = pneg %p114
      %p375 = pneg %p111
      %p376 = scmp.lt.s32.totalorder %s20, 2
      %s377 = scalar_select %p376, %s20, 2
      %s378 = smul.addr %s377, 8
      %s379 = scalar_lea.vmem %s4, %s378
      %p380 = pneg %p140
      %p381 = pneg %p137
      %p382 = scmp.lt.s32.totalorder %s20, 2
      %s383 = scalar_select %p382, %s20, 2
      %s384 = smul.addr %s383, 8
      %s385 = scalar_lea.vmem %s5, %s384
      %p386 = pneg %p166
      %p387 = pneg %p163
      %p388 = scmp.lt.s32.totalorder %s20, 2
      %s389 = scalar_select %p388, %s20, 2
      %s390 = smul.addr %s389, 2
      %s391 = smul.addr %s390, 8
      %s392 = scalar_lea.vmem %s6, %s391
      %p393 = pneg %p192
      %p394 = pneg %p189
      %p395 = scmp.lt.s32.totalorder %s20, 2
      %s396 = scalar_select %p395, %s20, 2
      %s397 = scalar_lea.vmem %s7, %s396
      %p398 = pneg %p218
      %p399 = pneg %p215
      %p400 = scmp.lt.s32.totalorder %s20, 2
      %s401 = scalar_select %p400, %s20, 2
      %s402 = smul.addr %s401, 2
      %s403 = smul.addr %s402, 8
      %s404 = scalar_lea.vmem %s8, %s403
      %p405 = pneg %p244
      %p406 = pneg %p241
      %p407 = pneg %p270
      %p408 = pneg %p267
      %p409 = scmp.lt.s32.totalorder %s20, 2
      %s410 = scalar_select %p409, %s20, 2
      %s411 = smul.addr %s410, 8
      %s412 = scalar_lea.vmem %s9, %s411
      %p413 = scmp.lt.s32.totalorder %s20, 2
      %s414 = scalar_select %p413, %s20, 2
      %s415 = smul.addr %s414, 8
      %s416 = scalar_lea.vmem %s1, %s415
      %p417 = scmp.lt.s32.totalorder %s20, 2
      %s418 = scalar_select %p417, %s20, 2
      %s419 = smul.addr %s418, 8
      %s420 = scalar_lea.vmem %s2, %s419
      %p421 = scmp.lt.s32.totalorder %s20, 2
      %s422 = scalar_select %p421, %s20, 2
      %s423 = smul.addr %s422, 8
      %s424 = scalar_lea.vmem %s3, %s423
      %p425 = scmp.lt.s32.totalorder %s20, 2
      %s426 = scalar_select %p425, %s20, 2
      %s427 = smul.addr %s426, 8
      %s428 = scalar_lea.vmem %s4, %s427
      %p429 = scmp.lt.s32.totalorder %s20, 2
      %s430 = scalar_select %p429, %s20, 2
      %s431 = smul.addr %s430, 8
      %s432 = scalar_lea.vmem %s5, %s431
      %p433 = scmp.lt.s32.totalorder %s20, 2
      %s434 = scalar_select %p433, %s20, 2
      %s435 = smul.addr %s434, 2
      %s436 = smul.addr %s435, 8
      %s437 = scalar_lea.vmem %s6, %s436
      %p438 = scmp.lt.s32.totalorder %s20, 2
      %s439 = scalar_select %p438, %s20, 2
      %s440 = scalar_lea.vmem %s7, %s439
      %p441 = scmp.lt.s32.totalorder %s20, 2
      %s442 = scalar_select %p441, %s20, 2
      %s443 = smul.addr %s442, 2
      %s444 = smul.addr %s443, 8
      %s445 = scalar_lea.vmem %s8, %s444
      %p446 = scmp.lt.s32.totalorder %s20, 2
      %s447 = scalar_select %p446, %s20, 2
      %s448 = smul.addr %s447, 8
      %s449 = scalar_lea.vmem %s9, %s448
      %v450 = vld [vmem:[%s0] sm:$0xff]
      %v451 = vld [vmem:[%s0 + $0x8] sm:$0xff]
      %v452 = vld [vmem:[%s0 + $0x10] sm:$0xff]
      %v453 = vld [vmem:[%s416] sm:$0xff]
      %vm454 = vcmask 195584
      %v456 = vsel %vm454, %v453, 0
      %458 = vmatprep.subr.mxu0 0.0
      %459 = vmatpush1.msra.mxu0 %v450
      %460 = vmatprep.subr.mxu0 0.0
      %461 = vmatpush1.msra.mxu0 %v451
      %462 = vmatprep.subr.mxu0 0.0
      %463 = vmatpush1.msra.mxu0 %v452
      %464 = vmatprep.subr.mxu0 0.0
      %465 = vmatpush1.msra.mxu0 0.0
      %466 = vmatprep.subr.mxu0 0.0
      %467 = vmatpush1.msra.mxu0 0.0
      %468 = vmatprep.subr.mxu0 0.0
      %469 = vmatpush1.msra.mxu0 0.0
      %470 = vmatprep.subr.mxu0 0.0
      %471 = vmatpush1.msra.mxu0 0.0
      %472 = vmatprep.subr.mxu0 0.0
      %473 = vmatpush1.msra.mxu0 0.0
      %474 = vmatprep.subr.mxu0 0.0
      %475 = vmatpush1.msra.mxu0 0.0
      %476 = vmatprep.subr.mxu0 0.0
      %477 = vmatpush1.msra.mxu0 0.0
      %478 = vmatprep.subr.mxu0 0.0
      %479 = vmatpush1.msra.mxu0 0.0
      %480 = vmatprep.subr.mxu0 0.0
      %481 = vmatpush1.msra.mxu0 0.0
      %482 = vmatprep.subr.mxu0 0.0
      %483 = vmatpush1.msra.mxu0 0.0
      %484 = vmatprep.subr.mxu0 0.0
      %485 = vmatpush1.msra.mxu0 0.0
      %486 = vmatprep.subr.mxu0 0.0
      %487 = vmatpush1.msra.mxu0 0.0
      %488 = vmatprep.subr.mxu0 0.0
      %489 = vmatpush1.msra.mxu0 0.0
      %490 = vmatprep.subr.mxu0 0.0
      %491 = vmatpush1.msra.mxu0 0.0
      %492 = vmatprep.subr.mxu0 0.0
      %493 = vmatpush1.msra.mxu0 0.0
      %494 = vmatprep.subr.mxu0 0.0
      %495 = vmatpush1.msra.mxu0 0.0
      %496 = vmatprep.subr.mxu0 0.0
      %497 = vmatpush1.msra.mxu0 0.0
      %498 = vmatprep.subr.mxu0 0.0
      %499 = vmatpush1.msra.mxu0 0.0
      %500 = vmatprep.subr.mxu0 0.0
      %501 = vmatpush1.msra.mxu0 0.0
      %502 = vmatprep.subr.mxu0 0.0
      %503 = vmatpush1.msra.mxu0 0.0
      %504 = vmatprep.subr.mxu0 0.0
      %505 = vmatpush1.msra.mxu0 0.0
      %506 = vmatprep.subr.mxu0 0.0
      %507 = vmatpush1.msra.mxu0 0.0
      %508 = vmatprep.subr.mxu0 0.0
      %509 = vmatpush1.msra.mxu0 0.0
      %510 = vmatprep.subr.mxu0 0.0
      %511 = vmatpush1.msra.mxu0 0.0
      %512 = vmatprep.subr.mxu0 0.0
      %513 = vmatpush1.msra.mxu0 0.0
      %514 = vmatprep.subr.mxu0 0.0
      %515 = vmatpush1.msra.mxu0 0.0
      %516 = vmatprep.subr.mxu0 0.0
      %517 = vmatpush1.msra.mxu0 0.0
      %518 = vmatprep.subr.mxu0 0.0
      %519 = vmatpush1.msra.mxu0 0.0
      %520 = vmatprep.subr.mxu0 0.0
      %521 = vmatpush1.msra.mxu0 0.0
      %522 = vmatprep.mubr.f32.mxu0 0.0
      %523 = vmatmul.mubr.f32.gmra.mrb[0].mxu0 %v456
      %v524 = vpop.f32.mrb[0].mxu0
      %v525 = vadd.f32 0.0, %v524
      %v526 = vpop.f32.mrb[0].mxu0
      %527 = vdwg.mxu0
      %v528 = vld [vmem:[%s424] sm:$0xff]
      %vm529 = vcmask 64512
      %v531 = vsel %vm529, %v528, 0
      %533 = vmatprep.subr.mxu0 0.0
      %534 = vmatpush1.msra.mxu0 %v525
      %535 = vmatprep.subr.mxu0 0.0
      %536 = vmatpush1.msra.mxu0 0.0
      %537 = vmatprep.subr.mxu0 0.0
      %538 = vmatpush1.msra.mxu0 0.0
      %539 = vmatprep.subr.mxu0 0.0
      %540 = vmatpush1.msra.mxu0 0.0
      %541 = vmatprep.subr.mxu0 0.0
      %542 = vmatpush1.msra.mxu0 0.0
      %543 = vmatprep.subr.mxu0 0.0
      %544 = vmatpush1.msra.mxu0 0.0
      %545 = vmatprep.subr.mxu0 0.0
      %546 = vmatpush1.msra.mxu0 0.0
      %547 = vmatprep.subr.mxu0 0.0
      %548 = vmatpush1.msra.mxu0 0.0
      %549 = vmatprep.subr.mxu0 0.0
      %550 = vmatpush1.msra.mxu0 0.0
      %551 = vmatprep.subr.mxu0 0.0
      %552 = vmatpush1.msra.mxu0 0.0
      %553 = vmatprep.subr.mxu0 0.0
      %554 = vmatpush1.msra.mxu0 0.0
      %555 = vmatprep.subr.mxu0 0.0
      %556 = vmatpush1.msra.mxu0 0.0
      %557 = vmatprep.subr.mxu0 0.0
      %558 = vmatpush1.msra.mxu0 0.0
      %559 = vmatprep.subr.mxu0 0.0
      %560 = vmatpush1.msra.mxu0 0.0
      %561 = vmatprep.subr.mxu0 0.0
      %562 = vmatpush1.msra.mxu0 0.0
      %563 = vmatprep.subr.mxu0 0.0
      %564 = vmatpush1.msra.mxu0 0.0
      %565 = vmatprep.subr.mxu0 0.0
      %566 = vmatpush1.msra.mxu0 0.0
      %567 = vmatprep.subr.mxu0 0.0
      %568 = vmatpush1.msra.mxu0 0.0
      %569 = vmatprep.subr.mxu0 0.0
      %570 = vmatpush1.msra.mxu0 0.0
      %571 = vmatprep.subr.mxu0 0.0
      %572 = vmatpush1.msra.mxu0 0.0
      %573 = vmatprep.subr.mxu0 0.0
      %574 = vmatpush1.msra.mxu0 0.0
      %575 = vmatprep.subr.mxu0 0.0
      %576 = vmatpush1.msra.mxu0 0.0
      %577 = vmatprep.subr.mxu0 0.0
      %578 = vmatpush1.msra.mxu0 0.0
      %579 = vmatprep.subr.mxu0 0.0
      %580 = vmatpush1.msra.mxu0 0.0
      %581 = vmatprep.subr.mxu0 0.0
      %582 = vmatpush1.msra.mxu0 0.0
      %583 = vmatprep.subr.mxu0 0.0
      %584 = vmatpush1.msra.mxu0 0.0
      %585 = vmatprep.subr.mxu0 0.0
      %586 = vmatpush1.msra.mxu0 0.0
      %587 = vmatprep.subr.mxu0 0.0
      %588 = vmatpush1.msra.mxu0 0.0
      %589 = vmatprep.subr.mxu0 0.0
      %590 = vmatpush1.msra.mxu0 0.0
      %591 = vmatprep.subr.mxu0 0.0
      %592 = vmatpush1.msra.mxu0 0.0
      %593 = vmatprep.subr.mxu0 0.0
      %594 = vmatpush1.msra.mxu0 0.0
      %595 = vmatprep.subr.mxu0 0.0
      %596 = vmatpush1.msra.mxu0 0.0
      %597 = vmatprep.mubr.f32.mxu0 0.0
      %598 = vmatmul.mubr.f32.gmra.mrb[0].mxu0 %v531
      %v599 = vpop.f32.mrb[0].mxu0
      %v600 = vadd.f32 0.0, %v599
      %v601 = vpop.f32.mrb[0].mxu0
      %602 = vdwg.mxu0
      %v603 = vld [vmem:[%s428] sm:$0xff]
      %605 = vset.pattern.permute.xlu0 0
      %606 = vperm.xlu0 %605, %v603
      %v607 = vpop.permute.xlu0 %606
      %v609 = vmul.f32 %v600, %v607
      %v610 = vld [vmem:[%s420] sm:$0xff]
      %v612 = vsel %vm454, %v610, 0
      %614 = vmatprep.subr.mxu0 0.0
      %615 = vmatpush1.msra.mxu0 %v450
      %616 = vmatprep.subr.mxu0 0.0
      %617 = vmatpush1.msra.mxu0 %v451
      %618 = vmatprep.subr.mxu0 0.0
      %619 = vmatpush1.msra.mxu0 %v452
      %620 = vmatprep.subr.mxu0 0.0
      %621 = vmatpush1.msra.mxu0 0.0
      %622 = vmatprep.subr.mxu0 0.0
      %623 = vmatpush1.msra.mxu0 0.0
      %624 = vmatprep.subr.mxu0 0.0
      %625 = vmatpush1.msra.mxu0 0.0
      %626 = vmatprep.subr.mxu0 0.0
      %627 = vmatpush1.msra.mxu0 0.0
      %628 = vmatprep.subr.mxu0 0.0
      %629 = vmatpush1.msra.mxu0 0.0
      %630 = vmatprep.subr.mxu0 0.0
      %631 = vmatpush1.msra.mxu0 0.0
      %632 = vmatprep.subr.mxu0 0.0
      %633 = vmatpush1.msra.mxu0 0.0
      %634 = vmatprep.subr.mxu0 0.0
      %635 = vmatpush1.msra.mxu0 0.0
      %636 = vmatprep.subr.mxu0 0.0
      %637 = vmatpush1.msra.mxu0 0.0
      %638 = vmatprep.subr.mxu0 0.0
      %639 = vmatpush1.msra.mxu0 0.0
      %640 = vmatprep.subr.mxu0 0.0
      %641 = vmatpush1.msra.mxu0 0.0
      %642 = vmatprep.subr.mxu0 0.0
      %643 = vmatpush1.msra.mxu0 0.0
      %644 = vmatprep.subr.mxu0 0.0
      %645 = vmatpush1.msra.mxu0 0.0
      %646 = vmatprep.subr.mxu0 0.0
      %647 = vmatpush1.msra.mxu0 0.0
      %648 = vmatprep.subr.mxu0 0.0
      %649 = vmatpush1.msra.mxu0 0.0
      %650 = vmatprep.subr.mxu0 0.0
      %651 = vmatpush1.msra.mxu0 0.0
      %652 = vmatprep.subr.mxu0 0.0
      %653 = vmatpush1.msra.mxu0 0.0
      %654 = vmatprep.subr.mxu0 0.0
      %655 = vmatpush1.msra.mxu0 0.0
      %656 = vmatprep.subr.mxu0 0.0
      %657 = vmatpush1.msra.mxu0 0.0
      %658 = vmatprep.subr.mxu0 0.0
      %659 = vmatpush1.msra.mxu0 0.0
      %660 = vmatprep.subr.mxu0 0.0
      %661 = vmatpush1.msra.mxu0 0.0
      %662 = vmatprep.subr.mxu0 0.0
      %663 = vmatpush1.msra.mxu0 0.0
      %664 = vmatprep.subr.mxu0 0.0
      %665 = vmatpush1.msra.mxu0 0.0
      %666 = vmatprep.subr.mxu0 0.0
      %667 = vmatpush1.msra.mxu0 0.0
      %668 = vmatprep.subr.mxu0 0.0
      %669 = vmatpush1.msra.mxu0 0.0
      %670 = vmatprep.subr.mxu0 0.0
      %671 = vmatpush1.msra.mxu0 0.0
      %672 = vmatprep.subr.mxu0 0.0
      %673 = vmatpush1.msra.mxu0 0.0
      %674 = vmatprep.subr.mxu0 0.0
      %675 = vmatpush1.msra.mxu0 0.0
      %676 = vmatprep.subr.mxu0 0.0
      %677 = vmatpush1.msra.mxu0 0.0
      %678 = vmatprep.mubr.f32.mxu0 0.0
      %679 = vmatmul.mubr.f32.gmra.mrb[0].mxu0 %v612
      %v680 = vpop.f32.mrb[0].mxu0
      %v681 = vadd.f32 0.0, %v680
      %v682 = vpop.f32.mrb[0].mxu0
      %683 = vdwg.mxu0
      %v684 = vld [vmem:[%s437] sm:$0xff]
      %v685 = vld [vmem:[%s437 + $0x8] sm:$0xff]
      %v686 = vld [vmem:[%s440] sm:$0x1]
      %v688 = vlaneseq
      %v689 = vshrl.u32 %v688, 7
      %v690 = vsub.s32 0, %v689
      %v691 = vrot.slane %v686, %v690
      %vm693 = vcmask 130048
      %v695 = vsel %vm693, %v609, 0
      %697 = vmatprep.subr.mxu0 0.0
      %698 = vmatpush1.msra.mxu0 %v684
      %699 = vmatprep.subr.mxu0 0.0
      %700 = vmatpush1.msra.mxu0 %v685
      %701 = vmatprep.subr.mxu0 0.0
      %702 = vmatpush1.msra.mxu0 0.0
      %703 = vmatprep.subr.mxu0 0.0
      %704 = vmatpush1.msra.mxu0 0.0
      %705 = vmatprep.subr.mxu0 0.0
      %706 = vmatpush1.msra.mxu0 0.0
      %707 = vmatprep.subr.mxu0 0.0
      %708 = vmatpush1.msra.mxu0 0.0
      %709 = vmatprep.subr.mxu0 0.0
      %710 = vmatpush1.msra.mxu0 0.0
      %711 = vmatprep.subr.mxu0 0.0
      %712 = vmatpush1.msra.mxu0 0.0
      %713 = vmatprep.subr.mxu0 0.0
      %714 = vmatpush1.msra.mxu0 0.0
      %715 = vmatprep.subr.mxu0 0.0
      %716 = vmatpush1.msra.mxu0 0.0
      %717 = vmatprep.subr.mxu0 0.0
      %718 = vmatpush1.msra.mxu0 0.0
      %719 = vmatprep.subr.mxu0 0.0
      %720 = vmatpush1.msra.mxu0 0.0
      %721 = vmatprep.subr.mxu0 0.0
      %722 = vmatpush1.msra.mxu0 0.0
      %723 = vmatprep.subr.mxu0 0.0
      %724 = vmatpush1.msra.mxu0 0.0
      %725 = vmatprep.subr.mxu0 0.0
      %726 = vmatpush1.msra.mxu0 0.0
      %727 = vmatprep.subr.mxu0 0.0
      %728 = vmatpush1.msra.mxu0 0.0
      %729 = vmatprep.subr.mxu0 0.0
      %730 = vmatpush1.msra.mxu0 0.0
      %731 = vmatprep.subr.mxu0 0.0
      %732 = vmatpush1.msra.mxu0 0.0
      %733 = vmatprep.subr.mxu0 0.0
      %734 = vmatpush1.msra.mxu0 0.0
      %735 = vmatprep.subr.mxu0 0.0
      %736 = vmatpush1.msra.mxu0 0.0
      %737 = vmatprep.subr.mxu0 0.0
      %738 = vmatpush1.msra.mxu0 0.0
      %739 = vmatprep.subr.mxu0 0.0
      %740 = vmatpush1.msra.mxu0 0.0
      %741 = vmatprep.subr.mxu0 0.0
      %742 = vmatpush1.msra.mxu0 0.0
      %743 = vmatprep.subr.mxu0 0.0
      %744 = vmatpush1.msra.mxu0 0.0
      %745 = vmatprep.subr.mxu0 0.0
      %746 = vmatpush1.msra.mxu0 0.0
      %747 = vmatprep.subr.mxu0 0.0
      %748 = vmatpush1.msra.mxu0 0.0
      %749 = vmatprep.subr.mxu0 0.0
      %750 = vmatpush1.msra.mxu0 0.0
      %751 = vmatprep.subr.mxu0 0.0
      %752 = vmatpush1.msra.mxu0 0.0
      %753 = vmatprep.subr.mxu0 0.0
      %754 = vmatpush1.msra.mxu0 0.0
      %755 = vmatprep.subr.mxu0 0.0
      %756 = vmatpush1.msra.mxu0 0.0
      %757 = vmatprep.subr.mxu0 0.0
      %758 = vmatpush1.msra.mxu0 0.0
      %759 = vmatprep.subr.mxu0 0.0
      %760 = vmatpush1.msra.mxu0 0.0
      %761 = vmatprep.mubr.f32.mxu0 0.0
      %762 = vmatmul.mubr.f32.gmra.mrb[0].mxu0 %v695
      %v763 = vpop.f32.mrb[0].mxu0
      %v764 = vadd.f32 %v691, %v763
      %v765 = vpop.f32.mrb[0].mxu0
      %766 = vdwg.mxu0
      %v767 = vld [vmem:[%s445] sm:$0xff]
      %v768 = vld [vmem:[%s445 + $0x8] sm:$0xff]
      %v770 = vsel %vm693, %v681, 0
      %772 = vmatprep.subr.mxu0 0.0
      %773 = vmatpush1.msra.mxu0 %v767
      %774 = vmatprep.subr.mxu0 0.0
      %775 = vmatpush1.msra.mxu0 %v768
      %776 = vmatprep.subr.mxu0 0.0
      %777 = vmatpush1.msra.mxu0 0.0
      %778 = vmatprep.subr.mxu0 0.0
      %779 = vmatpush1.msra.mxu0 0.0
      %780 = vmatprep.subr.mxu0 0.0
      %781 = vmatpush1.msra.mxu0 0.0
      %782 = vmatprep.subr.mxu0 0.0
      %783 = vmatpush1.msra.mxu0 0.0
      %784 = vmatprep.subr.mxu0 0.0
      %785 = vmatpush1.msra.mxu0 0.0
      %786 = vmatprep.subr.mxu0 0.0
      %787 = vmatpush1.msra.mxu0 0.0
      %788 = vmatprep.subr.mxu0 0.0
      %789 = vmatpush1.msra.mxu0 0.0
      %790 = vmatprep.subr.mxu0 0.0
      %791 = vmatpush1.msra.mxu0 0.0
      %792 = vmatprep.subr.mxu0 0.0
      %793 = vmatpush1.msra.mxu0 0.0
      %794 = vmatprep.subr.mxu0 0.0
      %795 = vmatpush1.msra.mxu0 0.0
      %796 = vmatprep.subr.mxu0 0.0
      %797 = vmatpush1.msra.mxu0 0.0
      %798 = vmatprep.subr.mxu0 0.0
      %799 = vmatpush1.msra.mxu0 0.0
      %800 = vmatprep.subr.mxu0 0.0
      %801 = vmatpush1.msra.mxu0 0.0
      %802 = vmatprep.subr.mxu0 0.0
      %803 = vmatpush1.msra.mxu0 0.0
      %804 = vmatprep.subr.mxu0 0.0
      %805 = vmatpush1.msra.mxu0 0.0
      %806 = vmatprep.subr.mxu0 0.0
      %807 = vmatpush1.msra.mxu0 0.0
      %808 = vmatprep.subr.mxu0 0.0
      %809 = vmatpush1.msra.mxu0 0.0
      %810 = vmatprep.subr.mxu0 0.0
      %811 = vmatpush1.msra.mxu0 0.0
      %812 = vmatprep.subr.mxu0 0.0
      %813 = vmatpush1.msra.mxu0 0.0
      %814 = vmatprep.subr.mxu0 0.0
      %815 = vmatpush1.msra.mxu0 0.0
      %816 = vmatprep.subr.mxu0 0.0
      %817 = vmatpush1.msra.mxu0 0.0
      %818 = vmatprep.subr.mxu0 0.0
      %819 = vmatpush1.msra.mxu0 0.0
      %820 = vmatprep.subr.mxu0 0.0
      %821 = vmatpush1.msra.mxu0 0.0
      %822 = vmatprep.subr.mxu0 0.0
      %823 = vmatpush1.msra.mxu0 0.0
      %824 = vmatprep.subr.mxu0 0.0
      %825 = vmatpush1.msra.mxu0 0.0
      %826 = vmatprep.subr.mxu0 0.0
      %827 = vmatpush1.msra.mxu0 0.0
      %828 = vmatprep.subr.mxu0 0.0
      %829 = vmatpush1.msra.mxu0 0.0
      %830 = vmatprep.subr.mxu0 0.0
      %831 = vmatpush1.msra.mxu0 0.0
      %832 = vmatprep.subr.mxu0 0.0
      %833 = vmatpush1.msra.mxu0 0.0
      %834 = vmatprep.subr.mxu0 0.0
      %835 = vmatpush1.msra.mxu0 0.0
      %836 = vmatprep.mubr.f32.mxu0 0.0
      %837 = vmatmul.mubr.f32.gmra.mrb[0].mxu0 %v770
      %v838 = vpop.f32.mrb[0].mxu0
      %v839 = vadd.f32 0.0, %v838
      %v840 = vpop.f32.mrb[0].mxu0
      %841 = vdwg.mxu0
      %v842 = vadd.f32 %v764, %v839
      %v843 = vld [vmem:[%s432] sm:$0xff]
      %845 = vset.pattern.permute.xlu0 0
      %846 = vperm.xlu0 %845, %v843
      %v847 = vpop.permute.xlu0 %846
      %v849 = vmul.f32 %v842, %v847
      %850 = vst.msk [vmem:[%s449] sm:$0xff] %vm693, %v849
      %p851 = scmp.lt.s32.totalorder %s20, 2
      %s852 = scalar_select %p851, %s20, 2
      %s853 = smul.addr %s852, 8
      %s854 = scalar_lea.vmem %s9, %s853
      // Predicated region
      $region57: #{gnn_forward.12} parent=55 // pred_check
        %p855 = pneg %p267
      $region58: #{gnn_forward.12} parent=55 // pred_check_branch
        %857 = sbr.rel (%p855) target = $region60
      $region59: #{gnn_forward.12} parent=55 // pred_region
        _
      $region60: #{gnn_forward.12} parent=55 // pred_fallthru
        _
    $region56: #{gnn_forward.12} parent=5 // pred_fallthru
      _
    %p858 = scmp.le.s32.totalorder 2, %s15
    // Predicated region
    $region61: #{gnn_forward.12} parent=5 // pred_check
      %p859 = pneg %p858
    $region62: #{gnn_forward.12} parent=5 // pred_check_branch
      %861 = sbr.rel (%p859) target = $region64
    $region63: #{gnn_forward.12} parent=5 // pred_region
      %s862 = ssub.s32 %s15, 2
      // Predicated region
      $region65: #{gnn_forward.12} parent=63 // pred_check
        %p863 = pneg %p273
      $region66: #{gnn_forward.12} parent=63 // pred_check_branch
        %865 = sbr.rel (%p863) target = $region68
      $region67: #{gnn_forward.12} parent=63 // pred_region
        %p866 = scmp.lt.s32.totalorder %s21, 2
        %s867 = scalar_select %p866, %s21, 2
        %s868 = smul.addr %s867, 8
        %s869 = scalar_lea.vmem %s9, %s868
      $region68: #{gnn_forward.12} parent=63 // pred_fallthru
        _
    $region64: #{gnn_forward.12} parent=5 // pred_fallthru
      _
  $region6: #{gnn_forward.12} parent=0 // loop_footer
    %s19 = sadd.s32 1, %s15
  $region7: #{gnn_forward.12} parent=0 // loop_footer_branch
    %14 = sbr.rel target = $region3
  $region8: #{gnn_forward.12} parent=0 // loop_exit
    _

// kernel: gnn_forward.9
$region0: #{gnn_forward.9}
  #allocation0 [shape = 'u32[]', space=smem, size = 0x4, offset = 0x4, fixed_abs, tag = 'smem constant byte address 0x4 - core index']
  #allocation1 [shape = 'u32[144,128]{1,0:T(1,128)}', space=vmem, size = 0x12000, scoped, tag = 'internal scratch']
  %s0 = inlined_call_operand.vmem [shape: f32[24,32], index: 0, kind: input, shape index: {}]
  %s1 = inlined_call_operand.vmem [shape: f32[7,12,32], index: 1, kind: input, shape index: {}]
  %s2 = inlined_call_operand.vmem [shape: f32[7,12,24], index: 2, kind: input, shape index: {}]
  %s3 = inlined_call_operand.vmem [shape: f32[7,8,24], index: 3, kind: input, shape index: {}]
  %s4 = inlined_call_operand.vmem [shape: f32[7,12,8], index: 4, kind: input, shape index: {}]
  %s5 = inlined_call_operand.vmem [shape: f32[7,8,12], index: 5, kind: input, shape index: {}]
  %s6 = inlined_call_operand.vmem [shape: f32[7,8,12], index: 6, kind: input, shape index: {}]
  %s7 = inlined_call_operand.vmem [shape: f32[7,8,1], index: 7, kind: input, shape index: {}]
  %s8 = inlined_call_operand.vmem [shape: f32[7,8,1], index: 8, kind: input, shape index: {}]
  %s9 = inlined_call_operand.vmem [shape: f32[7,1,1], index: 9, kind: input, shape index: {}]
  %s10 = inlined_call_operand.vmem [shape: f32[7,32,16], index: 10, kind: input, shape index: {}]
  %s11 = inlined_call_operand.vmem [shape: f32[7,1,16], index: 11, kind: input, shape index: {}]
  %s12 = inlined_call_operand.vmem [shape: f32[7,32,16], index: 12, kind: input, shape index: {}]
  %s13 = inlined_call_operand.vmem [shape: f32[7,32,16], index: 13, kind: input, shape index: {}]
  %s14 = inlined_call_operand.vmem [shape: f32[7,1,16], index: 14, kind: input, shape index: {}]
  %s15 = inlined_call_operand.vmem [shape: f32[7,16,16], index: 15, kind: input, shape index: {}]
  %s16 = inlined_call_operand.vmem [shape: f32[7,1,16], index: 16, kind: input, shape index: {}]
  %s17 = inlined_call_operand.vmem [shape: f32[7,32,16], index: 17, kind: input, shape index: {}]
  %s18 = inlined_call_operand.vmem [shape: f32[7,1,16], index: 18, kind: input, shape index: {}]
  %s19 = inlined_call_operand.vmem [shape: f32[7,16,16], index: 19, kind: input, shape index: {}]
  %s20 = inlined_call_operand.vmem [shape: f32[7,16,16], index: 20, kind: input, shape index: {}]
  %s21 = inlined_call_operand.vmem [shape: f32[7,16,16], index: 21, kind: input, shape index: {}]
  %s22 = inlined_call_operand.vmem [shape: f32[7,1,16], index: 22, kind: input, shape index: {}]
  %s23 = inlined_call_operand.vmem [shape: f32[7,1,16], index: 23, kind: input, shape index: {}]
  %s24 = inlined_call_operand.vmem [shape: f32[7,1,16], index: 24, kind: input, shape index: {}]
  %s25 = inlined_call_operand.vmem [shape: f32[7,8,16], index: 25, kind: output, shape index: {}]
  %s26 = sld [smem:[#allocation0]]
  $region133: #{gnn_forward.9} parent=0
    _
  %s28 = ssub.s32 1, %s26
  %s29 = scalar_select 0, %s28, %s26
  loop: start=0, step=1, limit=9
  $region2: #{gnn_forward.9} parent=0 // loop_pre_header
    _
  $region3: #{gnn_forward.9} parent=0 // loop_header
    %s31 = sphi 0, %s35
    %p32 = scmp.ge.s32.totalorder %s31, 9
    %s39 = sphi 0, %s39
    %s41 = sphi 0, %s39
    %s42 = sphi 0, %s41
    %s56 = sphi 0, %s42
    %s62 = sphi 0, %s64
    %s65 = sphi 0, %s62
    %s66 = sphi 0, %s65
    %s82 = sphi 0, %s66
    %s88 = sphi 0, %s90
    %s91 = sphi 0, %s88
    %s92 = sphi 0, %s91
    %s108 = sphi 0, %s92
    %s114 = sphi 0, %s116
    %s117 = sphi 0, %s114
    %s118 = sphi 0, %s117
    %s134 = sphi 0, %s118
    %s140 = sphi 0, %s142
    %s143 = sphi 0, %s140
    %s144 = sphi 0, %s143
    %s160 = sphi 0, %s144
    %s166 = sphi 0, %s168
    %s169 = sphi 0, %s166
    %s170 = sphi 0, %s169
    %s186 = sphi 0, %s170
    %s192 = sphi 0, %s194
    %s195 = sphi 0, %s192
    %s196 = sphi 0, %s195
    %s212 = sphi 0, %s196
    %s218 = sphi 0, %s220
    %s221 = sphi 0, %s218
    %s222 = sphi 0, %s221
    %s238 = sphi 0, %s222
    %s244 = sphi 0, %s246
    %s247 = sphi 0, %s244
    %s248 = sphi 0, %s247
    %s264 = sphi 0, %s248
    %s270 = sphi 0, %s272
    %s273 = sphi 0, %s270
    %s274 = sphi 0, %s273
    %s290 = sphi 0, %s274
    %s296 = sphi 0, %s298
    %s299 = sphi 0, %s296
    %s300 = sphi 0, %s299
    %s316 = sphi 0, %s300
    %s322 = sphi 0, %s324
    %s325 = sphi 0, %s322
    %s326 = sphi 0, %s325
    %s342 = sphi 0, %s326
    %s348 = sphi 0, %s350
    %s351 = sphi 0, %s348
    %s352 = sphi 0, %s351
    %s368 = sphi 0, %s352
    %s374 = sphi 0, %s376
    %s377 = sphi 0, %s374
    %s378 = sphi 0, %s377
    %s394 = sphi 0, %s378
    %s400 = sphi 0, %s402
    %s403 = sphi 0, %s400
    %s404 = sphi 0, %s403
    %s420 = sphi 0, %s404
    %s426 = sphi 0, %s428
    %s429 = sphi 0, %s426
    %s430 = sphi 0, %s429
    %s446 = sphi 0, %s430
    %s452 = sphi 0, %s454
    %s455 = sphi 0, %s452
    %s456 = sphi 0, %s455
    %s472 = sphi 0, %s456
    %s478 = sphi 0, %s480
    %s481 = sphi 0, %s478
    %s482 = sphi 0, %s481
    %s498 = sphi 0, %s482
    %s504 = sphi 0, %s506
    %s507 = sphi 0, %s504
    %s508 = sphi 0, %s507
    %s524 = sphi 0, %s508
    %s530 = sphi 0, %s532
    %s533 = sphi 0, %s530
    %s534 = sphi 0, %s533
    %s550 = sphi 0, %s534
    %s556 = sphi 0, %s558
    %s559 = sphi 0, %s556
    %s560 = sphi 0, %s559
    %s576 = sphi 0, %s560
    %s582 = sphi 0, %s584
    %s585 = sphi 0, %s582
    %s586 = sphi 0, %s585
    %s602 = sphi 0, %s586
    %s608 = sphi 0, %s610
    %s611 = sphi 0, %s608
    %s612 = sphi 0, %s611
    %s628 = sphi 0, %s612
    %s634 = sphi 0, %s636
    %s637 = sphi 0, %s634
    %s638 = sphi 0, %s637
    %s654 = sphi 0, %s638
    %s660 = sphi 0, %s662
    %s663 = sphi 0, %s660
    %s664 = sphi 0, %s663
    %s680 = sphi 0, %s664
    %s686 = sphi 0, %s688
    %s689 = sphi 0, %s686
    %s690 = sphi 0, %s689
    %s706 = sphi 0, %s690
  $region4: #{gnn_forward.9} parent=0 // loop_header_branch
    %34 = sbr.rel (%p32) target = $region8
  $region5: #{gnn_forward.9} parent=0 // loop_body
    %s36 = ssub.s32 %s31, 1
    %s37 = ssub.s32 %s31, 2
    %s38 = sadd.s32 %s31, 1
    %s40 = sadd.s32 %s39, 1
    %p43 = scmp.eq.s32.totalorder %s31, 6
    %p44 = scmp.ne.s32.totalorder %s39, %s41
    %p45 = scmp.eq.s32.totalorder %s31, 0
    %p46 = por %p44, %p45
    %p47 = scmp.ne.s32.totalorder %s39, %s41
    %p48 = scmp.eq.s32.totalorder %s36, 6
    %p49 = por %p47, %p48
    %p50 = scmp.ne.s32.totalorder %s41, %s42
    %p51 = scmp.eq.s32.totalorder %s36, 0
    %p52 = por %p50, %p51
    %p53 = scmp.ne.s32.totalorder %s41, %s42
    %p54 = scmp.eq.s32.totalorder %s37, 6
    %p55 = por %p53, %p54
    %p57 = scmp.ne.s32.totalorder %s42, %s56
    %p58 = scmp.eq.s32.totalorder %s37, 0
    %p59 = por %p57, %p58
    %s60 = ssub.s32 %s31, %s38
    %p61 = scmp.eq.s32.totalorder %s60, 0
    %s63 = sadd.s32 %s62, 1
    %s64 = scalar_select %p61, %s62, %s63
    %p67 = pneg %p61
    %p68 = scmp.eq.s32.totalorder %s31, 6
    %p69 = por %p67, %p68
    %p70 = scmp.ne.s32.totalorder %s62, %s65
    %p71 = scmp.eq.s32.totalorder %s31, 0
    %p72 = por %p70, %p71
    %p73 = scmp.ne.s32.totalorder %s62, %s65
    %p74 = scmp.eq.s32.totalorder %s36, 6
    %p75 = por %p73, %p74
    %p76 = scmp.ne.s32.totalorder %s65, %s66
    %p77 = scmp.eq.s32.totalorder %s36, 0
    %p78 = por %p76, %p77
    %p79 = scmp.ne.s32.totalorder %s65, %s66
    %p80 = scmp.eq.s32.totalorder %s37, 6
    %p81 = por %p79, %p80
    %p83 = scmp.ne.s32.totalorder %s66, %s82
    %p84 = scmp.eq.s32.totalorder %s37, 0
    %p85 = por %p83, %p84
    %s86 = ssub.s32 %s31, %s38
    %p87 = scmp.eq.s32.totalorder %s86, 0
    %s89 = sadd.s32 %s88, 1
    %s90 = scalar_select %p87, %s88, %s89
    %p93 = pneg %p87
    %p94 = scmp.eq.s32.totalorder %s31, 6
    %p95 = por %p93, %p94
    %p96 = scmp.ne.s32.totalorder %s88, %s91
    %p97 = scmp.eq.s32.totalorder %s31, 0
    %p98 = por %p96, %p97
    %p99 = scmp.ne.s32.totalorder %s88, %s91
    %p100 = scmp.eq.s32.totalorder %s36, 6
    %p101 = por %p99, %p100
    %p102 = scmp.ne.s32.totalorder %s91, %s92
    %p103 = scmp.eq.s32.totalorder %s36, 0
    %p104 = por %p102, %p103
    %p105 = scmp.ne.s32.totalorder %s91, %s92
    %p106 = scmp.eq.s32.totalorder %s37, 6
    %p107 = por %p105, %p106
    %p109 = scmp.ne.s32.totalorder %s92, %s108
    %p110 = scmp.eq.s32.totalorder %s37, 0
    %p111 = por %p109, %p110
    %s112 = ssub.s32 %s31, %s38
    %p113 = scmp.eq.s32.totalorder %s112, 0
    %s115 = sadd.s32 %s114, 1
    %s116 = scalar_select %p113, %s114, %s115
    %p119 = pneg %p113
    %p120 = scmp.eq.s32.totalorder %s31, 6
    %p121 = por %p119, %p120
    %p122 = scmp.ne.s32.totalorder %s114, %s117
    %p123 = scmp.eq.s32.totalorder %s31, 0
    %p124 = por %p122, %p123
    %p125 = scmp.ne.s32.totalorder %s114, %s117
    %p126 = scmp.eq.s32.totalorder %s36, 6
    %p127 = por %p125, %p126
    %p128 = scmp.ne.s32.totalorder %s117, %s118
    %p129 = scmp.eq.s32.totalorder %s36, 0
    %p130 = por %p128, %p129
    %p131 = scmp.ne.s32.totalorder %s117, %s118
    %p132 = scmp.eq.s32.totalorder %s37, 6
    %p133 = por %p131, %p132
    %p135 = scmp.ne.s32.totalorder %s118, %s134
    %p136 = scmp.eq.s32.totalorder %s37, 0
    %p137 = por %p135, %p136
    %s138 = ssub.s32 %s31, %s38
    %p139 = scmp.eq.s32.totalorder %s138, 0
    %s141 = sadd.s32 %s140, 1
    %s142 = scalar_select %p139, %s140, %s141
    %p145 = pneg %p139
    %p146 = scmp.eq.s32.totalorder %s31, 6
    %p147 = por %p145, %p146
    %p148 = scmp.ne.s32.totalorder %s140, %s143
    %p149 = scmp.eq.s32.totalorder %s31, 0
    %p150 = por %p148, %p149
    %p151 = scmp.ne.s32.totalorder %s140, %s143
    %p152 = scmp.eq.s32.totalorder %s36, 6
    %p153 = por %p151, %p152
    %p154 = scmp.ne.s32.totalorder %s143, %s144
    %p155 = scmp.eq.s32.totalorder %s36, 0
    %p156 = por %p154, %p155
    %p157 = scmp.ne.s32.totalorder %s143, %s144
    %p158 = scmp.eq.s32.totalorder %s37, 6
    %p159 = por %p157, %p158
    %p161 = scmp.ne.s32.totalorder %s144, %s160
    %p162 = scmp.eq.s32.totalorder %s37, 0
    %p163 = por %p161, %p162
    %s164 = ssub.s32 %s31, %s38
    %p165 = scmp.eq.s32.totalorder %s164, 0
    %s167 = sadd.s32 %s166, 1
    %s168 = scalar_select %p165, %s166, %s167
    %p171 = pneg %p165
    %p172 = scmp.eq.s32.totalorder %s31, 6
    %p173 = por %p171, %p172
    %p174 = scmp.ne.s32.totalorder %s166, %s169
    %p175 = scmp.eq.s32.totalorder %s31, 0
    %p176 = por %p174, %p175
    %p177 = scmp.ne.s32.totalorder %s166, %s169
    %p178 = scmp.eq.s32.totalorder %s36, 6
    %p179 = por %p177, %p178
    %p180 = scmp.ne.s32.totalorder %s169, %s170
    %p181 = scmp.eq.s32.totalorder %s36, 0
    %p182 = por %p180, %p181
    %p183 = scmp.ne.s32.totalorder %s169, %s170
    %p184 = scmp.eq.s32.totalorder %s37, 6
    %p185 = por %p183, %p184
    %p187 = scmp.ne.s32.totalorder %s170, %s186
    %p188 = scmp.eq.s32.totalorder %s37, 0
    %p189 = por %p187, %p188
    %s190 = ssub.s32 %s31, %s38
    %p191 = scmp.eq.s32.totalorder %s190, 0
    %s193 = sadd.s32 %s192, 1
    %s194 = scalar_select %p191, %s192, %s193
    %p197 = pneg %p191
    %p198 = scmp.eq.s32.totalorder %s31, 6
    %p199 = por %p197, %p198
    %p200 = scmp.ne.s32.totalorder %s192, %s195
    %p201 = scmp.eq.s32.totalorder %s31, 0
    %p202 = por %p200, %p201
    %p203 = scmp.ne.s32.totalorder %s192, %s195
    %p204 = scmp.eq.s32.totalorder %s36, 6
    %p205 = por %p203, %p204
    %p206 = scmp.ne.s32.totalorder %s195, %s196
    %p207 = scmp.eq.s32.totalorder %s36, 0
    %p208 = por %p206, %p207
    %p209 = scmp.ne.s32.totalorder %s195, %s196
    %p210 = scmp.eq.s32.totalorder %s37, 6
    %p211 = por %p209, %p210
    %p213 = scmp.ne.s32.totalorder %s196, %s212
    %p214 = scmp.eq.s32.totalorder %s37, 0
    %p215 = por %p213, %p214
    %s216 = ssub.s32 %s31, %s38
    %p217 = scmp.eq.s32.totalorder %s216, 0
    %s219 = sadd.s32 %s218, 1
    %s220 = scalar_select %p217, %s218, %s219
    %p223 = pneg %p217
    %p224 = scmp.eq.s32.totalorder %s31, 6
    %p225 = por %p223, %p224
    %p226 = scmp.ne.s32.totalorder %s218, %s221
    %p227 = scmp.eq.s32.totalorder %s31, 0
    %p228 = por %p226, %p227
    %p229 = scmp.ne.s32.totalorder %s218, %s221
    %p230 = scmp.eq.s32.totalorder %s36, 6
    %p231 = por %p229, %p230
    %p232 = scmp.ne.s32.totalorder %s221, %s222
    %p233 = scmp.eq.s32.totalorder %s36, 0
    %p234 = por %p232, %p233
    %p235 = scmp.ne.s32.totalorder %s221, %s222
    %p236 = scmp.eq.s32.totalorder %s37, 6
    %p237 = por %p235, %p236
    %p239 = scmp.ne.s32.totalorder %s222, %s238
    %p240 = scmp.eq.s32.totalorder %s37, 0
    %p241 = por %p239, %p240
    %s242 = ssub.s32 %s31, %s38
    %p243 = scmp.eq.s32.totalorder %s242, 0
    %s245 = sadd.s32 %s244, 1
    %s246 = scalar_select %p243, %s244, %s245
    %p249 = pneg %p243
    %p250 = scmp.eq.s32.totalorder %s31, 6
    %p251 = por %p249, %p250
    %p252 = scmp.ne.s32.totalorder %s244, %s247
    %p253 = scmp.eq.s32.totalorder %s31, 0
    %p254 = por %p252, %p253
    %p255 = scmp.ne.s32.totalorder %s244, %s247
    %p256 = scmp.eq.s32.totalorder %s36, 6
    %p257 = por %p255, %p256
    %p258 = scmp.ne.s32.totalorder %s247, %s248
    %p259 = scmp.eq.s32.totalorder %s36, 0
    %p260 = por %p258, %p259
    %p261 = scmp.ne.s32.totalorder %s247, %s248
    %p262 = scmp.eq.s32.totalorder %s37, 6
    %p263 = por %p261, %p262
    %p265 = scmp.ne.s32.totalorder %s248, %s264
    %p266 = scmp.eq.s32.totalorder %s37, 0
    %p267 = por %p265, %p266
    %s268 = ssub.s32 %s31, %s38
    %p269 = scmp.eq.s32.totalorder %s268, 0
    %s271 = sadd.s32 %s270, 1
    %s272 = scalar_select %p269, %s270, %s271
    %p275 = pneg %p269
    %p276 = scmp.eq.s32.totalorder %s31, 6
    %p277 = por %p275, %p276
    %p278 = scmp.ne.s32.totalorder %s270, %s273
    %p279 = scmp.eq.s32.totalorder %s31, 0
    %p280 = por %p278, %p279
    %p281 = scmp.ne.s32.totalorder %s270, %s273
    %p282 = scmp.eq.s32.totalorder %s36, 6
    %p283 = por %p281, %p282
    %p284 = scmp.ne.s32.totalorder %s273, %s274
    %p285 = scmp.eq.s32.totalorder %s36, 0
    %p286 = por %p284, %p285
    %p287 = scmp.ne.s32.totalorder %s273, %s274
    %p288 = scmp.eq.s32.totalorder %s37, 6
    %p289 = por %p287, %p288
    %p291 = scmp.ne.s32.totalorder %s274, %s290
    %p292 = scmp.eq.s32.totalorder %s37, 0
    %p293 = por %p291, %p292
    %s294 = ssub.s32 %s31, %s38
    %p295 = scmp.eq.s32.totalorder %s294, 0
    %s297 = sadd.s32 %s296, 1
    %s298 = scalar_select %p295, %s296, %s297
    %p301 = pneg %p295
    %p302 = scmp.eq.s32.totalorder %s31, 6
    %p303 = por %p301, %p302
    %p304 = scmp.ne.s32.totalorder %s296, %s299
    %p305 = scmp.eq.s32.totalorder %s31, 0
    %p306 = por %p304, %p305
    %p307 = scmp.ne.s32.totalorder %s296, %s299
    %p308 = scmp.eq.s32.totalorder %s36, 6
    %p309 = por %p307, %p308
    %p310 = scmp.ne.s32.totalorder %s299, %s300
    %p311 = scmp.eq.s32.totalorder %s36, 0
    %p312 = por %p310, %p311
    %p313 = scmp.ne.s32.totalorder %s299, %s300
    %p314 = scmp.eq.s32.totalorder %s37, 6
    %p315 = por %p313, %p314
    %p317 = scmp.ne.s32.totalorder %s300, %s316
    %p318 = scmp.eq.s32.totalorder %s37, 0
    %p319 = por %p317, %p318
    %s320 = ssub.s32 %s31, %s38
    %p321 = scmp.eq.s32.totalorder %s320, 0
    %s323 = sadd.s32 %s322, 1
    %s324 = scalar_select %p321, %s322, %s323
    %p327 = pneg %p321
    %p328 = scmp.eq.s32.totalorder %s31, 6
    %p329 = por %p327, %p328
    %p330 = scmp.ne.s32.totalorder %s322, %s325
    %p331 = scmp.eq.s32.totalorder %s31, 0
    %p332 = por %p330, %p331
    %p333 = scmp.ne.s32.totalorder %s322, %s325
    %p334 = scmp.eq.s32.totalorder %s36, 6
    %p335 = por %p333, %p334
    %p336 = scmp.ne.s32.totalorder %s325, %s326
    %p337 = scmp.eq.s32.totalorder %s36, 0
    %p338 = por %p336, %p337
    %p339 = scmp.ne.s32.totalorder %s325, %s326
    %p340 = scmp.eq.s32.totalorder %s37, 6
    %p341 = por %p339, %p340
    %p343 = scmp.ne.s32.totalorder %s326, %s342
    %p344 = scmp.eq.s32.totalorder %s37, 0
    %p345 = por %p343, %p344
    %s346 = ssub.s32 %s31, %s38
    %p347 = scmp.eq.s32.totalorder %s346, 0
    %s349 = sadd.s32 %s348, 1
    %s350 = scalar_select %p347, %s348, %s349
    %p353 = pneg %p347
    %p354 = scmp.eq.s32.totalorder %s31, 6
    %p355 = por %p353, %p354
    %p356 = scmp.ne.s32.totalorder %s348, %s351
    %p357 = scmp.eq.s32.totalorder %s31, 0
    %p358 = por %p356, %p357
    %p359 = scmp.ne.s32.totalorder %s348, %s351
    %p360 = scmp.eq.s32.totalorder %s36, 6
    %p361 = por %p359, %p360
    %p362 = scmp.ne.s32.totalorder %s351, %s352
    %p363 = scmp.eq.s32.totalorder %s36, 0
    %p364 = por %p362, %p363
    %p365 = scmp.ne.s32.totalorder %s351, %s352
    %p366 = scmp.eq.s32.totalorder %s37, 6
    %p367 = por %p365, %p366
    %p369 = scmp.ne.s32.totalorder %s352, %s368
    %p370 = scmp.eq.s32.totalorder %s37, 0
    %p371 = por %p369, %p370
    %s372 = ssub.s32 %s31, %s38
    %p373 = scmp.eq.s32.totalorder %s372, 0
    %s375 = sadd.s32 %s374, 1
    %s376 = scalar_select %p373, %s374, %s375
    %p379 = pneg %p373
    %p380 = scmp.eq.s32.totalorder %s31, 6
    %p381 = por %p379, %p380
    %p382 = scmp.ne.s32.totalorder %s374, %s377
    %p383 = scmp.eq.s32.totalorder %s31, 0
    %p384 = por %p382, %p383
    %p385 = scmp.ne.s32.totalorder %s374, %s377
    %p386 = scmp.eq.s32.totalorder %s36, 6
    %p387 = por %p385, %p386
    %p388 = scmp.ne.s32.totalorder %s377, %s378
    %p389 = scmp.eq.s32.totalorder %s36, 0
    %p390 = por %p388, %p389
    %p391 = scmp.ne.s32.totalorder %s377, %s378
    %p392 = scmp.eq.s32.totalorder %s37, 6
    %p393 = por %p391, %p392
    %p395 = scmp.ne.s32.totalorder %s378, %s394
    %p396 = scmp.eq.s32.totalorder %s37, 0
    %p397 = por %p395, %p396
    %s398 = ssub.s32 %s31, %s38
    %p399 = scmp.eq.s32.totalorder %s398, 0
    %s401 = sadd.s32 %s400, 1
    %s402 = scalar_select %p399, %s400, %s401
    %p405 = pneg %p399
    %p406 = scmp.eq.s32.totalorder %s31, 6
    %p407 = por %p405, %p406
    %p408 = scmp.ne.s32.totalorder %s400, %s403
    %p409 = scmp.eq.s32.totalorder %s31, 0
    %p410 = por %p408, %p409
    %p411 = scmp.ne.s32.totalorder %s400, %s403
    %p412 = scmp.eq.s32.totalorder %s36, 6
    %p413 = por %p411, %p412
    %p414 = scmp.ne.s32.totalorder %s403, %s404
    %p415 = scmp.eq.s32.totalorder %s36, 0
    %p416 = por %p414, %p415
    %p417 = scmp.ne.s32.totalorder %s403, %s404
    %p418 = scmp.eq.s32.totalorder %s37, 6
    %p419 = por %p417, %p418
    %p421 = scmp.ne.s32.totalorder %s404, %s420
    %p422 = scmp.eq.s32.totalorder %s37, 0
    %p423 = por %p421, %p422
    %s424 = ssub.s32 %s31, %s38
    %p425 = scmp.eq.s32.totalorder %s424, 0
    %s427 = sadd.s32 %s426, 1
    %s428 = scalar_select %p425, %s426, %s427
    %p431 = pneg %p425
    %p432 = scmp.eq.s32.totalorder %s31, 6
    %p433 = por %p431, %p432
    %p434 = scmp.ne.s32.totalorder %s426, %s429
    %p435 = scmp.eq.s32.totalorder %s31, 0
    %p436 = por %p434, %p435
    %p437 = scmp.ne.s32.totalorder %s426, %s429
    %p438 = scmp.eq.s32.totalorder %s36, 6
    %p439 = por %p437, %p438
    %p440 = scmp.ne.s32.totalorder %s429, %s430
    %p441 = scmp.eq.s32.totalorder %s36, 0
    %p442 = por %p440, %p441
    %p443 = scmp.ne.s32.totalorder %s429, %s430
    %p444 = scmp.eq.s32.totalorder %s37, 6
    %p445 = por %p443, %p444
    %p447 = scmp.ne.s32.totalorder %s430, %s446
    %p448 = scmp.eq.s32.totalorder %s37, 0
    %p449 = por %p447, %p448
    %s450 = ssub.s32 %s31, %s38
    %p451 = scmp.eq.s32.totalorder %s450, 0
    %s453 = sadd.s32 %s452, 1
    %s454 = scalar_select %p451, %s452, %s453
    %p457 = pneg %p451
    %p458 = scmp.eq.s32.totalorder %s31, 6
    %p459 = por %p457, %p458
    %p460 = scmp.ne.s32.totalorder %s452, %s455
    %p461 = scmp.eq.s32.totalorder %s31, 0
    %p462 = por %p460, %p461
    %p463 = scmp.ne.s32.totalorder %s452, %s455
    %p464 = scmp.eq.s32.totalorder %s36, 6
    %p465 = por %p463, %p464
    %p466 = scmp.ne.s32.totalorder %s455, %s456
    %p467 = scmp.eq.s32.totalorder %s36, 0
    %p468 = por %p466, %p467
    %p469 = scmp.ne.s32.totalorder %s455, %s456
    %p470 = scmp.eq.s32.totalorder %s37, 6
    %p471 = por %p469, %p470
    %p473 = scmp.ne.s32.totalorder %s456, %s472
    %p474 = scmp.eq.s32.totalorder %s37, 0
    %p475 = por %p473, %p474
    %s476 = ssub.s32 %s31, %s38
    %p477 = scmp.eq.s32.totalorder %s476, 0
    %s479 = sadd.s32 %s478, 1
    %s480 = scalar_select %p477, %s478, %s479
    %p483 = pneg %p477
    %p484 = scmp.eq.s32.totalorder %s31, 6
    %p485 = por %p483, %p484
    %p486 = scmp.ne.s32.totalorder %s478, %s481
    %p487 = scmp.eq.s32.totalorder %s31, 0
    %p488 = por %p486, %p487
    %p489 = scmp.ne.s32.totalorder %s478, %s481
    %p490 = scmp.eq.s32.totalorder %s36, 6
    %p491 = por %p489, %p490
    %p492 = scmp.ne.s32.totalorder %s481, %s482
    %p493 = scmp.eq.s32.totalorder %s36, 0
    %p494 = por %p492, %p493
    %p495 = scmp.ne.s32.totalorder %s481, %s482
    %p496 = scmp.eq.s32.totalorder %s37, 6
    %p497 = por %p495, %p496
    %p499 = scmp.ne.s32.totalorder %s482, %s498
    %p500 = scmp.eq.s32.totalorder %s37, 0
    %p501 = por %p499, %p500
    %s502 = ssub.s32 %s31, %s38
    %p503 = scmp.eq.s32.totalorder %s502, 0
    %s505 = sadd.s32 %s504, 1
    %s506 = scalar_select %p503, %s504, %s505
    %p509 = pneg %p503
    %p510 = scmp.eq.s32.totalorder %s31, 6
    %p511 = por %p509, %p510
    %p512 = scmp.ne.s32.totalorder %s504, %s507
    %p513 = scmp.eq.s32.totalorder %s31, 0
    %p514 = por %p512, %p513
    %p515 = scmp.ne.s32.totalorder %s504, %s507
    %p516 = scmp.eq.s32.totalorder %s36, 6
    %p517 = por %p515, %p516
    %p518 = scmp.ne.s32.totalorder %s507, %s508
    %p519 = scmp.eq.s32.totalorder %s36, 0
    %p520 = por %p518, %p519
    %p521 = scmp.ne.s32.totalorder %s507, %s508
    %p522 = scmp.eq.s32.totalorder %s37, 6
    %p523 = por %p521, %p522
    %p525 = scmp.ne.s32.totalorder %s508, %s524
    %p526 = scmp.eq.s32.totalorder %s37, 0
    %p527 = por %p525, %p526
    %s528 = ssub.s32 %s31, %s38
    %p529 = scmp.eq.s32.totalorder %s528, 0
    %s531 = sadd.s32 %s530, 1
    %s532 = scalar_select %p529, %s530, %s531
    %p535 = pneg %p529
    %p536 = scmp.eq.s32.totalorder %s31, 6
    %p537 = por %p535, %p536
    %p538 = scmp.ne.s32.totalorder %s530, %s533
    %p539 = scmp.eq.s32.totalorder %s31, 0
    %p540 = por %p538, %p539
    %p541 = scmp.ne.s32.totalorder %s530, %s533
    %p542 = scmp.eq.s32.totalorder %s36, 6
    %p543 = por %p541, %p542
    %p544 = scmp.ne.s32.totalorder %s533, %s534
    %p545 = scmp.eq.s32.totalorder %s36, 0
    %p546 = por %p544, %p545
    %p547 = scmp.ne.s32.totalorder %s533, %s534
    %p548 = scmp.eq.s32.totalorder %s37, 6
    %p549 = por %p547, %p548
    %p551 = scmp.ne.s32.totalorder %s534, %s550
    %p552 = scmp.eq.s32.totalorder %s37, 0
    %p553 = por %p551, %p552
    %s554 = ssub.s32 %s31, %s38
    %p555 = scmp.eq.s32.totalorder %s554, 0
    %s557 = sadd.s32 %s556, 1
    %s558 = scalar_select %p555, %s556, %s557
    %p561 = pneg %p555
    %p562 = scmp.eq.s32.totalorder %s31, 6
    %p563 = por %p561, %p562
    %p564 = scmp.ne.s32.totalorder %s556, %s559
    %p565 = scmp.eq.s32.totalorder %s31, 0
    %p566 = por %p564, %p565
    %p567 = scmp.ne.s32.totalorder %s556, %s559
    %p568 = scmp.eq.s32.totalorder %s36, 6
    %p569 = por %p567, %p568
    %p570 = scmp.ne.s32.totalorder %s559, %s560
    %p571 = scmp.eq.s32.totalorder %s36, 0
    %p572 = por %p570, %p571
    %p573 = scmp.ne.s32.totalorder %s559, %s560
    %p574 = scmp.eq.s32.totalorder %s37, 6
    %p575 = por %p573, %p574
    %p577 = scmp.ne.s32.totalorder %s560, %s576
    %p578 = scmp.eq.s32.totalorder %s37, 0
    %p579 = por %p577, %p578
    %s580 = ssub.s32 %s31, %s38
    %p581 = scmp.eq.s32.totalorder %s580, 0
    %s583 = sadd.s32 %s582, 1
    %s584 = scalar_select %p581, %s582, %s583
    %p587 = pneg %p581
    %p588 = scmp.eq.s32.totalorder %s31, 6
    %p589 = por %p587, %p588
    %p590 = scmp.ne.s32.totalorder %s582, %s585
    %p591 = scmp.eq.s32.totalorder %s31, 0
    %p592 = por %p590, %p591
    %p593 = scmp.ne.s32.totalorder %s582, %s585
    %p594 = scmp.eq.s32.totalorder %s36, 6
    %p595 = por %p593, %p594
    %p596 = scmp.ne.s32.totalorder %s585, %s586
    %p597 = scmp.eq.s32.totalorder %s36, 0
    %p598 = por %p596, %p597
    %p599 = scmp.ne.s32.totalorder %s585, %s586
    %p600 = scmp.eq.s32.totalorder %s37, 6
    %p601 = por %p599, %p600
    %p603 = scmp.ne.s32.totalorder %s586, %s602
    %p604 = scmp.eq.s32.totalorder %s37, 0
    %p605 = por %p603, %p604
    %s606 = ssub.s32 %s31, %s38
    %p607 = scmp.eq.s32.totalorder %s606, 0
    %s609 = sadd.s32 %s608, 1
    %s610 = scalar_select %p607, %s608, %s609
    %p613 = pneg %p607
    %p614 = scmp.eq.s32.totalorder %s31, 6
    %p615 = por %p613, %p614
    %p616 = scmp.ne.s32.totalorder %s608, %s611
    %p617 = scmp.eq.s32.totalorder %s31, 0
    %p618 = por %p616, %p617
    %p619 = scmp.ne.s32.totalorder %s608, %s611
    %p620 = scmp.eq.s32.totalorder %s36, 6
    %p621 = por %p619, %p620
    %p622 = scmp.ne.s32.totalorder %s611, %s612
    %p623 = scmp.eq.s32.totalorder %s36, 0
    %p624 = por %p622, %p623
    %p625 = scmp.ne.s32.totalorder %s611, %s612
    %p626 = scmp.eq.s32.totalorder %s37, 6
    %p627 = por %p625, %p626
    %p629 = scmp.ne.s32.totalorder %s612, %s628
    %p630 = scmp.eq.s32.totalorder %s37, 0
    %p631 = por %p629, %p630
    %s632 = ssub.s32 %s31, %s38
    %p633 = scmp.eq.s32.totalorder %s632, 0
    %s635 = sadd.s32 %s634, 1
    %s636 = scalar_select %p633, %s634, %s635
    %p639 = pneg %p633
    %p640 = scmp.eq.s32.totalorder %s31, 6
    %p641 = por %p639, %p640
    %p642 = scmp.ne.s32.totalorder %s634, %s637
    %p643 = scmp.eq.s32.totalorder %s31, 0
    %p644 = por %p642, %p643
    %p645 = scmp.ne.s32.totalorder %s634, %s637
    %p646 = scmp.eq.s32.totalorder %s36, 6
    %p647 = por %p645, %p646
    %p648 = scmp.ne.s32.totalorder %s637, %s638
    %p649 = scmp.eq.s32.totalorder %s36, 0
    %p650 = por %p648, %p649
    %p651 = scmp.ne.s32.totalorder %s637, %s638
    %p652 = scmp.eq.s32.totalorder %s37, 6
    %p653 = por %p651, %p652
    %p655 = scmp.ne.s32.totalorder %s638, %s654
    %p656 = scmp.eq.s32.totalorder %s37, 0
    %p657 = por %p655, %p656
    %s658 = ssub.s32 %s31, %s38
    %p659 = scmp.eq.s32.totalorder %s658, 0
    %s661 = sadd.s32 %s660, 1
    %s662 = scalar_select %p659, %s660, %s661
    %p665 = pneg %p659
    %p666 = scmp.eq.s32.totalorder %s31, 6
    %p667 = por %p665, %p666
    %p668 = scmp.ne.s32.totalorder %s660, %s663
    %p669 = scmp.eq.s32.totalorder %s31, 0
    %p670 = por %p668, %p669
    %p671 = scmp.ne.s32.totalorder %s660, %s663
    %p672 = scmp.eq.s32.totalorder %s36, 6
    %p673 = por %p671, %p672
    %p674 = scmp.ne.s32.totalorder %s663, %s664
    %p675 = scmp.eq.s32.totalorder %s36, 0
    %p676 = por %p674, %p675
    %p677 = scmp.ne.s32.totalorder %s663, %s664
    %p678 = scmp.eq.s32.totalorder %s37, 6
    %p679 = por %p677, %p678
    %p681 = scmp.ne.s32.totalorder %s664, %s680
    %p682 = scmp.eq.s32.totalorder %s37, 0
    %p683 = por %p681, %p682
    %s684 = ssub.s32 %s31, %s38
    %p685 = scmp.eq.s32.totalorder %s684, 0
    %s687 = sadd.s32 %s686, 1
    %s688 = scalar_select %p685, %s686, %s687
    %p691 = pneg %p685
    %p692 = scmp.eq.s32.totalorder %s31, 6
    %p693 = por %p691, %p692
    %p694 = scmp.ne.s32.totalorder %s686, %s689
    %p695 = scmp.eq.s32.totalorder %s31, 0
    %p696 = por %p694, %p695
    %p697 = scmp.ne.s32.totalorder %s686, %s689
    %p698 = scmp.eq.s32.totalorder %s36, 6
    %p699 = por %p697, %p698
    %p700 = scmp.ne.s32.totalorder %s689, %s690
    %p701 = scmp.eq.s32.totalorder %s36, 0
    %p702 = por %p700, %p701
    %p703 = scmp.ne.s32.totalorder %s689, %s690
    %p704 = scmp.eq.s32.totalorder %s37, 6
    %p705 = por %p703, %p704
    %p707 = scmp.ne.s32.totalorder %s690, %s706
    %p708 = scmp.eq.s32.totalorder %s37, 0
    %p709 = por %p707, %p708
    %p710 = scmp.le.s32.totalorder 1, %s31
    %p711 = scmp.lt.s32.totalorder %s31, 8
    %p712 = pnand %p710, %p711
    %p713 = pneg %p712
    // Predicated region
    $region9: #{gnn_forward.9} parent=5 // pred_check
      _
    $region10: #{gnn_forward.9} parent=5 // pred_check_branch
      %715 = sbr.rel (%p712) target = $region12
    $region11: #{gnn_forward.9} parent=5 // pred_region
      %s716 = ssub.s32 %s31, 1
      // Predicated region
      $region13: #{gnn_forward.9} parent=11 // pred_check
        %p717 = pneg %p52
      $region14: #{gnn_forward.9} parent=11 // pred_check_branch
        %719 = sbr.rel (%p717) target = $region16
      $region15: #{gnn_forward.9} parent=11 // pred_region
        _
      $region16: #{gnn_forward.9} parent=11 // pred_fallthru
        _
    $region12: #{gnn_forward.9} parent=5 // pred_fallthru
      _
    %p720 = scmp.lt.s32.totalorder %s31, 7
    // Predicated region
    $region17: #{gnn_forward.9} parent=5 // pred_check
      %p721 = pneg %p720
    $region18: #{gnn_forward.9} parent=5 // pred_check_branch
      %723 = sbr.rel (%p721) target = $region20
    $region19: #{gnn_forward.9} parent=5 // pred_region
      // Predicated region
      $region21: #{gnn_forward.9} parent=19 // pred_check
        %p724 = pneg %p72
      $region22: #{gnn_forward.9} parent=19 // pred_check_branch
        %726 = sbr.rel (%p724) target = $region24
      $region23: #{gnn_forward.9} parent=19 // pred_region
        %p727 = scmp.lt.s32.totalorder %s31, 6
        %s728 = scalar_select %p727, %s31, 6
        %s729 = smul.addr %s728, 2
        %s730 = smul.addr %s729, 8
        %s731 = scalar_lea.vmem %s1, %s730
      $region24: #{gnn_forward.9} parent=19 // pred_fallthru
        _
      // Predicated region
      $region25: #{gnn_forward.9} parent=19 // pred_check
        %p732 = pneg %p98
      $region26: #{gnn_forward.9} parent=19 // pred_check_branch
        %734 = sbr.rel (%p732) target = $region28
      $region27: #{gnn_forward.9} parent=19 // pred_region
        %p735 = scmp.lt.s32.totalorder %s31, 6
        %s736 = scalar_select %p735, %s31, 6
        %s737 = smul.addr %s736, 2
        %s738 = smul.addr %s737, 8
        %s739 = scalar_lea.vmem %s2, %s738
      $region28: #{gnn_forward.9} parent=19 // pred_fallthru
        _
      // Predicated region
      $region29: #{gnn_forward.9} parent=19 // pred_check
        %p740 = pneg %p124
      $region30: #{gnn_forward.9} parent=19 // pred_check_branch
        %742 = sbr.rel (%p740) target = $region32
      $region31: #{gnn_forward.9} parent=19 // pred_region
        %p743 = scmp.lt.s32.totalorder %s31, 6
        %s744 = scalar_select %p743, %s31, 6
        %s745 = smul.addr %s744, 8
        %s746 = scalar_lea.vmem %s3, %s745
      $region32: #{gnn_forward.9} parent=19 // pred_fallthru
        _
      // Predicated region
      $region33: #{gnn_forward.9} parent=19 // pred_check
        %p747 = pneg %p150
      $region34: #{gnn_forward.9} parent=19 // pred_check_branch
        %749 = sbr.rel (%p747) target = $region36
      $region35: #{gnn_forward.9} parent=19 // pred_region
        %p750 = scmp.lt.s32.totalorder %s31, 6
        %s751 = scalar_select %p750, %s31, 6
        %s752 = smul.addr %s751, 2
        %s753 = smul.addr %s752, 8
        %s754 = scalar_lea.vmem %s4, %s753
      $region36: #{gnn_forward.9} parent=19 // pred_fallthru
        _
      // Predicated region
      $region37: #{gnn_forward.9} parent=19 // pred_check
        %p755 = pneg %p176
      $region38: #{gnn_forward.9} parent=19 // pred_check_branch
        %757 = sbr.rel (%p755) target = $region40
      $region39: #{gnn_forward.9} parent=19 // pred_region
        %p758 = scmp.lt.s32.totalorder %s31, 6
        %s759 = scalar_select %p758, %s31, 6
        %s760 = smul.addr %s759, 8
        %s761 = scalar_lea.vmem %s5, %s760
      $region40: #{gnn_forward.9} parent=19 // pred_fallthru
        _
      // Predicated region
      $region41: #{gnn_forward.9} parent=19 // pred_check
        %p762 = pneg %p202
      $region42: #{gnn_forward.9} parent=19 // pred_check_branch
        %764 = sbr.rel (%p762) target = $region44
      $region43: #{gnn_forward.9} parent=19 // pred_region
        %p765 = scmp.lt.s32.totalorder %s31, 6
        %s766 = scalar_select %p765, %s31, 6
        %s767 = smul.addr %s766, 8
        %s768 = scalar_lea.vmem %s6, %s767
      $region44: #{gnn_forward.9} parent=19 // pred_fallthru
        _
      // Predicated region
      $region45: #{gnn_forward.9} parent=19 // pred_check
        %p769 = pneg %p228
      $region46: #{gnn_forward.9} parent=19 // pred_check_branch
        %771 = sbr.rel (%p769) target = $region48
      $region47: #{gnn_forward.9} parent=19 // pred_region
        %p772 = scmp.lt.s32.totalorder %s31, 6
        %s773 = scalar_select %p772, %s31, 6
        %s774 = smul.addr %s773, 8
        %s775 = scalar_lea.vmem %s7, %s774
      $region48: #{gnn_forward.9} parent=19 // pred_fallthru
        _
      // Predicated region
      $region49: #{gnn_forward.9} parent=19 // pred_check
        %p776 = pneg %p254
      $region50: #{gnn_forward.9} parent=19 // pred_check_branch
        %778 = sbr.rel (%p776) target = $region52
      $region51: #{gnn_forward.9} parent=19 // pred_region
        %p779 = scmp.lt.s32.totalorder %s31, 6
        %s780 = scalar_select %p779, %s31, 6
        %s781 = smul.addr %s780, 8
        %s782 = scalar_lea.vmem %s8, %s781
      $region52: #{gnn_forward.9} parent=19 // pred_fallthru
        _
      // Predicated region
      $region53: #{gnn_forward.9} parent=19 // pred_check
        %p783 = pneg %p280
      $region54: #{gnn_forward.9} parent=19 // pred_check_branch
        %785 = sbr.rel (%p783) target = $region56
      $region55: #{gnn_forward.9} parent=19 // pred_region
        %p786 = scmp.lt.s32.totalorder %s31, 6
        %s787 = scalar_select %p786, %s31, 6
        %s788 = scalar_lea.vmem %s9, %s787
      $region56: #{gnn_forward.9} parent=19 // pred_fallthru
        _
      // Predicated region
      $region57: #{gnn_forward.9} parent=19 // pred_check
        %p789 = pneg %p306
      $region58: #{gnn_forward.9} parent=19 // pred_check_branch
        %791 = sbr.rel (%p789) target = $region60
      $region59: #{gnn_forward.9} parent=19 // pred_region
        %p792 = scmp.lt.s32.totalorder %s31, 6
        %s793 = scalar_select %p792, %s31, 6
        %s794 = smul.addr %s793, 4
        %s795 = smul.addr %s794, 8
        %s796 = scalar_lea.vmem %s10, %s795
      $region60: #{gnn_forward.9} parent=19 // pred_fallthru
        _
      // Predicated region
      $region61: #{gnn_forward.9} parent=19 // pred_check
        %p797 = pneg %p332
      $region62: #{gnn_forward.9} parent=19 // pred_check_branch
        %799 = sbr.rel (%p797) target = $region64
      $region63: #{gnn_forward.9} parent=19 // pred_region
        %p800 = scmp.lt.s32.totalorder %s31, 6
        %s801 = scalar_select %p800, %s31, 6
        %s802 = scalar_lea.vmem %s11, %s801
      $region64: #{gnn_forward.9} parent=19 // pred_fallthru
        _
      // Predicated region
      $region65: #{gnn_forward.9} parent=19 // pred_check
        %p803 = pneg %p358
      $region66: #{gnn_forward.9} parent=19 // pred_check_branch
        %805 = sbr.rel (%p803) target = $region68
      $region67: #{gnn_forward.9} parent=19 // pred_region
        %p806 = scmp.lt.s32.totalorder %s31, 6
        %s807 = scalar_select %p806, %s31, 6
        %s808 = smul.addr %s807, 4
        %s809 = smul.addr %s808, 8
        %s810 = scalar_lea.vmem %s12, %s809
      $region68: #{gnn_forward.9} parent=19 // pred_fallthru
        _
      // Predicated region
      $region69: #{gnn_forward.9} parent=19 // pred_check
        %p811 = pneg %p384
      $region70: #{gnn_forward.9} parent=19 // pred_check_branch
        %813 = sbr.rel (%p811) target = $region72
      $region71: #{gnn_forward.9} parent=19 // pred_region
        %p814 = scmp.lt.s32.totalorder %s31, 6
        %s815 = scalar_select %p814, %s31, 6
        %s816 = smul.addr %s815, 4
        %s817 = smul.addr %s816, 8
        %s818 = scalar_lea.vmem %s13, %s817
      $region72: #{gnn_forward.9} parent=19 // pred_fallthru
        _
      // Predicated region
      $region73: #{gnn_forward.9} parent=19 // pred_check
        %p819 = pneg %p410
      $region74: #{gnn_forward.9} parent=19 // pred_check_branch
        %821 = sbr.rel (%p819) target = $region76
      $region75: #{gnn_forward.9} parent=19 // pred_region
        %p822 = scmp.lt.s32.totalorder %s31, 6
        %s823 = scalar_select %p822, %s31, 6
        %s824 = scalar_lea.vmem %s14, %s823
      $region76: #{gnn_forward.9} parent=19 // pred_fallthru
        _
      // Predicated region
      $region77: #{gnn_forward.9} parent=19 // pred_check
        %p825 = pneg %p436
      $region78: #{gnn_forward.9} parent=19 // pred_check_branch
        %827 = sbr.rel (%p825) target = $region80
      $region79: #{gnn_forward.9} parent=19 // pred_region
        %p828 = scmp.lt.s32.totalorder %s31, 6
        %s829 = scalar_select %p828, %s31, 6
        %s830 = smul.addr %s829, 2
        %s831 = smul.addr %s830, 8
        %s832 = scalar_lea.vmem %s15, %s831
      $region80: #{gnn_forward.9} parent=19 // pred_fallthru
        _
      // Predicated region
      $region81: #{gnn_forward.9} parent=19 // pred_check
        %p833 = pneg %p462
      $region82: #{gnn_forward.9} parent=19 // pred_check_branch
        %835 = sbr.rel (%p833) target = $region84
      $region83: #{gnn_forward.9} parent=19 // pred_region
        %p836 = scmp.lt.s32.totalorder %s31, 6
        %s837 = scalar_select %p836, %s31, 6
        %s838 = scalar_lea.vmem %s16, %s837
      $region84: #{gnn_forward.9} parent=19 // pred_fallthru
        _
      // Predicated region
      $region85: #{gnn_forward.9} parent=19 // pred_check
        %p839 = pneg %p488
      $region86: #{gnn_forward.9} parent=19 // pred_check_branch
        %841 = sbr.rel (%p839) target = $region88
      $region87: #{gnn_forward.9} parent=19 // pred_region
        %p842 = scmp.lt.s32.totalorder %s31, 6
        %s843 = scalar_select %p842, %s31, 6
        %s844 = smul.addr %s843, 4
        %s845 = smul.addr %s844, 8
        %s846 = scalar_lea.vmem %s17, %s845
      $region88: #{gnn_forward.9} parent=19 // pred_fallthru
        _
      // Predicated region
      $region89: #{gnn_forward.9} parent=19 // pred_check
        %p847 = pneg %p514
      $region90: #{gnn_forward.9} parent=19 // pred_check_branch
        %849 = sbr.rel (%p847) target = $region92
      $region91: #{gnn_forward.9} parent=19 // pred_region
        %p850 = scmp.lt.s32.totalorder %s31, 6
        %s851 = scalar_select %p850, %s31, 6
        %s852 = scalar_lea.vmem %s18, %s851
      $region92: #{gnn_forward.9} parent=19 // pred_fallthru
        _
      // Predicated region
      $region93: #{gnn_forward.9} parent=19 // pred_check
        %p853 = pneg %p540
      $region94: #{gnn_forward.9} parent=19 // pred_check_branch
        %855 = sbr.rel (%p853) target = $region96
      $region95: #{gnn_forward.9} parent=19 // pred_region
        %p856 = scmp.lt.s32.totalorder %s31, 6
        %s857 = scalar_select %p856, %s31, 6
        %s858 = smul.addr %s857, 2
        %s859 = smul.addr %s858, 8
        %s860 = scalar_lea.vmem %s19, %s859
      $region96: #{gnn_forward.9} parent=19 // pred_fallthru
        _
      // Predicated region
      $region97: #{gnn_forward.9} parent=19 // pred_check
        %p861 = pneg %p566
      $region98: #{gnn_forward.9} parent=19 // pred_check_branch
        %863 = sbr.rel (%p861) target = $region100
      $region99: #{gnn_forward.9} parent=19 // pred_region
        %p864 = scmp.lt.s32.totalorder %s31, 6
        %s865 = scalar_select %p864, %s31, 6
        %s866 = smul.addr %s865, 2
        %s867 = smul.addr %s866, 8
        %s868 = scalar_lea.vmem %s20, %s867
      $region100: #{gnn_forward.9} parent=19 // pred_fallthru
        _
      // Predicated region
      $region101: #{gnn_forward.9} parent=19 // pred_check
        %p869 = pneg %p592
      $region102: #{gnn_forward.9} parent=19 // pred_check_branch
        %871 = sbr.rel (%p869) target = $region104
      $region103: #{gnn_forward.9} parent=19 // pred_region
        %p872 = scmp.lt.s32.totalorder %s31, 6
        %s873 = scalar_select %p872, %s31, 6
        %s874 = smul.addr %s873, 2
        %s875 = smul.addr %s874, 8
        %s876 = scalar_lea.vmem %s21, %s875
      $region104: #{gnn_forward.9} parent=19 // pred_fallthru
        _
      // Predicated region
      $region105: #{gnn_forward.9} parent=19 // pred_check
        %p877 = pneg %p618
      $region106: #{gnn_forward.9} parent=19 // pred_check_branch
        %879 = sbr.rel (%p877) target = $region108
      $region107: #{gnn_forward.9} parent=19 // pred_region
        %p880 = scmp.lt.s32.totalorder %s31, 6
        %s881 = scalar_select %p880, %s31, 6
        %s882 = scalar_lea.vmem %s22, %s881
      $region108: #{gnn_forward.9} parent=19 // pred_fallthru
        _
      // Predicated region
      $region109: #{gnn_forward.9} parent=19 // pred_check
        %p883 = pneg %p644
      $region110: #{gnn_forward.9} parent=19 // pred_check_branch
        %885 = sbr.rel (%p883) target = $region112
      $region111: #{gnn_forward.9} parent=19 // pred_region
        %p886 = scmp.lt.s32.totalorder %s31, 6
        %s887 = scalar_select %p886, %s31, 6
        %s888 = scalar_lea.vmem %s23, %s887
      $region112: #{gnn_forward.9} parent=19 // pred_fallthru
        _
      // Predicated region
      $region113: #{gnn_forward.9} parent=19 // pred_check
        %p889 = pneg %p670
      $region114: #{gnn_forward.9} parent=19 // pred_check_branch
        %891 = sbr.rel (%p889) target = $region116
      $region115: #{gnn_forward.9} parent=19 // pred_region
        %p892 = scmp.lt.s32.totalorder %s31, 6
        %s893 = scalar_select %p892, %s31, 6
        %s894 = scalar_lea.vmem %s24, %s893
      $region116: #{gnn_forward.9} parent=19 // pred_fallthru
        _
    $region20: #{gnn_forward.9} parent=5 // pred_fallthru
      _
    %p895 = scmp.le.s32.totalorder 1, %s31
    %p896 = scmp.lt.s32.totalorder %s31, 8
    %p897 = pnand %p895, %p896
    %p898 = pneg %p897
    // Predicated region
    $region117: #{gnn_forward.9} parent=5 // pred_check
      _
    $region118: #{gnn_forward.9} parent=5 // pred_check_branch
      %900 = sbr.rel (%p897) target = $region120
    $region119: #{gnn_forward.9} parent=5 // pred_region
      %s901 = ssub.s32 %s31, 1
      %p902 = pneg %p52
      %p903 = pneg %p49
      %p904 = scmp.lt.s32.totalorder %s36, 6
      %s905 = scalar_select %p904, %s36, 6
      %s906 = smul.addr %s905, 2
      %s907 = smul.addr %s906, 8
      %s908 = scalar_lea.vmem %s1, %s907
      %p909 = pneg %p78
      %p910 = pneg %p75
      %p911 = scmp.lt.s32.totalorder %s36, 6
      %s912 = scalar_select %p911, %s36, 6
      %s913 = smul.addr %s912, 2
      %s914 = smul.addr %s913, 8
      %s915 = scalar_lea.vmem %s2, %s914
      %p916 = pneg %p104
      %p917 = pneg %p101
      %p918 = scmp.lt.s32.totalorder %s36, 6
      %s919 = scalar_select %p918, %s36, 6
      %s920 = smul.addr %s919, 8
      %s921 = scalar_lea.vmem %s3, %s920
      %p922 = pneg %p130
      %p923 = pneg %p127
      %p924 = scmp.lt.s32.totalorder %s36, 6
      %s925 = scalar_select %p924, %s36, 6
      %s926 = smul.addr %s925, 2
      %s927 = smul.addr %s926, 8
      %s928 = scalar_lea.vmem %s4, %s927
      %p929 = pneg %p156
      %p930 = pneg %p153
      %p931 = scmp.lt.s32.totalorder %s36, 6
      %s932 = scalar_select %p931, %s36, 6
      %s933 = smul.addr %s932, 8
      %s934 = scalar_lea.vmem %s5, %s933
      %p935 = pneg %p182
      %p936 = pneg %p179
      %p937 = scmp.lt.s32.totalorder %s36, 6
      %s938 = scalar_select %p937, %s36, 6
      %s939 = smul.addr %s938, 8
      %s940 = scalar_lea.vmem %s6, %s939
      %p941 = pneg %p208
      %p942 = pneg %p205
      %p943 = scmp.lt.s32.totalorder %s36, 6
      %s944 = scalar_select %p943, %s36, 6
      %s945 = smul.addr %s944, 8
      %s946 = scalar_lea.vmem %s7, %s945
      %p947 = pneg %p234
      %p948 = pneg %p231
      %p949 = scmp.lt.s32.totalorder %s36, 6
      %s950 = scalar_select %p949, %s36, 6
      %s951 = smul.addr %s950, 8
      %s952 = scalar_lea.vmem %s8, %s951
      %p953 = pneg %p260
      %p954 = pneg %p257
      %p955 = scmp.lt.s32.totalorder %s36, 6
      %s956 = scalar_select %p955, %s36, 6
      %s957 = scalar_lea.vmem %s9, %s956
      %p958 = pneg %p286
      %p959 = pneg %p283
      %p960 = scmp.lt.s32.totalorder %s36, 6
      %s961 = scalar_select %p960, %s36, 6
      %s962 = smul.addr %s961, 4
      %s963 = smul.addr %s962, 8
      %s964 = scalar_lea.vmem %s10, %s963
      %p965 = pneg %p312
      %p966 = pneg %p309
      %p967 = scmp.lt.s32.totalorder %s36, 6
      %s968 = scalar_select %p967, %s36, 6
      %s969 = scalar_lea.vmem %s11, %s968
      %p970 = pneg %p338
      %p971 = pneg %p335
      %p972 = scmp.lt.s32.totalorder %s36, 6
      %s973 = scalar_select %p972, %s36, 6
      %s974 = smul.addr %s973, 4
      %s975 = smul.addr %s974, 8
      %s976 = scalar_lea.vmem %s12, %s975
      %p977 = pneg %p364
      %p978 = pneg %p361
      %p979 = scmp.lt.s32.totalorder %s36, 6
      %s980 = scalar_select %p979, %s36, 6
      %s981 = smul.addr %s980, 4
      %s982 = smul.addr %s981, 8
      %s983 = scalar_lea.vmem %s13, %s982
      %p984 = pneg %p390
      %p985 = pneg %p387
      %p986 = scmp.lt.s32.totalorder %s36, 6
      %s987 = scalar_select %p986, %s36, 6
      %s988 = scalar_lea.vmem %s14, %s987
      %p989 = pneg %p416
      %p990 = pneg %p413
      %p991 = scmp.lt.s32.totalorder %s36, 6
      %s992 = scalar_select %p991, %s36, 6
      %s993 = smul.addr %s992, 2
      %s994 = smul.addr %s993, 8
      %s995 = scalar_lea.vmem %s15, %s994
      %p996 = pneg %p442
      %p997 = pneg %p439
      %p998 = scmp.lt.s32.totalorder %s36, 6
      %s999 = scalar_select %p998, %s36, 6
      %s1000 = scalar_lea.vmem %s16, %s999
      %p1001 = pneg %p468
      %p1002 = pneg %p465
      %p1003 = scmp.lt.s32.totalorder %s36, 6
      %s1004 = scalar_select %p1003, %s36, 6
      %s1005 = smul.addr %s1004, 4
      %s1006 = smul.addr %s1005, 8
      %s1007 = scalar_lea.vmem %s17, %s1006
      %p1008 = pneg %p494
      %p1009 = pneg %p491
      %p1010 = scmp.lt.s32.totalorder %s36, 6
      %s1011 = scalar_select %p1010, %s36, 6
      %s1012 = scalar_lea.vmem %s18, %s1011
      %p1013 = pneg %p520
      %p1014 = pneg %p517
      %p1015 = scmp.lt.s32.totalorder %s36, 6
      %s1016 = scalar_select %p1015, %s36, 6
      %s1017 = smul.addr %s1016, 2
      %s1018 = smul.addr %s1017, 8
      %s1019 = scalar_lea.vmem %s19, %s1018
      %p1020 = pneg %p546
      %p1021 = pneg %p543
      %p1022 = scmp.lt.s32.totalorder %s36, 6
      %s1023 = scalar_select %p1022, %s36, 6
      %s1024 = smul.addr %s1023, 2
      %s1025 = smul.addr %s1024, 8
      %s1026 = scalar_lea.vmem %s20, %s1025
      %p1027 = pneg %p572
      %p1028 = pneg %p569
      %p1029 = scmp.lt.s32.totalorder %s36, 6
      %s1030 = scalar_select %p1029, %s36, 6
      %s1031 = smul.addr %s1030, 2
      %s1032 = smul.addr %s1031, 8
      %s1033 = scalar_lea.vmem %s21, %s1032
      %p1034 = pneg %p598
      %p1035 = pneg %p595
      %p1036 = scmp.lt.s32.totalorder %s36, 6
      %s1037 = scalar_select %p1036, %s36, 6
      %s1038 = scalar_lea.vmem %s22, %s1037
      %p1039 = pneg %p624
      %p1040 = pneg %p621
      %p1041 = scmp.lt.s32.totalorder %s36, 6
      %s1042 = scalar_select %p1041, %s36, 6
      %s1043 = scalar_lea.vmem %s23, %s1042
      %p1044 = pneg %p650
      %p1045 = pneg %p647
      %p1046 = scmp.lt.s32.totalorder %s36, 6
      %s1047 = scalar_select %p1046, %s36, 6
      %s1048 = scalar_lea.vmem %s24, %s1047
      %p1049 = pneg %p676
      %p1050 = pneg %p673
      %p1051 = pneg %p702
      %p1052 = pneg %p699
      %p1053 = scmp.lt.s32.totalorder %s36, 6
      %s1054 = scalar_select %p1053, %s36, 6
      %s1055 = smul.addr %s1054, 8
      %s1056 = scalar_lea.vmem %s25, %s1055
      %p1057 = scmp.lt.s32.totalorder %s36, 6
      %s1058 = scalar_select %p1057, %s36, 6
      %s1059 = smul.addr %s1058, 2
      %s1060 = smul.addr %s1059, 8
      %s1061 = scalar_lea.vmem %s1, %s1060
      %p1062 = scmp.lt.s32.totalorder %s36, 6
      %s1063 = scalar_select %p1062, %s36, 6
      %s1064 = smul.addr %s1063, 2
      %s1065 = smul.addr %s1064, 8
      %s1066 = scalar_lea.vmem %s2, %s1065
      %p1067 = scmp.lt.s32.totalorder %s36, 6
      %s1068 = scalar_select %p1067, %s36, 6
      %s1069 = smul.addr %s1068, 8
      %s1070 = scalar_lea.vmem %s3, %s1069
      %p1071 = scmp.lt.s32.totalorder %s36, 6
      %s1072 = scalar_select %p1071, %s36, 6
      %s1073 = smul.addr %s1072, 2
      %s1074 = smul.addr %s1073, 8
      %s1075 = scalar_lea.vmem %s4, %s1074
      %p1076 = scmp.lt.s32.totalorder %s36, 6
      %s1077 = scalar_select %p1076, %s36, 6
      %s1078 = smul.addr %s1077, 8
      %s1079 = scalar_lea.vmem %s5, %s1078
      %p1080 = scmp.lt.s32.totalorder %s36, 6
      %s1081 = scalar_select %p1080, %s36, 6
      %s1082 = smul.addr %s1081, 8
      %s1083 = scalar_lea.vmem %s6, %s1082
      %p1084 = scmp.lt.s32.totalorder %s36, 6
      %s1085 = scalar_select %p1084, %s36, 6
      %s1086 = smul.addr %s1085, 8
      %s1087 = scalar_lea.vmem %s7, %s1086
      %p1088 = scmp.lt.s32.totalorder %s36, 6
      %s1089 = scalar_select %p1088, %s36, 6
      %s1090 = smul.addr %s1089, 8
      %s1091 = scalar_lea.vmem %s8, %s1090
      %p1092 = scmp.lt.s32.totalorder %s36, 6
      %s1093 = scalar_select %p1092, %s36, 6
      %s1094 = scalar_lea.vmem %s9, %s1093
      %p1095 = scmp.lt.s32.totalorder %s36, 6
      %s1096 = scalar_select %p1095, %s36, 6
      %s1097 = smul.addr %s1096, 4
      %s1098 = smul.addr %s1097, 8
      %s1099 = scalar_lea.vmem %s10, %s1098
      %p1100 = scmp.lt.s32.totalorder %s36, 6
      %s1101 = scalar_select %p1100, %s36, 6
      %s1102 = scalar_lea.vmem %s11, %s1101
      %p1103 = scmp.lt.s32.totalorder %s36, 6
      %s1104 = scalar_select %p1103, %s36, 6
      %s1105 = smul.addr %s1104, 4
      %s1106 = smul.addr %s1105, 8
      %s1107 = scalar_lea.vmem %s12, %s1106
      %p1108 = scmp.lt.s32.totalorder %s36, 6
      %s1109 = scalar_select %p1108, %s36, 6
      %s1110 = smul.addr %s1109, 4
      %s1111 = smul.addr %s1110, 8
      %s1112 = scalar_lea.vmem %s13, %s1111
      %p1113 = scmp.lt.s32.totalorder %s36, 6
      %s1114 = scalar_select %p1113, %s36, 6
      %s1115 = scalar_lea.vmem %s14, %s1114
      %p1116 = scmp.lt.s32.totalorder %s36, 6
      %s1117 = scalar_select %p1116, %s36, 6
      %s1118 = smul.addr %s1117, 2
      %s1119 = smul.addr %s1118, 8
      %s1120 = scalar_lea.vmem %s15, %s1119
      %p1121 = scmp.lt.s32.totalorder %s36, 6
      %s1122 = scalar_select %p1121, %s36, 6
      %s1123 = scalar_lea.vmem %s16, %s1122
      %p1124 = scmp.lt.s32.totalorder %s36, 6
      %s1125 = scalar_select %p1124, %s36, 6
      %s1126 = smul.addr %s1125, 4
      %s1127 = smul.addr %s1126, 8
      %s1128 = scalar_lea.vmem %s17, %s1127
      %p1129 = scmp.lt.s32.totalorder %s36, 6
      %s1130 = scalar_select %p1129, %s36, 6
      %s1131 = scalar_lea.vmem %s18, %s1130
      %p1132 = scmp.lt.s32.totalorder %s36, 6
      %s1133 = scalar_select %p1132, %s36, 6
      %s1134 = smul.addr %s1133, 2
      %s1135 = smul.addr %s1134, 8
      %s1136 = scalar_lea.vmem %s19, %s1135
      %p1137 = scmp.lt.s32.totalorder %s36, 6
      %s1138 = scalar_select %p1137, %s36, 6
      %s1139 = smul.addr %s1138, 2
      %s1140 = smul.addr %s1139, 8
      %s1141 = scalar_lea.vmem %s20, %s1140
      %p1142 = scmp.lt.s32.totalorder %s36, 6
      %s1143 = scalar_select %p1142, %s36, 6
      %s1144 = smul.addr %s1143, 2
      %s1145 = smul.addr %s1144, 8
      %s1146 = scalar_lea.vmem %s21, %s1145
      %p1147 = scmp.lt.s32.totalorder %s36, 6
      %s1148 = scalar_select %p1147, %s36, 6
      %s1149 = scalar_lea.vmem %s22, %s1148
      %p1150 = scmp.lt.s32.totalorder %s36, 6
      %s1151 = scalar_select %p1150, %s36, 6
      %s1152 = scalar_lea.vmem %s23, %s1151
      %p1153 = scmp.lt.s32.totalorder %s36, 6
      %s1154 = scalar_select %p1153, %s36, 6
      %s1155 = scalar_lea.vmem %s24, %s1154
      %p1156 = scmp.lt.s32.totalorder %s36, 6
      %s1157 = scalar_select %p1156, %s36, 6
      %s1158 = smul.addr %s1157, 8
      %s1159 = scalar_lea.vmem %s25, %s1158
      %v1160 = vld [vmem:[%s0] sm:$0xff]
      %v1161 = vld [vmem:[%s0 + $0x8] sm:$0xff]
      %v1162 = vld [vmem:[%s0 + $0x10] sm:$0xff]
      %v1163 = vld [vmem:[%s1061] sm:$0xff]
      %v1164 = vld [vmem:[%s1061 + $0x8] sm:$0xf]
      %v1165 = vld [vmem:[%s1091] sm:$0xff]
      %v1166 = vld [vmem:[%s1094] sm:$0x1]
      %v1167 = vld [vmem:[%s1066] sm:$0xff]
      %v1168 = vld [vmem:[%s1066 + $0x8] sm:$0xf]
      %vm1169 = vcmask 195584
      %v1171 = vsel %vm1169, %v1167, 0
      %v1174 = vsel %vm1169, %v1168, 0
      %1176 = vmatprep.subr.mxu0 0.0
      %1177 = vmatpush1.msra.mxu0 %v1160
      %1178 = vmatprep.subr.mxu0 0.0
      %1179 = vmatpush1.msra.mxu0 %v1161
      %1180 = vmatprep.subr.mxu0 0.0
      %1181 = vmatpush1.msra.mxu0 %v1162
      %1182 = vmatprep.subr.mxu0 0.0
      %1183 = vmatpush1.msra.mxu0 0.0
      %1184 = vmatprep.subr.mxu0 0.0
      %1185 = vmatpush1.msra.mxu0 0.0
      %1186 = vmatprep.subr.mxu0 0.0
      %1187 = vmatpush1.msra.mxu0 0.0
      %1188 = vmatprep.subr.mxu0 0.0
      %1189 = vmatpush1.msra.mxu0 0.0
      %1190 = vmatprep.subr.mxu0 0.0
      %1191 = vmatpush1.msra.mxu0 0.0
      %1192 = vmatprep.subr.mxu0 0.0
      %1193 = vmatpush1.msra.mxu0 0.0
      %1194 = vmatprep.subr.mxu0 0.0
      %1195 = vmatpush1.msra.mxu0 0.0
      %1196 = vmatprep.subr.mxu0 0.0
      %1197 = vmatpush1.msra.mxu0 0.0
      %1198 = vmatprep.subr.mxu0 0.0
      %1199 = vmatpush1.msra.mxu0 0.0
      %1200 = vmatprep.subr.mxu0 0.0
      %1201 = vmatpush1.msra.mxu0 0.0
      %1202 = vmatprep.subr.mxu0 0.0
      %1203 = vmatpush1.msra.mxu0 0.0
      %1204 = vmatprep.subr.mxu0 0.0
      %1205 = vmatpush1.msra.mxu0 0.0
      %1206 = vmatprep.subr.mxu0 0.0
      %1207 = vmatpush1.msra.mxu0 0.0
      %1208 = vmatprep.subr.mxu0 0.0
      %1209 = vmatpush1.msra.mxu0 0.0
      %1210 = vmatprep.subr.mxu0 0.0
      %1211 = vmatpush1.msra.mxu0 0.0
      %1212 = vmatprep.subr.mxu0 0.0
      %1213 = vmatpush1.msra.mxu0 0.0
      %1214 = vmatprep.subr.mxu0 0.0
      %1215 = vmatpush1.msra.mxu0 0.0
      %1216 = vmatprep.subr.mxu0 0.0
      %1217 = vmatpush1.msra.mxu0 0.0
      %1218 = vmatprep.subr.mxu0 0.0
      %1219 = vmatpush1.msra.mxu0 0.0
      %1220 = vmatprep.subr.mxu0 0.0
      %1221 = vmatpush1.msra.mxu0 0.0
      %1222 = vmatprep.subr.mxu0 0.0
      %1223 = vmatpush1.msra.mxu0 0.0
      %1224 = vmatprep.subr.mxu0 0.0
      %1225 = vmatpush1.msra.mxu0 0.0
      %1226 = vmatprep.subr.mxu0 0.0
      %1227 = vmatpush1.msra.mxu0 0.0
      %1228 = vmatprep.subr.mxu0 0.0
      %1229 = vmatpush1.msra.mxu0 0.0
      %1230 = vmatprep.subr.mxu0 0.0
      %1231 = vmatpush1.msra.mxu0 0.0
      %1232 = vmatprep.subr.mxu0 0.0
      %1233 = vmatpush1.msra.mxu0 0.0
      %1234 = vmatprep.subr.mxu0 0.0
      %1235 = vmatpush1.msra.mxu0 0.0
      %1236 = vmatprep.subr.mxu0 0.0
      %1237 = vmatpush1.msra.mxu0 0.0
      %1238 = vmatprep.subr.mxu0 0.0
      %1239 = vmatpush1.msra.mxu0 0.0
      %1240 = vmatprep.mubr.f32.mxu0 0.0
      %1241 = vmatmul.mubr.f32.gmra.mrb[0].mxu0 %v1171
      %v1242 = vpop.f32.mrb[0].mxu0
      %v1243 = vadd.f32 0.0, %v1242
      %v1244 = vpop.f32.mrb[0].mxu0
      %1245 = vmatprep.mubr.f32.mxu0 0.0
      %1246 = vmatmul.mubr.f32.gmra.mrb[0].mxu0 %v1174
      %v1247 = vpop.f32.mrb[0].mxu0
      %v1248 = vadd.f32 0.0, %v1247
      %v1249 = vpop.f32.mrb[0].mxu0
      %1250 = vdwg.mxu0
      %v1251 = vld [vmem:[%s1079] sm:$0xff]
      %vm1252 = vcmask 97280
      %v1254 = vsel %vm1252, %v1251, 0
      %vm1256 = vcmask 1043456
      %v1258 = vsel %vm1256, %v1248, 0
      %1260 = vmatprep.subr.mxu0 0.0
      %1261 = vmatpush1.msra.mxu0 %v1243
      %1262 = vmatprep.subr.mxu0 0.0
      %1263 = vmatpush1.msra.mxu0 %v1258
      %1264 = vmatprep.subr.mxu0 0.0
      %1265 = vmatpush1.msra.mxu0 0.0
      %1266 = vmatprep.subr.mxu0 0.0
      %1267 = vmatpush1.msra.mxu0 0.0
      %1268 = vmatprep.subr.mxu0 0.0
      %1269 = vmatpush1.msra.mxu0 0.0
      %1270 = vmatprep.subr.mxu0 0.0
      %1271 = vmatpush1.msra.mxu0 0.0
      %1272 = vmatprep.subr.mxu0 0.0
      %1273 = vmatpush1.msra.mxu0 0.0
      %1274 = vmatprep.subr.mxu0 0.0
      %1275 = vmatpush1.msra.mxu0 0.0
      %1276 = vmatprep.subr.mxu0 0.0
      %1277 = vmatpush1.msra.mxu0 0.0
      %1278 = vmatprep.subr.mxu0 0.0
      %1279 = vmatpush1.msra.mxu0 0.0
      %1280 = vmatprep.subr.mxu0 0.0
      %1281 = vmatpush1.msra.mxu0 0.0
      %1282 = vmatprep.subr.mxu0 0.0
      %1283 = vmatpush1.msra.mxu0 0.0
      %1284 = vmatprep.subr.mxu0 0.0
      %1285 = vmatpush1.msra.mxu0 0.0
      %1286 = vmatprep.subr.mxu0 0.0
      %1287 = vmatpush1.msra.mxu0 0.0
      %1288 = vmatprep.subr.mxu0 0.0
      %1289 = vmatpush1.msra.mxu0 0.0
      %1290 = vmatprep.subr.mxu0 0.0
      %1291 = vmatpush1.msra.mxu0 0.0
      %1292 = vmatprep.subr.mxu0 0.0
      %1293 = vmatpush1.msra.mxu0 0.0
      %1294 = vmatprep.subr.mxu0 0.0
      %1295 = vmatpush1.msra.mxu0 0.0
      %1296 = vmatprep.subr.mxu0 0.0
      %1297 = vmatpush1.msra.mxu0 0.0
      %1298 = vmatprep.subr.mxu0 0.0
      %1299 = vmatpush1.msra.mxu0 0.0
      %1300 = vmatprep.subr.mxu0 0.0
      %1301 = vmatpush1.msra.mxu0 0.0
      %1302 = vmatprep.subr.mxu0 0.0
      %1303 = vmatpush1.msra.mxu0 0.0
      %1304 = vmatprep.subr.mxu0 0.0
      %1305 = vmatpush1.msra.mxu0 0.0
      %1306 = vmatprep.subr.mxu0 0.0
      %1307 = vmatpush1.msra.mxu0 0.0
      %1308 = vmatprep.subr.mxu0 0.0
      %1309 = vmatpush1.msra.mxu0 0.0
      %1310 = vmatprep.subr.mxu0 0.0
      %1311 = vmatpush1.msra.mxu0 0.0
      %1312 = vmatprep.subr.mxu0 0.0
      %1313 = vmatpush1.msra.mxu0 0.0
      %1314 = vmatprep.subr.mxu0 0.0
      %1315 = vmatpush1.msra.mxu0 0.0
      %1316 = vmatprep.subr.mxu0 0.0
      %1317 = vmatpush1.msra.mxu0 0.0
      %1318 = vmatprep.subr.mxu0 0.0
      %1319 = vmatpush1.msra.mxu0 0.0
      %1320 = vmatprep.subr.mxu0 0.0
      %1321 = vmatpush1.msra.mxu0 0.0
      %1322 = vmatprep.subr.mxu0 0.0
      %1323 = vmatpush1.msra.mxu0 0.0
      %1324 = vmatprep.mubr.f32.mxu0 0.0
      %1325 = vmatmul.mubr.f32.gmra.mrb[0].mxu0 %v1254
      %v1326 = vpop.f32.mrb[0].mxu0
      %v1327 = vadd.f32 0.0, %v1326
      %v1328 = vpop.f32.mrb[0].mxu0
      %1329 = vdwg.mxu0
      %v1330 = vld [vmem:[%s1087] sm:$0xff]
      %1332 = vset.pattern.permute.xlu0 0
      %1333 = vperm.xlu0 %1332, %v1330
      %v1334 = vpop.permute.xlu0 %1333
      %v1336 = vmul.f32 %v1327, %v1334
      %v1337 = vld [vmem:[%s1070] sm:$0xff]
      %v1339 = vsel %vm1169, %v1337, 0
      %1341 = vmatprep.subr.mxu0 0.0
      %1342 = vmatpush1.msra.mxu0 %v1160
      %1343 = vmatprep.subr.mxu0 0.0
      %1344 = vmatpush1.msra.mxu0 %v1161
      %1345 = vmatprep.subr.mxu0 0.0
      %1346 = vmatpush1.msra.mxu0 %v1162
      %1347 = vmatprep.subr.mxu0 0.0
      %1348 = vmatpush1.msra.mxu0 0.0
      %1349 = vmatprep.subr.mxu0 0.0
      %1350 = vmatpush1.msra.mxu0 0.0
      %1351 = vmatprep.subr.mxu0 0.0
      %1352 = vmatpush1.msra.mxu0 0.0
      %1353 = vmatprep.subr.mxu0 0.0
      %1354 = vmatpush1.msra.mxu0 0.0
      %1355 = vmatprep.subr.mxu0 0.0
      %1356 = vmatpush1.msra.mxu0 0.0
      %1357 = vmatprep.subr.mxu0 0.0
      %1358 = vmatpush1.msra.mxu0 0.0
      %1359 = vmatprep.subr.mxu0 0.0
      %1360 = vmatpush1.msra.mxu0 0.0
      %1361 = vmatprep.subr.mxu0 0.0
      %1362 = vmatpush1.msra.mxu0 0.0
      %1363 = vmatprep.subr.mxu0 0.0
      %1364 = vmatpush1.msra.mxu0 0.0
      %1365 = vmatprep.subr.mxu0 0.0
      %1366 = vmatpush1.msra.mxu0 0.0
      %1367 = vmatprep.subr.mxu0 0.0
      %1368 = vmatpush1.msra.mxu0 0.0
      %1369 = vmatprep.subr.mxu0 0.0
      %1370 = vmatpush1.msra.mxu0 0.0
      %1371 = vmatprep.subr.mxu0 0.0
      %1372 = vmatpush1.msra.mxu0 0.0
      %1373 = vmatprep.subr.mxu0 0.0
      %1374 = vmatpush1.msra.mxu0 0.0
      %1375 = vmatprep.subr.mxu0 0.0
      %1376 = vmatpush1.msra.mxu0 0.0
      %1377 = vmatprep.subr.mxu0 0.0
      %1378 = vmatpush1.msra.mxu0 0.0
      %1379 = vmatprep.subr.mxu0 0.0
      %1380 = vmatpush1.msra.mxu0 0.0
      %1381 = vmatprep.subr.mxu0 0.0
      %1382 = vmatpush1.msra.mxu0 0.0
      %1383 = vmatprep.subr.mxu0 0.0
      %1384 = vmatpush1.msra.mxu0 0.0
      %1385 = vmatprep.subr.mxu0 0.0
      %1386 = vmatpush1.msra.mxu0 0.0
      %1387 = vmatprep.subr.mxu0 0.0
      %1388 = vmatpush1.msra.mxu0 0.0
      %1389 = vmatprep.subr.mxu0 0.0
      %1390 = vmatpush1.msra.mxu0 0.0
      %1391 = vmatprep.subr.mxu0 0.0
      %1392 = vmatpush1.msra.mxu0 0.0
      %1393 = vmatprep.subr.mxu0 0.0
      %1394 = vmatpush1.msra.mxu0 0.0
      %1395 = vmatprep.subr.mxu0 0.0
      %1396 = vmatpush1.msra.mxu0 0.0
      %1397 = vmatprep.subr.mxu0 0.0
      %1398 = vmatpush1.msra.mxu0 0.0
      %1399 = vmatprep.subr.mxu0 0.0
      %1400 = vmatpush1.msra.mxu0 0.0
      %1401 = vmatprep.subr.mxu0 0.0
      %1402 = vmatpush1.msra.mxu0 0.0
      %1403 = vmatprep.subr.mxu0 0.0
      %1404 = vmatpush1.msra.mxu0 0.0
      %1405 = vmatprep.mubr.f32.mxu0 0.0
      %1406 = vmatmul.mubr.f32.gmra.mrb[0].mxu0 %v1339
      %v1407 = vpop.f32.mrb[0].mxu0
      %v1408 = vadd.f32 0.0, %v1407
      %v1409 = vpop.f32.mrb[0].mxu0
      %1410 = vdwg.mxu0
      %v1411 = vld [vmem:[%s1099] sm:$0xff]
      %v1412 = vld [vmem:[%s1099 + $0x8] sm:$0xff]
      %v1413 = vld [vmem:[%s1099 + $0x10] sm:$0xff]
      %v1414 = vld [vmem:[%s1099 + $0x18] sm:$0xff]
      %v1415 = vld [vmem:[%s1102] sm:$0x1]
      %v1417 = vlaneseq
      %v1418 = vshrl.u32 %v1417, 7
      %v1419 = vsub.s32 0, %v1418
      %v1420 = vrot.slane %v1415, %v1419
      %vm1422 = vcmask 261120
      %v1424 = vsel %vm1422, %v1336, 0
      %1426 = vmatprep.subr.mxu0 0.0
      %1427 = vmatpush1.msra.mxu0 %v1411
      %1428 = vmatprep.subr.mxu0 0.0
      %1429 = vmatpush1.msra.mxu0 %v1412
      %1430 = vmatprep.subr.mxu0 0.0
      %1431 = vmatpush1.msra.mxu0 %v1413
      %1432 = vmatprep.subr.mxu0 0.0
      %1433 = vmatpush1.msra.mxu0 %v1414
      %1434 = vmatprep.subr.mxu0 0.0
      %1435 = vmatpush1.msra.mxu0 0.0
      %1436 = vmatprep.subr.mxu0 0.0
      %1437 = vmatpush1.msra.mxu0 0.0
      %1438 = vmatprep.subr.mxu0 0.0
      %1439 = vmatpush1.msra.mxu0 0.0
      %1440 = vmatprep.subr.mxu0 0.0
      %1441 = vmatpush1.msra.mxu0 0.0
      %1442 = vmatprep.subr.mxu0 0.0
      %1443 = vmatpush1.msra.mxu0 0.0
      %1444 = vmatprep.subr.mxu0 0.0
      %1445 = vmatpush1.msra.mxu0 0.0
      %1446 = vmatprep.subr.mxu0 0.0
      %1447 = vmatpush1.msra.mxu0 0.0
      %1448 = vmatprep.subr.mxu0 0.0
      %1449 = vmatpush1.msra.mxu0 0.0
      %1450 = vmatprep.subr.mxu0 0.0
      %1451 = vmatpush1.msra.mxu0 0.0
      %1452 = vmatprep.subr.mxu0 0.0
      %1453 = vmatpush1.msra.mxu0 0.0
      %1454 = vmatprep.subr.mxu0 0.0
      %1455 = vmatpush1.msra.mxu0 0.0
      %1456 = vmatprep.subr.mxu0 0.0
      %1457 = vmatpush1.msra.mxu0 0.0
      %1458 = vmatprep.subr.mxu0 0.0
      %1459 = vmatpush1.msra.mxu0 0.0
      %1460 = vmatprep.subr.mxu0 0.0
      %1461 = vmatpush1.msra.mxu0 0.0
      %1462 = vmatprep.subr.mxu0 0.0
      %1463 = vmatpush1.msra.mxu0 0.0
      %1464 = vmatprep.subr.mxu0 0.0
      %1465 = vmatpush1.msra.mxu0 0.0
      %1466 = vmatprep.subr.mxu0 0.0
      %1467 = vmatpush1.msra.mxu0 0.0
      %1468 = vmatprep.subr.mxu0 0.0
      %1469 = vmatpush1.msra.mxu0 0.0
      %1470 = vmatprep.subr.mxu0 0.0
      %1471 = vmatpush1.msra.mxu0 0.0
      %1472 = vmatprep.subr.mxu0 0.0
      %1473 = vmatpush1.msra.mxu0 0.0
      %1474 = vmatprep.subr.mxu0 0.0
      %1475 = vmatpush1.msra.mxu0 0.0
      %1476 = vmatprep.subr.mxu0 0.0
      %1477 = vmatpush1.msra.mxu0 0.0
      %1478 = vmatprep.subr.mxu0 0.0
      %1479 = vmatpush1.msra.mxu0 0.0
      %1480 = vmatprep.subr.mxu0 0.0
      %1481 = vmatpush1.msra.mxu0 0.0
      %1482 = vmatprep.subr.mxu0 0.0
      %1483 = vmatpush1.msra.mxu0 0.0
      %1484 = vmatprep.subr.mxu0 0.0
      %1485 = vmatpush1.msra.mxu0 0.0
      %1486 = vmatprep.subr.mxu0 0.0
      %1487 = vmatpush1.msra.mxu0 0.0
      %1488 = vmatprep.subr.mxu0 0.0
      %1489 = vmatpush1.msra.mxu0 0.0
      %1490 = vmatprep.mubr.f32.mxu0 0.0
      %1491 = vmatmul.mubr.f32.gmra.mrb[0].mxu0 %v1424
      %v1492 = vpop.f32.mrb[0].mxu0
      %v1493 = vadd.f32 %v1420, %v1492
      %v1494 = vpop.f32.mrb[0].mxu0
      %1495 = vdwg.mxu0
      %v1496 = vld [vmem:[%s1107] sm:$0xff]
      %v1497 = vld [vmem:[%s1107 + $0x8] sm:$0xff]
      %v1498 = vld [vmem:[%s1107 + $0x10] sm:$0xff]
      %v1499 = vld [vmem:[%s1107 + $0x18] sm:$0xff]
      %v1501 = vsel %vm1422, %v1408, 0
      %1503 = vmatprep.subr.mxu0 0.0
      %1504 = vmatpush1.msra.mxu0 %v1496
      %1505 = vmatprep.subr.mxu0 0.0
      %1506 = vmatpush1.msra.mxu0 %v1497
      %1507 = vmatprep.subr.mxu0 0.0
      %1508 = vmatpush1.msra.mxu0 %v1498
      %1509 = vmatprep.subr.mxu0 0.0
      %1510 = vmatpush1.msra.mxu0 %v1499
      %1511 = vmatprep.subr.mxu0 0.0
      %1512 = vmatpush1.msra.mxu0 0.0
      %1513 = vmatprep.subr.mxu0 0.0
      %1514 = vmatpush1.msra.mxu0 0.0
      %1515 = vmatprep.subr.mxu0 0.0
      %1516 = vmatpush1.msra.mxu0 0.0
      %1517 = vmatprep.subr.mxu0 0.0
      %1518 = vmatpush1.msra.mxu0 0.0
      %1519 = vmatprep.subr.mxu0 0.0
      %1520 = vmatpush1.msra.mxu0 0.0
      %1521 = vmatprep.subr.mxu0 0.0
      %1522 = vmatpush1.msra.mxu0 0.0
      %1523 = vmatprep.subr.mxu0 0.0
      %1524 = vmatpush1.msra.mxu0 0.0
      %1525 = vmatprep.subr.mxu0 0.0
      %1526 = vmatpush1.msra.mxu0 0.0
      %1527 = vmatprep.subr.mxu0 0.0
      %1528 = vmatpush1.msra.mxu0 0.0
      %1529 = vmatprep.subr.mxu0 0.0
      %1530 = vmatpush1.msra.mxu0 0.0
      %1531 = vmatprep.subr.mxu0 0.0
      %1532 = vmatpush1.msra.mxu0 0.0
      %1533 = vmatprep.subr.mxu0 0.0
      %1534 = vmatpush1.msra.mxu0 0.0
      %1535 = vmatprep.subr.mxu0 0.0
      %1536 = vmatpush1.msra.mxu0 0.0
      %1537 = vmatprep.subr.mxu0 0.0
      %1538 = vmatpush1.msra.mxu0 0.0
      %1539 = vmatprep.subr.mxu0 0.0
      %1540 = vmatpush1.msra.mxu0 0.0
      %1541 = vmatprep.subr.mxu0 0.0
      %1542 = vmatpush1.msra.mxu0 0.0
      %1543 = vmatprep.subr.mxu0 0.0
      %1544 = vmatpush1.msra.mxu0 0.0
      %1545 = vmatprep.subr.mxu0 0.0
      %1546 = vmatpush1.msra.mxu0 0.0
      %1547 = vmatprep.subr.mxu0 0.0
      %1548 = vmatpush1.msra.mxu0 0.0
      %1549 = vmatprep.subr.mxu0 0.0
      %1550 = vmatpush1.msra.mxu0 0.0
      %1551 = vmatprep.subr.mxu0 0.0
      %1552 = vmatpush1.msra.mxu0 0.0
      %1553 = vmatprep.subr.mxu0 0.0
      %1554 = vmatpush1.msra.mxu0 0.0
      %1555 = vmatprep.subr.mxu0 0.0
      %1556 = vmatpush1.msra.mxu0 0.0
      %1557 = vmatprep.subr.mxu0 0.0
      %1558 = vmatpush1.msra.mxu0 0.0
      %1559 = vmatprep.subr.mxu0 0.0
      %1560 = vmatpush1.msra.mxu0 0.0
      %1561 = vmatprep.subr.mxu0 0.0
      %1562 = vmatpush1.msra.mxu0 0.0
      %1563 = vmatprep.subr.mxu0 0.0
      %1564 = vmatpush1.msra.mxu0 0.0
      %1565 = vmatprep.subr.mxu0 0.0
      %1566 = vmatpush1.msra.mxu0 0.0
      %1567 = vmatprep.mubr.f32.mxu0 0.0
      %1568 = vmatmul.mubr.f32.gmra.mrb[0].mxu0 %v1501
      %v1569 = vpop.f32.mrb[0].mxu0
      %v1570 = vadd.f32 0.0, %v1569
      %v1571 = vpop.f32.mrb[0].mxu0
      %1572 = vdwg.mxu0
      %v1573 = vadd.f32 %v1493, %v1570
      %v1574 = vld [vmem:[%s1112] sm:$0xff]
      %v1575 = vld [vmem:[%s1112 + $0x8] sm:$0xff]
      %v1576 = vld [vmem:[%s1112 + $0x10] sm:$0xff]
      %v1577 = vld [vmem:[%s1112 + $0x18] sm:$0xff]
      %v1578 = vld [vmem:[%s1115] sm:$0x1]
      %v1580 = vlaneseq
      %v1581 = vshrl.u32 %v1580, 7
      %v1582 = vsub.s32 0, %v1581
      %v1583 = vrot.slane %v1578, %v1582
      %v1586 = vsel %vm1422, %v1163, 0
      %v1589 = vsel %vm1422, %v1164, 0
      %1591 = vmatprep.subr.mxu0 0.0
      %1592 = vmatpush1.msra.mxu0 %v1574
      %1593 = vmatprep.subr.mxu0 0.0
      %1594 = vmatpush1.msra.mxu0 %v1575
      %1595 = vmatprep.subr.mxu0 0.0
      %1596 = vmatpush1.msra.mxu0 %v1576
      %1597 = vmatprep.subr.mxu0 0.0
      %1598 = vmatpush1.msra.mxu0 %v1577
      %1599 = vmatprep.subr.mxu0 0.0
      %1600 = vmatpush1.msra.mxu0 0.0
      %1601 = vmatprep.subr.mxu0 0.0
      %1602 = vmatpush1.msra.mxu0 0.0
      %1603 = vmatprep.subr.mxu0 0.0
      %1604 = vmatpush1.msra.mxu0 0.0
      %1605 = vmatprep.subr.mxu0 0.0
      %1606 = vmatpush1.msra.mxu0 0.0
      %1607 = vmatprep.subr.mxu0 0.0
      %1608 = vmatpush1.msra.mxu0 0.0
      %1609 = vmatprep.subr.mxu0 0.0
      %1610 = vmatpush1.msra.mxu0 0.0
      %1611 = vmatprep.subr.mxu0 0.0
      %1612 = vmatpush1.msra.mxu0 0.0
      %1613 = vmatprep.subr.mxu0 0.0
      %1614 = vmatpush1.msra.mxu0 0.0
      %1615 = vmatprep.subr.mxu0 0.0
      %1616 = vmatpush1.msra.mxu0 0.0
      %1617 = vmatprep.subr.mxu0 0.0
      %1618 = vmatpush1.msra.mxu0 0.0
      %1619 = vmatprep.subr.mxu0 0.0
      %1620 = vmatpush1.msra.mxu0 0.0
      %1621 = vmatprep.subr.mxu0 0.0
      %1622 = vmatpush1.msra.mxu0 0.0
      %1623 = vmatprep.subr.mxu0 0.0
      %1624 = vmatpush1.msra.mxu0 0.0
      %1625 = vmatprep.subr.mxu0 0.0
      %1626 = vmatpush1.msra.mxu0 0.0
      %1627 = vmatprep.subr.mxu0 0.0
      %1628 = vmatpush1.msra.mxu0 0.0
      %1629 = vmatprep.subr.mxu0 0.0
      %1630 = vmatpush1.msra.mxu0 0.0
      %1631 = vmatprep.subr.mxu0 0.0
      %1632 = vmatpush1.msra.mxu0 0.0
      %1633 = vmatprep.subr.mxu0 0.0
      %1634 = vmatpush1.msra.mxu0 0.0
      %1635 = vmatprep.subr.mxu0 0.0
      %1636 = vmatpush1.msra.mxu0 0.0
      %1637 = vmatprep.subr.mxu0 0.0
      %1638 = vmatpush1.msra.mxu0 0.0
      %1639 = vmatprep.subr.mxu0 0.0
      %1640 = vmatpush1.msra.mxu0 0.0
      %1641 = vmatprep.subr.mxu0 0.0
      %1642 = vmatpush1.msra.mxu0 0.0
      %1643 = vmatprep.subr.mxu0 0.0
      %1644 = vmatpush1.msra.mxu0 0.0
      %1645 = vmatprep.subr.mxu0 0.0
      %1646 = vmatpush1.msra.mxu0 0.0
      %1647 = vmatprep.subr.mxu0 0.0
      %1648 = vmatpush1.msra.mxu0 0.0
      %1649 = vmatprep.subr.mxu0 0.0
      %1650 = vmatpush1.msra.mxu0 0.0
      %1651 = vmatprep.subr.mxu0 0.0
      %1652 = vmatpush1.msra.mxu0 0.0
      %1653 = vmatprep.subr.mxu0 0.0
      %1654 = vmatpush1.msra.mxu0 0.0
      %1655 = vmatprep.mubr.f32.mxu0 0.0
      %1656 = vmatmul.mubr.f32.gmra.mrb[0].mxu0 %v1586
      %v1657 = vpop.f32.mrb[0].mxu0
      %v1658 = vadd.f32 %v1583, %v1657
      %v1659 = vpop.f32.mrb[0].mxu0
      %1660 = vmatprep.mubr.f32.mxu0 0.0
      %1661 = vmatmul.mubr.f32.gmra.mrb[0].mxu0 %v1589
      %v1662 = vpop.f32.mrb[0].mxu0
      %v1663 = vadd.f32 %v1583, %v1662
      %v1664 = vpop.f32.mrb[0].mxu0
      %1665 = vdwg.mxu0
      %v1666 = vmax.f32 %v1658, 0.0
      %v1667 = vmax.f32 %v1663, 0.0
      %v1668 = vld [vmem:[%s1120] sm:$0xff]
      %v1669 = vld [vmem:[%s1120 + $0x8] sm:$0xff]
      %v1670 = vld [vmem:[%s1123] sm:$0x1]
      %v1672 = vlaneseq
      %v1673 = vshrl.u32 %v1672, 7
      %v1674 = vsub.s32 0, %v1673
      %v1675 = vrot.slane %v1670, %v1674
      %vm1677 = vcmask 130048
      %v1679 = vsel %vm1677, %v1666, 0
      %v1682 = vsel %vm1677, %v1667, 0
      %1684 = vmatprep.subr.mxu0 0.0
      %1685 = vmatpush1.msra.mxu0 %v1668
      %1686 = vmatprep.subr.mxu0 0.0
      %1687 = vmatpush1.msra.mxu0 %v1669
      %1688 = vmatprep.subr.mxu0 0.0
      %1689 = vmatpush1.msra.mxu0 0.0
      %1690 = vmatprep.subr.mxu0 0.0
      %1691 = vmatpush1.msra.mxu0 0.0
      %1692 = vmatprep.subr.mxu0 0.0
      %1693 = vmatpush1.msra.mxu0 0.0
      %1694 = vmatprep.subr.mxu0 0.0
      %1695 = vmatpush1.msra.mxu0 0.0
      %1696 = vmatprep.subr.mxu0 0.0
      %1697 = vmatpush1.msra.mxu0 0.0
      %1698 = vmatprep.subr.mxu0 0.0
      %1699 = vmatpush1.msra.mxu0 0.0
      %1700 = vmatprep.subr.mxu0 0.0
      %1701 = vmatpush1.msra.mxu0 0.0
      %1702 = vmatprep.subr.mxu0 0.0
      %1703 = vmatpush1.msra.mxu0 0.0
      %1704 = vmatprep.subr.mxu0 0.0
      %1705 = vmatpush1.msra.mxu0 0.0
      %1706 = vmatprep.subr.mxu0 0.0
      %1707 = vmatpush1.msra.mxu0 0.0
      %1708 = vmatprep.subr.mxu0 0.0
      %1709 = vmatpush1.msra.mxu0 0.0
      %1710 = vmatprep.subr.mxu0 0.0
      %1711 = vmatpush1.msra.mxu0 0.0
      %1712 = vmatprep.subr.mxu0 0.0
      %1713 = vmatpush1.msra.mxu0 0.0
      %1714 = vmatprep.subr.mxu0 0.0
      %1715 = vmatpush1.msra.mxu0 0.0
      %1716 = vmatprep.subr.mxu0 0.0
      %1717 = vmatpush1.msra.mxu0 0.0
      %1718 = vmatprep.subr.mxu0 0.0
      %1719 = vmatpush1.msra.mxu0 0.0
      %1720 = vmatprep.subr.mxu0 0.0
      %1721 = vmatpush1.msra.mxu0 0.0
      %1722 = vmatprep.subr.mxu0 0.0
      %1723 = vmatpush1.msra.mxu0 0.0
      %1724 = vmatprep.subr.mxu0 0.0
      %1725 = vmatpush1.msra.mxu0 0.0
      %1726 = vmatprep.subr.mxu0 0.0
      %1727 = vmatpush1.msra.mxu0 0.0
      %1728 = vmatprep.subr.mxu0 0.0
      %1729 = vmatpush1.msra.mxu0 0.0
      %1730 = vmatprep.subr.mxu0 0.0
      %1731 = vmatpush1.msra.mxu0 0.0
      %1732 = vmatprep.subr.mxu0 0.0
      %1733 = vmatpush1.msra.mxu0 0.0
      %1734 = vmatprep.subr.mxu0 0.0
      %1735 = vmatpush1.msra.mxu0 0.0
      %1736 = vmatprep.subr.mxu0 0.0
      %1737 = vmatpush1.msra.mxu0 0.0
      %1738 = vmatprep.subr.mxu0 0.0
      %1739 = vmatpush1.msra.mxu0 0.0
      %1740 = vmatprep.subr.mxu0 0.0
      %1741 = vmatpush1.msra.mxu0 0.0
      %1742 = vmatprep.subr.mxu0 0.0
      %1743 = vmatpush1.msra.mxu0 0.0
      %1744 = vmatprep.subr.mxu0 0.0
      %1745 = vmatpush1.msra.mxu0 0.0
      %1746 = vmatprep.subr.mxu0 0.0
      %1747 = vmatpush1.msra.mxu0 0.0
      %1748 = vmatprep.mubr.f32.mxu0 0.0
      %1749 = vmatmul.mubr.f32.gmra.mrb[0].mxu0 %v1679
      %v1750 = vpop.f32.mrb[0].mxu0
      %v1751 = vadd.f32 %v1675, %v1750
      %v1752 = vpop.f32.mrb[0].mxu0
      %1753 = vmatprep.mubr.f32.mxu0 0.0
      %1754 = vmatmul.mubr.f32.gmra.mrb[0].mxu0 %v1682
      %v1755 = vpop.f32.mrb[0].mxu0
      %v1756 = vadd.f32 %v1675, %v1755
      %v1757 = vpop.f32.mrb[0].mxu0
      %1758 = vdwg.mxu0
      %v1759 = vld [vmem:[%s1128] sm:$0xff]
      %v1760 = vld [vmem:[%s1128 + $0x8] sm:$0xff]
      %v1761 = vld [vmem:[%s1128 + $0x10] sm:$0xff]
      %v1762 = vld [vmem:[%s1128 + $0x18] sm:$0xff]
      %v1763 = vld [vmem:[%s1131] sm:$0x1]
      %v1765 = vlaneseq
      %v1766 = vshrl.u32 %v1765, 7
      %v1767 = vsub.s32 0, %v1766
      %v1768 = vrot.slane %v1763, %v1767
      %1770 = vmatprep.subr.mxu0 0.0
      %1771 = vmatpush1.msra.mxu0 %v1759
      %1772 = vmatprep.subr.mxu0 0.0
      %1773 = vmatpush1.msra.mxu0 %v1760
      %1774 = vmatprep.subr.mxu0 0.0
      %1775 = vmatpush1.msra.mxu0 %v1761
      %1776 = vmatprep.subr.mxu0 0.0
      %1777 = vmatpush1.msra.mxu0 %v1762
      %1778 = vmatprep.subr.mxu0 0.0
      %1779 = vmatpush1.msra.mxu0 0.0
      %1780 = vmatprep.subr.mxu0 0.0
      %1781 = vmatpush1.msra.mxu0 0.0
      %1782 = vmatprep.subr.mxu0 0.0
      %1783 = vmatpush1.msra.mxu0 0.0
      %1784 = vmatprep.subr.mxu0 0.0
      %1785 = vmatpush1.msra.mxu0 0.0
      %1786 = vmatprep.subr.mxu0 0.0
      %1787 = vmatpush1.msra.mxu0 0.0
      %1788 = vmatprep.subr.mxu0 0.0
      %1789 = vmatpush1.msra.mxu0 0.0
      %1790 = vmatprep.subr.mxu0 0.0
      %1791 = vmatpush1.msra.mxu0 0.0
      %1792 = vmatprep.subr.mxu0 0.0
      %1793 = vmatpush1.msra.mxu0 0.0
      %1794 = vmatprep.subr.mxu0 0.0
      %1795 = vmatpush1.msra.mxu0 0.0
      %1796 = vmatprep.subr.mxu0 0.0
      %1797 = vmatpush1.msra.mxu0 0.0
      %1798 = vmatprep.subr.mxu0 0.0
      %1799 = vmatpush1.msra.mxu0 0.0
      %1800 = vmatprep.subr.mxu0 0.0
      %1801 = vmatpush1.msra.mxu0 0.0
      %1802 = vmatprep.subr.mxu0 0.0
      %1803 = vmatpush1.msra.mxu0 0.0
      %1804 = vmatprep.subr.mxu0 0.0
      %1805 = vmatpush1.msra.mxu0 0.0
      %1806 = vmatprep.subr.mxu0 0.0
      %1807 = vmatpush1.msra.mxu0 0.0
      %1808 = vmatprep.subr.mxu0 0.0
      %1809 = vmatpush1.msra.mxu0 0.0
      %1810 = vmatprep.subr.mxu0 0.0
      %1811 = vmatpush1.msra.mxu0 0.0
      %1812 = vmatprep.subr.mxu0 0.0
      %1813 = vmatpush1.msra.mxu0 0.0
      %1814 = vmatprep.subr.mxu0 0.0
      %1815 = vmatpush1.msra.mxu0 0.0
      %1816 = vmatprep.subr.mxu0 0.0
      %1817 = vmatpush1.msra.mxu0 0.0
      %1818 = vmatprep.subr.mxu0 0.0
      %1819 = vmatpush1.msra.mxu0 0.0
      %1820 = vmatprep.subr.mxu0 0.0
      %1821 = vmatpush1.msra.mxu0 0.0
      %1822 = vmatprep.subr.mxu0 0.0
      %1823 = vmatpush1.msra.mxu0 0.0
      %1824 = vmatprep.subr.mxu0 0.0
      %1825 = vmatpush1.msra.mxu0 0.0
      %1826 = vmatprep.subr.mxu0 0.0
      %1827 = vmatpush1.msra.mxu0 0.0
      %1828 = vmatprep.subr.mxu0 0.0
      %1829 = vmatpush1.msra.mxu0 0.0
      %1830 = vmatprep.subr.mxu0 0.0
      %1831 = vmatpush1.msra.mxu0 0.0
      %1832 = vmatprep.subr.mxu0 0.0
      %1833 = vmatpush1.msra.mxu0 0.0
      %1834 = vmatprep.mubr.f32.mxu0 0.0
      %1835 = vmatmul.mubr.f32.gmra.mrb[0].mxu0 %v1586
      %v1836 = vpop.f32.mrb[0].mxu0
      %v1837 = vadd.f32 %v1768, %v1836
      %v1838 = vpop.f32.mrb[0].mxu0
      %1839 = vmatprep.mubr.f32.mxu0 0.0
      %1840 = vmatmul.mubr.f32.gmra.mrb[0].mxu0 %v1589
      %v1841 = vpop.f32.mrb[0].mxu0
      %v1842 = vadd.f32 %v1768, %v1841
      %v1843 = vpop.f32.mrb[0].mxu0
      %1844 = vdwg.mxu0
      %v1845 = vadd.f32 %v1751, %v1837
      %v1846 = vadd.f32 %v1756, %v1842
      %v1847 = vld [vmem:[%s1075] sm:$0xff]
      %v1848 = vld [vmem:[%s1075 + $0x8] sm:$0xf]
      %vm1849 = vcmask 64512
      %v1851 = vsel %vm1849, %v1847, 0
      %v1854 = vsel %vm1849, %v1848, 0
      %1856 = vmatprep.subr.mxu0 0.0
      %1857 = vmatpush1.msra.mxu0 %v1573
      %1858 = vmatprep.subr.mxu0 0.0
      %1859 = vmatpush1.msra.mxu0 0.0
      %1860 = vmatprep.subr.mxu0 0.0
      %1861 = vmatpush1.msra.mxu0 0.0
      %1862 = vmatprep.subr.mxu0 0.0
      %1863 = vmatpush1.msra.mxu0 0.0
      %1864 = vmatprep.subr.mxu0 0.0
      %1865 = vmatpush1.msra.mxu0 0.0
      %1866 = vmatprep.subr.mxu0 0.0
      %1867 = vmatpush1.msra.mxu0 0.0
      %1868 = vmatprep.subr.mxu0 0.0
      %1869 = vmatpush1.msra.mxu0 0.0
      %1870 = vmatprep.subr.mxu0 0.0
      %1871 = vmatpush1.msra.mxu0 0.0
      %1872 = vmatprep.subr.mxu0 0.0
      %1873 = vmatpush1.msra.mxu0 0.0
      %1874 = vmatprep.subr.mxu0 0.0
      %1875 = vmatpush1.msra.mxu0 0.0
      %1876 = vmatprep.subr.mxu0 0.0
      %1877 = vmatpush1.msra.mxu0 0.0
      %1878 = vmatprep.subr.mxu0 0.0
      %1879 = vmatpush1.msra.mxu0 0.0
      %1880 = vmatprep.subr.mxu0 0.0
      %1881 = vmatpush1.msra.mxu0 0.0
      %1882 = vmatprep.subr.mxu0 0.0
      %1883 = vmatpush1.msra.mxu0 0.0
      %1884 = vmatprep.subr.mxu0 0.0
      %1885 = vmatpush1.msra.mxu0 0.0
      %1886 = vmatprep.subr.mxu0 0.0
      %1887 = vmatpush1.msra.mxu0 0.0
      %1888 = vmatprep.subr.mxu0 0.0
      %1889 = vmatpush1.msra.mxu0 0.0
      %1890 = vmatprep.subr.mxu0 0.0
      %1891 = vmatpush1.msra.mxu0 0.0
      %1892 = vmatprep.subr.mxu0 0.0
      %1893 = vmatpush1.msra.mxu0 0.0
      %1894 = vmatprep.subr.mxu0 0.0
      %1895 = vmatpush1.msra.mxu0 0.0
      %1896 = vmatprep.subr.mxu0 0.0
      %1897 = vmatpush1.msra.mxu0 0.0
      %1898 = vmatprep.subr.mxu0 0.0
      %1899 = vmatpush1.msra.mxu0 0.0
      %1900 = vmatprep.subr.mxu0 0.0
      %1901 = vmatpush1.msra.mxu0 0.0
      %1902 = vmatprep.subr.mxu0 0.0
      %1903 = vmatpush1.msra.mxu0 0.0
      %1904 = vmatprep.subr.mxu0 0.0
      %1905 = vmatpush1.msra.mxu0 0.0
      %1906 = vmatprep.subr.mxu0 0.0
      %1907 = vmatpush1.msra.mxu0 0.0
      %1908 = vmatprep.subr.mxu0 0.0
      %1909 = vmatpush1.msra.mxu0 0.0
      %1910 = vmatprep.subr.mxu0 0.0
      %1911 = vmatpush1.msra.mxu0 0.0
      %1912 = vmatprep.subr.mxu0 0.0
      %1913 = vmatpush1.msra.mxu0 0.0
      %1914 = vmatprep.subr.mxu0 0.0
      %1915 = vmatpush1.msra.mxu0 0.0
      %1916 = vmatprep.subr.mxu0 0.0
      %1917 = vmatpush1.msra.mxu0 0.0
      %1918 = vmatprep.subr.mxu0 0.0
      %1919 = vmatpush1.msra.mxu0 0.0
      %1920 = vmatprep.mubr.f32.mxu0 0.0
      %1921 = vmatmul.mubr.f32.gmra.mrb[0].mxu0 %v1851
      %v1922 = vpop.f32.mrb[0].mxu0
      %v1923 = vadd.f32 0.0, %v1922
      %v1924 = vpop.f32.mrb[0].mxu0
      %1925 = vmatprep.mubr.f32.mxu0 0.0
      %1926 = vmatmul.mubr.f32.gmra.mrb[0].mxu0 %v1854
      %v1927 = vpop.f32.mrb[0].mxu0
      %v1928 = vadd.f32 0.0, %v1927
      %v1929 = vpop.f32.mrb[0].mxu0
      %1930 = vdwg.mxu0
      %v1931 = vld [vmem:[%s1136] sm:$0xff]
      %v1932 = vld [vmem:[%s1136 + $0x8] sm:$0xff]
      %v1933 = vld [vmem:[%s1141] sm:$0xff]
      %v1934 = vld [vmem:[%s1141 + $0x8] sm:$0xff]
      %v1936 = vsel %vm1677, %v1845, 0
      %v1939 = vsel %vm1677, %v1846, 0
      %1941 = vmatprep.subr.mxu0 0.0
      %1942 = vmatpush1.msra.mxu0 %v1933
      %1943 = vmatprep.subr.mxu0 0.0
      %1944 = vmatpush1.msra.mxu0 %v1934
      %1945 = vmatprep.subr.mxu0 0.0
      %1946 = vmatpush1.msra.mxu0 0.0
      %1947 = vmatprep.subr.mxu0 0.0
      %1948 = vmatpush1.msra.mxu0 0.0
      %1949 = vmatprep.subr.mxu0 0.0
      %1950 = vmatpush1.msra.mxu0 0.0
      %1951 = vmatprep.subr.mxu0 0.0
      %1952 = vmatpush1.msra.mxu0 0.0
      %1953 = vmatprep.subr.mxu0 0.0
      %1954 = vmatpush1.msra.mxu0 0.0
      %1955 = vmatprep.subr.mxu0 0.0
      %1956 = vmatpush1.msra.mxu0 0.0
      %1957 = vmatprep.subr.mxu0 0.0
      %1958 = vmatpush1.msra.mxu0 0.0
      %1959 = vmatprep.subr.mxu0 0.0
      %1960 = vmatpush1.msra.mxu0 0.0
      %1961 = vmatprep.subr.mxu0 0.0
      %1962 = vmatpush1.msra.mxu0 0.0
      %1963 = vmatprep.subr.mxu0 0.0
      %1964 = vmatpush1.msra.mxu0 0.0
      %1965 = vmatprep.subr.mxu0 0.0
      %1966 = vmatpush1.msra.mxu0 0.0
      %1967 = vmatprep.subr.mxu0 0.0
      %1968 = vmatpush1.msra.mxu0 0.0
      %1969 = vmatprep.subr.mxu0 0.0
      %1970 = vmatpush1.msra.mxu0 0.0
      %1971 = vmatprep.subr.mxu0 0.0
      %1972 = vmatpush1.msra.mxu0 0.0
      %1973 = vmatprep.subr.mxu0 0.0
      %1974 = vmatpush1.msra.mxu0 0.0
      %1975 = vmatprep.subr.mxu0 0.0
      %1976 = vmatpush1.msra.mxu0 0.0
      %1977 = vmatprep.subr.mxu0 0.0
      %1978 = vmatpush1.msra.mxu0 0.0
      %1979 = vmatprep.subr.mxu0 0.0
      %1980 = vmatpush1.msra.mxu0 0.0
      %1981 = vmatprep.subr.mxu0 0.0
      %1982 = vmatpush1.msra.mxu0 0.0
      %1983 = vmatprep.subr.mxu0 0.0
      %1984 = vmatpush1.msra.mxu0 0.0
      %1985 = vmatprep.subr.mxu0 0.0
      %1986 = vmatpush1.msra.mxu0 0.0
      %1987 = vmatprep.subr.mxu0 0.0
      %1988 = vmatpush1.msra.mxu0 0.0
      %1989 = vmatprep.subr.mxu0 0.0
      %1990 = vmatpush1.msra.mxu0 0.0
      %1991 = vmatprep.subr.mxu0 0.0
      %1992 = vmatpush1.msra.mxu0 0.0
      %1993 = vmatprep.subr.mxu0 0.0
      %1994 = vmatpush1.msra.mxu0 0.0
      %1995 = vmatprep.subr.mxu0 0.0
      %1996 = vmatpush1.msra.mxu0 0.0
      %1997 = vmatprep.subr.mxu0 0.0
      %1998 = vmatpush1.msra.mxu0 0.0
      %1999 = vmatprep.subr.mxu0 0.0
      %2000 = vmatpush1.msra.mxu0 0.0
      %2001 = vmatprep.subr.mxu0 0.0
      %2002 = vmatpush1.msra.mxu0 0.0
      %2003 = vmatprep.subr.mxu0 0.0
      %2004 = vmatpush1.msra.mxu0 0.0
      %2005 = vmatprep.mubr.f32.mxu0 0.0
      %2006 = vmatmul.mubr.f32.gmra.mrb[0].mxu0 %v1936
      %v2007 = vpop.f32.mrb[0].mxu0
      %v2008 = vadd.f32 0.0, %v2007
      %v2009 = vpop.f32.mrb[0].mxu0
      %2010 = vmatprep.mubr.f32.mxu0 0.0
      %2011 = vmatmul.mubr.f32.gmra.mrb[0].mxu0 %v1939
      %v2012 = vpop.f32.mrb[0].mxu0
      %v2013 = vadd.f32 0.0, %v2012
      %v2014 = vpop.f32.mrb[0].mxu0
      %2015 = vdwg.mxu0
      %v2017 = vsel %vm1677, %v1923, 0
      %v2020 = vsel %vm1677, %v1928, 0
      %2022 = vmatprep.subr.mxu0 0.0
      %2023 = vmatpush1.msra.mxu0 %v1931
      %2024 = vmatprep.subr.mxu0 0.0
      %2025 = vmatpush1.msra.mxu0 %v1932
      %2026 = vmatprep.subr.mxu0 0.0
      %2027 = vmatpush1.msra.mxu0 0.0
      %2028 = vmatprep.subr.mxu0 0.0
      %2029 = vmatpush1.msra.mxu0 0.0
      %2030 = vmatprep.subr.mxu0 0.0
      %2031 = vmatpush1.msra.mxu0 0.0
      %2032 = vmatprep.subr.mxu0 0.0
      %2033 = vmatpush1.msra.mxu0 0.0
      %2034 = vmatprep.subr.mxu0 0.0
      %2035 = vmatpush1.msra.mxu0 0.0
      %2036 = vmatprep.subr.mxu0 0.0
      %2037 = vmatpush1.msra.mxu0 0.0
      %2038 = vmatprep.subr.mxu0 0.0
      %2039 = vmatpush1.msra.mxu0 0.0
      %2040 = vmatprep.subr.mxu0 0.0
      %2041 = vmatpush1.msra.mxu0 0.0
      %2042 = vmatprep.subr.mxu0 0.0
      %2043 = vmatpush1.msra.mxu0 0.0
      %2044 = vmatprep.subr.mxu0 0.0
      %2045 = vmatpush1.msra.mxu0 0.0
      %2046 = vmatprep.subr.mxu0 0.0
      %2047 = vmatpush1.msra.mxu0 0.0
      %2048 = vmatprep.subr.mxu0 0.0
      %2049 = vmatpush1.msra.mxu0 0.0
      %2050 = vmatprep.subr.mxu0 0.0
      %2051 = vmatpush1.msra.mxu0 0.0
      %2052 = vmatprep.subr.mxu0 0.0
      %2053 = vmatpush1.msra.mxu0 0.0
      %2054 = vmatprep.subr.mxu0 0.0
      %2055 = vmatpush1.msra.mxu0 0.0
      %2056 = vmatprep.subr.mxu0 0.0
      %2057 = vmatpush1.msra.mxu0 0.0
      %2058 = vmatprep.subr.mxu0 0.0
      %2059 = vmatpush1.msra.mxu0 0.0
      %2060 = vmatprep.subr.mxu0 0.0
      %2061 = vmatpush1.msra.mxu0 0.0
      %2062 = vmatprep.subr.mxu0 0.0
      %2063 = vmatpush1.msra.mxu0 0.0
      %2064 = vmatprep.subr.mxu0 0.0
      %2065 = vmatpush1.msra.mxu0 0.0
      %2066 = vmatprep.subr.mxu0 0.0
      %2067 = vmatpush1.msra.mxu0 0.0
      %2068 = vmatprep.subr.mxu0 0.0
      %2069 = vmatpush1.msra.mxu0 0.0
      %2070 = vmatprep.subr.mxu0 0.0
      %2071 = vmatpush1.msra.mxu0 0.0
      %2072 = vmatprep.subr.mxu0 0.0
      %2073 = vmatpush1.msra.mxu0 0.0
      %2074 = vmatprep.subr.mxu0 0.0
      %2075 = vmatpush1.msra.mxu0 0.0
      %2076 = vmatprep.subr.mxu0 0.0
      %2077 = vmatpush1.msra.mxu0 0.0
      %2078 = vmatprep.subr.mxu0 0.0
      %2079 = vmatpush1.msra.mxu0 0.0
      %2080 = vmatprep.subr.mxu0 0.0
      %2081 = vmatpush1.msra.mxu0 0.0
      %2082 = vmatprep.subr.mxu0 0.0
      %2083 = vmatpush1.msra.mxu0 0.0
      %2084 = vmatprep.subr.mxu0 0.0
      %2085 = vmatpush1.msra.mxu0 0.0
      %2086 = vmatprep.mubr.f32.mxu0 0.0
      %2087 = vmatmul.mubr.f32.gmra.mrb[0].mxu0 %v2017
      %v2088 = vpop.f32.mrb[0].mxu0
      %v2089 = vadd.f32 %v2008, %v2088
      %v2090 = vpop.f32.mrb[0].mxu0
      %2091 = vmatprep.mubr.f32.mxu0 0.0
      %2092 = vmatmul.mubr.f32.gmra.mrb[0].mxu0 %v2020
      %v2093 = vpop.f32.mrb[0].mxu0
      %v2094 = vadd.f32 %v2013, %v2093
      %v2095 = vpop.f32.mrb[0].mxu0
      %2096 = vdwg.mxu0
      %v2097 = vld [vmem:[%s1146] sm:$0xff]
      %v2098 = vld [vmem:[%s1146 + $0x8] sm:$0xff]
      %v2100 = vsel %vm1677, %v1837, 0
      %v2103 = vsel %vm1677, %v1842, 0
      %2105 = vmatprep.subr.mxu0 0.0
      %2106 = vmatpush1.msra.mxu0 %v2097
      %2107 = vmatprep.subr.mxu0 0.0
      %2108 = vmatpush1.msra.mxu0 %v2098
      %2109 = vmatprep.subr.mxu0 0.0
      %2110 = vmatpush1.msra.mxu0 0.0
      %2111 = vmatprep.subr.mxu0 0.0
      %2112 = vmatpush1.msra.mxu0 0.0
      %2113 = vmatprep.subr.mxu0 0.0
      %2114 = vmatpush1.msra.mxu0 0.0
      %2115 = vmatprep.subr.mxu0 0.0
      %2116 = vmatpush1.msra.mxu0 0.0
      %2117 = vmatprep.subr.mxu0 0.0
      %2118 = vmatpush1.msra.mxu0 0.0
      %2119 = vmatprep.subr.mxu0 0.0
      %2120 = vmatpush1.msra.mxu0 0.0
      %2121 = vmatprep.subr.mxu0 0.0
      %2122 = vmatpush1.msra.mxu0 0.0
      %2123 = vmatprep.subr.mxu0 0.0
      %2124 = vmatpush1.msra.mxu0 0.0
      %2125 = vmatprep.subr.mxu0 0.0
      %2126 = vmatpush1.msra.mxu0 0.0
      %2127 = vmatprep.subr.mxu0 0.0
      %2128 = vmatpush1.msra.mxu0 0.0
      %2129 = vmatprep.subr.mxu0 0.0
      %2130 = vmatpush1.msra.mxu0 0.0
      %2131 = vmatprep.subr.mxu0 0.0
      %2132 = vmatpush1.msra.mxu0 0.0
      %2133 = vmatprep.subr.mxu0 0.0
      %2134 = vmatpush1.msra.mxu0 0.0
      %2135 = vmatprep.subr.mxu0 0.0
      %2136 = vmatpush1.msra.mxu0 0.0
      %2137 = vmatprep.subr.mxu0 0.0
      %2138 = vmatpush1.msra.mxu0 0.0
      %2139 = vmatprep.subr.mxu0 0.0
      %2140 = vmatpush1.msra.mxu0 0.0
      %2141 = vmatprep.subr.mxu0 0.0
      %2142 = vmatpush1.msra.mxu0 0.0
      %2143 = vmatprep.subr.mxu0 0.0
      %2144 = vmatpush1.msra.mxu0 0.0
      %2145 = vmatprep.subr.mxu0 0.0
      %2146 = vmatpush1.msra.mxu0 0.0
      %2147 = vmatprep.subr.mxu0 0.0
      %2148 = vmatpush1.msra.mxu0 0.0
      %2149 = vmatprep.subr.mxu0 0.0
      %2150 = vmatpush1.msra.mxu0 0.0
      %2151 = vmatprep.subr.mxu0 0.0
      %2152 = vmatpush1.msra.mxu0 0.0
      %2153 = vmatprep.subr.mxu0 0.0
      %2154 = vmatpush1.msra.mxu0 0.0
      %2155 = vmatprep.subr.mxu0 0.0
      %2156 = vmatpush1.msra.mxu0 0.0
      %2157 = vmatprep.subr.mxu0 0.0
      %2158 = vmatpush1.msra.mxu0 0.0
      %2159 = vmatprep.subr.mxu0 0.0
      %2160 = vmatpush1.msra.mxu0 0.0
      %2161 = vmatprep.subr.mxu0 0.0
      %2162 = vmatpush1.msra.mxu0 0.0
      %2163 = vmatprep.subr.mxu0 0.0
      %2164 = vmatpush1.msra.mxu0 0.0
      %2165 = vmatprep.subr.mxu0 0.0
      %2166 = vmatpush1.msra.mxu0 0.0
      %2167 = vmatprep.subr.mxu0 0.0
      %2168 = vmatpush1.msra.mxu0 0.0
      %2169 = vmatprep.mubr.f32.mxu0 0.0
      %2170 = vmatmul.mubr.f32.gmra.mrb[0].mxu0 %v2100
      %v2171 = vpop.f32.mrb[0].mxu0
      %v2172 = vadd.f32 0.0, %v2171
      %v2173 = vpop.f32.mrb[0].mxu0
      %2174 = vmatprep.mubr.f32.mxu0 0.0
      %2175 = vmatmul.mubr.f32.gmra.mrb[0].mxu0 %v2103
      %v2176 = vpop.f32.mrb[0].mxu0
      %v2177 = vadd.f32 0.0, %v2176
      %v2178 = vpop.f32.mrb[0].mxu0
      %2179 = vdwg.mxu0
      %v2180 = vadd.f32 %v2089, %v2172
      %v2181 = vadd.f32 %v2094, %v2177
      %v2182 = vld [vmem:[%s1149] sm:$0x1]
      %v2184 = vlaneseq
      %v2185 = vshrl.u32 %v2184, 7
      %v2186 = vsub.s32 0, %v2185
      %v2187 = vrot.slane %v2182, %v2186
      %v2189 = vadd.f32 %v2180, %v2187
      %v2190 = vadd.f32 %v2181, %v2187
      %v2191 = vxor.u32 %v2189, 2147483648
      %v2192 = vxor.u32 %v2190, 2147483648
      %v2193 = vmul.f32 %v2191, 1.442695
      %v2194 = vpow.pop %v2193
      %v2195 = vmul.f32 %v2192, 1.442695
      %v2196 = vpow.pop %v2195
      %v2197 = vadd.f32 %v2194, 1.0
      %v2198 = vadd.f32 %v2196, 1.0
      %v2199 = vrcp.pop %v2197
      %v2200 = vmul.f32 1.0, %v2199
      %v2201 = vrcp.pop %v2198
      %v2202 = vmul.f32 1.0, %v2201
      %v2203 = vmul.f32 %v2200, %v1845
      %v2204 = vmul.f32 %v2202, %v1846
      %v2205 = vld [vmem:[%s1083] sm:$0xff]
      %v2207 = vsel %vm1252, %v2205, 0
      %v2210 = vsel %vm1256, %v2204, 0
      %2212 = vmatprep.subr.mxu0 0.0
      %2213 = vmatpush1.msra.mxu0 %v2203
      %2214 = vmatprep.subr.mxu0 0.0
      %2215 = vmatpush1.msra.mxu0 %v2210
      %2216 = vmatprep.subr.mxu0 0.0
      %2217 = vmatpush1.msra.mxu0 0.0
      %2218 = vmatprep.subr.mxu0 0.0
      %2219 = vmatpush1.msra.mxu0 0.0
      %2220 = vmatprep.subr.mxu0 0.0
      %2221 = vmatpush1.msra.mxu0 0.0
      %2222 = vmatprep.subr.mxu0 0.0
      %2223 = vmatpush1.msra.mxu0 0.0
      %2224 = vmatprep.subr.mxu0 0.0
      %2225 = vmatpush1.msra.mxu0 0.0
      %2226 = vmatprep.subr.mxu0 0.0
      %2227 = vmatpush1.msra.mxu0 0.0
      %2228 = vmatprep.subr.mxu0 0.0
      %2229 = vmatpush1.msra.mxu0 0.0
      %2230 = vmatprep.subr.mxu0 0.0
      %2231 = vmatpush1.msra.mxu0 0.0
      %2232 = vmatprep.subr.mxu0 0.0
      %2233 = vmatpush1.msra.mxu0 0.0
      %2234 = vmatprep.subr.mxu0 0.0
      %2235 = vmatpush1.msra.mxu0 0.0
      %2236 = vmatprep.subr.mxu0 0.0
      %2237 = vmatpush1.msra.mxu0 0.0
      %2238 = vmatprep.subr.mxu0 0.0
      %2239 = vmatpush1.msra.mxu0 0.0
      %2240 = vmatprep.subr.mxu0 0.0
      %2241 = vmatpush1.msra.mxu0 0.0
      %2242 = vmatprep.subr.mxu0 0.0
      %2243 = vmatpush1.msra.mxu0 0.0
      %2244 = vmatprep.subr.mxu0 0.0
      %2245 = vmatpush1.msra.mxu0 0.0
      %2246 = vmatprep.subr.mxu0 0.0
      %2247 = vmatpush1.msra.mxu0 0.0
      %2248 = vmatprep.subr.mxu0 0.0
      %2249 = vmatpush1.msra.mxu0 0.0
      %2250 = vmatprep.subr.mxu0 0.0
      %2251 = vmatpush1.msra.mxu0 0.0
      %2252 = vmatprep.subr.mxu0 0.0
      %2253 = vmatpush1.msra.mxu0 0.0
      %2254 = vmatprep.subr.mxu0 0.0
      %2255 = vmatpush1.msra.mxu0 0.0
      %2256 = vmatprep.subr.mxu0 0.0
      %2257 = vmatpush1.msra.mxu0 0.0
      %2258 = vmatprep.subr.mxu0 0.0
      %2259 = vmatpush1.msra.mxu0 0.0
      %2260 = vmatprep.subr.mxu0 0.0
      %2261 = vmatpush1.msra.mxu0 0.0
      %2262 = vmatprep.subr.mxu0 0.0
      %2263 = vmatpush1.msra.mxu0 0.0
      %2264 = vmatprep.subr.mxu0 0.0
      %2265 = vmatpush1.msra.mxu0 0.0
      %2266 = vmatprep.subr.mxu0 0.0
      %2267 = vmatpush1.msra.mxu0 0.0
      %2268 = vmatprep.subr.mxu0 0.0
      %2269 = vmatpush1.msra.mxu0 0.0
      %2270 = vmatprep.subr.mxu0 0.0
      %2271 = vmatpush1.msra.mxu0 0.0
      %2272 = vmatprep.subr.mxu0 0.0
      %2273 = vmatpush1.msra.mxu0 0.0
      %2274 = vmatprep.subr.mxu0 0.0
      %2275 = vmatpush1.msra.mxu0 0.0
      %2276 = vmatprep.mubr.f32.mxu0 0.0
      %2277 = vmatmul.mubr.f32.gmra.mrb[0].mxu0 %v2207
      %v2278 = vpop.f32.mrb[0].mxu0
      %v2279 = vadd.f32 0.0, %v2278
      %v2280 = vpop.f32.mrb[0].mxu0
      %2281 = vdwg.mxu0
      %v2282 = vadd.f32 %v1573, %v2279
      %2284 = vset.pattern.permute.xlu0 0
      %2285 = vperm.xlu0 %2284, %v1165
      %v2286 = vpop.permute.xlu0 %2285
      %v2288 = vmul.f32 %v2282, %v2286
      %v2289 = vsel %vm1677, %v2288, 0.0
      %v2290 = vrot.slane %v2289, 4
      %v2291 = vadd.f32 %v2289, %v2290
      %v2292 = vrot.slane %v2291, 2
      %v2293 = vadd.f32 %v2291, %v2292
      %v2294 = vrot.slane %v2293, 1
      %v2295 = vadd.f32 %v2293, %v2294
      %2297 = vset.pattern.permute.xlu0 0
      %2298 = vperm.xlu0 %2297, %v1166
      %v2299 = vpop.permute.xlu0 %2298
      %v2301 = vlaneseq
      %v2302 = vshrl.u32 %v2301, 7
      %v2303 = vsub.s32 0, %v2302
      %v2304 = vrot.slane %v2299, %v2303
      %v2305 = vmul.f32 %v2295, %v2304
      %v2306 = vsub.f32 %v2282, %v2305
      %v2307 = vmul.f32 %v2306, %v2286
      %v2308 = vmul.f32 %v2307, %v2307
      %v2309 = vsel %vm1677, %v2308, 0.0
      %v2310 = vrot.slane %v2309, 4
      %v2311 = vadd.f32 %v2309, %v2310
      %v2312 = vrot.slane %v2311, 2
      %v2313 = vadd.f32 %v2311, %v2312
      %v2314 = vrot.slane %v2313, 1
      %v2315 = vadd.f32 %v2313, %v2314
      %v2316 = vmul.f32 %v2315, %v2304
      %v2317 = vadd.f32 %v2316, 1e-05
      %v2318 = vrsqrt.pop %v2317
      %v2319 = vmul.f32 %v2306, %v2318
      %v2320 = vld [vmem:[%s1152] sm:$0x1]
      %v2322 = vlaneseq
      %v2323 = vshrl.u32 %v2322, 7
      %v2324 = vsub.s32 0, %v2323
      %v2325 = vrot.slane %v2320, %v2324
      %v2327 = vmul.f32 %v2319, %v2325
      %v2328 = vld [vmem:[%s1155] sm:$0x1]
      %v2330 = vlaneseq
      %v2331 = vshrl.u32 %v2330, 7
      %v2332 = vsub.s32 0, %v2331
      %v2333 = vrot.slane %v2328, %v2332
      %v2335 = vadd.f32 %v2327, %v2333
      %v2336 = vadd.f32 %v2335, %v2335
      %v2337 = vmax.f32 %v2336, 0.0
      %v2338 = vmul.f32 %v2337, %v2286
      %2339 = vst.msk [vmem:[%s1159] sm:$0xff] %vm1677, %v2338
      %p2340 = scmp.lt.s32.totalorder %s36, 6
      %s2341 = scalar_select %p2340, %s36, 6
      %s2342 = smul.addr %s2341, 8
      %s2343 = scalar_lea.vmem %s25, %s2342
      // Predicated region
      $region121: #{gnn_forward.9} parent=119 // pred_check
        %p2344 = pneg %p699
      $region122: #{gnn_forward.9} parent=119 // pred_check_branch
        %2346 = sbr.rel (%p2344) target = $region124
      $region123: #{gnn_forward.9} parent=119 // pred_region
        _
      $region124: #{gnn_forward.9} parent=119 // pred_fallthru
        _
    $region120: #{gnn_forward.9} parent=5 // pred_fallthru
      _
    %p2347 = scmp.le.s32.totalorder 2, %s31
    // Predicated region
    $region125: #{gnn_forward.9} parent=5 // pred_check
      %p2348 = pneg %p2347
    $region126: #{gnn_forward.9} parent=5 // pred_check_branch
      %2350 = sbr.rel (%p2348) target = $region128
    $region127: #{gnn_forward.9} parent=5 // pred_region
      %s2351 = ssub.s32 %s31, 2
      // Predicated region
      $region129: #{gnn_forward.9} parent=127 // pred_check
        %p2352 = pneg %p705
      $region130: #{gnn_forward.9} parent=127 // pred_check_branch
        %2354 = sbr.rel (%p2352) target = $region132
      $region131: #{gnn_forward.9} parent=127 // pred_region
        %p2355 = scmp.lt.s32.totalorder %s37, 6
        %s2356 = scalar_select %p2355, %s37, 6
        %s2357 = smul.addr %s2356, 8
        %s2358 = scalar_lea.vmem %s25, %s2357
      $region132: #{gnn_forward.9} parent=127 // pred_fallthru
        _
    $region128: #{gnn_forward.9} parent=5 // pred_fallthru
      _
  $region6: #{gnn_forward.9} parent=0 // loop_footer
    %s35 = sadd.s32 1, %s31
  $region7: #{gnn_forward.9} parent=0 // loop_footer_branch
    %30 = sbr.rel target = $region3
  $region8: #{gnn_forward.9} parent=0 // loop_exit
    _

// kernel: gnn_forward.11
$region0: #{gnn_forward.11}
  #allocation0 [shape = 'u32[]', space=smem, size = 0x4, offset = 0x4, fixed_abs, tag = 'smem constant byte address 0x4 - core index']
  #allocation1 [shape = 'u32[144,128]{1,0:T(1,128)}', space=vmem, size = 0x12000, scoped, tag = 'internal scratch']
  %s0 = inlined_call_operand.vmem [shape: f32[24,16], index: 0, kind: input, shape index: {}]
  %s1 = inlined_call_operand.vmem [shape: f32[7,12,32], index: 1, kind: input, shape index: {}]
  %s2 = inlined_call_operand.vmem [shape: f32[7,12,24], index: 2, kind: input, shape index: {}]
  %s3 = inlined_call_operand.vmem [shape: f32[7,8,24], index: 3, kind: input, shape index: {}]
  %s4 = inlined_call_operand.vmem [shape: f32[7,12,8], index: 4, kind: input, shape index: {}]
  %s5 = inlined_call_operand.vmem [shape: f32[7,8,12], index: 5, kind: input, shape index: {}]
  %s6 = inlined_call_operand.vmem [shape: f32[7,8,12], index: 6, kind: input, shape index: {}]
  %s7 = inlined_call_operand.vmem [shape: f32[7,8,1], index: 7, kind: input, shape index: {}]
  %s8 = inlined_call_operand.vmem [shape: f32[7,8,1], index: 8, kind: input, shape index: {}]
  %s9 = inlined_call_operand.vmem [shape: f32[7,1,1], index: 9, kind: input, shape index: {}]
  %s10 = inlined_call_operand.vmem [shape: f32[7,16,16], index: 10, kind: input, shape index: {}]
  %s11 = inlined_call_operand.vmem [shape: f32[7,1,16], index: 11, kind: input, shape index: {}]
  %s12 = inlined_call_operand.vmem [shape: f32[7,16,16], index: 12, kind: input, shape index: {}]
  %s13 = inlined_call_operand.vmem [shape: f32[7,32,16], index: 13, kind: input, shape index: {}]
  %s14 = inlined_call_operand.vmem [shape: f32[7,1,16], index: 14, kind: input, shape index: {}]
  %s15 = inlined_call_operand.vmem [shape: f32[7,16,16], index: 15, kind: input, shape index: {}]
  %s16 = inlined_call_operand.vmem [shape: f32[7,1,16], index: 16, kind: input, shape index: {}]
  %s17 = inlined_call_operand.vmem [shape: f32[7,32,16], index: 17, kind: input, shape index: {}]
  %s18 = inlined_call_operand.vmem [shape: f32[7,1,16], index: 18, kind: input, shape index: {}]
  %s19 = inlined_call_operand.vmem [shape: f32[7,16,16], index: 19, kind: input, shape index: {}]
  %s20 = inlined_call_operand.vmem [shape: f32[7,16,16], index: 20, kind: input, shape index: {}]
  %s21 = inlined_call_operand.vmem [shape: f32[7,16,16], index: 21, kind: input, shape index: {}]
  %s22 = inlined_call_operand.vmem [shape: f32[7,1,16], index: 22, kind: input, shape index: {}]
  %s23 = inlined_call_operand.vmem [shape: f32[7,1,16], index: 23, kind: input, shape index: {}]
  %s24 = inlined_call_operand.vmem [shape: f32[7,1,16], index: 24, kind: input, shape index: {}]
  %s25 = inlined_call_operand.vmem [shape: f32[7,8,16], index: 25, kind: output, shape index: {}]
  %s26 = sld [smem:[#allocation0]]
  $region133: #{gnn_forward.11} parent=0
    _
  %s28 = ssub.s32 1, %s26
  %s29 = scalar_select 0, %s28, %s26
  loop: start=0, step=1, limit=9
  $region2: #{gnn_forward.11} parent=0 // loop_pre_header
    _
  $region3: #{gnn_forward.11} parent=0 // loop_header
    %s31 = sphi 0, %s35
    %p32 = scmp.ge.s32.totalorder %s31, 9
    %s39 = sphi 0, %s39
    %s41 = sphi 0, %s39
    %s42 = sphi 0, %s41
    %s56 = sphi 0, %s42
    %s62 = sphi 0, %s64
    %s65 = sphi 0, %s62
    %s66 = sphi 0, %s65
    %s82 = sphi 0, %s66
    %s88 = sphi 0, %s90
    %s91 = sphi 0, %s88
    %s92 = sphi 0, %s91
    %s108 = sphi 0, %s92
    %s114 = sphi 0, %s116
    %s117 = sphi 0, %s114
    %s118 = sphi 0, %s117
    %s134 = sphi 0, %s118
    %s140 = sphi 0, %s142
    %s143 = sphi 0, %s140
    %s144 = sphi 0, %s143
    %s160 = sphi 0, %s144
    %s166 = sphi 0, %s168
    %s169 = sphi 0, %s166
    %s170 = sphi 0, %s169
    %s186 = sphi 0, %s170
    %s192 = sphi 0, %s194
    %s195 = sphi 0, %s192
    %s196 = sphi 0, %s195
    %s212 = sphi 0, %s196
    %s218 = sphi 0, %s220
    %s221 = sphi 0, %s218
    %s222 = sphi 0, %s221
    %s238 = sphi 0, %s222
    %s244 = sphi 0, %s246
    %s247 = sphi 0, %s244
    %s248 = sphi 0, %s247
    %s264 = sphi 0, %s248
    %s270 = sphi 0, %s272
    %s273 = sphi 0, %s270
    %s274 = sphi 0, %s273
    %s290 = sphi 0, %s274
    %s296 = sphi 0, %s298
    %s299 = sphi 0, %s296
    %s300 = sphi 0, %s299
    %s316 = sphi 0, %s300
    %s322 = sphi 0, %s324
    %s325 = sphi 0, %s322
    %s326 = sphi 0, %s325
    %s342 = sphi 0, %s326
    %s348 = sphi 0, %s350
    %s351 = sphi 0, %s348
    %s352 = sphi 0, %s351
    %s368 = sphi 0, %s352
    %s374 = sphi 0, %s376
    %s377 = sphi 0, %s374
    %s378 = sphi 0, %s377
    %s394 = sphi 0, %s378
    %s400 = sphi 0, %s402
    %s403 = sphi 0, %s400
    %s404 = sphi 0, %s403
    %s420 = sphi 0, %s404
    %s426 = sphi 0, %s428
    %s429 = sphi 0, %s426
    %s430 = sphi 0, %s429
    %s446 = sphi 0, %s430
    %s452 = sphi 0, %s454
    %s455 = sphi 0, %s452
    %s456 = sphi 0, %s455
    %s472 = sphi 0, %s456
    %s478 = sphi 0, %s480
    %s481 = sphi 0, %s478
    %s482 = sphi 0, %s481
    %s498 = sphi 0, %s482
    %s504 = sphi 0, %s506
    %s507 = sphi 0, %s504
    %s508 = sphi 0, %s507
    %s524 = sphi 0, %s508
    %s530 = sphi 0, %s532
    %s533 = sphi 0, %s530
    %s534 = sphi 0, %s533
    %s550 = sphi 0, %s534
    %s556 = sphi 0, %s558
    %s559 = sphi 0, %s556
    %s560 = sphi 0, %s559
    %s576 = sphi 0, %s560
    %s582 = sphi 0, %s584
    %s585 = sphi 0, %s582
    %s586 = sphi 0, %s585
    %s602 = sphi 0, %s586
    %s608 = sphi 0, %s610
    %s611 = sphi 0, %s608
    %s612 = sphi 0, %s611
    %s628 = sphi 0, %s612
    %s634 = sphi 0, %s636
    %s637 = sphi 0, %s634
    %s638 = sphi 0, %s637
    %s654 = sphi 0, %s638
    %s660 = sphi 0, %s662
    %s663 = sphi 0, %s660
    %s664 = sphi 0, %s663
    %s680 = sphi 0, %s664
    %s686 = sphi 0, %s688
    %s689 = sphi 0, %s686
    %s690 = sphi 0, %s689
    %s706 = sphi 0, %s690
  $region4: #{gnn_forward.11} parent=0 // loop_header_branch
    %34 = sbr.rel (%p32) target = $region8
  $region5: #{gnn_forward.11} parent=0 // loop_body
    %s36 = ssub.s32 %s31, 1
    %s37 = ssub.s32 %s31, 2
    %s38 = sadd.s32 %s31, 1
    %s40 = sadd.s32 %s39, 1
    %p43 = scmp.eq.s32.totalorder %s31, 6
    %p44 = scmp.ne.s32.totalorder %s39, %s41
    %p45 = scmp.eq.s32.totalorder %s31, 0
    %p46 = por %p44, %p45
    %p47 = scmp.ne.s32.totalorder %s39, %s41
    %p48 = scmp.eq.s32.totalorder %s36, 6
    %p49 = por %p47, %p48
    %p50 = scmp.ne.s32.totalorder %s41, %s42
    %p51 = scmp.eq.s32.totalorder %s36, 0
    %p52 = por %p50, %p51
    %p53 = scmp.ne.s32.totalorder %s41, %s42
    %p54 = scmp.eq.s32.totalorder %s37, 6
    %p55 = por %p53, %p54
    %p57 = scmp.ne.s32.totalorder %s42, %s56
    %p58 = scmp.eq.s32.totalorder %s37, 0
    %p59 = por %p57, %p58
    %s60 = ssub.s32 %s31, %s38
    %p61 = scmp.eq.s32.totalorder %s60, 0
    %s63 = sadd.s32 %s62, 1
    %s64 = scalar_select %p61, %s62, %s63
    %p67 = pneg %p61
    %p68 = scmp.eq.s32.totalorder %s31, 6
    %p69 = por %p67, %p68
    %p70 = scmp.ne.s32.totalorder %s62, %s65
    %p71 = scmp.eq.s32.totalorder %s31, 0
    %p72 = por %p70, %p71
    %p73 = scmp.ne.s32.totalorder %s62, %s65
    %p74 = scmp.eq.s32.totalorder %s36, 6
    %p75 = por %p73, %p74
    %p76 = scmp.ne.s32.totalorder %s65, %s66
    %p77 = scmp.eq.s32.totalorder %s36, 0
    %p78 = por %p76, %p77
    %p79 = scmp.ne.s32.totalorder %s65, %s66
    %p80 = scmp.eq.s32.totalorder %s37, 6
    %p81 = por %p79, %p80
    %p83 = scmp.ne.s32.totalorder %s66, %s82
    %p84 = scmp.eq.s32.totalorder %s37, 0
    %p85 = por %p83, %p84
    %s86 = ssub.s32 %s31, %s38
    %p87 = scmp.eq.s32.totalorder %s86, 0
    %s89 = sadd.s32 %s88, 1
    %s90 = scalar_select %p87, %s88, %s89
    %p93 = pneg %p87
    %p94 = scmp.eq.s32.totalorder %s31, 6
    %p95 = por %p93, %p94
    %p96 = scmp.ne.s32.totalorder %s88, %s91
    %p97 = scmp.eq.s32.totalorder %s31, 0
    %p98 = por %p96, %p97
    %p99 = scmp.ne.s32.totalorder %s88, %s91
    %p100 = scmp.eq.s32.totalorder %s36, 6
    %p101 = por %p99, %p100
    %p102 = scmp.ne.s32.totalorder %s91, %s92
    %p103 = scmp.eq.s32.totalorder %s36, 0
    %p104 = por %p102, %p103
    %p105 = scmp.ne.s32.totalorder %s91, %s92
    %p106 = scmp.eq.s32.totalorder %s37, 6
    %p107 = por %p105, %p106
    %p109 = scmp.ne.s32.totalorder %s92, %s108
    %p110 = scmp.eq.s32.totalorder %s37, 0
    %p111 = por %p109, %p110
    %s112 = ssub.s32 %s31, %s38
    %p113 = scmp.eq.s32.totalorder %s112, 0
    %s115 = sadd.s32 %s114, 1
    %s116 = scalar_select %p113, %s114, %s115
    %p119 = pneg %p113
    %p120 = scmp.eq.s32.totalorder %s31, 6
    %p121 = por %p119, %p120
    %p122 = scmp.ne.s32.totalorder %s114, %s117
    %p123 = scmp.eq.s32.totalorder %s31, 0
    %p124 = por %p122, %p123
    %p125 = scmp.ne.s32.totalorder %s114, %s117
    %p126 = scmp.eq.s32.totalorder %s36, 6
    %p127 = por %p125, %p126
    %p128 = scmp.ne.s32.totalorder %s117, %s118
    %p129 = scmp.eq.s32.totalorder %s36, 0
    %p130 = por %p128, %p129
    %p131 = scmp.ne.s32.totalorder %s117, %s118
    %p132 = scmp.eq.s32.totalorder %s37, 6
    %p133 = por %p131, %p132
    %p135 = scmp.ne.s32.totalorder %s118, %s134
    %p136 = scmp.eq.s32.totalorder %s37, 0
    %p137 = por %p135, %p136
    %s138 = ssub.s32 %s31, %s38
    %p139 = scmp.eq.s32.totalorder %s138, 0
    %s141 = sadd.s32 %s140, 1
    %s142 = scalar_select %p139, %s140, %s141
    %p145 = pneg %p139
    %p146 = scmp.eq.s32.totalorder %s31, 6
    %p147 = por %p145, %p146
    %p148 = scmp.ne.s32.totalorder %s140, %s143
    %p149 = scmp.eq.s32.totalorder %s31, 0
    %p150 = por %p148, %p149
    %p151 = scmp.ne.s32.totalorder %s140, %s143
    %p152 = scmp.eq.s32.totalorder %s36, 6
    %p153 = por %p151, %p152
    %p154 = scmp.ne.s32.totalorder %s143, %s144
    %p155 = scmp.eq.s32.totalorder %s36, 0
    %p156 = por %p154, %p155
    %p157 = scmp.ne.s32.totalorder %s143, %s144
    %p158 = scmp.eq.s32.totalorder %s37, 6
    %p159 = por %p157, %p158
    %p161 = scmp.ne.s32.totalorder %s144, %s160
    %p162 = scmp.eq.s32.totalorder %s37, 0
    %p163 = por %p161, %p162
    %s164 = ssub.s32 %s31, %s38
    %p165 = scmp.eq.s32.totalorder %s164, 0
    %s167 = sadd.s32 %s166, 1
    %s168 = scalar_select %p165, %s166, %s167
    %p171 = pneg %p165
    %p172 = scmp.eq.s32.totalorder %s31, 6
    %p173 = por %p171, %p172
    %p174 = scmp.ne.s32.totalorder %s166, %s169
    %p175 = scmp.eq.s32.totalorder %s31, 0
    %p176 = por %p174, %p175
    %p177 = scmp.ne.s32.totalorder %s166, %s169
    %p178 = scmp.eq.s32.totalorder %s36, 6
    %p179 = por %p177, %p178
    %p180 = scmp.ne.s32.totalorder %s169, %s170
    %p181 = scmp.eq.s32.totalorder %s36, 0
    %p182 = por %p180, %p181
    %p183 = scmp.ne.s32.totalorder %s169, %s170
    %p184 = scmp.eq.s32.totalorder %s37, 6
    %p185 = por %p183, %p184
    %p187 = scmp.ne.s32.totalorder %s170, %s186
    %p188 = scmp.eq.s32.totalorder %s37, 0
    %p189 = por %p187, %p188
    %s190 = ssub.s32 %s31, %s38
    %p191 = scmp.eq.s32.totalorder %s190, 0
    %s193 = sadd.s32 %s192, 1
    %s194 = scalar_select %p191, %s192, %s193
    %p197 = pneg %p191
    %p198 = scmp.eq.s32.totalorder %s31, 6
    %p199 = por %p197, %p198
    %p200 = scmp.ne.s32.totalorder %s192, %s195
    %p201 = scmp.eq.s32.totalorder %s31, 0
    %p202 = por %p200, %p201
    %p203 = scmp.ne.s32.totalorder %s192, %s195
    %p204 = scmp.eq.s32.totalorder %s36, 6
    %p205 = por %p203, %p204
    %p206 = scmp.ne.s32.totalorder %s195, %s196
    %p207 = scmp.eq.s32.totalorder %s36, 0
    %p208 = por %p206, %p207
    %p209 = scmp.ne.s32.totalorder %s195, %s196
    %p210 = scmp.eq.s32.totalorder %s37, 6
    %p211 = por %p209, %p210
    %p213 = scmp.ne.s32.totalorder %s196, %s212
    %p214 = scmp.eq.s32.totalorder %s37, 0
    %p215 = por %p213, %p214
    %s216 = ssub.s32 %s31, %s38
    %p217 = scmp.eq.s32.totalorder %s216, 0
    %s219 = sadd.s32 %s218, 1
    %s220 = scalar_select %p217, %s218, %s219
    %p223 = pneg %p217
    %p224 = scmp.eq.s32.totalorder %s31, 6
    %p225 = por %p223, %p224
    %p226 = scmp.ne.s32.totalorder %s218, %s221
    %p227 = scmp.eq.s32.totalorder %s31, 0
    %p228 = por %p226, %p227
    %p229 = scmp.ne.s32.totalorder %s218, %s221
    %p230 = scmp.eq.s32.totalorder %s36, 6
    %p231 = por %p229, %p230
    %p232 = scmp.ne.s32.totalorder %s221, %s222
    %p233 = scmp.eq.s32.totalorder %s36, 0
    %p234 = por %p232, %p233
    %p235 = scmp.ne.s32.totalorder %s221, %s222
    %p236 = scmp.eq.s32.totalorder %s37, 6
    %p237 = por %p235, %p236
    %p239 = scmp.ne.s32.totalorder %s222, %s238
    %p240 = scmp.eq.s32.totalorder %s37, 0
    %p241 = por %p239, %p240
    %s242 = ssub.s32 %s31, %s38
    %p243 = scmp.eq.s32.totalorder %s242, 0
    %s245 = sadd.s32 %s244, 1
    %s246 = scalar_select %p243, %s244, %s245
    %p249 = pneg %p243
    %p250 = scmp.eq.s32.totalorder %s31, 6
    %p251 = por %p249, %p250
    %p252 = scmp.ne.s32.totalorder %s244, %s247
    %p253 = scmp.eq.s32.totalorder %s31, 0
    %p254 = por %p252, %p253
    %p255 = scmp.ne.s32.totalorder %s244, %s247
    %p256 = scmp.eq.s32.totalorder %s36, 6
    %p257 = por %p255, %p256
    %p258 = scmp.ne.s32.totalorder %s247, %s248
    %p259 = scmp.eq.s32.totalorder %s36, 0
    %p260 = por %p258, %p259
    %p261 = scmp.ne.s32.totalorder %s247, %s248
    %p262 = scmp.eq.s32.totalorder %s37, 6
    %p263 = por %p261, %p262
    %p265 = scmp.ne.s32.totalorder %s248, %s264
    %p266 = scmp.eq.s32.totalorder %s37, 0
    %p267 = por %p265, %p266
    %s268 = ssub.s32 %s31, %s38
    %p269 = scmp.eq.s32.totalorder %s268, 0
    %s271 = sadd.s32 %s270, 1
    %s272 = scalar_select %p269, %s270, %s271
    %p275 = pneg %p269
    %p276 = scmp.eq.s32.totalorder %s31, 6
    %p277 = por %p275, %p276
    %p278 = scmp.ne.s32.totalorder %s270, %s273
    %p279 = scmp.eq.s32.totalorder %s31, 0
    %p280 = por %p278, %p279
    %p281 = scmp.ne.s32.totalorder %s270, %s273
    %p282 = scmp.eq.s32.totalorder %s36, 6
    %p283 = por %p281, %p282
    %p284 = scmp.ne.s32.totalorder %s273, %s274
    %p285 = scmp.eq.s32.totalorder %s36, 0
    %p286 = por %p284, %p285
    %p287 = scmp.ne.s32.totalorder %s273, %s274
    %p288 = scmp.eq.s32.totalorder %s37, 6
    %p289 = por %p287, %p288
    %p291 = scmp.ne.s32.totalorder %s274, %s290
    %p292 = scmp.eq.s32.totalorder %s37, 0
    %p293 = por %p291, %p292
    %s294 = ssub.s32 %s31, %s38
    %p295 = scmp.eq.s32.totalorder %s294, 0
    %s297 = sadd.s32 %s296, 1
    %s298 = scalar_select %p295, %s296, %s297
    %p301 = pneg %p295
    %p302 = scmp.eq.s32.totalorder %s31, 6
    %p303 = por %p301, %p302
    %p304 = scmp.ne.s32.totalorder %s296, %s299
    %p305 = scmp.eq.s32.totalorder %s31, 0
    %p306 = por %p304, %p305
    %p307 = scmp.ne.s32.totalorder %s296, %s299
    %p308 = scmp.eq.s32.totalorder %s36, 6
    %p309 = por %p307, %p308
    %p310 = scmp.ne.s32.totalorder %s299, %s300
    %p311 = scmp.eq.s32.totalorder %s36, 0
    %p312 = por %p310, %p311
    %p313 = scmp.ne.s32.totalorder %s299, %s300
    %p314 = scmp.eq.s32.totalorder %s37, 6
    %p315 = por %p313, %p314
    %p317 = scmp.ne.s32.totalorder %s300, %s316
    %p318 = scmp.eq.s32.totalorder %s37, 0
    %p319 = por %p317, %p318
    %s320 = ssub.s32 %s31, %s38
    %p321 = scmp.eq.s32.totalorder %s320, 0
    %s323 = sadd.s32 %s322, 1
    %s324 = scalar_select %p321, %s322, %s323
    %p327 = pneg %p321
    %p328 = scmp.eq.s32.totalorder %s31, 6
    %p329 = por %p327, %p328
    %p330 = scmp.ne.s32.totalorder %s322, %s325
    %p331 = scmp.eq.s32.totalorder %s31, 0
    %p332 = por %p330, %p331
    %p333 = scmp.ne.s32.totalorder %s322, %s325
    %p334 = scmp.eq.s32.totalorder %s36, 6
    %p335 = por %p333, %p334
    %p336 = scmp.ne.s32.totalorder %s325, %s326
    %p337 = scmp.eq.s32.totalorder %s36, 0
    %p338 = por %p336, %p337
    %p339 = scmp.ne.s32.totalorder %s325, %s326
    %p340 = scmp.eq.s32.totalorder %s37, 6
    %p341 = por %p339, %p340
    %p343 = scmp.ne.s32.totalorder %s326, %s342
    %p344 = scmp.eq.s32.totalorder %s37, 0
    %p345 = por %p343, %p344
    %s346 = ssub.s32 %s31, %s38
    %p347 = scmp.eq.s32.totalorder %s346, 0
    %s349 = sadd.s32 %s348, 1
    %s350 = scalar_select %p347, %s348, %s349
    %p353 = pneg %p347
    %p354 = scmp.eq.s32.totalorder %s31, 6
    %p355 = por %p353, %p354
    %p356 = scmp.ne.s32.totalorder %s348, %s351
    %p357 = scmp.eq.s32.totalorder %s31, 0
    %p358 = por %p356, %p357
    %p359 = scmp.ne.s32.totalorder %s348, %s351
    %p360 = scmp.eq.s32.totalorder %s36, 6
    %p361 = por %p359, %p360
    %p362 = scmp.ne.s32.totalorder %s351, %s352
    %p363 = scmp.eq.s32.totalorder %s36, 0
    %p364 = por %p362, %p363
    %p365 = scmp.ne.s32.totalorder %s351, %s352
    %p366 = scmp.eq.s32.totalorder %s37, 6
    %p367 = por %p365, %p366
    %p369 = scmp.ne.s32.totalorder %s352, %s368
    %p370 = scmp.eq.s32.totalorder %s37, 0
    %p371 = por %p369, %p370
    %s372 = ssub.s32 %s31, %s38
    %p373 = scmp.eq.s32.totalorder %s372, 0
    %s375 = sadd.s32 %s374, 1
    %s376 = scalar_select %p373, %s374, %s375
    %p379 = pneg %p373
    %p380 = scmp.eq.s32.totalorder %s31, 6
    %p381 = por %p379, %p380
    %p382 = scmp.ne.s32.totalorder %s374, %s377
    %p383 = scmp.eq.s32.totalorder %s31, 0
    %p384 = por %p382, %p383
    %p385 = scmp.ne.s32.totalorder %s374, %s377
    %p386 = scmp.eq.s32.totalorder %s36, 6
    %p387 = por %p385, %p386
    %p388 = scmp.ne.s32.totalorder %s377, %s378
    %p389 = scmp.eq.s32.totalorder %s36, 0
    %p390 = por %p388, %p389
    %p391 = scmp.ne.s32.totalorder %s377, %s378
    %p392 = scmp.eq.s32.totalorder %s37, 6
    %p393 = por %p391, %p392
    %p395 = scmp.ne.s32.totalorder %s378, %s394
    %p396 = scmp.eq.s32.totalorder %s37, 0
    %p397 = por %p395, %p396
    %s398 = ssub.s32 %s31, %s38
    %p399 = scmp.eq.s32.totalorder %s398, 0
    %s401 = sadd.s32 %s400, 1
    %s402 = scalar_select %p399, %s400, %s401
    %p405 = pneg %p399
    %p406 = scmp.eq.s32.totalorder %s31, 6
    %p407 = por %p405, %p406
    %p408 = scmp.ne.s32.totalorder %s400, %s403
    %p409 = scmp.eq.s32.totalorder %s31, 0
    %p410 = por %p408, %p409
    %p411 = scmp.ne.s32.totalorder %s400, %s403
    %p412 = scmp.eq.s32.totalorder %s36, 6
    %p413 = por %p411, %p412
    %p414 = scmp.ne.s32.totalorder %s403, %s404
    %p415 = scmp.eq.s32.totalorder %s36, 0
    %p416 = por %p414, %p415
    %p417 = scmp.ne.s32.totalorder %s403, %s404
    %p418 = scmp.eq.s32.totalorder %s37, 6
    %p419 = por %p417, %p418
    %p421 = scmp.ne.s32.totalorder %s404, %s420
    %p422 = scmp.eq.s32.totalorder %s37, 0
    %p423 = por %p421, %p422
    %s424 = ssub.s32 %s31, %s38
    %p425 = scmp.eq.s32.totalorder %s424, 0
    %s427 = sadd.s32 %s426, 1
    %s428 = scalar_select %p425, %s426, %s427
    %p431 = pneg %p425
    %p432 = scmp.eq.s32.totalorder %s31, 6
    %p433 = por %p431, %p432
    %p434 = scmp.ne.s32.totalorder %s426, %s429
    %p435 = scmp.eq.s32.totalorder %s31, 0
    %p436 = por %p434, %p435
    %p437 = scmp.ne.s32.totalorder %s426, %s429
    %p438 = scmp.eq.s32.totalorder %s36, 6
    %p439 = por %p437, %p438
    %p440 = scmp.ne.s32.totalorder %s429, %s430
    %p441 = scmp.eq.s32.totalorder %s36, 0
    %p442 = por %p440, %p441
    %p443 = scmp.ne.s32.totalorder %s429, %s430
    %p444 = scmp.eq.s32.totalorder %s37, 6
    %p445 = por %p443, %p444
    %p447 = scmp.ne.s32.totalorder %s430, %s446
    %p448 = scmp.eq.s32.totalorder %s37, 0
    %p449 = por %p447, %p448
    %s450 = ssub.s32 %s31, %s38
    %p451 = scmp.eq.s32.totalorder %s450, 0
    %s453 = sadd.s32 %s452, 1
    %s454 = scalar_select %p451, %s452, %s453
    %p457 = pneg %p451
    %p458 = scmp.eq.s32.totalorder %s31, 6
    %p459 = por %p457, %p458
    %p460 = scmp.ne.s32.totalorder %s452, %s455
    %p461 = scmp.eq.s32.totalorder %s31, 0
    %p462 = por %p460, %p461
    %p463 = scmp.ne.s32.totalorder %s452, %s455
    %p464 = scmp.eq.s32.totalorder %s36, 6
    %p465 = por %p463, %p464
    %p466 = scmp.ne.s32.totalorder %s455, %s456
    %p467 = scmp.eq.s32.totalorder %s36, 0
    %p468 = por %p466, %p467
    %p469 = scmp.ne.s32.totalorder %s455, %s456
    %p470 = scmp.eq.s32.totalorder %s37, 6
    %p471 = por %p469, %p470
    %p473 = scmp.ne.s32.totalorder %s456, %s472
    %p474 = scmp.eq.s32.totalorder %s37, 0
    %p475 = por %p473, %p474
    %s476 = ssub.s32 %s31, %s38
    %p477 = scmp.eq.s32.totalorder %s476, 0
    %s479 = sadd.s32 %s478, 1
    %s480 = scalar_select %p477, %s478, %s479
    %p483 = pneg %p477
    %p484 = scmp.eq.s32.totalorder %s31, 6
    %p485 = por %p483, %p484
    %p486 = scmp.ne.s32.totalorder %s478, %s481
    %p487 = scmp.eq.s32.totalorder %s31, 0
    %p488 = por %p486, %p487
    %p489 = scmp.ne.s32.totalorder %s478, %s481
    %p490 = scmp.eq.s32.totalorder %s36, 6
    %p491 = por %p489, %p490
    %p492 = scmp.ne.s32.totalorder %s481, %s482
    %p493 = scmp.eq.s32.totalorder %s36, 0
    %p494 = por %p492, %p493
    %p495 = scmp.ne.s32.totalorder %s481, %s482
    %p496 = scmp.eq.s32.totalorder %s37, 6
    %p497 = por %p495, %p496
    %p499 = scmp.ne.s32.totalorder %s482, %s498
    %p500 = scmp.eq.s32.totalorder %s37, 0
    %p501 = por %p499, %p500
    %s502 = ssub.s32 %s31, %s38
    %p503 = scmp.eq.s32.totalorder %s502, 0
    %s505 = sadd.s32 %s504, 1
    %s506 = scalar_select %p503, %s504, %s505
    %p509 = pneg %p503
    %p510 = scmp.eq.s32.totalorder %s31, 6
    %p511 = por %p509, %p510
    %p512 = scmp.ne.s32.totalorder %s504, %s507
    %p513 = scmp.eq.s32.totalorder %s31, 0
    %p514 = por %p512, %p513
    %p515 = scmp.ne.s32.totalorder %s504, %s507
    %p516 = scmp.eq.s32.totalorder %s36, 6
    %p517 = por %p515, %p516
    %p518 = scmp.ne.s32.totalorder %s507, %s508
    %p519 = scmp.eq.s32.totalorder %s36, 0
    %p520 = por %p518, %p519
    %p521 = scmp.ne.s32.totalorder %s507, %s508
    %p522 = scmp.eq.s32.totalorder %s37, 6
    %p523 = por %p521, %p522
    %p525 = scmp.ne.s32.totalorder %s508, %s524
    %p526 = scmp.eq.s32.totalorder %s37, 0
    %p527 = por %p525, %p526
    %s528 = ssub.s32 %s31, %s38
    %p529 = scmp.eq.s32.totalorder %s528, 0
    %s531 = sadd.s32 %s530, 1
    %s532 = scalar_select %p529, %s530, %s531
    %p535 = pneg %p529
    %p536 = scmp.eq.s32.totalorder %s31, 6
    %p537 = por %p535, %p536
    %p538 = scmp.ne.s32.totalorder %s530, %s533
    %p539 = scmp.eq.s32.totalorder %s31, 0
    %p540 = por %p538, %p539
    %p541 = scmp.ne.s32.totalorder %s530, %s533
    %p542 = scmp.eq.s32.totalorder %s36, 6
    %p543 = por %p541, %p542
    %p544 = scmp.ne.s32.totalorder %s533, %s534
    %p545 = scmp.eq.s32.totalorder %s36, 0
    %p546 = por %p544, %p545
    %p547 = scmp.ne.s32.totalorder %s533, %s534
    %p548 = scmp.eq.s32.totalorder %s37, 6
    %p549 = por %p547, %p548
    %p551 = scmp.ne.s32.totalorder %s534, %s550
    %p552 = scmp.eq.s32.totalorder %s37, 0
    %p553 = por %p551, %p552
    %s554 = ssub.s32 %s31, %s38
    %p555 = scmp.eq.s32.totalorder %s554, 0
    %s557 = sadd.s32 %s556, 1
    %s558 = scalar_select %p555, %s556, %s557
    %p561 = pneg %p555
    %p562 = scmp.eq.s32.totalorder %s31, 6
    %p563 = por %p561, %p562
    %p564 = scmp.ne.s32.totalorder %s556, %s559
    %p565 = scmp.eq.s32.totalorder %s31, 0
    %p566 = por %p564, %p565
    %p567 = scmp.ne.s32.totalorder %s556, %s559
    %p568 = scmp.eq.s32.totalorder %s36, 6
    %p569 = por %p567, %p568
    %p570 = scmp.ne.s32.totalorder %s559, %s560
    %p571 = scmp.eq.s32.totalorder %s36, 0
    %p572 = por %p570, %p571
    %p573 = scmp.ne.s32.totalorder %s559, %s560
    %p574 = scmp.eq.s32.totalorder %s37, 6
    %p575 = por %p573, %p574
    %p577 = scmp.ne.s32.totalorder %s560, %s576
    %p578 = scmp.eq.s32.totalorder %s37, 0
    %p579 = por %p577, %p578
    %s580 = ssub.s32 %s31, %s38
    %p581 = scmp.eq.s32.totalorder %s580, 0
    %s583 = sadd.s32 %s582, 1
    %s584 = scalar_select %p581, %s582, %s583
    %p587 = pneg %p581
    %p588 = scmp.eq.s32.totalorder %s31, 6
    %p589 = por %p587, %p588
    %p590 = scmp.ne.s32.totalorder %s582, %s585
    %p591 = scmp.eq.s32.totalorder %s31, 0
    %p592 = por %p590, %p591
    %p593 = scmp.ne.s32.totalorder %s582, %s585
    %p594 = scmp.eq.s32.totalorder %s36, 6
    %p595 = por %p593, %p594
    %p596 = scmp.ne.s32.totalorder %s585, %s586
    %p597 = scmp.eq.s32.totalorder %s36, 0
    %p598 = por %p596, %p597
    %p599 = scmp.ne.s32.totalorder %s585, %s586
    %p600 = scmp.eq.s32.totalorder %s37, 6
    %p601 = por %p599, %p600
    %p603 = scmp.ne.s32.totalorder %s586, %s602
    %p604 = scmp.eq.s32.totalorder %s37, 0
    %p605 = por %p603, %p604
    %s606 = ssub.s32 %s31, %s38
    %p607 = scmp.eq.s32.totalorder %s606, 0
    %s609 = sadd.s32 %s608, 1
    %s610 = scalar_select %p607, %s608, %s609
    %p613 = pneg %p607
    %p614 = scmp.eq.s32.totalorder %s31, 6
    %p615 = por %p613, %p614
    %p616 = scmp.ne.s32.totalorder %s608, %s611
    %p617 = scmp.eq.s32.totalorder %s31, 0
    %p618 = por %p616, %p617
    %p619 = scmp.ne.s32.totalorder %s608, %s611
    %p620 = scmp.eq.s32.totalorder %s36, 6
    %p621 = por %p619, %p620
    %p622 = scmp.ne.s32.totalorder %s611, %s612
    %p623 = scmp.eq.s32.totalorder %s36, 0
    %p624 = por %p622, %p623
    %p625 = scmp.ne.s32.totalorder %s611, %s612
    %p626 = scmp.eq.s32.totalorder %s37, 6
    %p627 = por %p625, %p626
    %p629 = scmp.ne.s32.totalorder %s612, %s628
    %p630 = scmp.eq.s32.totalorder %s37, 0
    %p631 = por %p629, %p630
    %s632 = ssub.s32 %s31, %s38
    %p633 = scmp.eq.s32.totalorder %s632, 0
    %s635 = sadd.s32 %s634, 1
    %s636 = scalar_select %p633, %s634, %s635
    %p639 = pneg %p633
    %p640 = scmp.eq.s32.totalorder %s31, 6
    %p641 = por %p639, %p640
    %p642 = scmp.ne.s32.totalorder %s634, %s637
    %p643 = scmp.eq.s32.totalorder %s31, 0
    %p644 = por %p642, %p643
    %p645 = scmp.ne.s32.totalorder %s634, %s637
    %p646 = scmp.eq.s32.totalorder %s36, 6
    %p647 = por %p645, %p646
    %p648 = scmp.ne.s32.totalorder %s637, %s638
    %p649 = scmp.eq.s32.totalorder %s36, 0
    %p650 = por %p648, %p649
    %p651 = scmp.ne.s32.totalorder %s637, %s638
    %p652 = scmp.eq.s32.totalorder %s37, 6
    %p653 = por %p651, %p652
    %p655 = scmp.ne.s32.totalorder %s638, %s654
    %p656 = scmp.eq.s32.totalorder %s37, 0
    %p657 = por %p655, %p656
    %s658 = ssub.s32 %s31, %s38
    %p659 = scmp.eq.s32.totalorder %s658, 0
    %s661 = sadd.s32 %s660, 1
    %s662 = scalar_select %p659, %s660, %s661
    %p665 = pneg %p659
    %p666 = scmp.eq.s32.totalorder %s31, 6
    %p667 = por %p665, %p666
    %p668 = scmp.ne.s32.totalorder %s660, %s663
    %p669 = scmp.eq.s32.totalorder %s31, 0
    %p670 = por %p668, %p669
    %p671 = scmp.ne.s32.totalorder %s660, %s663
    %p672 = scmp.eq.s32.totalorder %s36, 6
    %p673 = por %p671, %p672
    %p674 = scmp.ne.s32.totalorder %s663, %s664
    %p675 = scmp.eq.s32.totalorder %s36, 0
    %p676 = por %p674, %p675
    %p677 = scmp.ne.s32.totalorder %s663, %s664
    %p678 = scmp.eq.s32.totalorder %s37, 6
    %p679 = por %p677, %p678
    %p681 = scmp.ne.s32.totalorder %s664, %s680
    %p682 = scmp.eq.s32.totalorder %s37, 0
    %p683 = por %p681, %p682
    %s684 = ssub.s32 %s31, %s38
    %p685 = scmp.eq.s32.totalorder %s684, 0
    %s687 = sadd.s32 %s686, 1
    %s688 = scalar_select %p685, %s686, %s687
    %p691 = pneg %p685
    %p692 = scmp.eq.s32.totalorder %s31, 6
    %p693 = por %p691, %p692
    %p694 = scmp.ne.s32.totalorder %s686, %s689
    %p695 = scmp.eq.s32.totalorder %s31, 0
    %p696 = por %p694, %p695
    %p697 = scmp.ne.s32.totalorder %s686, %s689
    %p698 = scmp.eq.s32.totalorder %s36, 6
    %p699 = por %p697, %p698
    %p700 = scmp.ne.s32.totalorder %s689, %s690
    %p701 = scmp.eq.s32.totalorder %s36, 0
    %p702 = por %p700, %p701
    %p703 = scmp.ne.s32.totalorder %s689, %s690
    %p704 = scmp.eq.s32.totalorder %s37, 6
    %p705 = por %p703, %p704
    %p707 = scmp.ne.s32.totalorder %s690, %s706
    %p708 = scmp.eq.s32.totalorder %s37, 0
    %p709 = por %p707, %p708
    %p710 = scmp.le.s32.totalorder 1, %s31
    %p711 = scmp.lt.s32.totalorder %s31, 8
    %p712 = pnand %p710, %p711
    %p713 = pneg %p712
    // Predicated region
    $region9: #{gnn_forward.11} parent=5 // pred_check
      _
    $region10: #{gnn_forward.11} parent=5 // pred_check_branch
      %715 = sbr.rel (%p712) target = $region12
    $region11: #{gnn_forward.11} parent=5 // pred_region
      %s716 = ssub.s32 %s31, 1
      // Predicated region
      $region13: #{gnn_forward.11} parent=11 // pred_check
        %p717 = pneg %p52
      $region14: #{gnn_forward.11} parent=11 // pred_check_branch
        %719 = sbr.rel (%p717) target = $region16
      $region15: #{gnn_forward.11} parent=11 // pred_region
        _
      $region16: #{gnn_forward.11} parent=11 // pred_fallthru
        _
    $region12: #{gnn_forward.11} parent=5 // pred_fallthru
      _
    %p720 = scmp.lt.s32.totalorder %s31, 7
    // Predicated region
    $region17: #{gnn_forward.11} parent=5 // pred_check
      %p721 = pneg %p720
    $region18: #{gnn_forward.11} parent=5 // pred_check_branch
      %723 = sbr.rel (%p721) target = $region20
    $region19: #{gnn_forward.11} parent=5 // pred_region
      // Predicated region
      $region21: #{gnn_forward.11} parent=19 // pred_check
        %p724 = pneg %p72
      $region22: #{gnn_forward.11} parent=19 // pred_check_branch
        %726 = sbr.rel (%p724) target = $region24
      $region23: #{gnn_forward.11} parent=19 // pred_region
        %p727 = scmp.lt.s32.totalorder %s31, 6
        %s728 = scalar_select %p727, %s31, 6
        %s729 = smul.addr %s728, 2
        %s730 = smul.addr %s729, 8
        %s731 = scalar_lea.vmem %s1, %s730
      $region24: #{gnn_forward.11} parent=19 // pred_fallthru
        _
      // Predicated region
      $region25: #{gnn_forward.11} parent=19 // pred_check
        %p732 = pneg %p98
      $region26: #{gnn_forward.11} parent=19 // pred_check_branch
        %734 = sbr.rel (%p732) target = $region28
      $region27: #{gnn_forward.11} parent=19 // pred_region
        %p735 = scmp.lt.s32.totalorder %s31, 6
        %s736 = scalar_select %p735, %s31, 6
        %s737 = smul.addr %s736, 2
        %s738 = smul.addr %s737, 8
        %s739 = scalar_lea.vmem %s2, %s738
      $region28: #{gnn_forward.11} parent=19 // pred_fallthru
        _
      // Predicated region
      $region29: #{gnn_forward.11} parent=19 // pred_check
        %p740 = pneg %p124
      $region30: #{gnn_forward.11} parent=19 // pred_check_branch
        %742 = sbr.rel (%p740) target = $region32
      $region31: #{gnn_forward.11} parent=19 // pred_region
        %p743 = scmp.lt.s32.totalorder %s31, 6
        %s744 = scalar_select %p743, %s31, 6
        %s745 = smul.addr %s744, 8
        %s746 = scalar_lea.vmem %s3, %s745
      $region32: #{gnn_forward.11} parent=19 // pred_fallthru
        _
      // Predicated region
      $region33: #{gnn_forward.11} parent=19 // pred_check
        %p747 = pneg %p150
      $region34: #{gnn_forward.11} parent=19 // pred_check_branch
        %749 = sbr.rel (%p747) target = $region36
      $region35: #{gnn_forward.11} parent=19 // pred_region
        %p750 = scmp.lt.s32.totalorder %s31, 6
        %s751 = scalar_select %p750, %s31, 6
        %s752 = smul.addr %s751, 2
        %s753 = smul.addr %s752, 8
        %s754 = scalar_lea.vmem %s4, %s753
      $region36: #{gnn_forward.11} parent=19 // pred_fallthru
        _
      // Predicated region
      $region37: #{gnn_forward.11} parent=19 // pred_check
        %p755 = pneg %p176
      $region38: #{gnn_forward.11} parent=19 // pred_check_branch
        %757 = sbr.rel (%p755) target = $region40
      $region39: #{gnn_forward.11} parent=19 // pred_region
        %p758 = scmp.lt.s32.totalorder %s31, 6
        %s759 = scalar_select %p758, %s31, 6
        %s760 = smul.addr %s759, 8
        %s761 = scalar_lea.vmem %s5, %s760
      $region40: #{gnn_forward.11} parent=19 // pred_fallthru
        _
      // Predicated region
      $region41: #{gnn_forward.11} parent=19 // pred_check
        %p762 = pneg %p202
      $region42: #{gnn_forward.11} parent=19 // pred_check_branch
        %764 = sbr.rel (%p762) target = $region44
      $region43: #{gnn_forward.11} parent=19 // pred_region
        %p765 = scmp.lt.s32.totalorder %s31, 6
        %s766 = scalar_select %p765, %s31, 6
        %s767 = smul.addr %s766, 8
        %s768 = scalar_lea.vmem %s6, %s767
      $region44: #{gnn_forward.11} parent=19 // pred_fallthru
        _
      // Predicated region
      $region45: #{gnn_forward.11} parent=19 // pred_check
        %p769 = pneg %p228
      $region46: #{gnn_forward.11} parent=19 // pred_check_branch
        %771 = sbr.rel (%p769) target = $region48
      $region47: #{gnn_forward.11} parent=19 // pred_region
        %p772 = scmp.lt.s32.totalorder %s31, 6
        %s773 = scalar_select %p772, %s31, 6
        %s774 = smul.addr %s773, 8
        %s775 = scalar_lea.vmem %s7, %s774
      $region48: #{gnn_forward.11} parent=19 // pred_fallthru
        _
      // Predicated region
      $region49: #{gnn_forward.11} parent=19 // pred_check
        %p776 = pneg %p254
      $region50: #{gnn_forward.11} parent=19 // pred_check_branch
        %778 = sbr.rel (%p776) target = $region52
      $region51: #{gnn_forward.11} parent=19 // pred_region
        %p779 = scmp.lt.s32.totalorder %s31, 6
        %s780 = scalar_select %p779, %s31, 6
        %s781 = smul.addr %s780, 8
        %s782 = scalar_lea.vmem %s8, %s781
      $region52: #{gnn_forward.11} parent=19 // pred_fallthru
        _
      // Predicated region
      $region53: #{gnn_forward.11} parent=19 // pred_check
        %p783 = pneg %p280
      $region54: #{gnn_forward.11} parent=19 // pred_check_branch
        %785 = sbr.rel (%p783) target = $region56
      $region55: #{gnn_forward.11} parent=19 // pred_region
        %p786 = scmp.lt.s32.totalorder %s31, 6
        %s787 = scalar_select %p786, %s31, 6
        %s788 = scalar_lea.vmem %s9, %s787
      $region56: #{gnn_forward.11} parent=19 // pred_fallthru
        _
      // Predicated region
      $region57: #{gnn_forward.11} parent=19 // pred_check
        %p789 = pneg %p306
      $region58: #{gnn_forward.11} parent=19 // pred_check_branch
        %791 = sbr.rel (%p789) target = $region60
      $region59: #{gnn_forward.11} parent=19 // pred_region
        %p792 = scmp.lt.s32.totalorder %s31, 6
        %s793 = scalar_select %p792, %s31, 6
        %s794 = smul.addr %s793, 2
        %s795 = smul.addr %s794, 8
        %s796 = scalar_lea.vmem %s10, %s795
      $region60: #{gnn_forward.11} parent=19 // pred_fallthru
        _
      // Predicated region
      $region61: #{gnn_forward.11} parent=19 // pred_check
        %p797 = pneg %p332
      $region62: #{gnn_forward.11} parent=19 // pred_check_branch
        %799 = sbr.rel (%p797) target = $region64
      $region63: #{gnn_forward.11} parent=19 // pred_region
        %p800 = scmp.lt.s32.totalorder %s31, 6
        %s801 = scalar_select %p800, %s31, 6
        %s802 = scalar_lea.vmem %s11, %s801
      $region64: #{gnn_forward.11} parent=19 // pred_fallthru
        _
      // Predicated region
      $region65: #{gnn_forward.11} parent=19 // pred_check
        %p803 = pneg %p358
      $region66: #{gnn_forward.11} parent=19 // pred_check_branch
        %805 = sbr.rel (%p803) target = $region68
      $region67: #{gnn_forward.11} parent=19 // pred_region
        %p806 = scmp.lt.s32.totalorder %s31, 6
        %s807 = scalar_select %p806, %s31, 6
        %s808 = smul.addr %s807, 2
        %s809 = smul.addr %s808, 8
        %s810 = scalar_lea.vmem %s12, %s809
      $region68: #{gnn_forward.11} parent=19 // pred_fallthru
        _
      // Predicated region
      $region69: #{gnn_forward.11} parent=19 // pred_check
        %p811 = pneg %p384
      $region70: #{gnn_forward.11} parent=19 // pred_check_branch
        %813 = sbr.rel (%p811) target = $region72
      $region71: #{gnn_forward.11} parent=19 // pred_region
        %p814 = scmp.lt.s32.totalorder %s31, 6
        %s815 = scalar_select %p814, %s31, 6
        %s816 = smul.addr %s815, 4
        %s817 = smul.addr %s816, 8
        %s818 = scalar_lea.vmem %s13, %s817
      $region72: #{gnn_forward.11} parent=19 // pred_fallthru
        _
      // Predicated region
      $region73: #{gnn_forward.11} parent=19 // pred_check
        %p819 = pneg %p410
      $region74: #{gnn_forward.11} parent=19 // pred_check_branch
        %821 = sbr.rel (%p819) target = $region76
      $region75: #{gnn_forward.11} parent=19 // pred_region
        %p822 = scmp.lt.s32.totalorder %s31, 6
        %s823 = scalar_select %p822, %s31, 6
        %s824 = scalar_lea.vmem %s14, %s823
      $region76: #{gnn_forward.11} parent=19 // pred_fallthru
        _
      // Predicated region
      $region77: #{gnn_forward.11} parent=19 // pred_check
        %p825 = pneg %p436
      $region78: #{gnn_forward.11} parent=19 // pred_check_branch
        %827 = sbr.rel (%p825) target = $region80
      $region79: #{gnn_forward.11} parent=19 // pred_region
        %p828 = scmp.lt.s32.totalorder %s31, 6
        %s829 = scalar_select %p828, %s31, 6
        %s830 = smul.addr %s829, 2
        %s831 = smul.addr %s830, 8
        %s832 = scalar_lea.vmem %s15, %s831
      $region80: #{gnn_forward.11} parent=19 // pred_fallthru
        _
      // Predicated region
      $region81: #{gnn_forward.11} parent=19 // pred_check
        %p833 = pneg %p462
      $region82: #{gnn_forward.11} parent=19 // pred_check_branch
        %835 = sbr.rel (%p833) target = $region84
      $region83: #{gnn_forward.11} parent=19 // pred_region
        %p836 = scmp.lt.s32.totalorder %s31, 6
        %s837 = scalar_select %p836, %s31, 6
        %s838 = scalar_lea.vmem %s16, %s837
      $region84: #{gnn_forward.11} parent=19 // pred_fallthru
        _
      // Predicated region
      $region85: #{gnn_forward.11} parent=19 // pred_check
        %p839 = pneg %p488
      $region86: #{gnn_forward.11} parent=19 // pred_check_branch
        %841 = sbr.rel (%p839) target = $region88
      $region87: #{gnn_forward.11} parent=19 // pred_region
        %p842 = scmp.lt.s32.totalorder %s31, 6
        %s843 = scalar_select %p842, %s31, 6
        %s844 = smul.addr %s843, 4
        %s845 = smul.addr %s844, 8
        %s846 = scalar_lea.vmem %s17, %s845
      $region88: #{gnn_forward.11} parent=19 // pred_fallthru
        _
      // Predicated region
      $region89: #{gnn_forward.11} parent=19 // pred_check
        %p847 = pneg %p514
      $region90: #{gnn_forward.11} parent=19 // pred_check_branch
        %849 = sbr.rel (%p847) target = $region92
      $region91: #{gnn_forward.11} parent=19 // pred_region
        %p850 = scmp.lt.s32.totalorder %s31, 6
        %s851 = scalar_select %p850, %s31, 6
        %s852 = scalar_lea.vmem %s18, %s851
      $region92: #{gnn_forward.11} parent=19 // pred_fallthru
        _
      // Predicated region
      $region93: #{gnn_forward.11} parent=19 // pred_check
        %p853 = pneg %p540
      $region94: #{gnn_forward.11} parent=19 // pred_check_branch
        %855 = sbr.rel (%p853) target = $region96
      $region95: #{gnn_forward.11} parent=19 // pred_region
        %p856 = scmp.lt.s32.totalorder %s31, 6
        %s857 = scalar_select %p856, %s31, 6
        %s858 = smul.addr %s857, 2
        %s859 = smul.addr %s858, 8
        %s860 = scalar_lea.vmem %s19, %s859
      $region96: #{gnn_forward.11} parent=19 // pred_fallthru
        _
      // Predicated region
      $region97: #{gnn_forward.11} parent=19 // pred_check
        %p861 = pneg %p566
      $region98: #{gnn_forward.11} parent=19 // pred_check_branch
        %863 = sbr.rel (%p861) target = $region100
      $region99: #{gnn_forward.11} parent=19 // pred_region
        %p864 = scmp.lt.s32.totalorder %s31, 6
        %s865 = scalar_select %p864, %s31, 6
        %s866 = smul.addr %s865, 2
        %s867 = smul.addr %s866, 8
        %s868 = scalar_lea.vmem %s20, %s867
      $region100: #{gnn_forward.11} parent=19 // pred_fallthru
        _
      // Predicated region
      $region101: #{gnn_forward.11} parent=19 // pred_check
        %p869 = pneg %p592
      $region102: #{gnn_forward.11} parent=19 // pred_check_branch
        %871 = sbr.rel (%p869) target = $region104
      $region103: #{gnn_forward.11} parent=19 // pred_region
        %p872 = scmp.lt.s32.totalorder %s31, 6
        %s873 = scalar_select %p872, %s31, 6
        %s874 = smul.addr %s873, 2
        %s875 = smul.addr %s874, 8
        %s876 = scalar_lea.vmem %s21, %s875
      $region104: #{gnn_forward.11} parent=19 // pred_fallthru
        _
      // Predicated region
      $region105: #{gnn_forward.11} parent=19 // pred_check
        %p877 = pneg %p618
      $region106: #{gnn_forward.11} parent=19 // pred_check_branch
        %879 = sbr.rel (%p877) target = $region108
      $region107: #{gnn_forward.11} parent=19 // pred_region
        %p880 = scmp.lt.s32.totalorder %s31, 6
        %s881 = scalar_select %p880, %s31, 6
        %s882 = scalar_lea.vmem %s22, %s881
      $region108: #{gnn_forward.11} parent=19 // pred_fallthru
        _
      // Predicated region
      $region109: #{gnn_forward.11} parent=19 // pred_check
        %p883 = pneg %p644
      $region110: #{gnn_forward.11} parent=19 // pred_check_branch
        %885 = sbr.rel (%p883) target = $region112
      $region111: #{gnn_forward.11} parent=19 // pred_region
        %p886 = scmp.lt.s32.totalorder %s31, 6
        %s887 = scalar_select %p886, %s31, 6
        %s888 = scalar_lea.vmem %s23, %s887
      $region112: #{gnn_forward.11} parent=19 // pred_fallthru
        _
      // Predicated region
      $region113: #{gnn_forward.11} parent=19 // pred_check
        %p889 = pneg %p670
      $region114: #{gnn_forward.11} parent=19 // pred_check_branch
        %891 = sbr.rel (%p889) target = $region116
      $region115: #{gnn_forward.11} parent=19 // pred_region
        %p892 = scmp.lt.s32.totalorder %s31, 6
        %s893 = scalar_select %p892, %s31, 6
        %s894 = scalar_lea.vmem %s24, %s893
      $region116: #{gnn_forward.11} parent=19 // pred_fallthru
        _
    $region20: #{gnn_forward.11} parent=5 // pred_fallthru
      _
    %p895 = scmp.le.s32.totalorder 1, %s31
    %p896 = scmp.lt.s32.totalorder %s31, 8
    %p897 = pnand %p895, %p896
    %p898 = pneg %p897
    // Predicated region
    $region117: #{gnn_forward.11} parent=5 // pred_check
      _
    $region118: #{gnn_forward.11} parent=5 // pred_check_branch
      %900 = sbr.rel (%p897) target = $region120
    $region119: #{gnn_forward.11} parent=5 // pred_region
      %s901 = ssub.s32 %s31, 1
      %p902 = pneg %p52
      %p903 = pneg %p49
      %p904 = scmp.lt.s32.totalorder %s36, 6
      %s905 = scalar_select %p904, %s36, 6
      %s906 = smul.addr %s905, 2
      %s907 = smul.addr %s906, 8
      %s908 = scalar_lea.vmem %s1, %s907
      %p909 = pneg %p78
      %p910 = pneg %p75
      %p911 = scmp.lt.s32.totalorder %s36, 6
      %s912 = scalar_select %p911, %s36, 6
      %s913 = smul.addr %s912, 2
      %s914 = smul.addr %s913, 8
      %s915 = scalar_lea.vmem %s2, %s914
      %p916 = pneg %p104
      %p917 = pneg %p101
      %p918 = scmp.lt.s32.totalorder %s36, 6
      %s919 = scalar_select %p918, %s36, 6
      %s920 = smul.addr %s919, 8
      %s921 = scalar_lea.vmem %s3, %s920
      %p922 = pneg %p130
      %p923 = pneg %p127
      %p924 = scmp.lt.s32.totalorder %s36, 6
      %s925 = scalar_select %p924, %s36, 6
      %s926 = smul.addr %s925, 2
      %s927 = smul.addr %s926, 8
      %s928 = scalar_lea.vmem %s4, %s927
      %p929 = pneg %p156
      %p930 = pneg %p153
      %p931 = scmp.lt.s32.totalorder %s36, 6
      %s932 = scalar_select %p931, %s36, 6
      %s933 = smul.addr %s932, 8
      %s934 = scalar_lea.vmem %s5, %s933
      %p935 = pneg %p182
      %p936 = pneg %p179
      %p937 = scmp.lt.s32.totalorder %s36, 6
      %s938 = scalar_select %p937, %s36, 6
      %s939 = smul.addr %s938, 8
      %s940 = scalar_lea.vmem %s6, %s939
      %p941 = pneg %p208
      %p942 = pneg %p205
      %p943 = scmp.lt.s32.totalorder %s36, 6
      %s944 = scalar_select %p943, %s36, 6
      %s945 = smul.addr %s944, 8
      %s946 = scalar_lea.vmem %s7, %s945
      %p947 = pneg %p234
      %p948 = pneg %p231
      %p949 = scmp.lt.s32.totalorder %s36, 6
      %s950 = scalar_select %p949, %s36, 6
      %s951 = smul.addr %s950, 8
      %s952 = scalar_lea.vmem %s8, %s951
      %p953 = pneg %p260
      %p954 = pneg %p257
      %p955 = scmp.lt.s32.totalorder %s36, 6
      %s956 = scalar_select %p955, %s36, 6
      %s957 = scalar_lea.vmem %s9, %s956
      %p958 = pneg %p286
      %p959 = pneg %p283
      %p960 = scmp.lt.s32.totalorder %s36, 6
      %s961 = scalar_select %p960, %s36, 6
      %s962 = smul.addr %s961, 2
      %s963 = smul.addr %s962, 8
      %s964 = scalar_lea.vmem %s10, %s963
      %p965 = pneg %p312
      %p966 = pneg %p309
      %p967 = scmp.lt.s32.totalorder %s36, 6
      %s968 = scalar_select %p967, %s36, 6
      %s969 = scalar_lea.vmem %s11, %s968
      %p970 = pneg %p338
      %p971 = pneg %p335
      %p972 = scmp.lt.s32.totalorder %s36, 6
      %s973 = scalar_select %p972, %s36, 6
      %s974 = smul.addr %s973, 2
      %s975 = smul.addr %s974, 8
      %s976 = scalar_lea.vmem %s12, %s975
      %p977 = pneg %p364
      %p978 = pneg %p361
      %p979 = scmp.lt.s32.totalorder %s36, 6
      %s980 = scalar_select %p979, %s36, 6
      %s981 = smul.addr %s980, 4
      %s982 = smul.addr %s981, 8
      %s983 = scalar_lea.vmem %s13, %s982
      %p984 = pneg %p390
      %p985 = pneg %p387
      %p986 = scmp.lt.s32.totalorder %s36, 6
      %s987 = scalar_select %p986, %s36, 6
      %s988 = scalar_lea.vmem %s14, %s987
      %p989 = pneg %p416
      %p990 = pneg %p413
      %p991 = scmp.lt.s32.totalorder %s36, 6
      %s992 = scalar_select %p991, %s36, 6
      %s993 = smul.addr %s992, 2
      %s994 = smul.addr %s993, 8
      %s995 = scalar_lea.vmem %s15, %s994
      %p996 = pneg %p442
      %p997 = pneg %p439
      %p998 = scmp.lt.s32.totalorder %s36, 6
      %s999 = scalar_select %p998, %s36, 6
      %s1000 = scalar_lea.vmem %s16, %s999
      %p1001 = pneg %p468
      %p1002 = pneg %p465
      %p1003 = scmp.lt.s32.totalorder %s36, 6
      %s1004 = scalar_select %p1003, %s36, 6
      %s1005 = smul.addr %s1004, 4
      %s1006 = smul.addr %s1005, 8
      %s1007 = scalar_lea.vmem %s17, %s1006
      %p1008 = pneg %p494
      %p1009 = pneg %p491
      %p1010 = scmp.lt.s32.totalorder %s36, 6
      %s1011 = scalar_select %p1010, %s36, 6
      %s1012 = scalar_lea.vmem %s18, %s1011
      %p1013 = pneg %p520
      %p1014 = pneg %p517
      %p1015 = scmp.lt.s32.totalorder %s36, 6
      %s1016 = scalar_select %p1015, %s36, 6
      %s1017 = smul.addr %s1016, 2
      %s1018 = smul.addr %s1017, 8
      %s1019 = scalar_lea.vmem %s19, %s1018
      %p1020 = pneg %p546
      %p1021 = pneg %p543
      %p1022 = scmp.lt.s32.totalorder %s36, 6
      %s1023 = scalar_select %p1022, %s36, 6
      %s1024 = smul.addr %s1023, 2
      %s1025 = smul.addr %s1024, 8
      %s1026 = scalar_lea.vmem %s20, %s1025
      %p1027 = pneg %p572
      %p1028 = pneg %p569
      %p1029 = scmp.lt.s32.totalorder %s36, 6
      %s1030 = scalar_select %p1029, %s36, 6
      %s1031 = smul.addr %s1030, 2
      %s1032 = smul.addr %s1031, 8
      %s1033 = scalar_lea.vmem %s21, %s1032
      %p1034 = pneg %p598
      %p1035 = pneg %p595
      %p1036 = scmp.lt.s32.totalorder %s36, 6
      %s1037 = scalar_select %p1036, %s36, 6
      %s1038 = scalar_lea.vmem %s22, %s1037
      %p1039 = pneg %p624
      %p1040 = pneg %p621
      %p1041 = scmp.lt.s32.totalorder %s36, 6
      %s1042 = scalar_select %p1041, %s36, 6
      %s1043 = scalar_lea.vmem %s23, %s1042
      %p1044 = pneg %p650
      %p1045 = pneg %p647
      %p1046 = scmp.lt.s32.totalorder %s36, 6
      %s1047 = scalar_select %p1046, %s36, 6
      %s1048 = scalar_lea.vmem %s24, %s1047
      %p1049 = pneg %p676
      %p1050 = pneg %p673
      %p1051 = pneg %p702
      %p1052 = pneg %p699
      %p1053 = scmp.lt.s32.totalorder %s36, 6
      %s1054 = scalar_select %p1053, %s36, 6
      %s1055 = smul.addr %s1054, 8
      %s1056 = scalar_lea.vmem %s25, %s1055
      %p1057 = scmp.lt.s32.totalorder %s36, 6
      %s1058 = scalar_select %p1057, %s36, 6
      %s1059 = smul.addr %s1058, 2
      %s1060 = smul.addr %s1059, 8
      %s1061 = scalar_lea.vmem %s1, %s1060
      %p1062 = scmp.lt.s32.totalorder %s36, 6
      %s1063 = scalar_select %p1062, %s36, 6
      %s1064 = smul.addr %s1063, 2
      %s1065 = smul.addr %s1064, 8
      %s1066 = scalar_lea.vmem %s2, %s1065
      %p1067 = scmp.lt.s32.totalorder %s36, 6
      %s1068 = scalar_select %p1067, %s36, 6
      %s1069 = smul.addr %s1068, 8
      %s1070 = scalar_lea.vmem %s3, %s1069
      %p1071 = scmp.lt.s32.totalorder %s36, 6
      %s1072 = scalar_select %p1071, %s36, 6
      %s1073 = smul.addr %s1072, 2
      %s1074 = smul.addr %s1073, 8
      %s1075 = scalar_lea.vmem %s4, %s1074
      %p1076 = scmp.lt.s32.totalorder %s36, 6
      %s1077 = scalar_select %p1076, %s36, 6
      %s1078 = smul.addr %s1077, 8
      %s1079 = scalar_lea.vmem %s5, %s1078
      %p1080 = scmp.lt.s32.totalorder %s36, 6
      %s1081 = scalar_select %p1080, %s36, 6
      %s1082 = smul.addr %s1081, 8
      %s1083 = scalar_lea.vmem %s6, %s1082
      %p1084 = scmp.lt.s32.totalorder %s36, 6
      %s1085 = scalar_select %p1084, %s36, 6
      %s1086 = smul.addr %s1085, 8
      %s1087 = scalar_lea.vmem %s7, %s1086
      %p1088 = scmp.lt.s32.totalorder %s36, 6
      %s1089 = scalar_select %p1088, %s36, 6
      %s1090 = smul.addr %s1089, 8
      %s1091 = scalar_lea.vmem %s8, %s1090
      %p1092 = scmp.lt.s32.totalorder %s36, 6
      %s1093 = scalar_select %p1092, %s36, 6
      %s1094 = scalar_lea.vmem %s9, %s1093
      %p1095 = scmp.lt.s32.totalorder %s36, 6
      %s1096 = scalar_select %p1095, %s36, 6
      %s1097 = smul.addr %s1096, 2
      %s1098 = smul.addr %s1097, 8
      %s1099 = scalar_lea.vmem %s10, %s1098
      %p1100 = scmp.lt.s32.totalorder %s36, 6
      %s1101 = scalar_select %p1100, %s36, 6
      %s1102 = scalar_lea.vmem %s11, %s1101
      %p1103 = scmp.lt.s32.totalorder %s36, 6
      %s1104 = scalar_select %p1103, %s36, 6
      %s1105 = smul.addr %s1104, 2
      %s1106 = smul.addr %s1105, 8
      %s1107 = scalar_lea.vmem %s12, %s1106
      %p1108 = scmp.lt.s32.totalorder %s36, 6
      %s1109 = scalar_select %p1108, %s36, 6
      %s1110 = smul.addr %s1109, 4
      %s1111 = smul.addr %s1110, 8
      %s1112 = scalar_lea.vmem %s13, %s1111
      %p1113 = scmp.lt.s32.totalorder %s36, 6
      %s1114 = scalar_select %p1113, %s36, 6
      %s1115 = scalar_lea.vmem %s14, %s1114
      %p1116 = scmp.lt.s32.totalorder %s36, 6
      %s1117 = scalar_select %p1116, %s36, 6
      %s1118 = smul.addr %s1117, 2
      %s1119 = smul.addr %s1118, 8
      %s1120 = scalar_lea.vmem %s15, %s1119
      %p1121 = scmp.lt.s32.totalorder %s36, 6
      %s1122 = scalar_select %p1121, %s36, 6
      %s1123 = scalar_lea.vmem %s16, %s1122
      %p1124 = scmp.lt.s32.totalorder %s36, 6
      %s1125 = scalar_select %p1124, %s36, 6
      %s1126 = smul.addr %s1125, 4
      %s1127 = smul.addr %s1126, 8
      %s1128 = scalar_lea.vmem %s17, %s1127
      %p1129 = scmp.lt.s32.totalorder %s36, 6
      %s1130 = scalar_select %p1129, %s36, 6
      %s1131 = scalar_lea.vmem %s18, %s1130
      %p1132 = scmp.lt.s32.totalorder %s36, 6
      %s1133 = scalar_select %p1132, %s36, 6
      %s1134 = smul.addr %s1133, 2
      %s1135 = smul.addr %s1134, 8
      %s1136 = scalar_lea.vmem %s19, %s1135
      %p1137 = scmp.lt.s32.totalorder %s36, 6
      %s1138 = scalar_select %p1137, %s36, 6
      %s1139 = smul.addr %s1138, 2
      %s1140 = smul.addr %s1139, 8
      %s1141 = scalar_lea.vmem %s20, %s1140
      %p1142 = scmp.lt.s32.totalorder %s36, 6
      %s1143 = scalar_select %p1142, %s36, 6
      %s1144 = smul.addr %s1143, 2
      %s1145 = smul.addr %s1144, 8
      %s1146 = scalar_lea.vmem %s21, %s1145
      %p1147 = scmp.lt.s32.totalorder %s36, 6
      %s1148 = scalar_select %p1147, %s36, 6
      %s1149 = scalar_lea.vmem %s22, %s1148
      %p1150 = scmp.lt.s32.totalorder %s36, 6
      %s1151 = scalar_select %p1150, %s36, 6
      %s1152 = scalar_lea.vmem %s23, %s1151
      %p1153 = scmp.lt.s32.totalorder %s36, 6
      %s1154 = scalar_select %p1153, %s36, 6
      %s1155 = scalar_lea.vmem %s24, %s1154
      %p1156 = scmp.lt.s32.totalorder %s36, 6
      %s1157 = scalar_select %p1156, %s36, 6
      %s1158 = smul.addr %s1157, 8
      %s1159 = scalar_lea.vmem %s25, %s1158
      %v1160 = vld [vmem:[%s0] sm:$0xff]
      %v1161 = vld [vmem:[%s0 + $0x8] sm:$0xff]
      %v1162 = vld [vmem:[%s0 + $0x10] sm:$0xff]
      %v1163 = vld [vmem:[%s1061] sm:$0xff]
      %v1164 = vld [vmem:[%s1061 + $0x8] sm:$0xf]
      %v1165 = vld [vmem:[%s1091] sm:$0xff]
      %v1166 = vld [vmem:[%s1094] sm:$0x1]
      %v1167 = vld [vmem:[%s1066] sm:$0xff]
      %v1168 = vld [vmem:[%s1066 + $0x8] sm:$0xf]
      %vm1169 = vcmask 195584
      %v1171 = vsel %vm1169, %v1167, 0
      %v1174 = vsel %vm1169, %v1168, 0
      %1176 = vmatprep.subr.mxu0 0.0
      %1177 = vmatpush1.msra.mxu0 %v1160
      %1178 = vmatprep.subr.mxu0 0.0
      %1179 = vmatpush1.msra.mxu0 %v1161
      %1180 = vmatprep.subr.mxu0 0.0
      %1181 = vmatpush1.msra.mxu0 %v1162
      %1182 = vmatprep.subr.mxu0 0.0
      %1183 = vmatpush1.msra.mxu0 0.0
      %1184 = vmatprep.subr.mxu0 0.0
      %1185 = vmatpush1.msra.mxu0 0.0
      %1186 = vmatprep.subr.mxu0 0.0
      %1187 = vmatpush1.msra.mxu0 0.0
      %1188 = vmatprep.subr.mxu0 0.0
      %1189 = vmatpush1.msra.mxu0 0.0
      %1190 = vmatprep.subr.mxu0 0.0
      %1191 = vmatpush1.msra.mxu0 0.0
      %1192 = vmatprep.subr.mxu0 0.0
      %1193 = vmatpush1.msra.mxu0 0.0
      %1194 = vmatprep.subr.mxu0 0.0
      %1195 = vmatpush1.msra.mxu0 0.0
      %1196 = vmatprep.subr.mxu0 0.0
      %1197 = vmatpush1.msra.mxu0 0.0
      %1198 = vmatprep.subr.mxu0 0.0
      %1199 = vmatpush1.msra.mxu0 0.0
      %1200 = vmatprep.subr.mxu0 0.0
      %1201 = vmatpush1.msra.mxu0 0.0
      %1202 = vmatprep.subr.mxu0 0.0
      %1203 = vmatpush1.msra.mxu0 0.0
      %1204 = vmatprep.subr.mxu0 0.0
      %1205 = vmatpush1.msra.mxu0 0.0
      %1206 = vmatprep.subr.mxu0 0.0
      %1207 = vmatpush1.msra.mxu0 0.0
      %1208 = vmatprep.subr.mxu0 0.0
      %1209 = vmatpush1.msra.mxu0 0.0
      %1210 = vmatprep.subr.mxu0 0.0
      %1211 = vmatpush1.msra.mxu0 0.0
      %1212 = vmatprep.subr.mxu0 0.0
      %1213 = vmatpush1.msra.mxu0 0.0
      %1214 = vmatprep.subr.mxu0 0.0
      %1215 = vmatpush1.msra.mxu0 0.0
      %1216 = vmatprep.subr.mxu0 0.0
      %1217 = vmatpush1.msra.mxu0 0.0
      %1218 = vmatprep.subr.mxu0 0.0
      %1219 = vmatpush1.msra.mxu0 0.0
      %1220 = vmatprep.subr.mxu0 0.0
      %1221 = vmatpush1.msra.mxu0 0.0
      %1222 = vmatprep.subr.mxu0 0.0
      %1223 = vmatpush1.msra.mxu0 0.0
      %1224 = vmatprep.subr.mxu0 0.0
      %1225 = vmatpush1.msra.mxu0 0.0
      %1226 = vmatprep.subr.mxu0 0.0
      %1227 = vmatpush1.msra.mxu0 0.0
      %1228 = vmatprep.subr.mxu0 0.0
      %1229 = vmatpush1.msra.mxu0 0.0
      %1230 = vmatprep.subr.mxu0 0.0
      %1231 = vmatpush1.msra.mxu0 0.0
      %1232 = vmatprep.subr.mxu0 0.0
      %1233 = vmatpush1.msra.mxu0 0.0
      %1234 = vmatprep.subr.mxu0 0.0
      %1235 = vmatpush1.msra.mxu0 0.0
      %1236 = vmatprep.subr.mxu0 0.0
      %1237 = vmatpush1.msra.mxu0 0.0
      %1238 = vmatprep.subr.mxu0 0.0
      %1239 = vmatpush1.msra.mxu0 0.0
      %1240 = vmatprep.mubr.f32.mxu0 0.0
      %1241 = vmatmul.mubr.f32.gmra.mrb[0].mxu0 %v1171
      %v1242 = vpop.f32.mrb[0].mxu0
      %v1243 = vadd.f32 0.0, %v1242
      %v1244 = vpop.f32.mrb[0].mxu0
      %1245 = vmatprep.mubr.f32.mxu0 0.0
      %1246 = vmatmul.mubr.f32.gmra.mrb[0].mxu0 %v1174
      %v1247 = vpop.f32.mrb[0].mxu0
      %v1248 = vadd.f32 0.0, %v1247
      %v1249 = vpop.f32.mrb[0].mxu0
      %1250 = vdwg.mxu0
      %v1251 = vld [vmem:[%s1079] sm:$0xff]
      %vm1252 = vcmask 97280
      %v1254 = vsel %vm1252, %v1251, 0
      %vm1256 = vcmask 1043456
      %v1258 = vsel %vm1256, %v1248, 0
      %1260 = vmatprep.subr.mxu0 0.0
      %1261 = vmatpush1.msra.mxu0 %v1243
      %1262 = vmatprep.subr.mxu0 0.0
      %1263 = vmatpush1.msra.mxu0 %v1258
      %1264 = vmatprep.subr.mxu0 0.0
      %1265 = vmatpush1.msra.mxu0 0.0
      %1266 = vmatprep.subr.mxu0 0.0
      %1267 = vmatpush1.msra.mxu0 0.0
      %1268 = vmatprep.subr.mxu0 0.0
      %1269 = vmatpush1.msra.mxu0 0.0
      %1270 = vmatprep.subr.mxu0 0.0
      %1271 = vmatpush1.msra.mxu0 0.0
      %1272 = vmatprep.subr.mxu0 0.0
      %1273 = vmatpush1.msra.mxu0 0.0
      %1274 = vmatprep.subr.mxu0 0.0
      %1275 = vmatpush1.msra.mxu0 0.0
      %1276 = vmatprep.subr.mxu0 0.0
      %1277 = vmatpush1.msra.mxu0 0.0
      %1278 = vmatprep.subr.mxu0 0.0
      %1279 = vmatpush1.msra.mxu0 0.0
      %1280 = vmatprep.subr.mxu0 0.0
      %1281 = vmatpush1.msra.mxu0 0.0
      %1282 = vmatprep.subr.mxu0 0.0
      %1283 = vmatpush1.msra.mxu0 0.0
      %1284 = vmatprep.subr.mxu0 0.0
      %1285 = vmatpush1.msra.mxu0 0.0
      %1286 = vmatprep.subr.mxu0 0.0
      %1287 = vmatpush1.msra.mxu0 0.0
      %1288 = vmatprep.subr.mxu0 0.0
      %1289 = vmatpush1.msra.mxu0 0.0
      %1290 = vmatprep.subr.mxu0 0.0
      %1291 = vmatpush1.msra.mxu0 0.0
      %1292 = vmatprep.subr.mxu0 0.0
      %1293 = vmatpush1.msra.mxu0 0.0
      %1294 = vmatprep.subr.mxu0 0.0
      %1295 = vmatpush1.msra.mxu0 0.0
      %1296 = vmatprep.subr.mxu0 0.0
      %1297 = vmatpush1.msra.mxu0 0.0
      %1298 = vmatprep.subr.mxu0 0.0
      %1299 = vmatpush1.msra.mxu0 0.0
      %1300 = vmatprep.subr.mxu0 0.0
      %1301 = vmatpush1.msra.mxu0 0.0
      %1302 = vmatprep.subr.mxu0 0.0
      %1303 = vmatpush1.msra.mxu0 0.0
      %1304 = vmatprep.subr.mxu0 0.0
      %1305 = vmatpush1.msra.mxu0 0.0
      %1306 = vmatprep.subr.mxu0 0.0
      %1307 = vmatpush1.msra.mxu0 0.0
      %1308 = vmatprep.subr.mxu0 0.0
      %1309 = vmatpush1.msra.mxu0 0.0
      %1310 = vmatprep.subr.mxu0 0.0
      %1311 = vmatpush1.msra.mxu0 0.0
      %1312 = vmatprep.subr.mxu0 0.0
      %1313 = vmatpush1.msra.mxu0 0.0
      %1314 = vmatprep.subr.mxu0 0.0
      %1315 = vmatpush1.msra.mxu0 0.0
      %1316 = vmatprep.subr.mxu0 0.0
      %1317 = vmatpush1.msra.mxu0 0.0
      %1318 = vmatprep.subr.mxu0 0.0
      %1319 = vmatpush1.msra.mxu0 0.0
      %1320 = vmatprep.subr.mxu0 0.0
      %1321 = vmatpush1.msra.mxu0 0.0
      %1322 = vmatprep.subr.mxu0 0.0
      %1323 = vmatpush1.msra.mxu0 0.0
      %1324 = vmatprep.mubr.f32.mxu0 0.0
      %1325 = vmatmul.mubr.f32.gmra.mrb[0].mxu0 %v1254
      %v1326 = vpop.f32.mrb[0].mxu0
      %v1327 = vadd.f32 0.0, %v1326
      %v1328 = vpop.f32.mrb[0].mxu0
      %1329 = vdwg.mxu0
      %v1330 = vld [vmem:[%s1087] sm:$0xff]
      %1332 = vset.pattern.permute.xlu0 0
      %1333 = vperm.xlu0 %1332, %v1330
      %v1334 = vpop.permute.xlu0 %1333
      %v1336 = vmul.f32 %v1327, %v1334
      %v1337 = vld [vmem:[%s1070] sm:$0xff]
      %v1339 = vsel %vm1169, %v1337, 0
      %1341 = vmatprep.subr.mxu0 0.0
      %1342 = vmatpush1.msra.mxu0 %v1160
      %1343 = vmatprep.subr.mxu0 0.0
      %1344 = vmatpush1.msra.mxu0 %v1161
      %1345 = vmatprep.subr.mxu0 0.0
      %1346 = vmatpush1.msra.mxu0 %v1162
      %1347 = vmatprep.subr.mxu0 0.0
      %1348 = vmatpush1.msra.mxu0 0.0
      %1349 = vmatprep.subr.mxu0 0.0
      %1350 = vmatpush1.msra.mxu0 0.0
      %1351 = vmatprep.subr.mxu0 0.0
      %1352 = vmatpush1.msra.mxu0 0.0
      %1353 = vmatprep.subr.mxu0 0.0
      %1354 = vmatpush1.msra.mxu0 0.0
      %1355 = vmatprep.subr.mxu0 0.0
      %1356 = vmatpush1.msra.mxu0 0.0
      %1357 = vmatprep.subr.mxu0 0.0
      %1358 = vmatpush1.msra.mxu0 0.0
      %1359 = vmatprep.subr.mxu0 0.0
      %1360 = vmatpush1.msra.mxu0 0.0
      %1361 = vmatprep.subr.mxu0 0.0
      %1362 = vmatpush1.msra.mxu0 0.0
      %1363 = vmatprep.subr.mxu0 0.0
      %1364 = vmatpush1.msra.mxu0 0.0
      %1365 = vmatprep.subr.mxu0 0.0
      %1366 = vmatpush1.msra.mxu0 0.0
      %1367 = vmatprep.subr.mxu0 0.0
      %1368 = vmatpush1.msra.mxu0 0.0
      %1369 = vmatprep.subr.mxu0 0.0
      %1370 = vmatpush1.msra.mxu0 0.0
      %1371 = vmatprep.subr.mxu0 0.0
      %1372 = vmatpush1.msra.mxu0 0.0
      %1373 = vmatprep.subr.mxu0 0.0
      %1374 = vmatpush1.msra.mxu0 0.0
      %1375 = vmatprep.subr.mxu0 0.0
      %1376 = vmatpush1.msra.mxu0 0.0
      %1377 = vmatprep.subr.mxu0 0.0
      %1378 = vmatpush1.msra.mxu0 0.0
      %1379 = vmatprep.subr.mxu0 0.0
      %1380 = vmatpush1.msra.mxu0 0.0
      %1381 = vmatprep.subr.mxu0 0.0
      %1382 = vmatpush1.msra.mxu0 0.0
      %1383 = vmatprep.subr.mxu0 0.0
      %1384 = vmatpush1.msra.mxu0 0.0
      %1385 = vmatprep.subr.mxu0 0.0
      %1386 = vmatpush1.msra.mxu0 0.0
      %1387 = vmatprep.subr.mxu0 0.0
      %1388 = vmatpush1.msra.mxu0 0.0
      %1389 = vmatprep.subr.mxu0 0.0
      %1390 = vmatpush1.msra.mxu0 0.0
      %1391 = vmatprep.subr.mxu0 0.0
      %1392 = vmatpush1.msra.mxu0 0.0
      %1393 = vmatprep.subr.mxu0 0.0
      %1394 = vmatpush1.msra.mxu0 0.0
      %1395 = vmatprep.subr.mxu0 0.0
      %1396 = vmatpush1.msra.mxu0 0.0
      %1397 = vmatprep.subr.mxu0 0.0
      %1398 = vmatpush1.msra.mxu0 0.0
      %1399 = vmatprep.subr.mxu0 0.0
      %1400 = vmatpush1.msra.mxu0 0.0
      %1401 = vmatprep.subr.mxu0 0.0
      %1402 = vmatpush1.msra.mxu0 0.0
      %1403 = vmatprep.subr.mxu0 0.0
      %1404 = vmatpush1.msra.mxu0 0.0
      %1405 = vmatprep.mubr.f32.mxu0 0.0
      %1406 = vmatmul.mubr.f32.gmra.mrb[0].mxu0 %v1339
      %v1407 = vpop.f32.mrb[0].mxu0
      %v1408 = vadd.f32 0.0, %v1407
      %v1409 = vpop.f32.mrb[0].mxu0
      %1410 = vdwg.mxu0
      %v1411 = vld [vmem:[%s1099] sm:$0xff]
      %v1412 = vld [vmem:[%s1099 + $0x8] sm:$0xff]
      %v1413 = vld [vmem:[%s1102] sm:$0x1]
      %v1415 = vlaneseq
      %v1416 = vshrl.u32 %v1415, 7
      %v1417 = vsub.s32 0, %v1416
      %v1418 = vrot.slane %v1413, %v1417
      %vm1420 = vcmask 130048
      %v1422 = vsel %vm1420, %v1336, 0
      %1424 = vmatprep.subr.mxu0 0.0
      %1425 = vmatpush1.msra.mxu0 %v1411
      %1426 = vmatprep.subr.mxu0 0.0
      %1427 = vmatpush1.msra.mxu0 %v1412
      %1428 = vmatprep.subr.mxu0 0.0
      %1429 = vmatpush1.msra.mxu0 0.0
      %1430 = vmatprep.subr.mxu0 0.0
      %1431 = vmatpush1.msra.mxu0 0.0
      %1432 = vmatprep.subr.mxu0 0.0
      %1433 = vmatpush1.msra.mxu0 0.0
      %1434 = vmatprep.subr.mxu0 0.0
      %1435 = vmatpush1.msra.mxu0 0.0
      %1436 = vmatprep.subr.mxu0 0.0
      %1437 = vmatpush1.msra.mxu0 0.0
      %1438 = vmatprep.subr.mxu0 0.0
      %1439 = vmatpush1.msra.mxu0 0.0
      %1440 = vmatprep.subr.mxu0 0.0
      %1441 = vmatpush1.msra.mxu0 0.0
      %1442 = vmatprep.subr.mxu0 0.0
      %1443 = vmatpush1.msra.mxu0 0.0
      %1444 = vmatprep.subr.mxu0 0.0
      %1445 = vmatpush1.msra.mxu0 0.0
      %1446 = vmatprep.subr.mxu0 0.0
      %1447 = vmatpush1.msra.mxu0 0.0
      %1448 = vmatprep.subr.mxu0 0.0
      %1449 = vmatpush1.msra.mxu0 0.0
      %1450 = vmatprep.subr.mxu0 0.0
      %1451 = vmatpush1.msra.mxu0 0.0
      %1452 = vmatprep.subr.mxu0 0.0
      %1453 = vmatpush1.msra.mxu0 0.0
      %1454 = vmatprep.subr.mxu0 0.0
      %1455 = vmatpush1.msra.mxu0 0.0
      %1456 = vmatprep.subr.mxu0 0.0
      %1457 = vmatpush1.msra.mxu0 0.0
      %1458 = vmatprep.subr.mxu0 0.0
      %1459 = vmatpush1.msra.mxu0 0.0
      %1460 = vmatprep.subr.mxu0 0.0
      %1461 = vmatpush1.msra.mxu0 0.0
      %1462 = vmatprep.subr.mxu0 0.0
      %1463 = vmatpush1.msra.mxu0 0.0
      %1464 = vmatprep.subr.mxu0 0.0
      %1465 = vmatpush1.msra.mxu0 0.0
      %1466 = vmatprep.subr.mxu0 0.0
      %1467 = vmatpush1.msra.mxu0 0.0
      %1468 = vmatprep.subr.mxu0 0.0
      %1469 = vmatpush1.msra.mxu0 0.0
      %1470 = vmatprep.subr.mxu0 0.0
      %1471 = vmatpush1.msra.mxu0 0.0
      %1472 = vmatprep.subr.mxu0 0.0
      %1473 = vmatpush1.msra.mxu0 0.0
      %1474 = vmatprep.subr.mxu0 0.0
      %1475 = vmatpush1.msra.mxu0 0.0
      %1476 = vmatprep.subr.mxu0 0.0
      %1477 = vmatpush1.msra.mxu0 0.0
      %1478 = vmatprep.subr.mxu0 0.0
      %1479 = vmatpush1.msra.mxu0 0.0
      %1480 = vmatprep.subr.mxu0 0.0
      %1481 = vmatpush1.msra.mxu0 0.0
      %1482 = vmatprep.subr.mxu0 0.0
      %1483 = vmatpush1.msra.mxu0 0.0
      %1484 = vmatprep.subr.mxu0 0.0
      %1485 = vmatpush1.msra.mxu0 0.0
      %1486 = vmatprep.subr.mxu0 0.0
      %1487 = vmatpush1.msra.mxu0 0.0
      %1488 = vmatprep.mubr.f32.mxu0 0.0
      %1489 = vmatmul.mubr.f32.gmra.mrb[0].mxu0 %v1422
      %v1490 = vpop.f32.mrb[0].mxu0
      %v1491 = vadd.f32 %v1418, %v1490
      %v1492 = vpop.f32.mrb[0].mxu0
      %1493 = vdwg.mxu0
      %v1494 = vld [vmem:[%s1107] sm:$0xff]
      %v1495 = vld [vmem:[%s1107 + $0x8] sm:$0xff]
      %v1497 = vsel %vm1420, %v1408, 0
      %1499 = vmatprep.subr.mxu0 0.0
      %1500 = vmatpush1.msra.mxu0 %v1494
      %1501 = vmatprep.subr.mxu0 0.0
      %1502 = vmatpush1.msra.mxu0 %v1495
      %1503 = vmatprep.subr.mxu0 0.0
      %1504 = vmatpush1.msra.mxu0 0.0
      %1505 = vmatprep.subr.mxu0 0.0
      %1506 = vmatpush1.msra.mxu0 0.0
      %1507 = vmatprep.subr.mxu0 0.0
      %1508 = vmatpush1.msra.mxu0 0.0
      %1509 = vmatprep.subr.mxu0 0.0
      %1510 = vmatpush1.msra.mxu0 0.0
      %1511 = vmatprep.subr.mxu0 0.0
      %1512 = vmatpush1.msra.mxu0 0.0
      %1513 = vmatprep.subr.mxu0 0.0
      %1514 = vmatpush1.msra.mxu0 0.0
      %1515 = vmatprep.subr.mxu0 0.0
      %1516 = vmatpush1.msra.mxu0 0.0
      %1517 = vmatprep.subr.mxu0 0.0
      %1518 = vmatpush1.msra.mxu0 0.0
      %1519 = vmatprep.subr.mxu0 0.0
      %1520 = vmatpush1.msra.mxu0 0.0
      %1521 = vmatprep.subr.mxu0 0.0
      %1522 = vmatpush1.msra.mxu0 0.0
      %1523 = vmatprep.subr.mxu0 0.0
      %1524 = vmatpush1.msra.mxu0 0.0
      %1525 = vmatprep.subr.mxu0 0.0
      %1526 = vmatpush1.msra.mxu0 0.0
      %1527 = vmatprep.subr.mxu0 0.0
      %1528 = vmatpush1.msra.mxu0 0.0
      %1529 = vmatprep.subr.mxu0 0.0
      %1530 = vmatpush1.msra.mxu0 0.0
      %1531 = vmatprep.subr.mxu0 0.0
      %1532 = vmatpush1.msra.mxu0 0.0
      %1533 = vmatprep.subr.mxu0 0.0
      %1534 = vmatpush1.msra.mxu0 0.0
      %1535 = vmatprep.subr.mxu0 0.0
      %1536 = vmatpush1.msra.mxu0 0.0
      %1537 = vmatprep.subr.mxu0 0.0
      %1538 = vmatpush1.msra.mxu0 0.0
      %1539 = vmatprep.subr.mxu0 0.0
      %1540 = vmatpush1.msra.mxu0 0.0
      %1541 = vmatprep.subr.mxu0 0.0
      %1542 = vmatpush1.msra.mxu0 0.0
      %1543 = vmatprep.subr.mxu0 0.0
      %1544 = vmatpush1.msra.mxu0 0.0
      %1545 = vmatprep.subr.mxu0 0.0
      %1546 = vmatpush1.msra.mxu0 0.0
      %1547 = vmatprep.subr.mxu0 0.0
      %1548 = vmatpush1.msra.mxu0 0.0
      %1549 = vmatprep.subr.mxu0 0.0
      %1550 = vmatpush1.msra.mxu0 0.0
      %1551 = vmatprep.subr.mxu0 0.0
      %1552 = vmatpush1.msra.mxu0 0.0
      %1553 = vmatprep.subr.mxu0 0.0
      %1554 = vmatpush1.msra.mxu0 0.0
      %1555 = vmatprep.subr.mxu0 0.0
      %1556 = vmatpush1.msra.mxu0 0.0
      %1557 = vmatprep.subr.mxu0 0.0
      %1558 = vmatpush1.msra.mxu0 0.0
      %1559 = vmatprep.subr.mxu0 0.0
      %1560 = vmatpush1.msra.mxu0 0.0
      %1561 = vmatprep.subr.mxu0 0.0
      %1562 = vmatpush1.msra.mxu0 0.0
      %1563 = vmatprep.mubr.f32.mxu0 0.0
      %1564 = vmatmul.mubr.f32.gmra.mrb[0].mxu0 %v1497
      %v1565 = vpop.f32.mrb[0].mxu0
      %v1566 = vadd.f32 0.0, %v1565
      %v1567 = vpop.f32.mrb[0].mxu0
      %1568 = vdwg.mxu0
      %v1569 = vadd.f32 %v1491, %v1566
      %v1570 = vld [vmem:[%s1112] sm:$0xff]
      %v1571 = vld [vmem:[%s1112 + $0x8] sm:$0xff]
      %v1572 = vld [vmem:[%s1112 + $0x10] sm:$0xff]
      %v1573 = vld [vmem:[%s1112 + $0x18] sm:$0xff]
      %v1574 = vld [vmem:[%s1115] sm:$0x1]
      %v1576 = vlaneseq
      %v1577 = vshrl.u32 %v1576, 7
      %v1578 = vsub.s32 0, %v1577
      %v1579 = vrot.slane %v1574, %v1578
      %vm1581 = vcmask 261120
      %v1583 = vsel %vm1581, %v1163, 0
      %v1586 = vsel %vm1581, %v1164, 0
      %1588 = vmatprep.subr.mxu0 0.0
      %1589 = vmatpush1.msra.mxu0 %v1570
      %1590 = vmatprep.subr.mxu0 0.0
      %1591 = vmatpush1.msra.mxu0 %v1571
      %1592 = vmatprep.subr.mxu0 0.0
      %1593 = vmatpush1.msra.mxu0 %v1572
      %1594 = vmatprep.subr.mxu0 0.0
      %1595 = vmatpush1.msra.mxu0 %v1573
      %1596 = vmatprep.subr.mxu0 0.0
      %1597 = vmatpush1.msra.mxu0 0.0
      %1598 = vmatprep.subr.mxu0 0.0
      %1599 = vmatpush1.msra.mxu0 0.0
      %1600 = vmatprep.subr.mxu0 0.0
      %1601 = vmatpush1.msra.mxu0 0.0
      %1602 = vmatprep.subr.mxu0 0.0
      %1603 = vmatpush1.msra.mxu0 0.0
      %1604 = vmatprep.subr.mxu0 0.0
      %1605 = vmatpush1.msra.mxu0 0.0
      %1606 = vmatprep.subr.mxu0 0.0
      %1607 = vmatpush1.msra.mxu0 0.0
      %1608 = vmatprep.subr.mxu0 0.0
      %1609 = vmatpush1.msra.mxu0 0.0
      %1610 = vmatprep.subr.mxu0 0.0
      %1611 = vmatpush1.msra.mxu0 0.0
      %1612 = vmatprep.subr.mxu0 0.0
      %1613 = vmatpush1.msra.mxu0 0.0
      %1614 = vmatprep.subr.mxu0 0.0
      %1615 = vmatpush1.msra.mxu0 0.0
      %1616 = vmatprep.subr.mxu0 0.0
      %1617 = vmatpush1.msra.mxu0 0.0
      %1618 = vmatprep.subr.mxu0 0.0
      %1619 = vmatpush1.msra.mxu0 0.0
      %1620 = vmatprep.subr.mxu0 0.0
      %1621 = vmatpush1.msra.mxu0 0.0
      %1622 = vmatprep.subr.mxu0 0.0
      %1623 = vmatpush1.msra.mxu0 0.0
      %1624 = vmatprep.subr.mxu0 0.0
      %1625 = vmatpush1.msra.mxu0 0.0
      %1626 = vmatprep.subr.mxu0 0.0
      %1627 = vmatpush1.msra.mxu0 0.0
      %1628 = vmatprep.subr.mxu0 0.0
      %1629 = vmatpush1.msra.mxu0 0.0
      %1630 = vmatprep.subr.mxu0 0.0
      %1631 = vmatpush1.msra.mxu0 0.0
      %1632 = vmatprep.subr.mxu0 0.0
      %1633 = vmatpush1.msra.mxu0 0.0
      %1634 = vmatprep.subr.mxu0 0.0
      %1635 = vmatpush1.msra.mxu0 0.0
      %1636 = vmatprep.subr.mxu0 0.0
      %1637 = vmatpush1.msra.mxu0 0.0
      %1638 = vmatprep.subr.mxu0 0.0
      %1639 = vmatpush1.msra.mxu0 0.0
      %1640 = vmatprep.subr.mxu0 0.0
      %1641 = vmatpush1.msra.mxu0 0.0
      %1642 = vmatprep.subr.mxu0 0.0
      %1643 = vmatpush1.msra.mxu0 0.0
      %1644 = vmatprep.subr.mxu0 0.0
      %1645 = vmatpush1.msra.mxu0 0.0
      %1646 = vmatprep.subr.mxu0 0.0
      %1647 = vmatpush1.msra.mxu0 0.0
      %1648 = vmatprep.subr.mxu0 0.0
      %1649 = vmatpush1.msra.mxu0 0.0
      %1650 = vmatprep.subr.mxu0 0.0
      %1651 = vmatpush1.msra.mxu0 0.0
      %1652 = vmatprep.mubr.f32.mxu0 0.0
      %1653 = vmatmul.mubr.f32.gmra.mrb[0].mxu0 %v1583
      %v1654 = vpop.f32.mrb[0].mxu0
      %v1655 = vadd.f32 %v1579, %v1654
      %v1656 = vpop.f32.mrb[0].mxu0
      %1657 = vmatprep.mubr.f32.mxu0 0.0
      %1658 = vmatmul.mubr.f32.gmra.mrb[0].mxu0 %v1586
      %v1659 = vpop.f32.mrb[0].mxu0
      %v1660 = vadd.f32 %v1579, %v1659
      %v1661 = vpop.f32.mrb[0].mxu0
      %1662 = vdwg.mxu0
      %v1663 = vmax.f32 %v1655, 0.0
      %v1664 = vmax.f32 %v1660, 0.0
      %v1665 = vld [vmem:[%s1120] sm:$0xff]
      %v1666 = vld [vmem:[%s1120 + $0x8] sm:$0xff]
      %v1667 = vld [vmem:[%s1123] sm:$0x1]
      %v1669 = vlaneseq
      %v1670 = vshrl.u32 %v1669, 7
      %v1671 = vsub.s32 0, %v1670
      %v1672 = vrot.slane %v1667, %v1671
      %v1675 = vsel %vm1420, %v1663, 0
      %v1678 = vsel %vm1420, %v1664, 0
      %1680 = vmatprep.subr.mxu0 0.0
      %1681 = vmatpush1.msra.mxu0 %v1665
      %1682 = vmatprep.subr.mxu0 0.0
      %1683 = vmatpush1.msra.mxu0 %v1666
      %1684 = vmatprep.subr.mxu0 0.0
      %1685 = vmatpush1.msra.mxu0 0.0
      %1686 = vmatprep.subr.mxu0 0.0
      %1687 = vmatpush1.msra.mxu0 0.0
      %1688 = vmatprep.subr.mxu0 0.0
      %1689 = vmatpush1.msra.mxu0 0.0
      %1690 = vmatprep.subr.mxu0 0.0
      %1691 = vmatpush1.msra.mxu0 0.0
      %1692 = vmatprep.subr.mxu0 0.0
      %1693 = vmatpush1.msra.mxu0 0.0
      %1694 = vmatprep.subr.mxu0 0.0
      %1695 = vmatpush1.msra.mxu0 0.0
      %1696 = vmatprep.subr.mxu0 0.0
      %1697 = vmatpush1.msra.mxu0 0.0
      %1698 = vmatprep.subr.mxu0 0.0
      %1699 = vmatpush1.msra.mxu0 0.0
      %1700 = vmatprep.subr.mxu0 0.0
      %1701 = vmatpush1.msra.mxu0 0.0
      %1702 = vmatprep.subr.mxu0 0.0
      %1703 = vmatpush1.msra.mxu0 0.0
      %1704 = vmatprep.subr.mxu0 0.0
      %1705 = vmatpush1.msra.mxu0 0.0
      %1706 = vmatprep.subr.mxu0 0.0
      %1707 = vmatpush1.msra.mxu0 0.0
      %1708 = vmatprep.subr.mxu0 0.0
      %1709 = vmatpush1.msra.mxu0 0.0
      %1710 = vmatprep.subr.mxu0 0.0
      %1711 = vmatpush1.msra.mxu0 0.0
      %1712 = vmatprep.subr.mxu0 0.0
      %1713 = vmatpush1.msra.mxu0 0.0
      %1714 = vmatprep.subr.mxu0 0.0
      %1715 = vmatpush1.msra.mxu0 0.0
      %1716 = vmatprep.subr.mxu0 0.0
      %1717 = vmatpush1.msra.mxu0 0.0
      %1718 = vmatprep.subr.mxu0 0.0
      %1719 = vmatpush1.msra.mxu0 0.0
      %1720 = vmatprep.subr.mxu0 0.0
      %1721 = vmatpush1.msra.mxu0 0.0
      %1722 = vmatprep.subr.mxu0 0.0
      %1723 = vmatpush1.msra.mxu0 0.0
      %1724 = vmatprep.subr.mxu0 0.0
      %1725 = vmatpush1.msra.mxu0 0.0
      %1726 = vmatprep.subr.mxu0 0.0
      %1727 = vmatpush1.msra.mxu0 0.0
      %1728 = vmatprep.subr.mxu0 0.0
      %1729 = vmatpush1.msra.mxu0 0.0
      %1730 = vmatprep.subr.mxu0 0.0
      %1731 = vmatpush1.msra.mxu0 0.0
      %1732 = vmatprep.subr.mxu0 0.0
      %1733 = vmatpush1.msra.mxu0 0.0
      %1734 = vmatprep.subr.mxu0 0.0
      %1735 = vmatpush1.msra.mxu0 0.0
      %1736 = vmatprep.subr.mxu0 0.0
      %1737 = vmatpush1.msra.mxu0 0.0
      %1738 = vmatprep.subr.mxu0 0.0
      %1739 = vmatpush1.msra.mxu0 0.0
      %1740 = vmatprep.subr.mxu0 0.0
      %1741 = vmatpush1.msra.mxu0 0.0
      %1742 = vmatprep.subr.mxu0 0.0
      %1743 = vmatpush1.msra.mxu0 0.0
      %1744 = vmatprep.mubr.f32.mxu0 0.0
      %1745 = vmatmul.mubr.f32.gmra.mrb[0].mxu0 %v1675
      %v1746 = vpop.f32.mrb[0].mxu0
      %v1747 = vadd.f32 %v1672, %v1746
      %v1748 = vpop.f32.mrb[0].mxu0
      %1749 = vmatprep.mubr.f32.mxu0 0.0
      %1750 = vmatmul.mubr.f32.gmra.mrb[0].mxu0 %v1678
      %v1751 = vpop.f32.mrb[0].mxu0
      %v1752 = vadd.f32 %v1672, %v1751
      %v1753 = vpop.f32.mrb[0].mxu0
      %1754 = vdwg.mxu0
      %v1755 = vld [vmem:[%s1128] sm:$0xff]
      %v1756 = vld [vmem:[%s1128 + $0x8] sm:$0xff]
      %v1757 = vld [vmem:[%s1128 + $0x10] sm:$0xff]
      %v1758 = vld [vmem:[%s1128 + $0x18] sm:$0xff]
      %v1759 = vld [vmem:[%s1131] sm:$0x1]
      %v1761 = vlaneseq
      %v1762 = vshrl.u32 %v1761, 7
      %v1763 = vsub.s32 0, %v1762
      %v1764 = vrot.slane %v1759, %v1763
      %1766 = vmatprep.subr.mxu0 0.0
      %1767 = vmatpush1.msra.mxu0 %v1755
      %1768 = vmatprep.subr.mxu0 0.0
      %1769 = vmatpush1.msra.mxu0 %v1756
      %1770 = vmatprep.subr.mxu0 0.0
      %1771 = vmatpush1.msra.mxu0 %v1757
      %1772 = vmatprep.subr.mxu0 0.0
      %1773 = vmatpush1.msra.mxu0 %v1758
      %1774 = vmatprep.subr.mxu0 0.0
      %1775 = vmatpush1.msra.mxu0 0.0
      %1776 = vmatprep.subr.mxu0 0.0
      %1777 = vmatpush1.msra.mxu0 0.0
      %1778 = vmatprep.subr.mxu0 0.0
      %1779 = vmatpush1.msra.mxu0 0.0
      %1780 = vmatprep.subr.mxu0 0.0
      %1781 = vmatpush1.msra.mxu0 0.0
      %1782 = vmatprep.subr.mxu0 0.0
      %1783 = vmatpush1.msra.mxu0 0.0
      %1784 = vmatprep.subr.mxu0 0.0
      %1785 = vmatpush1.msra.mxu0 0.0
      %1786 = vmatprep.subr.mxu0 0.0
      %1787 = vmatpush1.msra.mxu0 0.0
      %1788 = vmatprep.subr.mxu0 0.0
      %1789 = vmatpush1.msra.mxu0 0.0
      %1790 = vmatprep.subr.mxu0 0.0
      %1791 = vmatpush1.msra.mxu0 0.0
      %1792 = vmatprep.subr.mxu0 0.0
      %1793 = vmatpush1.msra.mxu0 0.0
      %1794 = vmatprep.subr.mxu0 0.0
      %1795 = vmatpush1.msra.mxu0 0.0
      %1796 = vmatprep.subr.mxu0 0.0
      %1797 = vmatpush1.msra.mxu0 0.0
      %1798 = vmatprep.subr.mxu0 0.0
      %1799 = vmatpush1.msra.mxu0 0.0
      %1800 = vmatprep.subr.mxu0 0.0
      %1801 = vmatpush1.msra.mxu0 0.0
      %1802 = vmatprep.subr.mxu0 0.0
      %1803 = vmatpush1.msra.mxu0 0.0
      %1804 = vmatprep.subr.mxu0 0.0
      %1805 = vmatpush1.msra.mxu0 0.0
      %1806 = vmatprep.subr.mxu0 0.0
      %1807 = vmatpush1.msra.mxu0 0.0
      %1808 = vmatprep.subr.mxu0 0.0
      %1809 = vmatpush1.msra.mxu0 0.0
      %1810 = vmatprep.subr.mxu0 0.0
      %1811 = vmatpush1.msra.mxu0 0.0
      %1812 = vmatprep.subr.mxu0 0.0
      %1813 = vmatpush1.msra.mxu0 0.0
      %1814 = vmatprep.subr.mxu0 0.0
      %1815 = vmatpush1.msra.mxu0 0.0
      %1816 = vmatprep.subr.mxu0 0.0
      %1817 = vmatpush1.msra.mxu0 0.0
      %1818 = vmatprep.subr.mxu0 0.0
      %1819 = vmatpush1.msra.mxu0 0.0
      %1820 = vmatprep.subr.mxu0 0.0
      %1821 = vmatpush1.msra.mxu0 0.0
      %1822 = vmatprep.subr.mxu0 0.0
      %1823 = vmatpush1.msra.mxu0 0.0
      %1824 = vmatprep.subr.mxu0 0.0
      %1825 = vmatpush1.msra.mxu0 0.0
      %1826 = vmatprep.subr.mxu0 0.0
      %1827 = vmatpush1.msra.mxu0 0.0
      %1828 = vmatprep.subr.mxu0 0.0
      %1829 = vmatpush1.msra.mxu0 0.0
      %1830 = vmatprep.mubr.f32.mxu0 0.0
      %1831 = vmatmul.mubr.f32.gmra.mrb[0].mxu0 %v1583
      %v1832 = vpop.f32.mrb[0].mxu0
      %v1833 = vadd.f32 %v1764, %v1832
      %v1834 = vpop.f32.mrb[0].mxu0
      %1835 = vmatprep.mubr.f32.mxu0 0.0
      %1836 = vmatmul.mubr.f32.gmra.mrb[0].mxu0 %v1586
      %v1837 = vpop.f32.mrb[0].mxu0
      %v1838 = vadd.f32 %v1764, %v1837
      %v1839 = vpop.f32.mrb[0].mxu0
      %1840 = vdwg.mxu0
      %v1841 = vadd.f32 %v1747, %v1833
      %v1842 = vadd.f32 %v1752, %v1838
      %v1843 = vld [vmem:[%s1075] sm:$0xff]
      %v1844 = vld [vmem:[%s1075 + $0x8] sm:$0xf]
      %vm1845 = vcmask 64512
      %v1847 = vsel %vm1845, %v1843, 0
      %v1850 = vsel %vm1845, %v1844, 0
      %1852 = vmatprep.subr.mxu0 0.0
      %1853 = vmatpush1.msra.mxu0 %v1569
      %1854 = vmatprep.subr.mxu0 0.0
      %1855 = vmatpush1.msra.mxu0 0.0
      %1856 = vmatprep.subr.mxu0 0.0
      %1857 = vmatpush1.msra.mxu0 0.0
      %1858 = vmatprep.subr.mxu0 0.0
      %1859 = vmatpush1.msra.mxu0 0.0
      %1860 = vmatprep.subr.mxu0 0.0
      %1861 = vmatpush1.msra.mxu0 0.0
      %1862 = vmatprep.subr.mxu0 0.0
      %1863 = vmatpush1.msra.mxu0 0.0
      %1864 = vmatprep.subr.mxu0 0.0
      %1865 = vmatpush1.msra.mxu0 0.0
      %1866 = vmatprep.subr.mxu0 0.0
      %1867 = vmatpush1.msra.mxu0 0.0
      %1868 = vmatprep.subr.mxu0 0.0
      %1869 = vmatpush1.msra.mxu0 0.0
      %1870 = vmatprep.subr.mxu0 0.0
      %1871 = vmatpush1.msra.mxu0 0.0
      %1872 = vmatprep.subr.mxu0 0.0
      %1873 = vmatpush1.msra.mxu0 0.0
      %1874 = vmatprep.subr.mxu0 0.0
      %1875 = vmatpush1.msra.mxu0 0.0
      %1876 = vmatprep.subr.mxu0 0.0
      %1877 = vmatpush1.msra.mxu0 0.0
      %1878 = vmatprep.subr.mxu0 0.0
      %1879 = vmatpush1.msra.mxu0 0.0
      %1880 = vmatprep.subr.mxu0 0.0
      %1881 = vmatpush1.msra.mxu0 0.0
      %1882 = vmatprep.subr.mxu0 0.0
      %1883 = vmatpush1.msra.mxu0 0.0
      %1884 = vmatprep.subr.mxu0 0.0
      %1885 = vmatpush1.msra.mxu0 0.0
      %1886 = vmatprep.subr.mxu0 0.0
      %1887 = vmatpush1.msra.mxu0 0.0
      %1888 = vmatprep.subr.mxu0 0.0
      %1889 = vmatpush1.msra.mxu0 0.0
      %1890 = vmatprep.subr.mxu0 0.0
      %1891 = vmatpush1.msra.mxu0 0.0
      %1892 = vmatprep.subr.mxu0 0.0
      %1893 = vmatpush1.msra.mxu0 0.0
      %1894 = vmatprep.subr.mxu0 0.0
      %1895 = vmatpush1.msra.mxu0 0.0
      %1896 = vmatprep.subr.mxu0 0.0
      %1897 = vmatpush1.msra.mxu0 0.0
      %1898 = vmatprep.subr.mxu0 0.0
      %1899 = vmatpush1.msra.mxu0 0.0
      %1900 = vmatprep.subr.mxu0 0.0
      %1901 = vmatpush1.msra.mxu0 0.0
      %1902 = vmatprep.subr.mxu0 0.0
      %1903 = vmatpush1.msra.mxu0 0.0
      %1904 = vmatprep.subr.mxu0 0.0
      %1905 = vmatpush1.msra.mxu0 0.0
      %1906 = vmatprep.subr.mxu0 0.0
      %1907 = vmatpush1.msra.mxu0 0.0
      %1908 = vmatprep.subr.mxu0 0.0
      %1909 = vmatpush1.msra.mxu0 0.0
      %1910 = vmatprep.subr.mxu0 0.0
      %1911 = vmatpush1.msra.mxu0 0.0
      %1912 = vmatprep.subr.mxu0 0.0
      %1913 = vmatpush1.msra.mxu0 0.0
      %1914 = vmatprep.subr.mxu0 0.0
      %1915 = vmatpush1.msra.mxu0 0.0
      %1916 = vmatprep.mubr.f32.mxu0 0.0
      %1917 = vmatmul.mubr.f32.gmra.mrb[0].mxu0 %v1847
      %v1918 = vpop.f32.mrb[0].mxu0
      %v1919 = vadd.f32 0.0, %v1918
      %v1920 = vpop.f32.mrb[0].mxu0
      %1921 = vmatprep.mubr.f32.mxu0 0.0
      %1922 = vmatmul.mubr.f32.gmra.mrb[0].mxu0 %v1850
      %v1923 = vpop.f32.mrb[0].mxu0
      %v1924 = vadd.f32 0.0, %v1923
      %v1925 = vpop.f32.mrb[0].mxu0
      %1926 = vdwg.mxu0
      %v1927 = vld [vmem:[%s1136] sm:$0xff]
      %v1928 = vld [vmem:[%s1136 + $0x8] sm:$0xff]
      %v1929 = vld [vmem:[%s1141] sm:$0xff]
      %v1930 = vld [vmem:[%s1141 + $0x8] sm:$0xff]
      %v1932 = vsel %vm1420, %v1841, 0
      %v1935 = vsel %vm1420, %v1842, 0
      %1937 = vmatprep.subr.mxu0 0.0
      %1938 = vmatpush1.msra.mxu0 %v1929
      %1939 = vmatprep.subr.mxu0 0.0
      %1940 = vmatpush1.msra.mxu0 %v1930
      %1941 = vmatprep.subr.mxu0 0.0
      %1942 = vmatpush1.msra.mxu0 0.0
      %1943 = vmatprep.subr.mxu0 0.0
      %1944 = vmatpush1.msra.mxu0 0.0
      %1945 = vmatprep.subr.mxu0 0.0
      %1946 = vmatpush1.msra.mxu0 0.0
      %1947 = vmatprep.subr.mxu0 0.0
      %1948 = vmatpush1.msra.mxu0 0.0
      %1949 = vmatprep.subr.mxu0 0.0
      %1950 = vmatpush1.msra.mxu0 0.0
      %1951 = vmatprep.subr.mxu0 0.0
      %1952 = vmatpush1.msra.mxu0 0.0
      %1953 = vmatprep.subr.mxu0 0.0
      %1954 = vmatpush1.msra.mxu0 0.0
      %1955 = vmatprep.subr.mxu0 0.0
      %1956 = vmatpush1.msra.mxu0 0.0
      %1957 = vmatprep.subr.mxu0 0.0
      %1958 = vmatpush1.msra.mxu0 0.0
      %1959 = vmatprep.subr.mxu0 0.0
      %1960 = vmatpush1.msra.mxu0 0.0
      %1961 = vmatprep.subr.mxu0 0.0
      %1962 = vmatpush1.msra.mxu0 0.0
      %1963 = vmatprep.subr.mxu0 0.0
      %1964 = vmatpush1.msra.mxu0 0.0
      %1965 = vmatprep.subr.mxu0 0.0
      %1966 = vmatpush1.msra.mxu0 0.0
      %1967 = vmatprep.subr.mxu0 0.0
      %1968 = vmatpush1.msra.mxu0 0.0
      %1969 = vmatprep.subr.mxu0 0.0
      %1970 = vmatpush1.msra.mxu0 0.0
      %1971 = vmatprep.subr.mxu0 0.0
      %1972 = vmatpush1.msra.mxu0 0.0
      %1973 = vmatprep.subr.mxu0 0.0
      %1974 = vmatpush1.msra.mxu0 0.0
      %1975 = vmatprep.subr.mxu0 0.0
      %1976 = vmatpush1.msra.mxu0 0.0
      %1977 = vmatprep.subr.mxu0 0.0
      %1978 = vmatpush1.msra.mxu0 0.0
      %1979 = vmatprep.subr.mxu0 0.0
      %1980 = vmatpush1.msra.mxu0 0.0
      %1981 = vmatprep.subr.mxu0 0.0
      %1982 = vmatpush1.msra.mxu0 0.0
      %1983 = vmatprep.subr.mxu0 0.0
      %1984 = vmatpush1.msra.mxu0 0.0
      %1985 = vmatprep.subr.mxu0 0.0
      %1986 = vmatpush1.msra.mxu0 0.0
      %1987 = vmatprep.subr.mxu0 0.0
      %1988 = vmatpush1.msra.mxu0 0.0
      %1989 = vmatprep.subr.mxu0 0.0
      %1990 = vmatpush1.msra.mxu0 0.0
      %1991 = vmatprep.subr.mxu0 0.0
      %1992 = vmatpush1.msra.mxu0 0.0
      %1993 = vmatprep.subr.mxu0 0.0
      %1994 = vmatpush1.msra.mxu0 0.0
      %1995 = vmatprep.subr.mxu0 0.0
      %1996 = vmatpush1.msra.mxu0 0.0
      %1997 = vmatprep.subr.mxu0 0.0
      %1998 = vmatpush1.msra.mxu0 0.0
      %1999 = vmatprep.subr.mxu0 0.0
      %2000 = vmatpush1.msra.mxu0 0.0
      %2001 = vmatprep.mubr.f32.mxu0 0.0
      %2002 = vmatmul.mubr.f32.gmra.mrb[0].mxu0 %v1932
      %v2003 = vpop.f32.mrb[0].mxu0
      %v2004 = vadd.f32 0.0, %v2003
      %v2005 = vpop.f32.mrb[0].mxu0
      %2006 = vmatprep.mubr.f32.mxu0 0.0
      %2007 = vmatmul.mubr.f32.gmra.mrb[0].mxu0 %v1935
      %v2008 = vpop.f32.mrb[0].mxu0
      %v2009 = vadd.f32 0.0, %v2008
      %v2010 = vpop.f32.mrb[0].mxu0
      %2011 = vdwg.mxu0
      %v2013 = vsel %vm1420, %v1919, 0
      %v2016 = vsel %vm1420, %v1924, 0
      %2018 = vmatprep.subr.mxu0 0.0
      %2019 = vmatpush1.msra.mxu0 %v1927
      %2020 = vmatprep.subr.mxu0 0.0
      %2021 = vmatpush1.msra.mxu0 %v1928
      %2022 = vmatprep.subr.mxu0 0.0
      %2023 = vmatpush1.msra.mxu0 0.0
      %2024 = vmatprep.subr.mxu0 0.0
      %2025 = vmatpush1.msra.mxu0 0.0
      %2026 = vmatprep.subr.mxu0 0.0
      %2027 = vmatpush1.msra.mxu0 0.0
      %2028 = vmatprep.subr.mxu0 0.0
      %2029 = vmatpush1.msra.mxu0 0.0
      %2030 = vmatprep.subr.mxu0 0.0
      %2031 = vmatpush1.msra.mxu0 0.0
      %2032 = vmatprep.subr.mxu0 0.0
      %2033 = vmatpush1.msra.mxu0 0.0
      %2034 = vmatprep.subr.mxu0 0.0
      %2035 = vmatpush1.msra.mxu0 0.0
      %2036 = vmatprep.subr.mxu0 0.0
      %2037 = vmatpush1.msra.mxu0 0.0
      %2038 = vmatprep.subr.mxu0 0.0
      %2039 = vmatpush1.msra.mxu0 0.0
      %2040 = vmatprep.subr.mxu0 0.0
      %2041 = vmatpush1.msra.mxu0 0.0
      %2042 = vmatprep.subr.mxu0 0.0
      %2043 = vmatpush1.msra.mxu0 0.0
      %2044 = vmatprep.subr.mxu0 0.0
      %2045 = vmatpush1.msra.mxu0 0.0
      %2046 = vmatprep.subr.mxu0 0.0
      %2047 = vmatpush1.msra.mxu0 0.0
      %2048 = vmatprep.subr.mxu0 0.0
      %2049 = vmatpush1.msra.mxu0 0.0
      %2050 = vmatprep.subr.mxu0 0.0
      %2051 = vmatpush1.msra.mxu0 0.0
      %2052 = vmatprep.subr.mxu0 0.0
      %2053 = vmatpush1.msra.mxu0 0.0
      %2054 = vmatprep.subr.mxu0 0.0
      %2055 = vmatpush1.msra.mxu0 0.0
      %2056 = vmatprep.subr.mxu0 0.0
      %2057 = vmatpush1.msra.mxu0 0.0
      %2058 = vmatprep.subr.mxu0 0.0
      %2059 = vmatpush1.msra.mxu0 0.0
      %2060 = vmatprep.subr.mxu0 0.0
      %2061 = vmatpush1.msra.mxu0 0.0
      %2062 = vmatprep.subr.mxu0 0.0
      %2063 = vmatpush1.msra.mxu0 0.0
      %2064 = vmatprep.subr.mxu0 0.0
      %2065 = vmatpush1.msra.mxu0 0.0
      %2066 = vmatprep.subr.mxu0 0.0
      %2067 = vmatpush1.msra.mxu0 0.0
      %2068 = vmatprep.subr.mxu0 0.0
      %2069 = vmatpush1.msra.mxu0 0.0
      %2070 = vmatprep.subr.mxu0 0.0
      %2071 = vmatpush1.msra.mxu0 0.0
      %2072 = vmatprep.subr.mxu0 0.0
      %2073 = vmatpush1.msra.mxu0 0.0
      %2074 = vmatprep.subr.mxu0 0.0
      %2075 = vmatpush1.msra.mxu0 0.0
      %2076 = vmatprep.subr.mxu0 0.0
      %2077 = vmatpush1.msra.mxu0 0.0
      %2078 = vmatprep.subr.mxu0 0.0
      %2079 = vmatpush1.msra.mxu0 0.0
      %2080 = vmatprep.subr.mxu0 0.0
      %2081 = vmatpush1.msra.mxu0 0.0
      %2082 = vmatprep.mubr.f32.mxu0 0.0
      %2083 = vmatmul.mubr.f32.gmra.mrb[0].mxu0 %v2013
      %v2084 = vpop.f32.mrb[0].mxu0
      %v2085 = vadd.f32 %v2004, %v2084
      %v2086 = vpop.f32.mrb[0].mxu0
      %2087 = vmatprep.mubr.f32.mxu0 0.0
      %2088 = vmatmul.mubr.f32.gmra.mrb[0].mxu0 %v2016
      %v2089 = vpop.f32.mrb[0].mxu0
      %v2090 = vadd.f32 %v2009, %v2089
      %v2091 = vpop.f32.mrb[0].mxu0
      %2092 = vdwg.mxu0
      %v2093 = vld [vmem:[%s1146] sm:$0xff]
      %v2094 = vld [vmem:[%s1146 + $0x8] sm:$0xff]
      %v2096 = vsel %vm1420, %v1833, 0
      %v2099 = vsel %vm1420, %v1838, 0
      %2101 = vmatprep.subr.mxu0 0.0
      %2102 = vmatpush1.msra.mxu0 %v2093
      %2103 = vmatprep.subr.mxu0 0.0
      %2104 = vmatpush1.msra.mxu0 %v2094
      %2105 = vmatprep.subr.mxu0 0.0
      %2106 = vmatpush1.msra.mxu0 0.0
      %2107 = vmatprep.subr.mxu0 0.0
      %2108 = vmatpush1.msra.mxu0 0.0
      %2109 = vmatprep.subr.mxu0 0.0
      %2110 = vmatpush1.msra.mxu0 0.0
      %2111 = vmatprep.subr.mxu0 0.0
      %2112 = vmatpush1.msra.mxu0 0.0
      %2113 = vmatprep.subr.mxu0 0.0
      %2114 = vmatpush1.msra.mxu0 0.0
      %2115 = vmatprep.subr.mxu0 0.0
      %2116 = vmatpush1.msra.mxu0 0.0
      %2117 = vmatprep.subr.mxu0 0.0
      %2118 = vmatpush1.msra.mxu0 0.0
      %2119 = vmatprep.subr.mxu0 0.0
      %2120 = vmatpush1.msra.mxu0 0.0
      %2121 = vmatprep.subr.mxu0 0.0
      %2122 = vmatpush1.msra.mxu0 0.0
      %2123 = vmatprep.subr.mxu0 0.0
      %2124 = vmatpush1.msra.mxu0 0.0
      %2125 = vmatprep.subr.mxu0 0.0
      %2126 = vmatpush1.msra.mxu0 0.0
      %2127 = vmatprep.subr.mxu0 0.0
      %2128 = vmatpush1.msra.mxu0 0.0
      %2129 = vmatprep.subr.mxu0 0.0
      %2130 = vmatpush1.msra.mxu0 0.0
      %2131 = vmatprep.subr.mxu0 0.0
      %2132 = vmatpush1.msra.mxu0 0.0
      %2133 = vmatprep.subr.mxu0 0.0
      %2134 = vmatpush1.msra.mxu0 0.0
      %2135 = vmatprep.subr.mxu0 0.0
      %2136 = vmatpush1.msra.mxu0 0.0
      %2137 = vmatprep.subr.mxu0 0.0
      %2138 = vmatpush1.msra.mxu0 0.0
      %2139 = vmatprep.subr.mxu0 0.0
      %2140 = vmatpush1.msra.mxu0 0.0
      %2141 = vmatprep.subr.mxu0 0.0
      %2142 = vmatpush1.msra.mxu0 0.0
      %2143 = vmatprep.subr.mxu0 0.0
      %2144 = vmatpush1.msra.mxu0 0.0
      %2145 = vmatprep.subr.mxu0 0.0
      %2146 = vmatpush1.msra.mxu0 0.0
      %2147 = vmatprep.subr.mxu0 0.0
      %2148 = vmatpush1.msra.mxu0 0.0
      %2149 = vmatprep.subr.mxu0 0.0
      %2150 = vmatpush1.msra.mxu0 0.0
      %2151 = vmatprep.subr.mxu0 0.0
      %2152 = vmatpush1.msra.mxu0 0.0
      %2153 = vmatprep.subr.mxu0 0.0
      %2154 = vmatpush1.msra.mxu0 0.0
      %2155 = vmatprep.subr.mxu0 0.0
      %2156 = vmatpush1.msra.mxu0 0.0
      %2157 = vmatprep.subr.mxu0 0.0
      %2158 = vmatpush1.msra.mxu0 0.0
      %2159 = vmatprep.subr.mxu0 0.0
      %2160 = vmatpush1.msra.mxu0 0.0
      %2161 = vmatprep.subr.mxu0 0.0
      %2162 = vmatpush1.msra.mxu0 0.0
      %2163 = vmatprep.subr.mxu0 0.0
      %2164 = vmatpush1.msra.mxu0 0.0
      %2165 = vmatprep.mubr.f32.mxu0 0.0
      %2166 = vmatmul.mubr.f32.gmra.mrb[0].mxu0 %v2096
      %v2167 = vpop.f32.mrb[0].mxu0
      %v2168 = vadd.f32 0.0, %v2167
      %v2169 = vpop.f32.mrb[0].mxu0
      %2170 = vmatprep.mubr.f32.mxu0 0.0
      %2171 = vmatmul.mubr.f32.gmra.mrb[0].mxu0 %v2099
      %v2172 = vpop.f32.mrb[0].mxu0
      %v2173 = vadd.f32 0.0, %v2172
      %v2174 = vpop.f32.mrb[0].mxu0
      %2175 = vdwg.mxu0
      %v2176 = vadd.f32 %v2085, %v2168
      %v2177 = vadd.f32 %v2090, %v2173
      %v2178 = vld [vmem:[%s1149] sm:$0x1]
      %v2180 = vlaneseq
      %v2181 = vshrl.u32 %v2180, 7
      %v2182 = vsub.s32 0, %v2181
      %v2183 = vrot.slane %v2178, %v2182
      %v2185 = vadd.f32 %v2176, %v2183
      %v2186 = vadd.f32 %v2177, %v2183
      %v2187 = vxor.u32 %v2185, 2147483648
      %v2188 = vxor.u32 %v2186, 2147483648
      %v2189 = vmul.f32 %v2187, 1.442695
      %v2190 = vpow.pop %v2189
      %v2191 = vmul.f32 %v2188, 1.442695
      %v2192 = vpow.pop %v2191
      %v2193 = vadd.f32 %v2190, 1.0
      %v2194 = vadd.f32 %v2192, 1.0
      %v2195 = vrcp.pop %v2193
      %v2196 = vmul.f32 1.0, %v2195
      %v2197 = vrcp.pop %v2194
      %v2198 = vmul.f32 1.0, %v2197
      %v2199 = vmul.f32 %v2196, %v1841
      %v2200 = vmul.f32 %v2198, %v1842
      %v2201 = vld [vmem:[%s1083] sm:$0xff]
      %v2203 = vsel %vm1252, %v2201, 0
      %v2206 = vsel %vm1256, %v2200, 0
      %2208 = vmatprep.subr.mxu0 0.0
      %2209 = vmatpush1.msra.mxu0 %v2199
      %2210 = vmatprep.subr.mxu0 0.0
      %2211 = vmatpush1.msra.mxu0 %v2206
      %2212 = vmatprep.subr.mxu0 0.0
      %2213 = vmatpush1.msra.mxu0 0.0
      %2214 = vmatprep.subr.mxu0 0.0
      %2215 = vmatpush1.msra.mxu0 0.0
      %2216 = vmatprep.subr.mxu0 0.0
      %2217 = vmatpush1.msra.mxu0 0.0
      %2218 = vmatprep.subr.mxu0 0.0
      %2219 = vmatpush1.msra.mxu0 0.0
      %2220 = vmatprep.subr.mxu0 0.0
      %2221 = vmatpush1.msra.mxu0 0.0
      %2222 = vmatprep.subr.mxu0 0.0
      %2223 = vmatpush1.msra.mxu0 0.0
      %2224 = vmatprep.subr.mxu0 0.0
      %2225 = vmatpush1.msra.mxu0 0.0
      %2226 = vmatprep.subr.mxu0 0.0
      %2227 = vmatpush1.msra.mxu0 0.0
      %2228 = vmatprep.subr.mxu0 0.0
      %2229 = vmatpush1.msra.mxu0 0.0
      %2230 = vmatprep.subr.mxu0 0.0
      %2231 = vmatpush1.msra.mxu0 0.0
      %2232 = vmatprep.subr.mxu0 0.0
      %2233 = vmatpush1.msra.mxu0 0.0
      %2234 = vmatprep.subr.mxu0 0.0
      %2235 = vmatpush1.msra.mxu0 0.0
      %2236 = vmatprep.subr.mxu0 0.0
      %2237 = vmatpush1.msra.mxu0 0.0
      %2238 = vmatprep.subr.mxu0 0.0
      %2239 = vmatpush1.msra.mxu0 0.0
      %2240 = vmatprep.subr.mxu0 0.0
      %2241 = vmatpush1.msra.mxu0 0.0
      %2242 = vmatprep.subr.mxu0 0.0
      %2243 = vmatpush1.msra.mxu0 0.0
      %2244 = vmatprep.subr.mxu0 0.0
      %2245 = vmatpush1.msra.mxu0 0.0
      %2246 = vmatprep.subr.mxu0 0.0
      %2247 = vmatpush1.msra.mxu0 0.0
      %2248 = vmatprep.subr.mxu0 0.0
      %2249 = vmatpush1.msra.mxu0 0.0
      %2250 = vmatprep.subr.mxu0 0.0
      %2251 = vmatpush1.msra.mxu0 0.0
      %2252 = vmatprep.subr.mxu0 0.0
      %2253 = vmatpush1.msra.mxu0 0.0
      %2254 = vmatprep.subr.mxu0 0.0
      %2255 = vmatpush1.msra.mxu0 0.0
      %2256 = vmatprep.subr.mxu0 0.0
      %2257 = vmatpush1.msra.mxu0 0.0
      %2258 = vmatprep.subr.mxu0 0.0
      %2259 = vmatpush1.msra.mxu0 0.0
      %2260 = vmatprep.subr.mxu0 0.0
      %2261 = vmatpush1.msra.mxu0 0.0
      %2262 = vmatprep.subr.mxu0 0.0
      %2263 = vmatpush1.msra.mxu0 0.0
      %2264 = vmatprep.subr.mxu0 0.0
      %2265 = vmatpush1.msra.mxu0 0.0
      %2266 = vmatprep.subr.mxu0 0.0
      %2267 = vmatpush1.msra.mxu0 0.0
      %2268 = vmatprep.subr.mxu0 0.0
      %2269 = vmatpush1.msra.mxu0 0.0
      %2270 = vmatprep.subr.mxu0 0.0
      %2271 = vmatpush1.msra.mxu0 0.0
      %2272 = vmatprep.mubr.f32.mxu0 0.0
      %2273 = vmatmul.mubr.f32.gmra.mrb[0].mxu0 %v2203
      %v2274 = vpop.f32.mrb[0].mxu0
      %v2275 = vadd.f32 0.0, %v2274
      %v2276 = vpop.f32.mrb[0].mxu0
      %2277 = vdwg.mxu0
      %v2278 = vadd.f32 %v1569, %v2275
      %2280 = vset.pattern.permute.xlu0 0
      %2281 = vperm.xlu0 %2280, %v1165
      %v2282 = vpop.permute.xlu0 %2281
      %v2284 = vmul.f32 %v2278, %v2282
      %v2285 = vsel %vm1420, %v2284, 0.0
      %v2286 = vrot.slane %v2285, 4
      %v2287 = vadd.f32 %v2285, %v2286
      %v2288 = vrot.slane %v2287, 2
      %v2289 = vadd.f32 %v2287, %v2288
      %v2290 = vrot.slane %v2289, 1
      %v2291 = vadd.f32 %v2289, %v2290
      %2293 = vset.pattern.permute.xlu0 0
      %2294 = vperm.xlu0 %2293, %v1166
      %v2295 = vpop.permute.xlu0 %2294
      %v2297 = vlaneseq
      %v2298 = vshrl.u32 %v2297, 7
      %v2299 = vsub.s32 0, %v2298
      %v2300 = vrot.slane %v2295, %v2299
      %v2301 = vmul.f32 %v2291, %v2300
      %v2302 = vsub.f32 %v2278, %v2301
      %v2303 = vmul.f32 %v2302, %v2282
      %v2304 = vmul.f32 %v2303, %v2303
      %v2305 = vsel %vm1420, %v2304, 0.0
      %v2306 = vrot.slane %v2305, 4
      %v2307 = vadd.f32 %v2305, %v2306
      %v2308 = vrot.slane %v2307, 2
      %v2309 = vadd.f32 %v2307, %v2308
      %v2310 = vrot.slane %v2309, 1
      %v2311 = vadd.f32 %v2309, %v2310
      %v2312 = vmul.f32 %v2311, %v2300
      %v2313 = vadd.f32 %v2312, 1e-05
      %v2314 = vrsqrt.pop %v2313
      %v2315 = vmul.f32 %v2302, %v2314
      %v2316 = vld [vmem:[%s1152] sm:$0x1]
      %v2318 = vlaneseq
      %v2319 = vshrl.u32 %v2318, 7
      %v2320 = vsub.s32 0, %v2319
      %v2321 = vrot.slane %v2316, %v2320
      %v2323 = vmul.f32 %v2315, %v2321
      %v2324 = vld [vmem:[%s1155] sm:$0x1]
      %v2326 = vlaneseq
      %v2327 = vshrl.u32 %v2326, 7
      %v2328 = vsub.s32 0, %v2327
      %v2329 = vrot.slane %v2324, %v2328
      %v2331 = vadd.f32 %v2323, %v2329
      %v2332 = vadd.f32 %v2331, %v2331
      %v2333 = vmax.f32 %v2332, 0.0
      %v2334 = vmul.f32 %v2333, %v2282
      %2335 = vst.msk [vmem:[%s1159] sm:$0xff] %vm1420, %v2334
      %p2336 = scmp.lt.s32.totalorder %s36, 6
      %s2337 = scalar_select %p2336, %s36, 6
      %s2338 = smul.addr %s2337, 8
      %s2339 = scalar_lea.vmem %s25, %s2338
      // Predicated region
      $region121: #{gnn_forward.11} parent=119 // pred_check
        %p2340 = pneg %p699
      $region122: #{gnn_forward.11} parent=119 // pred_check_branch
        %2342 = sbr.rel (%p2340) target = $region124
      $region123: #{gnn_forward.11} parent=119 // pred_region
        _
      $region124: #{gnn_forward.11} parent=119 // pred_fallthru
        _
    $region120: #{gnn_forward.11} parent=5 // pred_fallthru
      _
    %p2343 = scmp.le.s32.totalorder 2, %s31
    // Predicated region
    $region125: #{gnn_forward.11} parent=5 // pred_check
      %p2344 = pneg %p2343
    $region126: #{gnn_forward.11} parent=5 // pred_check_branch
      %2346 = sbr.rel (%p2344) target = $region128
    $region127: #{gnn_forward.11} parent=5 // pred_region
      %s2347 = ssub.s32 %s31, 2
      // Predicated region
      $region129: #{gnn_forward.11} parent=127 // pred_check
        %p2348 = pneg %p705
      $region130: #{gnn_forward.11} parent=127 // pred_check_branch
        %2350 = sbr.rel (%p2348) target = $region132
      $region131: #{gnn_forward.11} parent=127 // pred_region
        %p2351 = scmp.lt.s32.totalorder %s37, 6
        %s2352 = scalar_select %p2351, %s37, 6
        %s2353 = smul.addr %s2352, 8
        %s2354 = scalar_lea.vmem %s25, %s2353
      $region132: #{gnn_forward.11} parent=127 // pred_fallthru
        _
    $region128: #{gnn_forward.11} parent=5 // pred_fallthru
      _
  $region6: #{gnn_forward.11} parent=0 // loop_footer
    %s35 = sadd.s32 1, %s31
  $region7: #{gnn_forward.11} parent=0 // loop_footer_branch
    %30 = sbr.rel target = $region3
  $region8: #{gnn_forward.11} parent=0 // loop_exit
    _

// kernel: gnn_forward.13
$region0: #{gnn_forward.13}
  #allocation0 [shape = 'u32[]', space=smem, size = 0x4, offset = 0x4, fixed_abs, tag = 'smem constant byte address 0x4 - core index']
  #allocation1 [shape = 'u32[144,128]{1,0:T(1,128)}', space=vmem, size = 0x12000, scoped, tag = 'internal scratch']
  #allocation2 [shape = 'f32[1,1]{1,0:T(1,128)S(1)}', space=vmem, size = 0x200, scoped, tag = 'scoped memory for gnn_forward.13']
  #allocation3 [shape = 'f32[1,1]{1,0:T(1,128)S(1)}', space=vmem, size = 0x200, scoped, tag = 'scoped memory for gnn_forward.13']
  %s0 = inlined_call_operand.vmem [shape: f32[24,16], index: 0, kind: input, shape index: {}]
  %s1 = inlined_call_operand.vmem [shape: f32[16,1], index: 1, kind: input, shape index: {}]
  %s2 = inlined_call_operand.<no memory space> [shape: f32[1,1], index: 2, kind: input, shape index: {}]
  %s3 = inlined_call_operand.<no memory space> [shape: f32[1,1], index: 3, kind: input, shape index: {}]
  %s4 = inlined_call_operand.vmem [shape: f32[24,1], index: 4, kind: output, shape index: {}]
  %s5 = sld [smem:[#allocation0]]
  $region26: #{gnn_forward.13} parent=0
    _
  %s7 = ssub.s32 1, %s5
  %s8 = scalar_select 0, %s7, %s5
  %v9 = vstv %s2
  %10 = vst [vmem:[#allocation2] sm:$0x1] %v9
  %v11 = vstv %s3
  %12 = vst [vmem:[#allocation3] sm:$0x1] %v11
  // Predicated region
  $region2: #{gnn_forward.13} parent=0 // pred_check
    _
  $region3: #{gnn_forward.13} parent=0 // pred_check_branch
    %14 = sbr.rel (0) target = $region5
  $region4: #{gnn_forward.13} parent=0 // pred_region
    _
  $region5: #{gnn_forward.13} parent=0 // pred_fallthru
    _
  // Predicated region
  $region6: #{gnn_forward.13} parent=0 // pred_check
    _
  $region7: #{gnn_forward.13} parent=0 // pred_check_branch
    %16 = sbr.rel (0) target = $region9
  $region8: #{gnn_forward.13} parent=0 // pred_region
    _
  $region9: #{gnn_forward.13} parent=0 // pred_fallthru
    _
  // Predicated region
  $region10: #{gnn_forward.13} parent=0 // pred_check
    _
  $region11: #{gnn_forward.13} parent=0 // pred_check_branch
    %18 = sbr.rel (0) target = $region13
  $region12: #{gnn_forward.13} parent=0 // pred_region
    _
  $region13: #{gnn_forward.13} parent=0 // pred_fallthru
    _
  // Predicated region
  $region14: #{gnn_forward.13} parent=0 // pred_check
    _
  $region15: #{gnn_forward.13} parent=0 // pred_check_branch
    %20 = sbr.rel (0) target = $region17
  $region16: #{gnn_forward.13} parent=0 // pred_region
    _
  $region17: #{gnn_forward.13} parent=0 // pred_fallthru
    _
  %v21 = vld [vmem:[%s0] sm:$0xff]
  %v22 = vld [vmem:[%s0 + $0x8] sm:$0xff]
  %v23 = vld [vmem:[%s0 + $0x10] sm:$0xff]
  %v24 = vld [vmem:[%s1] sm:$0xff]
  %v25 = vld [vmem:[%s1 + $0x8] sm:$0xff]
  %v26 = vld [vmem:[#allocation2] sm:$0x1]
  %v28 = vlaneseq
  %v29 = vshrl.u32 %v28, 7
  %v30 = vsub.s32 0, %v29
  %v31 = vrot.slane %v26, %v30
  %vm33 = vcmask 130048
  %v35 = vsel %vm33, %v21, 0
  %v38 = vsel %vm33, %v22, 0
  %v41 = vsel %vm33, %v23, 0
  %43 = vmatprep.subr.mxu0 0.0
  %44 = vmatpush1.msra.mxu0 %v24
  %45 = vmatprep.subr.mxu0 0.0
  %46 = vmatpush1.msra.mxu0 %v25
  %47 = vmatprep.subr.mxu0 0.0
  %48 = vmatpush1.msra.mxu0 0.0
  %49 = vmatprep.subr.mxu0 0.0
  %50 = vmatpush1.msra.mxu0 0.0
  %51 = vmatprep.subr.mxu0 0.0
  %52 = vmatpush1.msra.mxu0 0.0
  %53 = vmatprep.subr.mxu0 0.0
  %54 = vmatpush1.msra.mxu0 0.0
  %55 = vmatprep.subr.mxu0 0.0
  %56 = vmatpush1.msra.mxu0 0.0
  %57 = vmatprep.subr.mxu0 0.0
  %58 = vmatpush1.msra.mxu0 0.0
  %59 = vmatprep.subr.mxu0 0.0
  %60 = vmatpush1.msra.mxu0 0.0
  %61 = vmatprep.subr.mxu0 0.0
  %62 = vmatpush1.msra.mxu0 0.0
  %63 = vmatprep.subr.mxu0 0.0
  %64 = vmatpush1.msra.mxu0 0.0
  %65 = vmatprep.subr.mxu0 0.0
  %66 = vmatpush1.msra.mxu0 0.0
  %67 = vmatprep.subr.mxu0 0.0
  %68 = vmatpush1.msra.mxu0 0.0
  %69 = vmatprep.subr.mxu0 0.0
  %70 = vmatpush1.msra.mxu0 0.0
  %71 = vmatprep.subr.mxu0 0.0
  %72 = vmatpush1.msra.mxu0 0.0
  %73 = vmatprep.subr.mxu0 0.0
  %74 = vmatpush1.msra.mxu0 0.0
  %75 = vmatprep.subr.mxu0 0.0
  %76 = vmatpush1.msra.mxu0 0.0
  %77 = vmatprep.subr.mxu0 0.0
  %78 = vmatpush1.msra.mxu0 0.0
  %79 = vmatprep.subr.mxu0 0.0
  %80 = vmatpush1.msra.mxu0 0.0
  %81 = vmatprep.subr.mxu0 0.0
  %82 = vmatpush1.msra.mxu0 0.0
  %83 = vmatprep.subr.mxu0 0.0
  %84 = vmatpush1.msra.mxu0 0.0
  %85 = vmatprep.subr.mxu0 0.0
  %86 = vmatpush1.msra.mxu0 0.0
  %87 = vmatprep.subr.mxu0 0.0
  %88 = vmatpush1.msra.mxu0 0.0
  %89 = vmatprep.subr.mxu0 0.0
  %90 = vmatpush1.msra.mxu0 0.0
  %91 = vmatprep.subr.mxu0 0.0
  %92 = vmatpush1.msra.mxu0 0.0
  %93 = vmatprep.subr.mxu0 0.0
  %94 = vmatpush1.msra.mxu0 0.0
  %95 = vmatprep.subr.mxu0 0.0
  %96 = vmatpush1.msra.mxu0 0.0
  %97 = vmatprep.subr.mxu0 0.0
  %98 = vmatpush1.msra.mxu0 0.0
  %99 = vmatprep.subr.mxu0 0.0
  %100 = vmatpush1.msra.mxu0 0.0
  %101 = vmatprep.subr.mxu0 0.0
  %102 = vmatpush1.msra.mxu0 0.0
  %103 = vmatprep.subr.mxu0 0.0
  %104 = vmatpush1.msra.mxu0 0.0
  %105 = vmatprep.subr.mxu0 0.0
  %106 = vmatpush1.msra.mxu0 0.0
  %107 = vmatprep.mubr.f32.mxu0 0.0
  %108 = vmatmul.mubr.f32.gmra.mrb[0].mxu0 %v35
  %v109 = vpop.f32.mrb[0].mxu0
  %v110 = vadd.f32 %v31, %v109
  %v111 = vpop.f32.mrb[0].mxu0
  %112 = vmatprep.mubr.f32.mxu0 0.0
  %113 = vmatmul.mubr.f32.gmra.mrb[0].mxu0 %v38
  %v114 = vpop.f32.mrb[0].mxu0
  %v115 = vadd.f32 %v31, %v114
  %v116 = vpop.f32.mrb[0].mxu0
  %117 = vmatprep.mubr.f32.mxu0 0.0
  %118 = vmatmul.mubr.f32.gmra.mrb[0].mxu0 %v41
  %v119 = vpop.f32.mrb[0].mxu0
  %v120 = vadd.f32 %v31, %v119
  %v121 = vpop.f32.mrb[0].mxu0
  %122 = vdwg.mxu0
  %vm123 = vcmp.ge.f32.partialorder %v110, 0.0
  %vm124 = vcmp.ge.f32.partialorder %v115, 0.0
  %vm125 = vcmp.ge.f32.partialorder %v120, 0.0
  %v126 = vld [vmem:[#allocation3] sm:$0x1]
  %v128 = vlaneseq
  %v129 = vshrl.u32 %v128, 7
  %v130 = vsub.s32 0, %v129
  %v131 = vrot.slane %v126, %v130
  %v133 = vmul.f32 %v131, %v110
  %v134 = vmul.f32 %v131, %v115
  %v135 = vmul.f32 %v131, %v120
  %v136 = vsel %vm123, %v110, %v133
  %v137 = vsel %vm124, %v115, %v134
  %v138 = vsel %vm125, %v120, %v135
  %vm139 = vcmask 7168
  %140 = vst.msk [vmem:[%s4] sm:$0xff] %vm139, %v136
  %141 = vst.msk [vmem:[%s4 + $0x8] sm:$0xff] %vm139, %v137
  %142 = vst.msk [vmem:[%s4 + $0x10] sm:$0xff] %vm139, %v138
  // Predicated region
  $region18: #{gnn_forward.13} parent=0 // pred_check
    _
  $region19: #{gnn_forward.13} parent=0 // pred_check_branch
    %144 = sbr.rel (0) target = $region21
  $region20: #{gnn_forward.13} parent=0 // pred_region
    _
  $region21: #{gnn_forward.13} parent=0 // pred_fallthru
    _
  // Predicated region
  $region22: #{gnn_forward.13} parent=0 // pred_check
    _
  $region23: #{gnn_forward.13} parent=0 // pred_check_branch
    %146 = sbr.rel (0) target = $region25
  $region24: #{gnn_forward.13} parent=0 // pred_region
    _
  $region25: #{gnn_forward.13} parent=0 // pred_fallthru
    _

</llo_original>
